<compile_context>
chip_gen: v7x
topology: tpu7x:2x2x1
jax: 0.10.0
libtpu: 0.0.40
codegen_flags: <defaults>
</compile_context>

<pallas_src>
import jax
import jax.numpy as jnp
from jax import lax
from jax.experimental import pallas as pl
from jax.experimental.pallas import tpu as pltpu


def net_head_kernel(feat_ref, w1t_ref, b1_ref, w2_ref, b2_ref, out_ref):
    # feat_ref : (B, C, S)   f32   dense features (NCDHW flattened; C == 512)
    # w1t_ref  : (C, HID)    bf16  fc weight, pre-transposed to (in, out)
    # b1_ref   : (1, HID)    f32   fc bias
    # w2_ref   : (OUT, HID)  f32   linear weight (PyTorch (out, in) layout)
    # b2_ref   : (1, OUT)    f32   linear bias
    # out_ref  : (B, OUT)    f32

    # AdaptiveAvgPool3d((1,1,1)) + flatten  ->  mean over the spatial axis.
    pooled = jnp.mean(feat_ref[...], axis=2)                        # (B, C) f32

    # fc: (B, C) . (C, HID) -> (B, HID); bf16 on the MXU, f32 accumulation.
    h = jnp.dot(pooled.astype(jnp.bfloat16), w1t_ref[...],
                preferred_element_type=jnp.float32) + b1_ref[...]
    h = jnp.maximum(h, 0.0)                                         # ReLU(inplace)

    # linear: (B, HID) x (OUT, HID)^T -> (B, OUT), kept in f32 (tiny dot).
    out = lax.dot_general(
        h, w2_ref[...],
        dimension_numbers=(((1,), (1,)), ((), ())),
        preferred_element_type=jnp.float32) + b2_ref[...]
    out_ref[...] = out.astype(out_ref.dtype)


def prepare_params(w1, b1, w2, b2):
    """One-time parameter prep (run once, NOT per forward call):
    transpose + bf16-cast w1, reshape biases, keep tiny w2 in f32."""
    HID, C = w1.shape
    OUT, HID2 = w2.shape
    assert HID == HID2
    w1t_bf = jnp.asarray(w1).T.astype(jnp.bfloat16)              # (C, HID) bf16
    b1_2d = jnp.asarray(b1).reshape(1, HID).astype(jnp.float32)  # (1, HID)
    w2_f32 = jnp.asarray(w2).astype(jnp.float32)                 # (OUT, HID)
    b2_2d = jnp.asarray(b2).reshape(1, OUT).astype(jnp.float32)  # (1, OUT)
    return w1t_bf, b1_2d, w2_f32, b2_2d


def net_forward(feat_ncdhw, w1t_bf, b1_2d, w2_f32, b2_2d):
    """feat_ncdhw: (B, C, D, H, W) f32 dense feature volume (C == 512).
    Weights must come from prepare_params() (pre-cast / pre-transposed)."""
    B, C, D, H, W = feat_ncdhw.shape
    S = D * H * W
    C_in, HID = w1t_bf.shape
    OUT, HID2 = w2_f32.shape
    assert C == C_in and HID == HID2

    feat = feat_ncdhw.reshape(B, C, S)   # contiguous metadata reshape, no copy

    return pl.pallas_call(
        net_head_kernel,
        out_shape=jax.ShapeDtypeStruct((B, OUT), jnp.float32),
        grid_spec=pltpu.PrefetchScalarGridSpec(
            num_scalar_prefetch=0,
            grid=(1,),                                    # single step: no pipeline overhead
            in_specs=[
                pl.BlockSpec((B, C, S), lambda n: (0, 0, 0)),    # feat (f32)
                pl.BlockSpec((C, HID), lambda n: (0, 0)),        # w1^T (bf16)
                pl.BlockSpec((1, HID), lambda n: (0, 0)),        # b1
                pl.BlockSpec((OUT, HID), lambda n: (0, 0)),      # w2 (f32)
                pl.BlockSpec((1, OUT), lambda n: (0, 0)),        # b2
            ],
            out_specs=pl.BlockSpec((B, OUT), lambda n: (0, 0)),
        ),
        compiler_params=pltpu.CompilerParams(
            dimension_semantics=("arbitrary",),
            vmem_limit_bytes=32 << 20,   # ~9 MiB actually used; safe on v5e/v6e/v7x
        ),
    )(feat, w1t_bf, b1_2d, w2_f32, b2_2d)


if __name__ == "__main__":
    key = jax.random.PRNGKey(0)
    k_feat, k_w1, k_b1, k_w2, k_b2 = jax.random.split(key, 5)

    # Small shapes: batch=2, channels=512 (matches Net.fc in_features),
    # spatial 4x4x4 stand-in for the dense SparseToDense output.
    B, C, D, H, W = 2, 512, 4, 4, 4
    HID, OUT = 4096, 3

    feat = jax.random.normal(k_feat, (B, C, D, H, W), dtype=jnp.float32)

    # Deterministic parameter init (PyTorch Linear-style uniform bounds),
    # weights in PyTorch (out_features, in_features) layout.
    bound1 = 1.0 / (C ** 0.5)
    w1 = jax.random.uniform(k_w1, (HID, C), jnp.float32, -bound1, bound1)
    b1 = jax.random.uniform(k_b1, (HID,), jnp.float32, -bound1, bound1)
    bound2 = 1.0 / (HID ** 0.5)
    w2 = jax.random.uniform(k_w2, (OUT, HID), jnp.float32, -bound2, bound2)
    b2 = jax.random.uniform(k_b2, (OUT,), jnp.float32, -bound2, bound2)

    # One-time prep: bf16 cast + transpose happen here, NOT per forward call.
    params = prepare_params(w1, b1, w2, b2)
    params = jax.block_until_ready(params)

    out = net_forward(feat, *params)
    jax.block_until_ready(out)

    # Pure-JAX reference of the implemented (dense) portion, matched to the
    # kernel's numerics: bf16 weights / f32 accumulate for fc, full f32 linear.
    pooled_ref = feat.reshape(B, C, -1).mean(-1)                       # (B, C)
    h_ref = lax.dot_general(
        pooled_ref.astype(jnp.bfloat16), w1.astype(jnp.bfloat16),
        dimension_numbers=(((1,), (1,)), ((), ())),
        preferred_element_type=jnp.float32) + b1
    h_ref = jnp.maximum(h_ref, 0.0)
    ref = lax.dot_general(
        h_ref, w2,
        dimension_numbers=(((1,), (1,)), ((), ())),
        preferred_element_type=jnp.float32) + b2

    assert out.shape == (B, OUT)
    assert jnp.allclose(out, ref, atol=2e-3, rtol=2e-3)

    print("KERNEL_OK")
</pallas_src>

<mosaic_0001>
module attributes {stable_mosaic.version = 11 : i64} {
  func.func @net_head_kernel(%arg0: i32, %arg1: memref<2x512x64xf32, #tpu.memory_space<vmem>>, %arg2: memref<512x4096xbf16, #tpu.memory_space<vmem>>, %arg3: memref<1x4096xf32, #tpu.memory_space<vmem>>, %arg4: memref<3x4096xf32, #tpu.memory_space<vmem>>, %arg5: memref<1x3xf32, #tpu.memory_space<vmem>>, %arg6: memref<2x3xf32, #tpu.memory_space<vmem>>) attributes {dimension_semantics = [#tpu.dimension_semantics<arbitrary>], iteration_bounds = array<i64: 1>, scalar_prefetch = 0 : i64, scratch_operands = 0 : i64, tpu.core_type = #tpu.core_type<tc>, window_params = [{pipeline_mode = #tpu.pipeline_mode<synchronous>, transform_indices = @transform_0, window_bounds = array<i64: 2, 512, 64>}, {pipeline_mode = #tpu.pipeline_mode<synchronous>, transform_indices = @transform_1, window_bounds = array<i64: 512, 4096>}, {pipeline_mode = #tpu.pipeline_mode<synchronous>, transform_indices = @transform_2, window_bounds = array<i64: 1, 4096>}, {pipeline_mode = #tpu.pipeline_mode<synchronous>, transform_indices = @transform_3, window_bounds = array<i64: 3, 4096>}, {pipeline_mode = #tpu.pipeline_mode<synchronous>, transform_indices = @transform_4, window_bounds = array<i64: 1, 3>}, {pipeline_mode = #tpu.pipeline_mode<synchronous>, transform_indices = @transform_5, window_bounds = array<i64: 2, 3>}]} {
    %c0 = arith.constant 0 : index
    %c0_0 = arith.constant 0 : index
    %c0_1 = arith.constant 0 : index
    %0 = vector.load %arg1[%c0, %c0_0, %c0_1] : memref<2x512x64xf32, #tpu.memory_space<vmem>>, vector<2x512x64xf32>
    %cst = arith.constant dense<0.000000e+00> : vector<2x512xf32>
    %1 = vector.multi_reduction <add>, %0, %cst [2] : vector<2x512x64xf32> to vector<2x512xf32>
    %cst_2 = arith.constant 6.400000e+01 : f32
    %2 = vector.broadcast %cst_2 : f32 to vector<2x512xf32>
    %3 = arith.divf %1, %2 : vector<2x512xf32>
    %4 = arith.truncf %3 : vector<2x512xf32> to vector<2x512xbf16>
    %c0_3 = arith.constant 0 : index
    %c0_4 = arith.constant 0 : index
    %5 = vector.load %arg2[%c0_3, %c0_4] : memref<512x4096xbf16, #tpu.memory_space<vmem>>, vector<512x4096xbf16>
    %cst_5 = arith.constant dense<0.000000e+00> : vector<2x4096xf32>
    %6 = tpu.matmul %4, %5, %cst_5 {dimension_numbers = #tpu.dot_dimension_numbers<[1], [0], [0], [1], [0, 0, 1, 1], [], []>} : vector<2x512xbf16>, vector<512x4096xbf16>, vector<2x4096xf32> -> vector<2x4096xf32>
    %c0_6 = arith.constant 0 : index
    %c0_7 = arith.constant 0 : index
    %7 = vector.load %arg3[%c0_6, %c0_7] : memref<1x4096xf32, #tpu.memory_space<vmem>>, vector<1x4096xf32>
    %8 = vector.broadcast %7 : vector<1x4096xf32> to vector<2x4096xf32>
    %9 = arith.addf %6, %8 : vector<2x4096xf32>
    %cst_8 = arith.constant 0.000000e+00 : f32
    %10 = vector.broadcast %cst_8 : f32 to vector<2x4096xf32>
    %11 = arith.maximumf %9, %10 : vector<2x4096xf32>
    %c0_9 = arith.constant 0 : index
    %c0_10 = arith.constant 0 : index
    %12 = vector.load %arg4[%c0_9, %c0_10] : memref<3x4096xf32, #tpu.memory_space<vmem>>, vector<3x4096xf32>
    %cst_11 = arith.constant dense<0.000000e+00> : vector<2x3xf32>
    %13 = tpu.matmul %11, %12, %cst_11 {dimension_numbers = #tpu.dot_dimension_numbers<[1], [1], [0], [0], [0, 0, 1, 0], [], []>} : vector<2x4096xf32>, vector<3x4096xf32>, vector<2x3xf32> -> vector<2x3xf32>
    %c0_12 = arith.constant 0 : index
    %c0_13 = arith.constant 0 : index
    %14 = vector.load %arg5[%c0_12, %c0_13] : memref<1x3xf32, #tpu.memory_space<vmem>>, vector<1x3xf32>
    %15 = vector.broadcast %14 : vector<1x3xf32> to vector<2x3xf32>
    %16 = arith.addf %13, %15 : vector<2x3xf32>
    %c0_14 = arith.constant 0 : index
    %c0_15 = arith.constant 0 : index
    %17 = vector.load %arg6[%c0_14, %c0_15] : memref<2x3xf32, #tpu.memory_space<vmem>>, vector<2x3xf32>
    tpu.vector_store %arg6[%c0_14, %c0_15], %16 {strides = array<i32>} : memref<2x3xf32, #tpu.memory_space<vmem>>, vector<2x3xf32>,
    return
  }
  func.func @transform_0(%arg0: i32) -> (i32, i32, i32) {
    %c0_i32 = arith.constant 0 : i32
    %c0_i32_0 = arith.constant 0 : i32
    %c0_i32_1 = arith.constant 0 : i32
    %c0_i32_2 = arith.constant 0 : i32
    return %c0_i32, %c0_i32_0, %c0_i32_1 : i32, i32, i32
  }
  func.func @transform_1(%arg0: i32) -> (i32, i32) {
    %c0_i32 = arith.constant 0 : i32
    %c0_i32_0 = arith.constant 0 : i32
    %c0_i32_1 = arith.constant 0 : i32
    return %c0_i32, %c0_i32_0 : i32, i32
  }
  func.func @transform_2(%arg0: i32) -> (i32, i32) {
    %c0_i32 = arith.constant 0 : i32
    %c0_i32_0 = arith.constant 0 : i32
    %c0_i32_1 = arith.constant 0 : i32
    return %c0_i32, %c0_i32_0 : i32, i32
  }
  func.func @transform_3(%arg0: i32) -> (i32, i32) {
    %c0_i32 = arith.constant 0 : i32
    %c0_i32_0 = arith.constant 0 : i32
    %c0_i32_1 = arith.constant 0 : i32
    return %c0_i32, %c0_i32_0 : i32, i32
  }
  func.func @transform_4(%arg0: i32) -> (i32, i32) {
    %c0_i32 = arith.constant 0 : i32
    %c0_i32_0 = arith.constant 0 : i32
    %c0_i32_1 = arith.constant 0 : i32
    return %c0_i32, %c0_i32_0 : i32, i32
  }
  func.func @transform_5(%arg0: i32) -> (i32, i32) {
    %c0_i32 = arith.constant 0 : i32
    %c0_i32_0 = arith.constant 0 : i32
    %c0_i32_1 = arith.constant 0 : i32
    return %c0_i32, %c0_i32_0 : i32, i32
  }
}

</mosaic_0001>

<llo_original>
// kernel: tpu_custom_call.1
$region0: #{tpu_custom_call.1}
  #allocation0 [shape = 'u32[]', space=smem, size = 0x4, offset = 0x4, fixed_abs, tag = 'smem constant byte address 0x4 - core index']
  #allocation1 [shape = 'u32[144,128]{1,0:T(1,128)}', space=vmem, size = 0x12000, scoped, tag = 'internal scratch']
  %s0 = inlined_call_operand.vmem [shape: f32[2,512,64], index: 0, kind: input, shape index: {}]
  %s1 = inlined_call_operand.hbm [shape: bf16[512,4096], index: 1, kind: input, shape index: {}]
  %s2 = inlined_call_operand.hbm [shape: f32[1,4096], index: 2, kind: input, shape index: {}]
  %s3 = inlined_call_operand.hbm [shape: f32[3,4096], index: 3, kind: input, shape index: {}]
  %s4 = inlined_call_operand.hbm [shape: f32[1,3], index: 4, kind: input, shape index: {}]
  %s5 = inlined_call_operand.hbm [shape: f32[2,3], index: 5, kind: output, shape index: {}]
  %s6 = sld [smem:[#allocation0]]
  $region46: #{tpu_custom_call.1} parent=0
    _
  %s8 = ssub.s32 1, %s6
  %s9 = scalar_select 0, %s8, %s6
  $region1: #{tpu_custom_call.1} parent=0
    #allocation2 [shape = 'u8[4194304]{0}', space=vmem, size = 0x400000, scoped, tag = 'input window, operand 1, single buffered']
    #allocation3 [shape = 's32[1]{0}', space=sflag, size = 0x4, scoped, tag = 'scoped memory for tpu_custom_call.1']
    #allocation4 [shape = 's32[1]{0}', space=sflag, size = 0x4, scoped, tag = 'scoped memory for tpu_custom_call.1']
    #allocation5 [shape = 'u8[16384]{0}', space=vmem, size = 0x4000, scoped, tag = 'input window, operand 2, single buffered']
    #allocation6 [shape = 's32[1]{0}', space=sflag, size = 0x4, scoped, tag = 'scoped memory for tpu_custom_call.1']
    #allocation7 [shape = 'u8[65536]{0}', space=vmem, size = 0x10000, scoped, tag = 'input window, operand 3, single buffered']
    #allocation8 [shape = 'u8[512]{0}', space=vmem, size = 0x400, scoped, tag = 'input window, operand 4, single buffered']
    #allocation9 [shape = 's32[1]{0}', space=sflag, size = 0x4, scoped, tag = 'scoped memory for tpu_custom_call.1']
    #allocation10 [shape = 'u8[1024]{0}', space=vmem, size = 0x400, scoped, tag = 'output window, operand 0, single buffered']
    %10 = vsyncpa [#allocation3], 0
    %11 = vsyncpa [#allocation6], 0
    %12 = vsyncpa [#allocation9], 0
    %13 = vsyncpa [#allocation4], 0
    // Predicated region
    $region2: #{tpu_custom_call.1} parent=1 // pred_check
      _
    $region3: #{tpu_custom_call.1} parent=1 // pred_check_branch
      %15 = sbr.rel (0) target = $region5
    $region4: #{tpu_custom_call.1} parent=1 // pred_region
      _
    $region5: #{tpu_custom_call.1} parent=1 // pred_fallthru
      _
    // Predicated region
    $region6: #{tpu_custom_call.1} parent=1 // pred_check
      _
    $region7: #{tpu_custom_call.1} parent=1 // pred_check_branch
      %17 = sbr.rel (0) target = $region9
    $region8: #{tpu_custom_call.1} parent=1 // pred_region
      %s19 = ssub.s32 131072, 131072
      %20 = vsyncadd [#allocation3], %s19
      %s21 = sshll.u32 [#allocation2], 4
      %s22 = int_to_ptr.vmem [resolvable:$true] %s21
      %27 = dma.hbm_to_vmem [thread:$0]  %s1, 131072, %s22, [#allocation3], 2048, 2048, 128
    $region9: #{tpu_custom_call.1} parent=1 // pred_fallthru
      _
    // Predicated region
    $region10: #{tpu_custom_call.1} parent=1 // pred_check
      _
    $region11: #{tpu_custom_call.1} parent=1 // pred_check_branch
      %29 = sbr.rel (0) target = $region13
    $region12: #{tpu_custom_call.1} parent=1 // pred_region
      %s31 = ssub.s32 512, 512
      %32 = vsyncadd [#allocation6], %s31
      %s34 = sshll.u32 [#allocation5], 4
      %s35 = int_to_ptr.vmem [resolvable:$true] %s34
      %37 = dma.hbm_to_vmem [thread:$0]  %s2, 512, %s35, [#allocation6]
    $region13: #{tpu_custom_call.1} parent=1 // pred_fallthru
      _
    // Predicated region
    $region14: #{tpu_custom_call.1} parent=1 // pred_check
      _
    $region15: #{tpu_custom_call.1} parent=1 // pred_check_branch
      %39 = sbr.rel (0) target = $region17
    $region16: #{tpu_custom_call.1} parent=1 // pred_region
      %s41 = ssub.s32 2048, 2048
      %42 = vsyncadd [#allocation6], %s41
      %s44 = sshll.u32 [#allocation7], 4
      %s45 = int_to_ptr.vmem [resolvable:$true] %s44
      %47 = dma.hbm_to_vmem [thread:$0]  %s3, 2048, %s45, [#allocation6]
    $region17: #{tpu_custom_call.1} parent=1 // pred_fallthru
      _
    // Predicated region
    $region18: #{tpu_custom_call.1} parent=1 // pred_check
      _
    $region19: #{tpu_custom_call.1} parent=1 // pred_check_branch
      %49 = sbr.rel (0) target = $region21
    $region20: #{tpu_custom_call.1} parent=1 // pred_region
      %s51 = ssub.s32 16, 16
      %52 = vsyncadd [#allocation9], %s51
      %s54 = sshll.u32 [#allocation8], 4
      %s55 = int_to_ptr.vmem [resolvable:$true] %s54
      %57 = dma.hbm_to_vmem [thread:$0]  %s4, 16, %s55, [#allocation9]
    $region21: #{tpu_custom_call.1} parent=1 // pred_fallthru
      _
    // Predicated region
    $region22: #{tpu_custom_call.1} parent=1 // pred_check
      _
    $region23: #{tpu_custom_call.1} parent=1 // pred_check_branch
      %59 = sbr.rel (0) target = $region25
    $region24: #{tpu_custom_call.1} parent=1 // pred_region
      %60 = dma.done [#allocation3], 131072
    $region25: #{tpu_custom_call.1} parent=1 // pred_fallthru
      _
    // Predicated region
    $region26: #{tpu_custom_call.1} parent=1 // pred_check
      _
    $region27: #{tpu_custom_call.1} parent=1 // pred_check_branch
      %62 = sbr.rel (0) target = $region29
    $region28: #{tpu_custom_call.1} parent=1 // pred_region
      %63 = dma.done [#allocation6], 512
    $region29: #{tpu_custom_call.1} parent=1 // pred_fallthru
      _
    // Predicated region
    $region30: #{tpu_custom_call.1} parent=1 // pred_check
      _
    $region31: #{tpu_custom_call.1} parent=1 // pred_check_branch
      %65 = sbr.rel (0) target = $region33
    $region32: #{tpu_custom_call.1} parent=1 // pred_region
      %66 = dma.done [#allocation6], 2048
    $region33: #{tpu_custom_call.1} parent=1 // pred_fallthru
      _
    // Predicated region
    $region34: #{tpu_custom_call.1} parent=1 // pred_check
      _
    $region35: #{tpu_custom_call.1} parent=1 // pred_check_branch
      %68 = sbr.rel (0) target = $region37
    $region36: #{tpu_custom_call.1} parent=1 // pred_region
      %69 = dma.done [#allocation9], 16
    $region37: #{tpu_custom_call.1} parent=1 // pred_fallthru
      _
    %v70 = vld [vmem:[%s0] sm:$0xff]
    %v71 = vld [vmem:[%s0 + $0x8] sm:$0xff]
    %v72 = vld [vmem:[%s0 + $0x10] sm:$0xff]
    %v73 = vld [vmem:[%s0 + $0x18] sm:$0xff]
    %v74 = vld [vmem:[%s0 + $0x20] sm:$0xff]
    %v75 = vld [vmem:[%s0 + $0x28] sm:$0xff]
    %v76 = vld [vmem:[%s0 + $0x30] sm:$0xff]
    %v77 = vld [vmem:[%s0 + $0x38] sm:$0xff]
    %v78 = vld [vmem:[%s0 + $0x40] sm:$0xff]
    %v79 = vld [vmem:[%s0 + $0x48] sm:$0xff]
    %v80 = vld [vmem:[%s0 + $0x50] sm:$0xff]
    %v81 = vld [vmem:[%s0 + $0x58] sm:$0xff]
    %v82 = vld [vmem:[%s0 + $0x60] sm:$0xff]
    %v83 = vld [vmem:[%s0 + $0x68] sm:$0xff]
    %v84 = vld [vmem:[%s0 + $0x70] sm:$0xff]
    %v85 = vld [vmem:[%s0 + $0x78] sm:$0xff]
    %v86 = vld [vmem:[%s0 + $0x80] sm:$0xff]
    %v87 = vld [vmem:[%s0 + $0x88] sm:$0xff]
    %v88 = vld [vmem:[%s0 + $0x90] sm:$0xff]
    %v89 = vld [vmem:[%s0 + $0x98] sm:$0xff]
    %v90 = vld [vmem:[%s0 + $0xa0] sm:$0xff]
    %v91 = vld [vmem:[%s0 + $0xa8] sm:$0xff]
    %v92 = vld [vmem:[%s0 + $0xb0] sm:$0xff]
    %v93 = vld [vmem:[%s0 + $0xb8] sm:$0xff]
    %v94 = vld [vmem:[%s0 + $0xc0] sm:$0xff]
    %v95 = vld [vmem:[%s0 + $0xc8] sm:$0xff]
    %v96 = vld [vmem:[%s0 + $0xd0] sm:$0xff]
    %v97 = vld [vmem:[%s0 + $0xd8] sm:$0xff]
    %v98 = vld [vmem:[%s0 + $0xe0] sm:$0xff]
    %v99 = vld [vmem:[%s0 + $0xe8] sm:$0xff]
    %v100 = vld [vmem:[%s0 + $0xf0] sm:$0xff]
    %v101 = vld [vmem:[%s0 + $0xf8] sm:$0xff]
    %v102 = vld [vmem:[%s0 + $0x100] sm:$0xff]
    %v103 = vld [vmem:[%s0 + $0x108] sm:$0xff]
    %v104 = vld [vmem:[%s0 + $0x110] sm:$0xff]
    %v105 = vld [vmem:[%s0 + $0x118] sm:$0xff]
    %v106 = vld [vmem:[%s0 + $0x120] sm:$0xff]
    %v107 = vld [vmem:[%s0 + $0x128] sm:$0xff]
    %v108 = vld [vmem:[%s0 + $0x130] sm:$0xff]
    %v109 = vld [vmem:[%s0 + $0x138] sm:$0xff]
    %v110 = vld [vmem:[%s0 + $0x140] sm:$0xff]
    %v111 = vld [vmem:[%s0 + $0x148] sm:$0xff]
    %v112 = vld [vmem:[%s0 + $0x150] sm:$0xff]
    %v113 = vld [vmem:[%s0 + $0x158] sm:$0xff]
    %v114 = vld [vmem:[%s0 + $0x160] sm:$0xff]
    %v115 = vld [vmem:[%s0 + $0x168] sm:$0xff]
    %v116 = vld [vmem:[%s0 + $0x170] sm:$0xff]
    %v117 = vld [vmem:[%s0 + $0x178] sm:$0xff]
    %v118 = vld [vmem:[%s0 + $0x180] sm:$0xff]
    %v119 = vld [vmem:[%s0 + $0x188] sm:$0xff]
    %v120 = vld [vmem:[%s0 + $0x190] sm:$0xff]
    %v121 = vld [vmem:[%s0 + $0x198] sm:$0xff]
    %v122 = vld [vmem:[%s0 + $0x1a0] sm:$0xff]
    %v123 = vld [vmem:[%s0 + $0x1a8] sm:$0xff]
    %v124 = vld [vmem:[%s0 + $0x1b0] sm:$0xff]
    %v125 = vld [vmem:[%s0 + $0x1b8] sm:$0xff]
    %v126 = vld [vmem:[%s0 + $0x1c0] sm:$0xff]
    %v127 = vld [vmem:[%s0 + $0x1c8] sm:$0xff]
    %v128 = vld [vmem:[%s0 + $0x1d0] sm:$0xff]
    %v129 = vld [vmem:[%s0 + $0x1d8] sm:$0xff]
    %v130 = vld [vmem:[%s0 + $0x1e0] sm:$0xff]
    %v131 = vld [vmem:[%s0 + $0x1e8] sm:$0xff]
    %v132 = vld [vmem:[%s0 + $0x1f0] sm:$0xff]
    %v133 = vld [vmem:[%s0 + $0x1f8] sm:$0xff]
    %v134 = vld [vmem:[%s0 + $0x200] sm:$0xff]
    %v135 = vld [vmem:[%s0 + $0x208] sm:$0xff]
    %v136 = vld [vmem:[%s0 + $0x210] sm:$0xff]
    %v137 = vld [vmem:[%s0 + $0x218] sm:$0xff]
    %v138 = vld [vmem:[%s0 + $0x220] sm:$0xff]
    %v139 = vld [vmem:[%s0 + $0x228] sm:$0xff]
    %v140 = vld [vmem:[%s0 + $0x230] sm:$0xff]
    %v141 = vld [vmem:[%s0 + $0x238] sm:$0xff]
    %v142 = vld [vmem:[%s0 + $0x240] sm:$0xff]
    %v143 = vld [vmem:[%s0 + $0x248] sm:$0xff]
    %v144 = vld [vmem:[%s0 + $0x250] sm:$0xff]
    %v145 = vld [vmem:[%s0 + $0x258] sm:$0xff]
    %v146 = vld [vmem:[%s0 + $0x260] sm:$0xff]
    %v147 = vld [vmem:[%s0 + $0x268] sm:$0xff]
    %v148 = vld [vmem:[%s0 + $0x270] sm:$0xff]
    %v149 = vld [vmem:[%s0 + $0x278] sm:$0xff]
    %v150 = vld [vmem:[%s0 + $0x280] sm:$0xff]
    %v151 = vld [vmem:[%s0 + $0x288] sm:$0xff]
    %v152 = vld [vmem:[%s0 + $0x290] sm:$0xff]
    %v153 = vld [vmem:[%s0 + $0x298] sm:$0xff]
    %v154 = vld [vmem:[%s0 + $0x2a0] sm:$0xff]
    %v155 = vld [vmem:[%s0 + $0x2a8] sm:$0xff]
    %v156 = vld [vmem:[%s0 + $0x2b0] sm:$0xff]
    %v157 = vld [vmem:[%s0 + $0x2b8] sm:$0xff]
    %v158 = vld [vmem:[%s0 + $0x2c0] sm:$0xff]
    %v159 = vld [vmem:[%s0 + $0x2c8] sm:$0xff]
    %v160 = vld [vmem:[%s0 + $0x2d0] sm:$0xff]
    %v161 = vld [vmem:[%s0 + $0x2d8] sm:$0xff]
    %v162 = vld [vmem:[%s0 + $0x2e0] sm:$0xff]
    %v163 = vld [vmem:[%s0 + $0x2e8] sm:$0xff]
    %v164 = vld [vmem:[%s0 + $0x2f0] sm:$0xff]
    %v165 = vld [vmem:[%s0 + $0x2f8] sm:$0xff]
    %v166 = vld [vmem:[%s0 + $0x300] sm:$0xff]
    %v167 = vld [vmem:[%s0 + $0x308] sm:$0xff]
    %v168 = vld [vmem:[%s0 + $0x310] sm:$0xff]
    %v169 = vld [vmem:[%s0 + $0x318] sm:$0xff]
    %v170 = vld [vmem:[%s0 + $0x320] sm:$0xff]
    %v171 = vld [vmem:[%s0 + $0x328] sm:$0xff]
    %v172 = vld [vmem:[%s0 + $0x330] sm:$0xff]
    %v173 = vld [vmem:[%s0 + $0x338] sm:$0xff]
    %v174 = vld [vmem:[%s0 + $0x340] sm:$0xff]
    %v175 = vld [vmem:[%s0 + $0x348] sm:$0xff]
    %v176 = vld [vmem:[%s0 + $0x350] sm:$0xff]
    %v177 = vld [vmem:[%s0 + $0x358] sm:$0xff]
    %v178 = vld [vmem:[%s0 + $0x360] sm:$0xff]
    %v179 = vld [vmem:[%s0 + $0x368] sm:$0xff]
    %v180 = vld [vmem:[%s0 + $0x370] sm:$0xff]
    %v181 = vld [vmem:[%s0 + $0x378] sm:$0xff]
    %v182 = vld [vmem:[%s0 + $0x380] sm:$0xff]
    %v183 = vld [vmem:[%s0 + $0x388] sm:$0xff]
    %v184 = vld [vmem:[%s0 + $0x390] sm:$0xff]
    %v185 = vld [vmem:[%s0 + $0x398] sm:$0xff]
    %v186 = vld [vmem:[%s0 + $0x3a0] sm:$0xff]
    %v187 = vld [vmem:[%s0 + $0x3a8] sm:$0xff]
    %v188 = vld [vmem:[%s0 + $0x3b0] sm:$0xff]
    %v189 = vld [vmem:[%s0 + $0x3b8] sm:$0xff]
    %v190 = vld [vmem:[%s0 + $0x3c0] sm:$0xff]
    %v191 = vld [vmem:[%s0 + $0x3c8] sm:$0xff]
    %v192 = vld [vmem:[%s0 + $0x3d0] sm:$0xff]
    %v193 = vld [vmem:[%s0 + $0x3d8] sm:$0xff]
    %v194 = vld [vmem:[%s0 + $0x3e0] sm:$0xff]
    %v195 = vld [vmem:[%s0 + $0x3e8] sm:$0xff]
    %v196 = vld [vmem:[%s0 + $0x3f0] sm:$0xff]
    %v197 = vld [vmem:[%s0 + $0x3f8] sm:$0xff]
    %vm198 = vcmask 523264
    %v199 = vsel %vm198, %v70, 0.0
    %200 = vadd.xlane.f32.xlu0 %v199
    %v201 = vpop.xlane.xlu0 %200
    %v202 = vsel %vm198, %v71, 0.0
    %203 = vadd.xlane.f32.xlu0 %v202
    %v204 = vpop.xlane.xlu0 %203
    %v205 = vsel %vm198, %v72, 0.0
    %206 = vadd.xlane.f32.xlu0 %v205
    %v207 = vpop.xlane.xlu0 %206
    %v208 = vsel %vm198, %v73, 0.0
    %209 = vadd.xlane.f32.xlu0 %v208
    %v210 = vpop.xlane.xlu0 %209
    %v211 = vsel %vm198, %v74, 0.0
    %212 = vadd.xlane.f32.xlu0 %v211
    %v213 = vpop.xlane.xlu0 %212
    %v214 = vsel %vm198, %v75, 0.0
    %215 = vadd.xlane.f32.xlu0 %v214
    %v216 = vpop.xlane.xlu0 %215
    %v217 = vsel %vm198, %v76, 0.0
    %218 = vadd.xlane.f32.xlu0 %v217
    %v219 = vpop.xlane.xlu0 %218
    %v220 = vsel %vm198, %v77, 0.0
    %221 = vadd.xlane.f32.xlu0 %v220
    %v222 = vpop.xlane.xlu0 %221
    %v223 = vsel %vm198, %v78, 0.0
    %224 = vadd.xlane.f32.xlu0 %v223
    %v225 = vpop.xlane.xlu0 %224
    %v226 = vsel %vm198, %v79, 0.0
    %227 = vadd.xlane.f32.xlu0 %v226
    %v228 = vpop.xlane.xlu0 %227
    %v229 = vsel %vm198, %v80, 0.0
    %230 = vadd.xlane.f32.xlu0 %v229
    %v231 = vpop.xlane.xlu0 %230
    %v232 = vsel %vm198, %v81, 0.0
    %233 = vadd.xlane.f32.xlu0 %v232
    %v234 = vpop.xlane.xlu0 %233
    %v235 = vsel %vm198, %v82, 0.0
    %236 = vadd.xlane.f32.xlu0 %v235
    %v237 = vpop.xlane.xlu0 %236
    %v238 = vsel %vm198, %v83, 0.0
    %239 = vadd.xlane.f32.xlu0 %v238
    %v240 = vpop.xlane.xlu0 %239
    %v241 = vsel %vm198, %v84, 0.0
    %242 = vadd.xlane.f32.xlu0 %v241
    %v243 = vpop.xlane.xlu0 %242
    %v244 = vsel %vm198, %v85, 0.0
    %245 = vadd.xlane.f32.xlu0 %v244
    %v246 = vpop.xlane.xlu0 %245
    %v247 = vsel %vm198, %v86, 0.0
    %248 = vadd.xlane.f32.xlu0 %v247
    %v249 = vpop.xlane.xlu0 %248
    %v250 = vsel %vm198, %v87, 0.0
    %251 = vadd.xlane.f32.xlu0 %v250
    %v252 = vpop.xlane.xlu0 %251
    %v253 = vsel %vm198, %v88, 0.0
    %254 = vadd.xlane.f32.xlu0 %v253
    %v255 = vpop.xlane.xlu0 %254
    %v256 = vsel %vm198, %v89, 0.0
    %257 = vadd.xlane.f32.xlu0 %v256
    %v258 = vpop.xlane.xlu0 %257
    %v259 = vsel %vm198, %v90, 0.0
    %260 = vadd.xlane.f32.xlu0 %v259
    %v261 = vpop.xlane.xlu0 %260
    %v262 = vsel %vm198, %v91, 0.0
    %263 = vadd.xlane.f32.xlu0 %v262
    %v264 = vpop.xlane.xlu0 %263
    %v265 = vsel %vm198, %v92, 0.0
    %266 = vadd.xlane.f32.xlu0 %v265
    %v267 = vpop.xlane.xlu0 %266
    %v268 = vsel %vm198, %v93, 0.0
    %269 = vadd.xlane.f32.xlu0 %v268
    %v270 = vpop.xlane.xlu0 %269
    %v271 = vsel %vm198, %v94, 0.0
    %272 = vadd.xlane.f32.xlu0 %v271
    %v273 = vpop.xlane.xlu0 %272
    %v274 = vsel %vm198, %v95, 0.0
    %275 = vadd.xlane.f32.xlu0 %v274
    %v276 = vpop.xlane.xlu0 %275
    %v277 = vsel %vm198, %v96, 0.0
    %278 = vadd.xlane.f32.xlu0 %v277
    %v279 = vpop.xlane.xlu0 %278
    %v280 = vsel %vm198, %v97, 0.0
    %281 = vadd.xlane.f32.xlu0 %v280
    %v282 = vpop.xlane.xlu0 %281
    %v283 = vsel %vm198, %v98, 0.0
    %284 = vadd.xlane.f32.xlu0 %v283
    %v285 = vpop.xlane.xlu0 %284
    %v286 = vsel %vm198, %v99, 0.0
    %287 = vadd.xlane.f32.xlu0 %v286
    %v288 = vpop.xlane.xlu0 %287
    %v289 = vsel %vm198, %v100, 0.0
    %290 = vadd.xlane.f32.xlu0 %v289
    %v291 = vpop.xlane.xlu0 %290
    %v292 = vsel %vm198, %v101, 0.0
    %293 = vadd.xlane.f32.xlu0 %v292
    %v294 = vpop.xlane.xlu0 %293
    %v295 = vsel %vm198, %v102, 0.0
    %296 = vadd.xlane.f32.xlu0 %v295
    %v297 = vpop.xlane.xlu0 %296
    %v298 = vsel %vm198, %v103, 0.0
    %299 = vadd.xlane.f32.xlu0 %v298
    %v300 = vpop.xlane.xlu0 %299
    %v301 = vsel %vm198, %v104, 0.0
    %302 = vadd.xlane.f32.xlu0 %v301
    %v303 = vpop.xlane.xlu0 %302
    %v304 = vsel %vm198, %v105, 0.0
    %305 = vadd.xlane.f32.xlu0 %v304
    %v306 = vpop.xlane.xlu0 %305
    %v307 = vsel %vm198, %v106, 0.0
    %308 = vadd.xlane.f32.xlu0 %v307
    %v309 = vpop.xlane.xlu0 %308
    %v310 = vsel %vm198, %v107, 0.0
    %311 = vadd.xlane.f32.xlu0 %v310
    %v312 = vpop.xlane.xlu0 %311
    %v313 = vsel %vm198, %v108, 0.0
    %314 = vadd.xlane.f32.xlu0 %v313
    %v315 = vpop.xlane.xlu0 %314
    %v316 = vsel %vm198, %v109, 0.0
    %317 = vadd.xlane.f32.xlu0 %v316
    %v318 = vpop.xlane.xlu0 %317
    %v319 = vsel %vm198, %v110, 0.0
    %320 = vadd.xlane.f32.xlu0 %v319
    %v321 = vpop.xlane.xlu0 %320
    %v322 = vsel %vm198, %v111, 0.0
    %323 = vadd.xlane.f32.xlu0 %v322
    %v324 = vpop.xlane.xlu0 %323
    %v325 = vsel %vm198, %v112, 0.0
    %326 = vadd.xlane.f32.xlu0 %v325
    %v327 = vpop.xlane.xlu0 %326
    %v328 = vsel %vm198, %v113, 0.0
    %329 = vadd.xlane.f32.xlu0 %v328
    %v330 = vpop.xlane.xlu0 %329
    %v331 = vsel %vm198, %v114, 0.0
    %332 = vadd.xlane.f32.xlu0 %v331
    %v333 = vpop.xlane.xlu0 %332
    %v334 = vsel %vm198, %v115, 0.0
    %335 = vadd.xlane.f32.xlu0 %v334
    %v336 = vpop.xlane.xlu0 %335
    %v337 = vsel %vm198, %v116, 0.0
    %338 = vadd.xlane.f32.xlu0 %v337
    %v339 = vpop.xlane.xlu0 %338
    %v340 = vsel %vm198, %v117, 0.0
    %341 = vadd.xlane.f32.xlu0 %v340
    %v342 = vpop.xlane.xlu0 %341
    %v343 = vsel %vm198, %v118, 0.0
    %344 = vadd.xlane.f32.xlu0 %v343
    %v345 = vpop.xlane.xlu0 %344
    %v346 = vsel %vm198, %v119, 0.0
    %347 = vadd.xlane.f32.xlu0 %v346
    %v348 = vpop.xlane.xlu0 %347
    %v349 = vsel %vm198, %v120, 0.0
    %350 = vadd.xlane.f32.xlu0 %v349
    %v351 = vpop.xlane.xlu0 %350
    %v352 = vsel %vm198, %v121, 0.0
    %353 = vadd.xlane.f32.xlu0 %v352
    %v354 = vpop.xlane.xlu0 %353
    %v355 = vsel %vm198, %v122, 0.0
    %356 = vadd.xlane.f32.xlu0 %v355
    %v357 = vpop.xlane.xlu0 %356
    %v358 = vsel %vm198, %v123, 0.0
    %359 = vadd.xlane.f32.xlu0 %v358
    %v360 = vpop.xlane.xlu0 %359
    %v361 = vsel %vm198, %v124, 0.0
    %362 = vadd.xlane.f32.xlu0 %v361
    %v363 = vpop.xlane.xlu0 %362
    %v364 = vsel %vm198, %v125, 0.0
    %365 = vadd.xlane.f32.xlu0 %v364
    %v366 = vpop.xlane.xlu0 %365
    %v367 = vsel %vm198, %v126, 0.0
    %368 = vadd.xlane.f32.xlu0 %v367
    %v369 = vpop.xlane.xlu0 %368
    %v370 = vsel %vm198, %v127, 0.0
    %371 = vadd.xlane.f32.xlu0 %v370
    %v372 = vpop.xlane.xlu0 %371
    %v373 = vsel %vm198, %v128, 0.0
    %374 = vadd.xlane.f32.xlu0 %v373
    %v375 = vpop.xlane.xlu0 %374
    %v376 = vsel %vm198, %v129, 0.0
    %377 = vadd.xlane.f32.xlu0 %v376
    %v378 = vpop.xlane.xlu0 %377
    %v379 = vsel %vm198, %v130, 0.0
    %380 = vadd.xlane.f32.xlu0 %v379
    %v381 = vpop.xlane.xlu0 %380
    %v382 = vsel %vm198, %v131, 0.0
    %383 = vadd.xlane.f32.xlu0 %v382
    %v384 = vpop.xlane.xlu0 %383
    %v385 = vsel %vm198, %v132, 0.0
    %386 = vadd.xlane.f32.xlu0 %v385
    %v387 = vpop.xlane.xlu0 %386
    %v388 = vsel %vm198, %v133, 0.0
    %389 = vadd.xlane.f32.xlu0 %v388
    %v390 = vpop.xlane.xlu0 %389
    %v391 = vsel %vm198, %v134, 0.0
    %392 = vadd.xlane.f32.xlu0 %v391
    %v393 = vpop.xlane.xlu0 %392
    %v394 = vsel %vm198, %v135, 0.0
    %395 = vadd.xlane.f32.xlu0 %v394
    %v396 = vpop.xlane.xlu0 %395
    %v397 = vsel %vm198, %v136, 0.0
    %398 = vadd.xlane.f32.xlu0 %v397
    %v399 = vpop.xlane.xlu0 %398
    %v400 = vsel %vm198, %v137, 0.0
    %401 = vadd.xlane.f32.xlu0 %v400
    %v402 = vpop.xlane.xlu0 %401
    %v403 = vsel %vm198, %v138, 0.0
    %404 = vadd.xlane.f32.xlu0 %v403
    %v405 = vpop.xlane.xlu0 %404
    %v406 = vsel %vm198, %v139, 0.0
    %407 = vadd.xlane.f32.xlu0 %v406
    %v408 = vpop.xlane.xlu0 %407
    %v409 = vsel %vm198, %v140, 0.0
    %410 = vadd.xlane.f32.xlu0 %v409
    %v411 = vpop.xlane.xlu0 %410
    %v412 = vsel %vm198, %v141, 0.0
    %413 = vadd.xlane.f32.xlu0 %v412
    %v414 = vpop.xlane.xlu0 %413
    %v415 = vsel %vm198, %v142, 0.0
    %416 = vadd.xlane.f32.xlu0 %v415
    %v417 = vpop.xlane.xlu0 %416
    %v418 = vsel %vm198, %v143, 0.0
    %419 = vadd.xlane.f32.xlu0 %v418
    %v420 = vpop.xlane.xlu0 %419
    %v421 = vsel %vm198, %v144, 0.0
    %422 = vadd.xlane.f32.xlu0 %v421
    %v423 = vpop.xlane.xlu0 %422
    %v424 = vsel %vm198, %v145, 0.0
    %425 = vadd.xlane.f32.xlu0 %v424
    %v426 = vpop.xlane.xlu0 %425
    %v427 = vsel %vm198, %v146, 0.0
    %428 = vadd.xlane.f32.xlu0 %v427
    %v429 = vpop.xlane.xlu0 %428
    %v430 = vsel %vm198, %v147, 0.0
    %431 = vadd.xlane.f32.xlu0 %v430
    %v432 = vpop.xlane.xlu0 %431
    %v433 = vsel %vm198, %v148, 0.0
    %434 = vadd.xlane.f32.xlu0 %v433
    %v435 = vpop.xlane.xlu0 %434
    %v436 = vsel %vm198, %v149, 0.0
    %437 = vadd.xlane.f32.xlu0 %v436
    %v438 = vpop.xlane.xlu0 %437
    %v439 = vsel %vm198, %v150, 0.0
    %440 = vadd.xlane.f32.xlu0 %v439
    %v441 = vpop.xlane.xlu0 %440
    %v442 = vsel %vm198, %v151, 0.0
    %443 = vadd.xlane.f32.xlu0 %v442
    %v444 = vpop.xlane.xlu0 %443
    %v445 = vsel %vm198, %v152, 0.0
    %446 = vadd.xlane.f32.xlu0 %v445
    %v447 = vpop.xlane.xlu0 %446
    %v448 = vsel %vm198, %v153, 0.0
    %449 = vadd.xlane.f32.xlu0 %v448
    %v450 = vpop.xlane.xlu0 %449
    %v451 = vsel %vm198, %v154, 0.0
    %452 = vadd.xlane.f32.xlu0 %v451
    %v453 = vpop.xlane.xlu0 %452
    %v454 = vsel %vm198, %v155, 0.0
    %455 = vadd.xlane.f32.xlu0 %v454
    %v456 = vpop.xlane.xlu0 %455
    %v457 = vsel %vm198, %v156, 0.0
    %458 = vadd.xlane.f32.xlu0 %v457
    %v459 = vpop.xlane.xlu0 %458
    %v460 = vsel %vm198, %v157, 0.0
    %461 = vadd.xlane.f32.xlu0 %v460
    %v462 = vpop.xlane.xlu0 %461
    %v463 = vsel %vm198, %v158, 0.0
    %464 = vadd.xlane.f32.xlu0 %v463
    %v465 = vpop.xlane.xlu0 %464
    %v466 = vsel %vm198, %v159, 0.0
    %467 = vadd.xlane.f32.xlu0 %v466
    %v468 = vpop.xlane.xlu0 %467
    %v469 = vsel %vm198, %v160, 0.0
    %470 = vadd.xlane.f32.xlu0 %v469
    %v471 = vpop.xlane.xlu0 %470
    %v472 = vsel %vm198, %v161, 0.0
    %473 = vadd.xlane.f32.xlu0 %v472
    %v474 = vpop.xlane.xlu0 %473
    %v475 = vsel %vm198, %v162, 0.0
    %476 = vadd.xlane.f32.xlu0 %v475
    %v477 = vpop.xlane.xlu0 %476
    %v478 = vsel %vm198, %v163, 0.0
    %479 = vadd.xlane.f32.xlu0 %v478
    %v480 = vpop.xlane.xlu0 %479
    %v481 = vsel %vm198, %v164, 0.0
    %482 = vadd.xlane.f32.xlu0 %v481
    %v483 = vpop.xlane.xlu0 %482
    %v484 = vsel %vm198, %v165, 0.0
    %485 = vadd.xlane.f32.xlu0 %v484
    %v486 = vpop.xlane.xlu0 %485
    %v487 = vsel %vm198, %v166, 0.0
    %488 = vadd.xlane.f32.xlu0 %v487
    %v489 = vpop.xlane.xlu0 %488
    %v490 = vsel %vm198, %v167, 0.0
    %491 = vadd.xlane.f32.xlu0 %v490
    %v492 = vpop.xlane.xlu0 %491
    %v493 = vsel %vm198, %v168, 0.0
    %494 = vadd.xlane.f32.xlu0 %v493
    %v495 = vpop.xlane.xlu0 %494
    %v496 = vsel %vm198, %v169, 0.0
    %497 = vadd.xlane.f32.xlu0 %v496
    %v498 = vpop.xlane.xlu0 %497
    %v499 = vsel %vm198, %v170, 0.0
    %500 = vadd.xlane.f32.xlu0 %v499
    %v501 = vpop.xlane.xlu0 %500
    %v502 = vsel %vm198, %v171, 0.0
    %503 = vadd.xlane.f32.xlu0 %v502
    %v504 = vpop.xlane.xlu0 %503
    %v505 = vsel %vm198, %v172, 0.0
    %506 = vadd.xlane.f32.xlu0 %v505
    %v507 = vpop.xlane.xlu0 %506
    %v508 = vsel %vm198, %v173, 0.0
    %509 = vadd.xlane.f32.xlu0 %v508
    %v510 = vpop.xlane.xlu0 %509
    %v511 = vsel %vm198, %v174, 0.0
    %512 = vadd.xlane.f32.xlu0 %v511
    %v513 = vpop.xlane.xlu0 %512
    %v514 = vsel %vm198, %v175, 0.0
    %515 = vadd.xlane.f32.xlu0 %v514
    %v516 = vpop.xlane.xlu0 %515
    %v517 = vsel %vm198, %v176, 0.0
    %518 = vadd.xlane.f32.xlu0 %v517
    %v519 = vpop.xlane.xlu0 %518
    %v520 = vsel %vm198, %v177, 0.0
    %521 = vadd.xlane.f32.xlu0 %v520
    %v522 = vpop.xlane.xlu0 %521
    %v523 = vsel %vm198, %v178, 0.0
    %524 = vadd.xlane.f32.xlu0 %v523
    %v525 = vpop.xlane.xlu0 %524
    %v526 = vsel %vm198, %v179, 0.0
    %527 = vadd.xlane.f32.xlu0 %v526
    %v528 = vpop.xlane.xlu0 %527
    %v529 = vsel %vm198, %v180, 0.0
    %530 = vadd.xlane.f32.xlu0 %v529
    %v531 = vpop.xlane.xlu0 %530
    %v532 = vsel %vm198, %v181, 0.0
    %533 = vadd.xlane.f32.xlu0 %v532
    %v534 = vpop.xlane.xlu0 %533
    %v535 = vsel %vm198, %v182, 0.0
    %536 = vadd.xlane.f32.xlu0 %v535
    %v537 = vpop.xlane.xlu0 %536
    %v538 = vsel %vm198, %v183, 0.0
    %539 = vadd.xlane.f32.xlu0 %v538
    %v540 = vpop.xlane.xlu0 %539
    %v541 = vsel %vm198, %v184, 0.0
    %542 = vadd.xlane.f32.xlu0 %v541
    %v543 = vpop.xlane.xlu0 %542
    %v544 = vsel %vm198, %v185, 0.0
    %545 = vadd.xlane.f32.xlu0 %v544
    %v546 = vpop.xlane.xlu0 %545
    %v547 = vsel %vm198, %v186, 0.0
    %548 = vadd.xlane.f32.xlu0 %v547
    %v549 = vpop.xlane.xlu0 %548
    %v550 = vsel %vm198, %v187, 0.0
    %551 = vadd.xlane.f32.xlu0 %v550
    %v552 = vpop.xlane.xlu0 %551
    %v553 = vsel %vm198, %v188, 0.0
    %554 = vadd.xlane.f32.xlu0 %v553
    %v555 = vpop.xlane.xlu0 %554
    %v556 = vsel %vm198, %v189, 0.0
    %557 = vadd.xlane.f32.xlu0 %v556
    %v558 = vpop.xlane.xlu0 %557
    %v559 = vsel %vm198, %v190, 0.0
    %560 = vadd.xlane.f32.xlu0 %v559
    %v561 = vpop.xlane.xlu0 %560
    %v562 = vsel %vm198, %v191, 0.0
    %563 = vadd.xlane.f32.xlu0 %v562
    %v564 = vpop.xlane.xlu0 %563
    %v565 = vsel %vm198, %v192, 0.0
    %566 = vadd.xlane.f32.xlu0 %v565
    %v567 = vpop.xlane.xlu0 %566
    %v568 = vsel %vm198, %v193, 0.0
    %569 = vadd.xlane.f32.xlu0 %v568
    %v570 = vpop.xlane.xlu0 %569
    %v571 = vsel %vm198, %v194, 0.0
    %572 = vadd.xlane.f32.xlu0 %v571
    %v573 = vpop.xlane.xlu0 %572
    %v574 = vsel %vm198, %v195, 0.0
    %575 = vadd.xlane.f32.xlu0 %v574
    %v576 = vpop.xlane.xlu0 %575
    %v577 = vsel %vm198, %v196, 0.0
    %578 = vadd.xlane.f32.xlu0 %v577
    %v579 = vpop.xlane.xlu0 %578
    %v580 = vsel %vm198, %v197, 0.0
    %581 = vadd.xlane.f32.xlu0 %v580
    %v582 = vpop.xlane.xlu0 %581
    %v583 = vrcp.pop 64.0
    %v584 = vmul.f32 %v201, %v583
    %v585 = vmul.f32 %v204, %v583
    %v586 = vmul.f32 %v207, %v583
    %v587 = vmul.f32 %v210, %v583
    %v588 = vmul.f32 %v213, %v583
    %v589 = vmul.f32 %v216, %v583
    %v590 = vmul.f32 %v219, %v583
    %v591 = vmul.f32 %v222, %v583
    %v592 = vmul.f32 %v225, %v583
    %v593 = vmul.f32 %v228, %v583
    %v594 = vmul.f32 %v231, %v583
    %v595 = vmul.f32 %v234, %v583
    %v596 = vmul.f32 %v237, %v583
    %v597 = vmul.f32 %v240, %v583
    %v598 = vmul.f32 %v243, %v583
    %v599 = vmul.f32 %v246, %v583
    %v600 = vmul.f32 %v249, %v583
    %v601 = vmul.f32 %v252, %v583
    %v602 = vmul.f32 %v255, %v583
    %v603 = vmul.f32 %v258, %v583
    %v604 = vmul.f32 %v261, %v583
    %v605 = vmul.f32 %v264, %v583
    %v606 = vmul.f32 %v267, %v583
    %v607 = vmul.f32 %v270, %v583
    %v608 = vmul.f32 %v273, %v583
    %v609 = vmul.f32 %v276, %v583
    %v610 = vmul.f32 %v279, %v583
    %v611 = vmul.f32 %v282, %v583
    %v612 = vmul.f32 %v285, %v583
    %v613 = vmul.f32 %v288, %v583
    %v614 = vmul.f32 %v291, %v583
    %v615 = vmul.f32 %v294, %v583
    %v616 = vmul.f32 %v297, %v583
    %v617 = vmul.f32 %v300, %v583
    %v618 = vmul.f32 %v303, %v583
    %v619 = vmul.f32 %v306, %v583
    %v620 = vmul.f32 %v309, %v583
    %v621 = vmul.f32 %v312, %v583
    %v622 = vmul.f32 %v315, %v583
    %v623 = vmul.f32 %v318, %v583
    %v624 = vmul.f32 %v321, %v583
    %v625 = vmul.f32 %v324, %v583
    %v626 = vmul.f32 %v327, %v583
    %v627 = vmul.f32 %v330, %v583
    %v628 = vmul.f32 %v333, %v583
    %v629 = vmul.f32 %v336, %v583
    %v630 = vmul.f32 %v339, %v583
    %v631 = vmul.f32 %v342, %v583
    %v632 = vmul.f32 %v345, %v583
    %v633 = vmul.f32 %v348, %v583
    %v634 = vmul.f32 %v351, %v583
    %v635 = vmul.f32 %v354, %v583
    %v636 = vmul.f32 %v357, %v583
    %v637 = vmul.f32 %v360, %v583
    %v638 = vmul.f32 %v363, %v583
    %v639 = vmul.f32 %v366, %v583
    %v640 = vmul.f32 %v369, %v583
    %v641 = vmul.f32 %v372, %v583
    %v642 = vmul.f32 %v375, %v583
    %v643 = vmul.f32 %v378, %v583
    %v644 = vmul.f32 %v381, %v583
    %v645 = vmul.f32 %v384, %v583
    %v646 = vmul.f32 %v387, %v583
    %v647 = vmul.f32 %v390, %v583
    %v648 = vmul.f32 %v393, %v583
    %v649 = vmul.f32 %v396, %v583
    %v650 = vmul.f32 %v399, %v583
    %v651 = vmul.f32 %v402, %v583
    %v652 = vmul.f32 %v405, %v583
    %v653 = vmul.f32 %v408, %v583
    %v654 = vmul.f32 %v411, %v583
    %v655 = vmul.f32 %v414, %v583
    %v656 = vmul.f32 %v417, %v583
    %v657 = vmul.f32 %v420, %v583
    %v658 = vmul.f32 %v423, %v583
    %v659 = vmul.f32 %v426, %v583
    %v660 = vmul.f32 %v429, %v583
    %v661 = vmul.f32 %v432, %v583
    %v662 = vmul.f32 %v435, %v583
    %v663 = vmul.f32 %v438, %v583
    %v664 = vmul.f32 %v441, %v583
    %v665 = vmul.f32 %v444, %v583
    %v666 = vmul.f32 %v447, %v583
    %v667 = vmul.f32 %v450, %v583
    %v668 = vmul.f32 %v453, %v583
    %v669 = vmul.f32 %v456, %v583
    %v670 = vmul.f32 %v459, %v583
    %v671 = vmul.f32 %v462, %v583
    %v672 = vmul.f32 %v465, %v583
    %v673 = vmul.f32 %v468, %v583
    %v674 = vmul.f32 %v471, %v583
    %v675 = vmul.f32 %v474, %v583
    %v676 = vmul.f32 %v477, %v583
    %v677 = vmul.f32 %v480, %v583
    %v678 = vmul.f32 %v483, %v583
    %v679 = vmul.f32 %v486, %v583
    %v680 = vmul.f32 %v489, %v583
    %v681 = vmul.f32 %v492, %v583
    %v682 = vmul.f32 %v495, %v583
    %v683 = vmul.f32 %v498, %v583
    %v684 = vmul.f32 %v501, %v583
    %v685 = vmul.f32 %v504, %v583
    %v686 = vmul.f32 %v507, %v583
    %v687 = vmul.f32 %v510, %v583
    %v688 = vmul.f32 %v513, %v583
    %v689 = vmul.f32 %v516, %v583
    %v690 = vmul.f32 %v519, %v583
    %v691 = vmul.f32 %v522, %v583
    %v692 = vmul.f32 %v525, %v583
    %v693 = vmul.f32 %v528, %v583
    %v694 = vmul.f32 %v531, %v583
    %v695 = vmul.f32 %v534, %v583
    %v696 = vmul.f32 %v537, %v583
    %v697 = vmul.f32 %v540, %v583
    %v698 = vmul.f32 %v543, %v583
    %v699 = vmul.f32 %v546, %v583
    %v700 = vmul.f32 %v549, %v583
    %v701 = vmul.f32 %v552, %v583
    %v702 = vmul.f32 %v555, %v583
    %v703 = vmul.f32 %v558, %v583
    %v704 = vmul.f32 %v561, %v583
    %v705 = vmul.f32 %v564, %v583
    %v706 = vmul.f32 %v567, %v583
    %v707 = vmul.f32 %v570, %v583
    %v708 = vmul.f32 %v573, %v583
    %v709 = vmul.f32 %v576, %v583
    %v710 = vmul.f32 %v579, %v583
    %v711 = vmul.f32 %v582, %v583
    %v712 = vpack.c.bf16 %v585, %v584
    %v713 = vpack.c.bf16 %v587, %v586
    %v714 = vpack.c.bf16 %v589, %v588
    %v715 = vpack.c.bf16 %v591, %v590
    %v716 = vpack.c.bf16 %v593, %v592
    %v717 = vpack.c.bf16 %v595, %v594
    %v718 = vpack.c.bf16 %v597, %v596
    %v719 = vpack.c.bf16 %v599, %v598
    %v720 = vpack.c.bf16 %v601, %v600
    %v721 = vpack.c.bf16 %v603, %v602
    %v722 = vpack.c.bf16 %v605, %v604
    %v723 = vpack.c.bf16 %v607, %v606
    %v724 = vpack.c.bf16 %v609, %v608
    %v725 = vpack.c.bf16 %v611, %v610
    %v726 = vpack.c.bf16 %v613, %v612
    %v727 = vpack.c.bf16 %v615, %v614
    %v728 = vpack.c.bf16 %v617, %v616
    %v729 = vpack.c.bf16 %v619, %v618
    %v730 = vpack.c.bf16 %v621, %v620
    %v731 = vpack.c.bf16 %v623, %v622
    %v732 = vpack.c.bf16 %v625, %v624
    %v733 = vpack.c.bf16 %v627, %v626
    %v734 = vpack.c.bf16 %v629, %v628
    %v735 = vpack.c.bf16 %v631, %v630
    %v736 = vpack.c.bf16 %v633, %v632
    %v737 = vpack.c.bf16 %v635, %v634
    %v738 = vpack.c.bf16 %v637, %v636
    %v739 = vpack.c.bf16 %v639, %v638
    %v740 = vpack.c.bf16 %v641, %v640
    %v741 = vpack.c.bf16 %v643, %v642
    %v742 = vpack.c.bf16 %v645, %v644
    %v743 = vpack.c.bf16 %v647, %v646
    %v744 = vpack.c.bf16 %v649, %v648
    %v745 = vpack.c.bf16 %v651, %v650
    %v746 = vpack.c.bf16 %v653, %v652
    %v747 = vpack.c.bf16 %v655, %v654
    %v748 = vpack.c.bf16 %v657, %v656
    %v749 = vpack.c.bf16 %v659, %v658
    %v750 = vpack.c.bf16 %v661, %v660
    %v751 = vpack.c.bf16 %v663, %v662
    %v752 = vpack.c.bf16 %v665, %v664
    %v753 = vpack.c.bf16 %v667, %v666
    %v754 = vpack.c.bf16 %v669, %v668
    %v755 = vpack.c.bf16 %v671, %v670
    %v756 = vpack.c.bf16 %v673, %v672
    %v757 = vpack.c.bf16 %v675, %v674
    %v758 = vpack.c.bf16 %v677, %v676
    %v759 = vpack.c.bf16 %v679, %v678
    %v760 = vpack.c.bf16 %v681, %v680
    %v761 = vpack.c.bf16 %v683, %v682
    %v762 = vpack.c.bf16 %v685, %v684
    %v763 = vpack.c.bf16 %v687, %v686
    %v764 = vpack.c.bf16 %v689, %v688
    %v765 = vpack.c.bf16 %v691, %v690
    %v766 = vpack.c.bf16 %v693, %v692
    %v767 = vpack.c.bf16 %v695, %v694
    %v768 = vpack.c.bf16 %v697, %v696
    %v769 = vpack.c.bf16 %v699, %v698
    %v770 = vpack.c.bf16 %v701, %v700
    %v771 = vpack.c.bf16 %v703, %v702
    %v772 = vpack.c.bf16 %v705, %v704
    %v773 = vpack.c.bf16 %v707, %v706
    %v774 = vpack.c.bf16 %v709, %v708
    %v775 = vpack.c.bf16 %v711, %v710
    %v776 = vld [vmem:[#allocation2] sm:$0xff]
    %v777 = vld [vmem:[#allocation2 + $0x8] sm:$0xff]
    %v778 = vld [vmem:[#allocation2 + $0x10] sm:$0xff]
    %v779 = vld [vmem:[#allocation2 + $0x18] sm:$0xff]
    %v780 = vld [vmem:[#allocation2 + $0x20] sm:$0xff]
    %v781 = vld [vmem:[#allocation2 + $0x28] sm:$0xff]
    %v782 = vld [vmem:[#allocation2 + $0x30] sm:$0xff]
    %v783 = vld [vmem:[#allocation2 + $0x38] sm:$0xff]
    %v784 = vld [vmem:[#allocation2 + $0x40] sm:$0xff]
    %v785 = vld [vmem:[#allocation2 + $0x48] sm:$0xff]
    %v786 = vld [vmem:[#allocation2 + $0x50] sm:$0xff]
    %v787 = vld [vmem:[#allocation2 + $0x58] sm:$0xff]
    %v788 = vld [vmem:[#allocation2 + $0x60] sm:$0xff]
    %v789 = vld [vmem:[#allocation2 + $0x68] sm:$0xff]
    %v790 = vld [vmem:[#allocation2 + $0x70] sm:$0xff]
    %v791 = vld [vmem:[#allocation2 + $0x78] sm:$0xff]
    %v792 = vld [vmem:[#allocation2 + $0x80] sm:$0xff]
    %v793 = vld [vmem:[#allocation2 + $0x88] sm:$0xff]
    %v794 = vld [vmem:[#allocation2 + $0x90] sm:$0xff]
    %v795 = vld [vmem:[#allocation2 + $0x98] sm:$0xff]
    %v796 = vld [vmem:[#allocation2 + $0xa0] sm:$0xff]
    %v797 = vld [vmem:[#allocation2 + $0xa8] sm:$0xff]
    %v798 = vld [vmem:[#allocation2 + $0xb0] sm:$0xff]
    %v799 = vld [vmem:[#allocation2 + $0xb8] sm:$0xff]
    %v800 = vld [vmem:[#allocation2 + $0xc0] sm:$0xff]
    %v801 = vld [vmem:[#allocation2 + $0xc8] sm:$0xff]
    %v802 = vld [vmem:[#allocation2 + $0xd0] sm:$0xff]
    %v803 = vld [vmem:[#allocation2 + $0xd8] sm:$0xff]
    %v804 = vld [vmem:[#allocation2 + $0xe0] sm:$0xff]
    %v805 = vld [vmem:[#allocation2 + $0xe8] sm:$0xff]
    %v806 = vld [vmem:[#allocation2 + $0xf0] sm:$0xff]
    %v807 = vld [vmem:[#allocation2 + $0xf8] sm:$0xff]
    %v808 = vld [vmem:[#allocation2 + $0x100] sm:$0xff]
    %v809 = vld [vmem:[#allocation2 + $0x108] sm:$0xff]
    %v810 = vld [vmem:[#allocation2 + $0x110] sm:$0xff]
    %v811 = vld [vmem:[#allocation2 + $0x118] sm:$0xff]
    %v812 = vld [vmem:[#allocation2 + $0x120] sm:$0xff]
    %v813 = vld [vmem:[#allocation2 + $0x128] sm:$0xff]
    %v814 = vld [vmem:[#allocation2 + $0x130] sm:$0xff]
    %v815 = vld [vmem:[#allocation2 + $0x138] sm:$0xff]
    %v816 = vld [vmem:[#allocation2 + $0x140] sm:$0xff]
    %v817 = vld [vmem:[#allocation2 + $0x148] sm:$0xff]
    %v818 = vld [vmem:[#allocation2 + $0x150] sm:$0xff]
    %v819 = vld [vmem:[#allocation2 + $0x158] sm:$0xff]
    %v820 = vld [vmem:[#allocation2 + $0x160] sm:$0xff]
    %v821 = vld [vmem:[#allocation2 + $0x168] sm:$0xff]
    %v822 = vld [vmem:[#allocation2 + $0x170] sm:$0xff]
    %v823 = vld [vmem:[#allocation2 + $0x178] sm:$0xff]
    %v824 = vld [vmem:[#allocation2 + $0x180] sm:$0xff]
    %v825 = vld [vmem:[#allocation2 + $0x188] sm:$0xff]
    %v826 = vld [vmem:[#allocation2 + $0x190] sm:$0xff]
    %v827 = vld [vmem:[#allocation2 + $0x198] sm:$0xff]
    %v828 = vld [vmem:[#allocation2 + $0x1a0] sm:$0xff]
    %v829 = vld [vmem:[#allocation2 + $0x1a8] sm:$0xff]
    %v830 = vld [vmem:[#allocation2 + $0x1b0] sm:$0xff]
    %v831 = vld [vmem:[#allocation2 + $0x1b8] sm:$0xff]
    %v832 = vld [vmem:[#allocation2 + $0x1c0] sm:$0xff]
    %v833 = vld [vmem:[#allocation2 + $0x1c8] sm:$0xff]
    %v834 = vld [vmem:[#allocation2 + $0x1d0] sm:$0xff]
    %v835 = vld [vmem:[#allocation2 + $0x1d8] sm:$0xff]
    %v836 = vld [vmem:[#allocation2 + $0x1e0] sm:$0xff]
    %v837 = vld [vmem:[#allocation2 + $0x1e8] sm:$0xff]
    %v838 = vld [vmem:[#allocation2 + $0x1f0] sm:$0xff]
    %v839 = vld [vmem:[#allocation2 + $0x1f8] sm:$0xff]
    %v840 = vld [vmem:[#allocation2 + $0x200] sm:$0xff]
    %v841 = vld [vmem:[#allocation2 + $0x208] sm:$0xff]
    %v842 = vld [vmem:[#allocation2 + $0x210] sm:$0xff]
    %v843 = vld [vmem:[#allocation2 + $0x218] sm:$0xff]
    %v844 = vld [vmem:[#allocation2 + $0x220] sm:$0xff]
    %v845 = vld [vmem:[#allocation2 + $0x228] sm:$0xff]
    %v846 = vld [vmem:[#allocation2 + $0x230] sm:$0xff]
    %v847 = vld [vmem:[#allocation2 + $0x238] sm:$0xff]
    %v848 = vld [vmem:[#allocation2 + $0x240] sm:$0xff]
    %v849 = vld [vmem:[#allocation2 + $0x248] sm:$0xff]
    %v850 = vld [vmem:[#allocation2 + $0x250] sm:$0xff]
    %v851 = vld [vmem:[#allocation2 + $0x258] sm:$0xff]
    %v852 = vld [vmem:[#allocation2 + $0x260] sm:$0xff]
    %v853 = vld [vmem:[#allocation2 + $0x268] sm:$0xff]
    %v854 = vld [vmem:[#allocation2 + $0x270] sm:$0xff]
    %v855 = vld [vmem:[#allocation2 + $0x278] sm:$0xff]
    %v856 = vld [vmem:[#allocation2 + $0x280] sm:$0xff]
    %v857 = vld [vmem:[#allocation2 + $0x288] sm:$0xff]
    %v858 = vld [vmem:[#allocation2 + $0x290] sm:$0xff]
    %v859 = vld [vmem:[#allocation2 + $0x298] sm:$0xff]
    %v860 = vld [vmem:[#allocation2 + $0x2a0] sm:$0xff]
    %v861 = vld [vmem:[#allocation2 + $0x2a8] sm:$0xff]
    %v862 = vld [vmem:[#allocation2 + $0x2b0] sm:$0xff]
    %v863 = vld [vmem:[#allocation2 + $0x2b8] sm:$0xff]
    %v864 = vld [vmem:[#allocation2 + $0x2c0] sm:$0xff]
    %v865 = vld [vmem:[#allocation2 + $0x2c8] sm:$0xff]
    %v866 = vld [vmem:[#allocation2 + $0x2d0] sm:$0xff]
    %v867 = vld [vmem:[#allocation2 + $0x2d8] sm:$0xff]
    %v868 = vld [vmem:[#allocation2 + $0x2e0] sm:$0xff]
    %v869 = vld [vmem:[#allocation2 + $0x2e8] sm:$0xff]
    %v870 = vld [vmem:[#allocation2 + $0x2f0] sm:$0xff]
    %v871 = vld [vmem:[#allocation2 + $0x2f8] sm:$0xff]
    %v872 = vld [vmem:[#allocation2 + $0x300] sm:$0xff]
    %v873 = vld [vmem:[#allocation2 + $0x308] sm:$0xff]
    %v874 = vld [vmem:[#allocation2 + $0x310] sm:$0xff]
    %v875 = vld [vmem:[#allocation2 + $0x318] sm:$0xff]
    %v876 = vld [vmem:[#allocation2 + $0x320] sm:$0xff]
    %v877 = vld [vmem:[#allocation2 + $0x328] sm:$0xff]
    %v878 = vld [vmem:[#allocation2 + $0x330] sm:$0xff]
    %v879 = vld [vmem:[#allocation2 + $0x338] sm:$0xff]
    %v880 = vld [vmem:[#allocation2 + $0x340] sm:$0xff]
    %v881 = vld [vmem:[#allocation2 + $0x348] sm:$0xff]
    %v882 = vld [vmem:[#allocation2 + $0x350] sm:$0xff]
    %v883 = vld [vmem:[#allocation2 + $0x358] sm:$0xff]
    %v884 = vld [vmem:[#allocation2 + $0x360] sm:$0xff]
    %v885 = vld [vmem:[#allocation2 + $0x368] sm:$0xff]
    %v886 = vld [vmem:[#allocation2 + $0x370] sm:$0xff]
    %v887 = vld [vmem:[#allocation2 + $0x378] sm:$0xff]
    %v888 = vld [vmem:[#allocation2 + $0x380] sm:$0xff]
    %v889 = vld [vmem:[#allocation2 + $0x388] sm:$0xff]
    %v890 = vld [vmem:[#allocation2 + $0x390] sm:$0xff]
    %v891 = vld [vmem:[#allocation2 + $0x398] sm:$0xff]
    %v892 = vld [vmem:[#allocation2 + $0x3a0] sm:$0xff]
    %v893 = vld [vmem:[#allocation2 + $0x3a8] sm:$0xff]
    %v894 = vld [vmem:[#allocation2 + $0x3b0] sm:$0xff]
    %v895 = vld [vmem:[#allocation2 + $0x3b8] sm:$0xff]
    %v896 = vld [vmem:[#allocation2 + $0x3c0] sm:$0xff]
    %v897 = vld [vmem:[#allocation2 + $0x3c8] sm:$0xff]
    %v898 = vld [vmem:[#allocation2 + $0x3d0] sm:$0xff]
    %v899 = vld [vmem:[#allocation2 + $0x3d8] sm:$0xff]
    %v900 = vld [vmem:[#allocation2 + $0x3e0] sm:$0xff]
    %v901 = vld [vmem:[#allocation2 + $0x3e8] sm:$0xff]
    %v902 = vld [vmem:[#allocation2 + $0x3f0] sm:$0xff]
    %v903 = vld [vmem:[#allocation2 + $0x3f8] sm:$0xff]
    %v904 = vld [vmem:[#allocation2 + $0x400] sm:$0xff]
    %v905 = vld [vmem:[#allocation2 + $0x408] sm:$0xff]
    %v906 = vld [vmem:[#allocation2 + $0x410] sm:$0xff]
    %v907 = vld [vmem:[#allocation2 + $0x418] sm:$0xff]
    %v908 = vld [vmem:[#allocation2 + $0x420] sm:$0xff]
    %v909 = vld [vmem:[#allocation2 + $0x428] sm:$0xff]
    %v910 = vld [vmem:[#allocation2 + $0x430] sm:$0xff]
    %v911 = vld [vmem:[#allocation2 + $0x438] sm:$0xff]
    %v912 = vld [vmem:[#allocation2 + $0x440] sm:$0xff]
    %v913 = vld [vmem:[#allocation2 + $0x448] sm:$0xff]
    %v914 = vld [vmem:[#allocation2 + $0x450] sm:$0xff]
    %v915 = vld [vmem:[#allocation2 + $0x458] sm:$0xff]
    %v916 = vld [vmem:[#allocation2 + $0x460] sm:$0xff]
    %v917 = vld [vmem:[#allocation2 + $0x468] sm:$0xff]
    %v918 = vld [vmem:[#allocation2 + $0x470] sm:$0xff]
    %v919 = vld [vmem:[#allocation2 + $0x478] sm:$0xff]
    %v920 = vld [vmem:[#allocation2 + $0x480] sm:$0xff]
    %v921 = vld [vmem:[#allocation2 + $0x488] sm:$0xff]
    %v922 = vld [vmem:[#allocation2 + $0x490] sm:$0xff]
    %v923 = vld [vmem:[#allocation2 + $0x498] sm:$0xff]
    %v924 = vld [vmem:[#allocation2 + $0x4a0] sm:$0xff]
    %v925 = vld [vmem:[#allocation2 + $0x4a8] sm:$0xff]
    %v926 = vld [vmem:[#allocation2 + $0x4b0] sm:$0xff]
    %v927 = vld [vmem:[#allocation2 + $0x4b8] sm:$0xff]
    %v928 = vld [vmem:[#allocation2 + $0x4c0] sm:$0xff]
    %v929 = vld [vmem:[#allocation2 + $0x4c8] sm:$0xff]
    %v930 = vld [vmem:[#allocation2 + $0x4d0] sm:$0xff]
    %v931 = vld [vmem:[#allocation2 + $0x4d8] sm:$0xff]
    %v932 = vld [vmem:[#allocation2 + $0x4e0] sm:$0xff]
    %v933 = vld [vmem:[#allocation2 + $0x4e8] sm:$0xff]
    %v934 = vld [vmem:[#allocation2 + $0x4f0] sm:$0xff]
    %v935 = vld [vmem:[#allocation2 + $0x4f8] sm:$0xff]
    %v936 = vld [vmem:[#allocation2 + $0x500] sm:$0xff]
    %v937 = vld [vmem:[#allocation2 + $0x508] sm:$0xff]
    %v938 = vld [vmem:[#allocation2 + $0x510] sm:$0xff]
    %v939 = vld [vmem:[#allocation2 + $0x518] sm:$0xff]
    %v940 = vld [vmem:[#allocation2 + $0x520] sm:$0xff]
    %v941 = vld [vmem:[#allocation2 + $0x528] sm:$0xff]
    %v942 = vld [vmem:[#allocation2 + $0x530] sm:$0xff]
    %v943 = vld [vmem:[#allocation2 + $0x538] sm:$0xff]
    %v944 = vld [vmem:[#allocation2 + $0x540] sm:$0xff]
    %v945 = vld [vmem:[#allocation2 + $0x548] sm:$0xff]
    %v946 = vld [vmem:[#allocation2 + $0x550] sm:$0xff]
    %v947 = vld [vmem:[#allocation2 + $0x558] sm:$0xff]
    %v948 = vld [vmem:[#allocation2 + $0x560] sm:$0xff]
    %v949 = vld [vmem:[#allocation2 + $0x568] sm:$0xff]
    %v950 = vld [vmem:[#allocation2 + $0x570] sm:$0xff]
    %v951 = vld [vmem:[#allocation2 + $0x578] sm:$0xff]
    %v952 = vld [vmem:[#allocation2 + $0x580] sm:$0xff]
    %v953 = vld [vmem:[#allocation2 + $0x588] sm:$0xff]
    %v954 = vld [vmem:[#allocation2 + $0x590] sm:$0xff]
    %v955 = vld [vmem:[#allocation2 + $0x598] sm:$0xff]
    %v956 = vld [vmem:[#allocation2 + $0x5a0] sm:$0xff]
    %v957 = vld [vmem:[#allocation2 + $0x5a8] sm:$0xff]
    %v958 = vld [vmem:[#allocation2 + $0x5b0] sm:$0xff]
    %v959 = vld [vmem:[#allocation2 + $0x5b8] sm:$0xff]
    %v960 = vld [vmem:[#allocation2 + $0x5c0] sm:$0xff]
    %v961 = vld [vmem:[#allocation2 + $0x5c8] sm:$0xff]
    %v962 = vld [vmem:[#allocation2 + $0x5d0] sm:$0xff]
    %v963 = vld [vmem:[#allocation2 + $0x5d8] sm:$0xff]
    %v964 = vld [vmem:[#allocation2 + $0x5e0] sm:$0xff]
    %v965 = vld [vmem:[#allocation2 + $0x5e8] sm:$0xff]
    %v966 = vld [vmem:[#allocation2 + $0x5f0] sm:$0xff]
    %v967 = vld [vmem:[#allocation2 + $0x5f8] sm:$0xff]
    %v968 = vld [vmem:[#allocation2 + $0x600] sm:$0xff]
    %v969 = vld [vmem:[#allocation2 + $0x608] sm:$0xff]
    %v970 = vld [vmem:[#allocation2 + $0x610] sm:$0xff]
    %v971 = vld [vmem:[#allocation2 + $0x618] sm:$0xff]
    %v972 = vld [vmem:[#allocation2 + $0x620] sm:$0xff]
    %v973 = vld [vmem:[#allocation2 + $0x628] sm:$0xff]
    %v974 = vld [vmem:[#allocation2 + $0x630] sm:$0xff]
    %v975 = vld [vmem:[#allocation2 + $0x638] sm:$0xff]
    %v976 = vld [vmem:[#allocation2 + $0x640] sm:$0xff]
    %v977 = vld [vmem:[#allocation2 + $0x648] sm:$0xff]
    %v978 = vld [vmem:[#allocation2 + $0x650] sm:$0xff]
    %v979 = vld [vmem:[#allocation2 + $0x658] sm:$0xff]
    %v980 = vld [vmem:[#allocation2 + $0x660] sm:$0xff]
    %v981 = vld [vmem:[#allocation2 + $0x668] sm:$0xff]
    %v982 = vld [vmem:[#allocation2 + $0x670] sm:$0xff]
    %v983 = vld [vmem:[#allocation2 + $0x678] sm:$0xff]
    %v984 = vld [vmem:[#allocation2 + $0x680] sm:$0xff]
    %v985 = vld [vmem:[#allocation2 + $0x688] sm:$0xff]
    %v986 = vld [vmem:[#allocation2 + $0x690] sm:$0xff]
    %v987 = vld [vmem:[#allocation2 + $0x698] sm:$0xff]
    %v988 = vld [vmem:[#allocation2 + $0x6a0] sm:$0xff]
    %v989 = vld [vmem:[#allocation2 + $0x6a8] sm:$0xff]
    %v990 = vld [vmem:[#allocation2 + $0x6b0] sm:$0xff]
    %v991 = vld [vmem:[#allocation2 + $0x6b8] sm:$0xff]
    %v992 = vld [vmem:[#allocation2 + $0x6c0] sm:$0xff]
    %v993 = vld [vmem:[#allocation2 + $0x6c8] sm:$0xff]
    %v994 = vld [vmem:[#allocation2 + $0x6d0] sm:$0xff]
    %v995 = vld [vmem:[#allocation2 + $0x6d8] sm:$0xff]
    %v996 = vld [vmem:[#allocation2 + $0x6e0] sm:$0xff]
    %v997 = vld [vmem:[#allocation2 + $0x6e8] sm:$0xff]
    %v998 = vld [vmem:[#allocation2 + $0x6f0] sm:$0xff]
    %v999 = vld [vmem:[#allocation2 + $0x6f8] sm:$0xff]
    %v1000 = vld [vmem:[#allocation2 + $0x700] sm:$0xff]
    %v1001 = vld [vmem:[#allocation2 + $0x708] sm:$0xff]
    %v1002 = vld [vmem:[#allocation2 + $0x710] sm:$0xff]
    %v1003 = vld [vmem:[#allocation2 + $0x718] sm:$0xff]
    %v1004 = vld [vmem:[#allocation2 + $0x720] sm:$0xff]
    %v1005 = vld [vmem:[#allocation2 + $0x728] sm:$0xff]
    %v1006 = vld [vmem:[#allocation2 + $0x730] sm:$0xff]
    %v1007 = vld [vmem:[#allocation2 + $0x738] sm:$0xff]
    %v1008 = vld [vmem:[#allocation2 + $0x740] sm:$0xff]
    %v1009 = vld [vmem:[#allocation2 + $0x748] sm:$0xff]
    %v1010 = vld [vmem:[#allocation2 + $0x750] sm:$0xff]
    %v1011 = vld [vmem:[#allocation2 + $0x758] sm:$0xff]
    %v1012 = vld [vmem:[#allocation2 + $0x760] sm:$0xff]
    %v1013 = vld [vmem:[#allocation2 + $0x768] sm:$0xff]
    %v1014 = vld [vmem:[#allocation2 + $0x770] sm:$0xff]
    %v1015 = vld [vmem:[#allocation2 + $0x778] sm:$0xff]
    %v1016 = vld [vmem:[#allocation2 + $0x780] sm:$0xff]
    %v1017 = vld [vmem:[#allocation2 + $0x788] sm:$0xff]
    %v1018 = vld [vmem:[#allocation2 + $0x790] sm:$0xff]
    %v1019 = vld [vmem:[#allocation2 + $0x798] sm:$0xff]
    %v1020 = vld [vmem:[#allocation2 + $0x7a0] sm:$0xff]
    %v1021 = vld [vmem:[#allocation2 + $0x7a8] sm:$0xff]
    %v1022 = vld [vmem:[#allocation2 + $0x7b0] sm:$0xff]
    %v1023 = vld [vmem:[#allocation2 + $0x7b8] sm:$0xff]
    %v1024 = vld [vmem:[#allocation2 + $0x7c0] sm:$0xff]
    %v1025 = vld [vmem:[#allocation2 + $0x7c8] sm:$0xff]
    %v1026 = vld [vmem:[#allocation2 + $0x7d0] sm:$0xff]
    %v1027 = vld [vmem:[#allocation2 + $0x7d8] sm:$0xff]
    %v1028 = vld [vmem:[#allocation2 + $0x7e0] sm:$0xff]
    %v1029 = vld [vmem:[#allocation2 + $0x7e8] sm:$0xff]
    %v1030 = vld [vmem:[#allocation2 + $0x7f0] sm:$0xff]
    %v1031 = vld [vmem:[#allocation2 + $0x7f8] sm:$0xff]
    %v1032 = vld [vmem:[#allocation2 + $0x800] sm:$0xff]
    %v1033 = vld [vmem:[#allocation2 + $0x808] sm:$0xff]
    %v1034 = vld [vmem:[#allocation2 + $0x810] sm:$0xff]
    %v1035 = vld [vmem:[#allocation2 + $0x818] sm:$0xff]
    %v1036 = vld [vmem:[#allocation2 + $0x820] sm:$0xff]
    %v1037 = vld [vmem:[#allocation2 + $0x828] sm:$0xff]
    %v1038 = vld [vmem:[#allocation2 + $0x830] sm:$0xff]
    %v1039 = vld [vmem:[#allocation2 + $0x838] sm:$0xff]
    %v1040 = vld [vmem:[#allocation2 + $0x840] sm:$0xff]
    %v1041 = vld [vmem:[#allocation2 + $0x848] sm:$0xff]
    %v1042 = vld [vmem:[#allocation2 + $0x850] sm:$0xff]
    %v1043 = vld [vmem:[#allocation2 + $0x858] sm:$0xff]
    %v1044 = vld [vmem:[#allocation2 + $0x860] sm:$0xff]
    %v1045 = vld [vmem:[#allocation2 + $0x868] sm:$0xff]
    %v1046 = vld [vmem:[#allocation2 + $0x870] sm:$0xff]
    %v1047 = vld [vmem:[#allocation2 + $0x878] sm:$0xff]
    %v1048 = vld [vmem:[#allocation2 + $0x880] sm:$0xff]
    %v1049 = vld [vmem:[#allocation2 + $0x888] sm:$0xff]
    %v1050 = vld [vmem:[#allocation2 + $0x890] sm:$0xff]
    %v1051 = vld [vmem:[#allocation2 + $0x898] sm:$0xff]
    %v1052 = vld [vmem:[#allocation2 + $0x8a0] sm:$0xff]
    %v1053 = vld [vmem:[#allocation2 + $0x8a8] sm:$0xff]
    %v1054 = vld [vmem:[#allocation2 + $0x8b0] sm:$0xff]
    %v1055 = vld [vmem:[#allocation2 + $0x8b8] sm:$0xff]
    %v1056 = vld [vmem:[#allocation2 + $0x8c0] sm:$0xff]
    %v1057 = vld [vmem:[#allocation2 + $0x8c8] sm:$0xff]
    %v1058 = vld [vmem:[#allocation2 + $0x8d0] sm:$0xff]
    %v1059 = vld [vmem:[#allocation2 + $0x8d8] sm:$0xff]
    %v1060 = vld [vmem:[#allocation2 + $0x8e0] sm:$0xff]
    %v1061 = vld [vmem:[#allocation2 + $0x8e8] sm:$0xff]
    %v1062 = vld [vmem:[#allocation2 + $0x8f0] sm:$0xff]
    %v1063 = vld [vmem:[#allocation2 + $0x8f8] sm:$0xff]
    %v1064 = vld [vmem:[#allocation2 + $0x900] sm:$0xff]
    %v1065 = vld [vmem:[#allocation2 + $0x908] sm:$0xff]
    %v1066 = vld [vmem:[#allocation2 + $0x910] sm:$0xff]
    %v1067 = vld [vmem:[#allocation2 + $0x918] sm:$0xff]
    %v1068 = vld [vmem:[#allocation2 + $0x920] sm:$0xff]
    %v1069 = vld [vmem:[#allocation2 + $0x928] sm:$0xff]
    %v1070 = vld [vmem:[#allocation2 + $0x930] sm:$0xff]
    %v1071 = vld [vmem:[#allocation2 + $0x938] sm:$0xff]
    %v1072 = vld [vmem:[#allocation2 + $0x940] sm:$0xff]
    %v1073 = vld [vmem:[#allocation2 + $0x948] sm:$0xff]
    %v1074 = vld [vmem:[#allocation2 + $0x950] sm:$0xff]
    %v1075 = vld [vmem:[#allocation2 + $0x958] sm:$0xff]
    %v1076 = vld [vmem:[#allocation2 + $0x960] sm:$0xff]
    %v1077 = vld [vmem:[#allocation2 + $0x968] sm:$0xff]
    %v1078 = vld [vmem:[#allocation2 + $0x970] sm:$0xff]
    %v1079 = vld [vmem:[#allocation2 + $0x978] sm:$0xff]
    %v1080 = vld [vmem:[#allocation2 + $0x980] sm:$0xff]
    %v1081 = vld [vmem:[#allocation2 + $0x988] sm:$0xff]
    %v1082 = vld [vmem:[#allocation2 + $0x990] sm:$0xff]
    %v1083 = vld [vmem:[#allocation2 + $0x998] sm:$0xff]
    %v1084 = vld [vmem:[#allocation2 + $0x9a0] sm:$0xff]
    %v1085 = vld [vmem:[#allocation2 + $0x9a8] sm:$0xff]
    %v1086 = vld [vmem:[#allocation2 + $0x9b0] sm:$0xff]
    %v1087 = vld [vmem:[#allocation2 + $0x9b8] sm:$0xff]
    %v1088 = vld [vmem:[#allocation2 + $0x9c0] sm:$0xff]
    %v1089 = vld [vmem:[#allocation2 + $0x9c8] sm:$0xff]
    %v1090 = vld [vmem:[#allocation2 + $0x9d0] sm:$0xff]
    %v1091 = vld [vmem:[#allocation2 + $0x9d8] sm:$0xff]
    %v1092 = vld [vmem:[#allocation2 + $0x9e0] sm:$0xff]
    %v1093 = vld [vmem:[#allocation2 + $0x9e8] sm:$0xff]
    %v1094 = vld [vmem:[#allocation2 + $0x9f0] sm:$0xff]
    %v1095 = vld [vmem:[#allocation2 + $0x9f8] sm:$0xff]
    %v1096 = vld [vmem:[#allocation2 + $0xa00] sm:$0xff]
    %v1097 = vld [vmem:[#allocation2 + $0xa08] sm:$0xff]
    %v1098 = vld [vmem:[#allocation2 + $0xa10] sm:$0xff]
    %v1099 = vld [vmem:[#allocation2 + $0xa18] sm:$0xff]
    %v1100 = vld [vmem:[#allocation2 + $0xa20] sm:$0xff]
    %v1101 = vld [vmem:[#allocation2 + $0xa28] sm:$0xff]
    %v1102 = vld [vmem:[#allocation2 + $0xa30] sm:$0xff]
    %v1103 = vld [vmem:[#allocation2 + $0xa38] sm:$0xff]
    %v1104 = vld [vmem:[#allocation2 + $0xa40] sm:$0xff]
    %v1105 = vld [vmem:[#allocation2 + $0xa48] sm:$0xff]
    %v1106 = vld [vmem:[#allocation2 + $0xa50] sm:$0xff]
    %v1107 = vld [vmem:[#allocation2 + $0xa58] sm:$0xff]
    %v1108 = vld [vmem:[#allocation2 + $0xa60] sm:$0xff]
    %v1109 = vld [vmem:[#allocation2 + $0xa68] sm:$0xff]
    %v1110 = vld [vmem:[#allocation2 + $0xa70] sm:$0xff]
    %v1111 = vld [vmem:[#allocation2 + $0xa78] sm:$0xff]
    %v1112 = vld [vmem:[#allocation2 + $0xa80] sm:$0xff]
    %v1113 = vld [vmem:[#allocation2 + $0xa88] sm:$0xff]
    %v1114 = vld [vmem:[#allocation2 + $0xa90] sm:$0xff]
    %v1115 = vld [vmem:[#allocation2 + $0xa98] sm:$0xff]
    %v1116 = vld [vmem:[#allocation2 + $0xaa0] sm:$0xff]
    %v1117 = vld [vmem:[#allocation2 + $0xaa8] sm:$0xff]
    %v1118 = vld [vmem:[#allocation2 + $0xab0] sm:$0xff]
    %v1119 = vld [vmem:[#allocation2 + $0xab8] sm:$0xff]
    %v1120 = vld [vmem:[#allocation2 + $0xac0] sm:$0xff]
    %v1121 = vld [vmem:[#allocation2 + $0xac8] sm:$0xff]
    %v1122 = vld [vmem:[#allocation2 + $0xad0] sm:$0xff]
    %v1123 = vld [vmem:[#allocation2 + $0xad8] sm:$0xff]
    %v1124 = vld [vmem:[#allocation2 + $0xae0] sm:$0xff]
    %v1125 = vld [vmem:[#allocation2 + $0xae8] sm:$0xff]
    %v1126 = vld [vmem:[#allocation2 + $0xaf0] sm:$0xff]
    %v1127 = vld [vmem:[#allocation2 + $0xaf8] sm:$0xff]
    %v1128 = vld [vmem:[#allocation2 + $0xb00] sm:$0xff]
    %v1129 = vld [vmem:[#allocation2 + $0xb08] sm:$0xff]
    %v1130 = vld [vmem:[#allocation2 + $0xb10] sm:$0xff]
    %v1131 = vld [vmem:[#allocation2 + $0xb18] sm:$0xff]
    %v1132 = vld [vmem:[#allocation2 + $0xb20] sm:$0xff]
    %v1133 = vld [vmem:[#allocation2 + $0xb28] sm:$0xff]
    %v1134 = vld [vmem:[#allocation2 + $0xb30] sm:$0xff]
    %v1135 = vld [vmem:[#allocation2 + $0xb38] sm:$0xff]
    %v1136 = vld [vmem:[#allocation2 + $0xb40] sm:$0xff]
    %v1137 = vld [vmem:[#allocation2 + $0xb48] sm:$0xff]
    %v1138 = vld [vmem:[#allocation2 + $0xb50] sm:$0xff]
    %v1139 = vld [vmem:[#allocation2 + $0xb58] sm:$0xff]
    %v1140 = vld [vmem:[#allocation2 + $0xb60] sm:$0xff]
    %v1141 = vld [vmem:[#allocation2 + $0xb68] sm:$0xff]
    %v1142 = vld [vmem:[#allocation2 + $0xb70] sm:$0xff]
    %v1143 = vld [vmem:[#allocation2 + $0xb78] sm:$0xff]
    %v1144 = vld [vmem:[#allocation2 + $0xb80] sm:$0xff]
    %v1145 = vld [vmem:[#allocation2 + $0xb88] sm:$0xff]
    %v1146 = vld [vmem:[#allocation2 + $0xb90] sm:$0xff]
    %v1147 = vld [vmem:[#allocation2 + $0xb98] sm:$0xff]
    %v1148 = vld [vmem:[#allocation2 + $0xba0] sm:$0xff]
    %v1149 = vld [vmem:[#allocation2 + $0xba8] sm:$0xff]
    %v1150 = vld [vmem:[#allocation2 + $0xbb0] sm:$0xff]
    %v1151 = vld [vmem:[#allocation2 + $0xbb8] sm:$0xff]
    %v1152 = vld [vmem:[#allocation2 + $0xbc0] sm:$0xff]
    %v1153 = vld [vmem:[#allocation2 + $0xbc8] sm:$0xff]
    %v1154 = vld [vmem:[#allocation2 + $0xbd0] sm:$0xff]
    %v1155 = vld [vmem:[#allocation2 + $0xbd8] sm:$0xff]
    %v1156 = vld [vmem:[#allocation2 + $0xbe0] sm:$0xff]
    %v1157 = vld [vmem:[#allocation2 + $0xbe8] sm:$0xff]
    %v1158 = vld [vmem:[#allocation2 + $0xbf0] sm:$0xff]
    %v1159 = vld [vmem:[#allocation2 + $0xbf8] sm:$0xff]
    %v1160 = vld [vmem:[#allocation2 + $0xc00] sm:$0xff]
    %v1161 = vld [vmem:[#allocation2 + $0xc08] sm:$0xff]
    %v1162 = vld [vmem:[#allocation2 + $0xc10] sm:$0xff]
    %v1163 = vld [vmem:[#allocation2 + $0xc18] sm:$0xff]
    %v1164 = vld [vmem:[#allocation2 + $0xc20] sm:$0xff]
    %v1165 = vld [vmem:[#allocation2 + $0xc28] sm:$0xff]
    %v1166 = vld [vmem:[#allocation2 + $0xc30] sm:$0xff]
    %v1167 = vld [vmem:[#allocation2 + $0xc38] sm:$0xff]
    %v1168 = vld [vmem:[#allocation2 + $0xc40] sm:$0xff]
    %v1169 = vld [vmem:[#allocation2 + $0xc48] sm:$0xff]
    %v1170 = vld [vmem:[#allocation2 + $0xc50] sm:$0xff]
    %v1171 = vld [vmem:[#allocation2 + $0xc58] sm:$0xff]
    %v1172 = vld [vmem:[#allocation2 + $0xc60] sm:$0xff]
    %v1173 = vld [vmem:[#allocation2 + $0xc68] sm:$0xff]
    %v1174 = vld [vmem:[#allocation2 + $0xc70] sm:$0xff]
    %v1175 = vld [vmem:[#allocation2 + $0xc78] sm:$0xff]
    %v1176 = vld [vmem:[#allocation2 + $0xc80] sm:$0xff]
    %v1177 = vld [vmem:[#allocation2 + $0xc88] sm:$0xff]
    %v1178 = vld [vmem:[#allocation2 + $0xc90] sm:$0xff]
    %v1179 = vld [vmem:[#allocation2 + $0xc98] sm:$0xff]
    %v1180 = vld [vmem:[#allocation2 + $0xca0] sm:$0xff]
    %v1181 = vld [vmem:[#allocation2 + $0xca8] sm:$0xff]
    %v1182 = vld [vmem:[#allocation2 + $0xcb0] sm:$0xff]
    %v1183 = vld [vmem:[#allocation2 + $0xcb8] sm:$0xff]
    %v1184 = vld [vmem:[#allocation2 + $0xcc0] sm:$0xff]
    %v1185 = vld [vmem:[#allocation2 + $0xcc8] sm:$0xff]
    %v1186 = vld [vmem:[#allocation2 + $0xcd0] sm:$0xff]
    %v1187 = vld [vmem:[#allocation2 + $0xcd8] sm:$0xff]
    %v1188 = vld [vmem:[#allocation2 + $0xce0] sm:$0xff]
    %v1189 = vld [vmem:[#allocation2 + $0xce8] sm:$0xff]
    %v1190 = vld [vmem:[#allocation2 + $0xcf0] sm:$0xff]
    %v1191 = vld [vmem:[#allocation2 + $0xcf8] sm:$0xff]
    %v1192 = vld [vmem:[#allocation2 + $0xd00] sm:$0xff]
    %v1193 = vld [vmem:[#allocation2 + $0xd08] sm:$0xff]
    %v1194 = vld [vmem:[#allocation2 + $0xd10] sm:$0xff]
    %v1195 = vld [vmem:[#allocation2 + $0xd18] sm:$0xff]
    %v1196 = vld [vmem:[#allocation2 + $0xd20] sm:$0xff]
    %v1197 = vld [vmem:[#allocation2 + $0xd28] sm:$0xff]
    %v1198 = vld [vmem:[#allocation2 + $0xd30] sm:$0xff]
    %v1199 = vld [vmem:[#allocation2 + $0xd38] sm:$0xff]
    %v1200 = vld [vmem:[#allocation2 + $0xd40] sm:$0xff]
    %v1201 = vld [vmem:[#allocation2 + $0xd48] sm:$0xff]
    %v1202 = vld [vmem:[#allocation2 + $0xd50] sm:$0xff]
    %v1203 = vld [vmem:[#allocation2 + $0xd58] sm:$0xff]
    %v1204 = vld [vmem:[#allocation2 + $0xd60] sm:$0xff]
    %v1205 = vld [vmem:[#allocation2 + $0xd68] sm:$0xff]
    %v1206 = vld [vmem:[#allocation2 + $0xd70] sm:$0xff]
    %v1207 = vld [vmem:[#allocation2 + $0xd78] sm:$0xff]
    %v1208 = vld [vmem:[#allocation2 + $0xd80] sm:$0xff]
    %v1209 = vld [vmem:[#allocation2 + $0xd88] sm:$0xff]
    %v1210 = vld [vmem:[#allocation2 + $0xd90] sm:$0xff]
    %v1211 = vld [vmem:[#allocation2 + $0xd98] sm:$0xff]
    %v1212 = vld [vmem:[#allocation2 + $0xda0] sm:$0xff]
    %v1213 = vld [vmem:[#allocation2 + $0xda8] sm:$0xff]
    %v1214 = vld [vmem:[#allocation2 + $0xdb0] sm:$0xff]
    %v1215 = vld [vmem:[#allocation2 + $0xdb8] sm:$0xff]
    %v1216 = vld [vmem:[#allocation2 + $0xdc0] sm:$0xff]
    %v1217 = vld [vmem:[#allocation2 + $0xdc8] sm:$0xff]
    %v1218 = vld [vmem:[#allocation2 + $0xdd0] sm:$0xff]
    %v1219 = vld [vmem:[#allocation2 + $0xdd8] sm:$0xff]
    %v1220 = vld [vmem:[#allocation2 + $0xde0] sm:$0xff]
    %v1221 = vld [vmem:[#allocation2 + $0xde8] sm:$0xff]
    %v1222 = vld [vmem:[#allocation2 + $0xdf0] sm:$0xff]
    %v1223 = vld [vmem:[#allocation2 + $0xdf8] sm:$0xff]
    %v1224 = vld [vmem:[#allocation2 + $0xe00] sm:$0xff]
    %v1225 = vld [vmem:[#allocation2 + $0xe08] sm:$0xff]
    %v1226 = vld [vmem:[#allocation2 + $0xe10] sm:$0xff]
    %v1227 = vld [vmem:[#allocation2 + $0xe18] sm:$0xff]
    %v1228 = vld [vmem:[#allocation2 + $0xe20] sm:$0xff]
    %v1229 = vld [vmem:[#allocation2 + $0xe28] sm:$0xff]
    %v1230 = vld [vmem:[#allocation2 + $0xe30] sm:$0xff]
    %v1231 = vld [vmem:[#allocation2 + $0xe38] sm:$0xff]
    %v1232 = vld [vmem:[#allocation2 + $0xe40] sm:$0xff]
    %v1233 = vld [vmem:[#allocation2 + $0xe48] sm:$0xff]
    %v1234 = vld [vmem:[#allocation2 + $0xe50] sm:$0xff]
    %v1235 = vld [vmem:[#allocation2 + $0xe58] sm:$0xff]
    %v1236 = vld [vmem:[#allocation2 + $0xe60] sm:$0xff]
    %v1237 = vld [vmem:[#allocation2 + $0xe68] sm:$0xff]
    %v1238 = vld [vmem:[#allocation2 + $0xe70] sm:$0xff]
    %v1239 = vld [vmem:[#allocation2 + $0xe78] sm:$0xff]
    %v1240 = vld [vmem:[#allocation2 + $0xe80] sm:$0xff]
    %v1241 = vld [vmem:[#allocation2 + $0xe88] sm:$0xff]
    %v1242 = vld [vmem:[#allocation2 + $0xe90] sm:$0xff]
    %v1243 = vld [vmem:[#allocation2 + $0xe98] sm:$0xff]
    %v1244 = vld [vmem:[#allocation2 + $0xea0] sm:$0xff]
    %v1245 = vld [vmem:[#allocation2 + $0xea8] sm:$0xff]
    %v1246 = vld [vmem:[#allocation2 + $0xeb0] sm:$0xff]
    %v1247 = vld [vmem:[#allocation2 + $0xeb8] sm:$0xff]
    %v1248 = vld [vmem:[#allocation2 + $0xec0] sm:$0xff]
    %v1249 = vld [vmem:[#allocation2 + $0xec8] sm:$0xff]
    %v1250 = vld [vmem:[#allocation2 + $0xed0] sm:$0xff]
    %v1251 = vld [vmem:[#allocation2 + $0xed8] sm:$0xff]
    %v1252 = vld [vmem:[#allocation2 + $0xee0] sm:$0xff]
    %v1253 = vld [vmem:[#allocation2 + $0xee8] sm:$0xff]
    %v1254 = vld [vmem:[#allocation2 + $0xef0] sm:$0xff]
    %v1255 = vld [vmem:[#allocation2 + $0xef8] sm:$0xff]
    %v1256 = vld [vmem:[#allocation2 + $0xf00] sm:$0xff]
    %v1257 = vld [vmem:[#allocation2 + $0xf08] sm:$0xff]
    %v1258 = vld [vmem:[#allocation2 + $0xf10] sm:$0xff]
    %v1259 = vld [vmem:[#allocation2 + $0xf18] sm:$0xff]
    %v1260 = vld [vmem:[#allocation2 + $0xf20] sm:$0xff]
    %v1261 = vld [vmem:[#allocation2 + $0xf28] sm:$0xff]
    %v1262 = vld [vmem:[#allocation2 + $0xf30] sm:$0xff]
    %v1263 = vld [vmem:[#allocation2 + $0xf38] sm:$0xff]
    %v1264 = vld [vmem:[#allocation2 + $0xf40] sm:$0xff]
    %v1265 = vld [vmem:[#allocation2 + $0xf48] sm:$0xff]
    %v1266 = vld [vmem:[#allocation2 + $0xf50] sm:$0xff]
    %v1267 = vld [vmem:[#allocation2 + $0xf58] sm:$0xff]
    %v1268 = vld [vmem:[#allocation2 + $0xf60] sm:$0xff]
    %v1269 = vld [vmem:[#allocation2 + $0xf68] sm:$0xff]
    %v1270 = vld [vmem:[#allocation2 + $0xf70] sm:$0xff]
    %v1271 = vld [vmem:[#allocation2 + $0xf78] sm:$0xff]
    %v1272 = vld [vmem:[#allocation2 + $0xf80] sm:$0xff]
    %v1273 = vld [vmem:[#allocation2 + $0xf88] sm:$0xff]
    %v1274 = vld [vmem:[#allocation2 + $0xf90] sm:$0xff]
    %v1275 = vld [vmem:[#allocation2 + $0xf98] sm:$0xff]
    %v1276 = vld [vmem:[#allocation2 + $0xfa0] sm:$0xff]
    %v1277 = vld [vmem:[#allocation2 + $0xfa8] sm:$0xff]
    %v1278 = vld [vmem:[#allocation2 + $0xfb0] sm:$0xff]
    %v1279 = vld [vmem:[#allocation2 + $0xfb8] sm:$0xff]
    %v1280 = vld [vmem:[#allocation2 + $0xfc0] sm:$0xff]
    %v1281 = vld [vmem:[#allocation2 + $0xfc8] sm:$0xff]
    %v1282 = vld [vmem:[#allocation2 + $0xfd0] sm:$0xff]
    %v1283 = vld [vmem:[#allocation2 + $0xfd8] sm:$0xff]
    %v1284 = vld [vmem:[#allocation2 + $0xfe0] sm:$0xff]
    %v1285 = vld [vmem:[#allocation2 + $0xfe8] sm:$0xff]
    %v1286 = vld [vmem:[#allocation2 + $0xff0] sm:$0xff]
    %v1287 = vld [vmem:[#allocation2 + $0xff8] sm:$0xff]
    %v1288 = vld [vmem:[#allocation2 + $0x1000] sm:$0xff]
    %v1289 = vld [vmem:[#allocation2 + $0x1008] sm:$0xff]
    %v1290 = vld [vmem:[#allocation2 + $0x1010] sm:$0xff]
    %v1291 = vld [vmem:[#allocation2 + $0x1018] sm:$0xff]
    %v1292 = vld [vmem:[#allocation2 + $0x1020] sm:$0xff]
    %v1293 = vld [vmem:[#allocation2 + $0x1028] sm:$0xff]
    %v1294 = vld [vmem:[#allocation2 + $0x1030] sm:$0xff]
    %v1295 = vld [vmem:[#allocation2 + $0x1038] sm:$0xff]
    %v1296 = vld [vmem:[#allocation2 + $0x1040] sm:$0xff]
    %v1297 = vld [vmem:[#allocation2 + $0x1048] sm:$0xff]
    %v1298 = vld [vmem:[#allocation2 + $0x1050] sm:$0xff]
    %v1299 = vld [vmem:[#allocation2 + $0x1058] sm:$0xff]
    %v1300 = vld [vmem:[#allocation2 + $0x1060] sm:$0xff]
    %v1301 = vld [vmem:[#allocation2 + $0x1068] sm:$0xff]
    %v1302 = vld [vmem:[#allocation2 + $0x1070] sm:$0xff]
    %v1303 = vld [vmem:[#allocation2 + $0x1078] sm:$0xff]
    %v1304 = vld [vmem:[#allocation2 + $0x1080] sm:$0xff]
    %v1305 = vld [vmem:[#allocation2 + $0x1088] sm:$0xff]
    %v1306 = vld [vmem:[#allocation2 + $0x1090] sm:$0xff]
    %v1307 = vld [vmem:[#allocation2 + $0x1098] sm:$0xff]
    %v1308 = vld [vmem:[#allocation2 + $0x10a0] sm:$0xff]
    %v1309 = vld [vmem:[#allocation2 + $0x10a8] sm:$0xff]
    %v1310 = vld [vmem:[#allocation2 + $0x10b0] sm:$0xff]
    %v1311 = vld [vmem:[#allocation2 + $0x10b8] sm:$0xff]
    %v1312 = vld [vmem:[#allocation2 + $0x10c0] sm:$0xff]
    %v1313 = vld [vmem:[#allocation2 + $0x10c8] sm:$0xff]
    %v1314 = vld [vmem:[#allocation2 + $0x10d0] sm:$0xff]
    %v1315 = vld [vmem:[#allocation2 + $0x10d8] sm:$0xff]
    %v1316 = vld [vmem:[#allocation2 + $0x10e0] sm:$0xff]
    %v1317 = vld [vmem:[#allocation2 + $0x10e8] sm:$0xff]
    %v1318 = vld [vmem:[#allocation2 + $0x10f0] sm:$0xff]
    %v1319 = vld [vmem:[#allocation2 + $0x10f8] sm:$0xff]
    %v1320 = vld [vmem:[#allocation2 + $0x1100] sm:$0xff]
    %v1321 = vld [vmem:[#allocation2 + $0x1108] sm:$0xff]
    %v1322 = vld [vmem:[#allocation2 + $0x1110] sm:$0xff]
    %v1323 = vld [vmem:[#allocation2 + $0x1118] sm:$0xff]
    %v1324 = vld [vmem:[#allocation2 + $0x1120] sm:$0xff]
    %v1325 = vld [vmem:[#allocation2 + $0x1128] sm:$0xff]
    %v1326 = vld [vmem:[#allocation2 + $0x1130] sm:$0xff]
    %v1327 = vld [vmem:[#allocation2 + $0x1138] sm:$0xff]
    %v1328 = vld [vmem:[#allocation2 + $0x1140] sm:$0xff]
    %v1329 = vld [vmem:[#allocation2 + $0x1148] sm:$0xff]
    %v1330 = vld [vmem:[#allocation2 + $0x1150] sm:$0xff]
    %v1331 = vld [vmem:[#allocation2 + $0x1158] sm:$0xff]
    %v1332 = vld [vmem:[#allocation2 + $0x1160] sm:$0xff]
    %v1333 = vld [vmem:[#allocation2 + $0x1168] sm:$0xff]
    %v1334 = vld [vmem:[#allocation2 + $0x1170] sm:$0xff]
    %v1335 = vld [vmem:[#allocation2 + $0x1178] sm:$0xff]
    %v1336 = vld [vmem:[#allocation2 + $0x1180] sm:$0xff]
    %v1337 = vld [vmem:[#allocation2 + $0x1188] sm:$0xff]
    %v1338 = vld [vmem:[#allocation2 + $0x1190] sm:$0xff]
    %v1339 = vld [vmem:[#allocation2 + $0x1198] sm:$0xff]
    %v1340 = vld [vmem:[#allocation2 + $0x11a0] sm:$0xff]
    %v1341 = vld [vmem:[#allocation2 + $0x11a8] sm:$0xff]
    %v1342 = vld [vmem:[#allocation2 + $0x11b0] sm:$0xff]
    %v1343 = vld [vmem:[#allocation2 + $0x11b8] sm:$0xff]
    %v1344 = vld [vmem:[#allocation2 + $0x11c0] sm:$0xff]
    %v1345 = vld [vmem:[#allocation2 + $0x11c8] sm:$0xff]
    %v1346 = vld [vmem:[#allocation2 + $0x11d0] sm:$0xff]
    %v1347 = vld [vmem:[#allocation2 + $0x11d8] sm:$0xff]
    %v1348 = vld [vmem:[#allocation2 + $0x11e0] sm:$0xff]
    %v1349 = vld [vmem:[#allocation2 + $0x11e8] sm:$0xff]
    %v1350 = vld [vmem:[#allocation2 + $0x11f0] sm:$0xff]
    %v1351 = vld [vmem:[#allocation2 + $0x11f8] sm:$0xff]
    %v1352 = vld [vmem:[#allocation2 + $0x1200] sm:$0xff]
    %v1353 = vld [vmem:[#allocation2 + $0x1208] sm:$0xff]
    %v1354 = vld [vmem:[#allocation2 + $0x1210] sm:$0xff]
    %v1355 = vld [vmem:[#allocation2 + $0x1218] sm:$0xff]
    %v1356 = vld [vmem:[#allocation2 + $0x1220] sm:$0xff]
    %v1357 = vld [vmem:[#allocation2 + $0x1228] sm:$0xff]
    %v1358 = vld [vmem:[#allocation2 + $0x1230] sm:$0xff]
    %v1359 = vld [vmem:[#allocation2 + $0x1238] sm:$0xff]
    %v1360 = vld [vmem:[#allocation2 + $0x1240] sm:$0xff]
    %v1361 = vld [vmem:[#allocation2 + $0x1248] sm:$0xff]
    %v1362 = vld [vmem:[#allocation2 + $0x1250] sm:$0xff]
    %v1363 = vld [vmem:[#allocation2 + $0x1258] sm:$0xff]
    %v1364 = vld [vmem:[#allocation2 + $0x1260] sm:$0xff]
    %v1365 = vld [vmem:[#allocation2 + $0x1268] sm:$0xff]
    %v1366 = vld [vmem:[#allocation2 + $0x1270] sm:$0xff]
    %v1367 = vld [vmem:[#allocation2 + $0x1278] sm:$0xff]
    %v1368 = vld [vmem:[#allocation2 + $0x1280] sm:$0xff]
    %v1369 = vld [vmem:[#allocation2 + $0x1288] sm:$0xff]
    %v1370 = vld [vmem:[#allocation2 + $0x1290] sm:$0xff]
    %v1371 = vld [vmem:[#allocation2 + $0x1298] sm:$0xff]
    %v1372 = vld [vmem:[#allocation2 + $0x12a0] sm:$0xff]
    %v1373 = vld [vmem:[#allocation2 + $0x12a8] sm:$0xff]
    %v1374 = vld [vmem:[#allocation2 + $0x12b0] sm:$0xff]
    %v1375 = vld [vmem:[#allocation2 + $0x12b8] sm:$0xff]
    %v1376 = vld [vmem:[#allocation2 + $0x12c0] sm:$0xff]
    %v1377 = vld [vmem:[#allocation2 + $0x12c8] sm:$0xff]
    %v1378 = vld [vmem:[#allocation2 + $0x12d0] sm:$0xff]
    %v1379 = vld [vmem:[#allocation2 + $0x12d8] sm:$0xff]
    %v1380 = vld [vmem:[#allocation2 + $0x12e0] sm:$0xff]
    %v1381 = vld [vmem:[#allocation2 + $0x12e8] sm:$0xff]
    %v1382 = vld [vmem:[#allocation2 + $0x12f0] sm:$0xff]
    %v1383 = vld [vmem:[#allocation2 + $0x12f8] sm:$0xff]
    %v1384 = vld [vmem:[#allocation2 + $0x1300] sm:$0xff]
    %v1385 = vld [vmem:[#allocation2 + $0x1308] sm:$0xff]
    %v1386 = vld [vmem:[#allocation2 + $0x1310] sm:$0xff]
    %v1387 = vld [vmem:[#allocation2 + $0x1318] sm:$0xff]
    %v1388 = vld [vmem:[#allocation2 + $0x1320] sm:$0xff]
    %v1389 = vld [vmem:[#allocation2 + $0x1328] sm:$0xff]
    %v1390 = vld [vmem:[#allocation2 + $0x1330] sm:$0xff]
    %v1391 = vld [vmem:[#allocation2 + $0x1338] sm:$0xff]
    %v1392 = vld [vmem:[#allocation2 + $0x1340] sm:$0xff]
    %v1393 = vld [vmem:[#allocation2 + $0x1348] sm:$0xff]
    %v1394 = vld [vmem:[#allocation2 + $0x1350] sm:$0xff]
    %v1395 = vld [vmem:[#allocation2 + $0x1358] sm:$0xff]
    %v1396 = vld [vmem:[#allocation2 + $0x1360] sm:$0xff]
    %v1397 = vld [vmem:[#allocation2 + $0x1368] sm:$0xff]
    %v1398 = vld [vmem:[#allocation2 + $0x1370] sm:$0xff]
    %v1399 = vld [vmem:[#allocation2 + $0x1378] sm:$0xff]
    %v1400 = vld [vmem:[#allocation2 + $0x1380] sm:$0xff]
    %v1401 = vld [vmem:[#allocation2 + $0x1388] sm:$0xff]
    %v1402 = vld [vmem:[#allocation2 + $0x1390] sm:$0xff]
    %v1403 = vld [vmem:[#allocation2 + $0x1398] sm:$0xff]
    %v1404 = vld [vmem:[#allocation2 + $0x13a0] sm:$0xff]
    %v1405 = vld [vmem:[#allocation2 + $0x13a8] sm:$0xff]
    %v1406 = vld [vmem:[#allocation2 + $0x13b0] sm:$0xff]
    %v1407 = vld [vmem:[#allocation2 + $0x13b8] sm:$0xff]
    %v1408 = vld [vmem:[#allocation2 + $0x13c0] sm:$0xff]
    %v1409 = vld [vmem:[#allocation2 + $0x13c8] sm:$0xff]
    %v1410 = vld [vmem:[#allocation2 + $0x13d0] sm:$0xff]
    %v1411 = vld [vmem:[#allocation2 + $0x13d8] sm:$0xff]
    %v1412 = vld [vmem:[#allocation2 + $0x13e0] sm:$0xff]
    %v1413 = vld [vmem:[#allocation2 + $0x13e8] sm:$0xff]
    %v1414 = vld [vmem:[#allocation2 + $0x13f0] sm:$0xff]
    %v1415 = vld [vmem:[#allocation2 + $0x13f8] sm:$0xff]
    %v1416 = vld [vmem:[#allocation2 + $0x1400] sm:$0xff]
    %v1417 = vld [vmem:[#allocation2 + $0x1408] sm:$0xff]
    %v1418 = vld [vmem:[#allocation2 + $0x1410] sm:$0xff]
    %v1419 = vld [vmem:[#allocation2 + $0x1418] sm:$0xff]
    %v1420 = vld [vmem:[#allocation2 + $0x1420] sm:$0xff]
    %v1421 = vld [vmem:[#allocation2 + $0x1428] sm:$0xff]
    %v1422 = vld [vmem:[#allocation2 + $0x1430] sm:$0xff]
    %v1423 = vld [vmem:[#allocation2 + $0x1438] sm:$0xff]
    %v1424 = vld [vmem:[#allocation2 + $0x1440] sm:$0xff]
    %v1425 = vld [vmem:[#allocation2 + $0x1448] sm:$0xff]
    %v1426 = vld [vmem:[#allocation2 + $0x1450] sm:$0xff]
    %v1427 = vld [vmem:[#allocation2 + $0x1458] sm:$0xff]
    %v1428 = vld [vmem:[#allocation2 + $0x1460] sm:$0xff]
    %v1429 = vld [vmem:[#allocation2 + $0x1468] sm:$0xff]
    %v1430 = vld [vmem:[#allocation2 + $0x1470] sm:$0xff]
    %v1431 = vld [vmem:[#allocation2 + $0x1478] sm:$0xff]
    %v1432 = vld [vmem:[#allocation2 + $0x1480] sm:$0xff]
    %v1433 = vld [vmem:[#allocation2 + $0x1488] sm:$0xff]
    %v1434 = vld [vmem:[#allocation2 + $0x1490] sm:$0xff]
    %v1435 = vld [vmem:[#allocation2 + $0x1498] sm:$0xff]
    %v1436 = vld [vmem:[#allocation2 + $0x14a0] sm:$0xff]
    %v1437 = vld [vmem:[#allocation2 + $0x14a8] sm:$0xff]
    %v1438 = vld [vmem:[#allocation2 + $0x14b0] sm:$0xff]
    %v1439 = vld [vmem:[#allocation2 + $0x14b8] sm:$0xff]
    %v1440 = vld [vmem:[#allocation2 + $0x14c0] sm:$0xff]
    %v1441 = vld [vmem:[#allocation2 + $0x14c8] sm:$0xff]
    %v1442 = vld [vmem:[#allocation2 + $0x14d0] sm:$0xff]
    %v1443 = vld [vmem:[#allocation2 + $0x14d8] sm:$0xff]
    %v1444 = vld [vmem:[#allocation2 + $0x14e0] sm:$0xff]
    %v1445 = vld [vmem:[#allocation2 + $0x14e8] sm:$0xff]
    %v1446 = vld [vmem:[#allocation2 + $0x14f0] sm:$0xff]
    %v1447 = vld [vmem:[#allocation2 + $0x14f8] sm:$0xff]
    %v1448 = vld [vmem:[#allocation2 + $0x1500] sm:$0xff]
    %v1449 = vld [vmem:[#allocation2 + $0x1508] sm:$0xff]
    %v1450 = vld [vmem:[#allocation2 + $0x1510] sm:$0xff]
    %v1451 = vld [vmem:[#allocation2 + $0x1518] sm:$0xff]
    %v1452 = vld [vmem:[#allocation2 + $0x1520] sm:$0xff]
    %v1453 = vld [vmem:[#allocation2 + $0x1528] sm:$0xff]
    %v1454 = vld [vmem:[#allocation2 + $0x1530] sm:$0xff]
    %v1455 = vld [vmem:[#allocation2 + $0x1538] sm:$0xff]
    %v1456 = vld [vmem:[#allocation2 + $0x1540] sm:$0xff]
    %v1457 = vld [vmem:[#allocation2 + $0x1548] sm:$0xff]
    %v1458 = vld [vmem:[#allocation2 + $0x1550] sm:$0xff]
    %v1459 = vld [vmem:[#allocation2 + $0x1558] sm:$0xff]
    %v1460 = vld [vmem:[#allocation2 + $0x1560] sm:$0xff]
    %v1461 = vld [vmem:[#allocation2 + $0x1568] sm:$0xff]
    %v1462 = vld [vmem:[#allocation2 + $0x1570] sm:$0xff]
    %v1463 = vld [vmem:[#allocation2 + $0x1578] sm:$0xff]
    %v1464 = vld [vmem:[#allocation2 + $0x1580] sm:$0xff]
    %v1465 = vld [vmem:[#allocation2 + $0x1588] sm:$0xff]
    %v1466 = vld [vmem:[#allocation2 + $0x1590] sm:$0xff]
    %v1467 = vld [vmem:[#allocation2 + $0x1598] sm:$0xff]
    %v1468 = vld [vmem:[#allocation2 + $0x15a0] sm:$0xff]
    %v1469 = vld [vmem:[#allocation2 + $0x15a8] sm:$0xff]
    %v1470 = vld [vmem:[#allocation2 + $0x15b0] sm:$0xff]
    %v1471 = vld [vmem:[#allocation2 + $0x15b8] sm:$0xff]
    %v1472 = vld [vmem:[#allocation2 + $0x15c0] sm:$0xff]
    %v1473 = vld [vmem:[#allocation2 + $0x15c8] sm:$0xff]
    %v1474 = vld [vmem:[#allocation2 + $0x15d0] sm:$0xff]
    %v1475 = vld [vmem:[#allocation2 + $0x15d8] sm:$0xff]
    %v1476 = vld [vmem:[#allocation2 + $0x15e0] sm:$0xff]
    %v1477 = vld [vmem:[#allocation2 + $0x15e8] sm:$0xff]
    %v1478 = vld [vmem:[#allocation2 + $0x15f0] sm:$0xff]
    %v1479 = vld [vmem:[#allocation2 + $0x15f8] sm:$0xff]
    %v1480 = vld [vmem:[#allocation2 + $0x1600] sm:$0xff]
    %v1481 = vld [vmem:[#allocation2 + $0x1608] sm:$0xff]
    %v1482 = vld [vmem:[#allocation2 + $0x1610] sm:$0xff]
    %v1483 = vld [vmem:[#allocation2 + $0x1618] sm:$0xff]
    %v1484 = vld [vmem:[#allocation2 + $0x1620] sm:$0xff]
    %v1485 = vld [vmem:[#allocation2 + $0x1628] sm:$0xff]
    %v1486 = vld [vmem:[#allocation2 + $0x1630] sm:$0xff]
    %v1487 = vld [vmem:[#allocation2 + $0x1638] sm:$0xff]
    %v1488 = vld [vmem:[#allocation2 + $0x1640] sm:$0xff]
    %v1489 = vld [vmem:[#allocation2 + $0x1648] sm:$0xff]
    %v1490 = vld [vmem:[#allocation2 + $0x1650] sm:$0xff]
    %v1491 = vld [vmem:[#allocation2 + $0x1658] sm:$0xff]
    %v1492 = vld [vmem:[#allocation2 + $0x1660] sm:$0xff]
    %v1493 = vld [vmem:[#allocation2 + $0x1668] sm:$0xff]
    %v1494 = vld [vmem:[#allocation2 + $0x1670] sm:$0xff]
    %v1495 = vld [vmem:[#allocation2 + $0x1678] sm:$0xff]
    %v1496 = vld [vmem:[#allocation2 + $0x1680] sm:$0xff]
    %v1497 = vld [vmem:[#allocation2 + $0x1688] sm:$0xff]
    %v1498 = vld [vmem:[#allocation2 + $0x1690] sm:$0xff]
    %v1499 = vld [vmem:[#allocation2 + $0x1698] sm:$0xff]
    %v1500 = vld [vmem:[#allocation2 + $0x16a0] sm:$0xff]
    %v1501 = vld [vmem:[#allocation2 + $0x16a8] sm:$0xff]
    %v1502 = vld [vmem:[#allocation2 + $0x16b0] sm:$0xff]
    %v1503 = vld [vmem:[#allocation2 + $0x16b8] sm:$0xff]
    %v1504 = vld [vmem:[#allocation2 + $0x16c0] sm:$0xff]
    %v1505 = vld [vmem:[#allocation2 + $0x16c8] sm:$0xff]
    %v1506 = vld [vmem:[#allocation2 + $0x16d0] sm:$0xff]
    %v1507 = vld [vmem:[#allocation2 + $0x16d8] sm:$0xff]
    %v1508 = vld [vmem:[#allocation2 + $0x16e0] sm:$0xff]
    %v1509 = vld [vmem:[#allocation2 + $0x16e8] sm:$0xff]
    %v1510 = vld [vmem:[#allocation2 + $0x16f0] sm:$0xff]
    %v1511 = vld [vmem:[#allocation2 + $0x16f8] sm:$0xff]
    %v1512 = vld [vmem:[#allocation2 + $0x1700] sm:$0xff]
    %v1513 = vld [vmem:[#allocation2 + $0x1708] sm:$0xff]
    %v1514 = vld [vmem:[#allocation2 + $0x1710] sm:$0xff]
    %v1515 = vld [vmem:[#allocation2 + $0x1718] sm:$0xff]
    %v1516 = vld [vmem:[#allocation2 + $0x1720] sm:$0xff]
    %v1517 = vld [vmem:[#allocation2 + $0x1728] sm:$0xff]
    %v1518 = vld [vmem:[#allocation2 + $0x1730] sm:$0xff]
    %v1519 = vld [vmem:[#allocation2 + $0x1738] sm:$0xff]
    %v1520 = vld [vmem:[#allocation2 + $0x1740] sm:$0xff]
    %v1521 = vld [vmem:[#allocation2 + $0x1748] sm:$0xff]
    %v1522 = vld [vmem:[#allocation2 + $0x1750] sm:$0xff]
    %v1523 = vld [vmem:[#allocation2 + $0x1758] sm:$0xff]
    %v1524 = vld [vmem:[#allocation2 + $0x1760] sm:$0xff]
    %v1525 = vld [vmem:[#allocation2 + $0x1768] sm:$0xff]
    %v1526 = vld [vmem:[#allocation2 + $0x1770] sm:$0xff]
    %v1527 = vld [vmem:[#allocation2 + $0x1778] sm:$0xff]
    %v1528 = vld [vmem:[#allocation2 + $0x1780] sm:$0xff]
    %v1529 = vld [vmem:[#allocation2 + $0x1788] sm:$0xff]
    %v1530 = vld [vmem:[#allocation2 + $0x1790] sm:$0xff]
    %v1531 = vld [vmem:[#allocation2 + $0x1798] sm:$0xff]
    %v1532 = vld [vmem:[#allocation2 + $0x17a0] sm:$0xff]
    %v1533 = vld [vmem:[#allocation2 + $0x17a8] sm:$0xff]
    %v1534 = vld [vmem:[#allocation2 + $0x17b0] sm:$0xff]
    %v1535 = vld [vmem:[#allocation2 + $0x17b8] sm:$0xff]
    %v1536 = vld [vmem:[#allocation2 + $0x17c0] sm:$0xff]
    %v1537 = vld [vmem:[#allocation2 + $0x17c8] sm:$0xff]
    %v1538 = vld [vmem:[#allocation2 + $0x17d0] sm:$0xff]
    %v1539 = vld [vmem:[#allocation2 + $0x17d8] sm:$0xff]
    %v1540 = vld [vmem:[#allocation2 + $0x17e0] sm:$0xff]
    %v1541 = vld [vmem:[#allocation2 + $0x17e8] sm:$0xff]
    %v1542 = vld [vmem:[#allocation2 + $0x17f0] sm:$0xff]
    %v1543 = vld [vmem:[#allocation2 + $0x17f8] sm:$0xff]
    %v1544 = vld [vmem:[#allocation2 + $0x1800] sm:$0xff]
    %v1545 = vld [vmem:[#allocation2 + $0x1808] sm:$0xff]
    %v1546 = vld [vmem:[#allocation2 + $0x1810] sm:$0xff]
    %v1547 = vld [vmem:[#allocation2 + $0x1818] sm:$0xff]
    %v1548 = vld [vmem:[#allocation2 + $0x1820] sm:$0xff]
    %v1549 = vld [vmem:[#allocation2 + $0x1828] sm:$0xff]
    %v1550 = vld [vmem:[#allocation2 + $0x1830] sm:$0xff]
    %v1551 = vld [vmem:[#allocation2 + $0x1838] sm:$0xff]
    %v1552 = vld [vmem:[#allocation2 + $0x1840] sm:$0xff]
    %v1553 = vld [vmem:[#allocation2 + $0x1848] sm:$0xff]
    %v1554 = vld [vmem:[#allocation2 + $0x1850] sm:$0xff]
    %v1555 = vld [vmem:[#allocation2 + $0x1858] sm:$0xff]
    %v1556 = vld [vmem:[#allocation2 + $0x1860] sm:$0xff]
    %v1557 = vld [vmem:[#allocation2 + $0x1868] sm:$0xff]
    %v1558 = vld [vmem:[#allocation2 + $0x1870] sm:$0xff]
    %v1559 = vld [vmem:[#allocation2 + $0x1878] sm:$0xff]
    %v1560 = vld [vmem:[#allocation2 + $0x1880] sm:$0xff]
    %v1561 = vld [vmem:[#allocation2 + $0x1888] sm:$0xff]
    %v1562 = vld [vmem:[#allocation2 + $0x1890] sm:$0xff]
    %v1563 = vld [vmem:[#allocation2 + $0x1898] sm:$0xff]
    %v1564 = vld [vmem:[#allocation2 + $0x18a0] sm:$0xff]
    %v1565 = vld [vmem:[#allocation2 + $0x18a8] sm:$0xff]
    %v1566 = vld [vmem:[#allocation2 + $0x18b0] sm:$0xff]
    %v1567 = vld [vmem:[#allocation2 + $0x18b8] sm:$0xff]
    %v1568 = vld [vmem:[#allocation2 + $0x18c0] sm:$0xff]
    %v1569 = vld [vmem:[#allocation2 + $0x18c8] sm:$0xff]
    %v1570 = vld [vmem:[#allocation2 + $0x18d0] sm:$0xff]
    %v1571 = vld [vmem:[#allocation2 + $0x18d8] sm:$0xff]
    %v1572 = vld [vmem:[#allocation2 + $0x18e0] sm:$0xff]
    %v1573 = vld [vmem:[#allocation2 + $0x18e8] sm:$0xff]
    %v1574 = vld [vmem:[#allocation2 + $0x18f0] sm:$0xff]
    %v1575 = vld [vmem:[#allocation2 + $0x18f8] sm:$0xff]
    %v1576 = vld [vmem:[#allocation2 + $0x1900] sm:$0xff]
    %v1577 = vld [vmem:[#allocation2 + $0x1908] sm:$0xff]
    %v1578 = vld [vmem:[#allocation2 + $0x1910] sm:$0xff]
    %v1579 = vld [vmem:[#allocation2 + $0x1918] sm:$0xff]
    %v1580 = vld [vmem:[#allocation2 + $0x1920] sm:$0xff]
    %v1581 = vld [vmem:[#allocation2 + $0x1928] sm:$0xff]
    %v1582 = vld [vmem:[#allocation2 + $0x1930] sm:$0xff]
    %v1583 = vld [vmem:[#allocation2 + $0x1938] sm:$0xff]
    %v1584 = vld [vmem:[#allocation2 + $0x1940] sm:$0xff]
    %v1585 = vld [vmem:[#allocation2 + $0x1948] sm:$0xff]
    %v1586 = vld [vmem:[#allocation2 + $0x1950] sm:$0xff]
    %v1587 = vld [vmem:[#allocation2 + $0x1958] sm:$0xff]
    %v1588 = vld [vmem:[#allocation2 + $0x1960] sm:$0xff]
    %v1589 = vld [vmem:[#allocation2 + $0x1968] sm:$0xff]
    %v1590 = vld [vmem:[#allocation2 + $0x1970] sm:$0xff]
    %v1591 = vld [vmem:[#allocation2 + $0x1978] sm:$0xff]
    %v1592 = vld [vmem:[#allocation2 + $0x1980] sm:$0xff]
    %v1593 = vld [vmem:[#allocation2 + $0x1988] sm:$0xff]
    %v1594 = vld [vmem:[#allocation2 + $0x1990] sm:$0xff]
    %v1595 = vld [vmem:[#allocation2 + $0x1998] sm:$0xff]
    %v1596 = vld [vmem:[#allocation2 + $0x19a0] sm:$0xff]
    %v1597 = vld [vmem:[#allocation2 + $0x19a8] sm:$0xff]
    %v1598 = vld [vmem:[#allocation2 + $0x19b0] sm:$0xff]
    %v1599 = vld [vmem:[#allocation2 + $0x19b8] sm:$0xff]
    %v1600 = vld [vmem:[#allocation2 + $0x19c0] sm:$0xff]
    %v1601 = vld [vmem:[#allocation2 + $0x19c8] sm:$0xff]
    %v1602 = vld [vmem:[#allocation2 + $0x19d0] sm:$0xff]
    %v1603 = vld [vmem:[#allocation2 + $0x19d8] sm:$0xff]
    %v1604 = vld [vmem:[#allocation2 + $0x19e0] sm:$0xff]
    %v1605 = vld [vmem:[#allocation2 + $0x19e8] sm:$0xff]
    %v1606 = vld [vmem:[#allocation2 + $0x19f0] sm:$0xff]
    %v1607 = vld [vmem:[#allocation2 + $0x19f8] sm:$0xff]
    %v1608 = vld [vmem:[#allocation2 + $0x1a00] sm:$0xff]
    %v1609 = vld [vmem:[#allocation2 + $0x1a08] sm:$0xff]
    %v1610 = vld [vmem:[#allocation2 + $0x1a10] sm:$0xff]
    %v1611 = vld [vmem:[#allocation2 + $0x1a18] sm:$0xff]
    %v1612 = vld [vmem:[#allocation2 + $0x1a20] sm:$0xff]
    %v1613 = vld [vmem:[#allocation2 + $0x1a28] sm:$0xff]
    %v1614 = vld [vmem:[#allocation2 + $0x1a30] sm:$0xff]
    %v1615 = vld [vmem:[#allocation2 + $0x1a38] sm:$0xff]
    %v1616 = vld [vmem:[#allocation2 + $0x1a40] sm:$0xff]
    %v1617 = vld [vmem:[#allocation2 + $0x1a48] sm:$0xff]
    %v1618 = vld [vmem:[#allocation2 + $0x1a50] sm:$0xff]
    %v1619 = vld [vmem:[#allocation2 + $0x1a58] sm:$0xff]
    %v1620 = vld [vmem:[#allocation2 + $0x1a60] sm:$0xff]
    %v1621 = vld [vmem:[#allocation2 + $0x1a68] sm:$0xff]
    %v1622 = vld [vmem:[#allocation2 + $0x1a70] sm:$0xff]
    %v1623 = vld [vmem:[#allocation2 + $0x1a78] sm:$0xff]
    %v1624 = vld [vmem:[#allocation2 + $0x1a80] sm:$0xff]
    %v1625 = vld [vmem:[#allocation2 + $0x1a88] sm:$0xff]
    %v1626 = vld [vmem:[#allocation2 + $0x1a90] sm:$0xff]
    %v1627 = vld [vmem:[#allocation2 + $0x1a98] sm:$0xff]
    %v1628 = vld [vmem:[#allocation2 + $0x1aa0] sm:$0xff]
    %v1629 = vld [vmem:[#allocation2 + $0x1aa8] sm:$0xff]
    %v1630 = vld [vmem:[#allocation2 + $0x1ab0] sm:$0xff]
    %v1631 = vld [vmem:[#allocation2 + $0x1ab8] sm:$0xff]
    %v1632 = vld [vmem:[#allocation2 + $0x1ac0] sm:$0xff]
    %v1633 = vld [vmem:[#allocation2 + $0x1ac8] sm:$0xff]
    %v1634 = vld [vmem:[#allocation2 + $0x1ad0] sm:$0xff]
    %v1635 = vld [vmem:[#allocation2 + $0x1ad8] sm:$0xff]
    %v1636 = vld [vmem:[#allocation2 + $0x1ae0] sm:$0xff]
    %v1637 = vld [vmem:[#allocation2 + $0x1ae8] sm:$0xff]
    %v1638 = vld [vmem:[#allocation2 + $0x1af0] sm:$0xff]
    %v1639 = vld [vmem:[#allocation2 + $0x1af8] sm:$0xff]
    %v1640 = vld [vmem:[#allocation2 + $0x1b00] sm:$0xff]
    %v1641 = vld [vmem:[#allocation2 + $0x1b08] sm:$0xff]
    %v1642 = vld [vmem:[#allocation2 + $0x1b10] sm:$0xff]
    %v1643 = vld [vmem:[#allocation2 + $0x1b18] sm:$0xff]
    %v1644 = vld [vmem:[#allocation2 + $0x1b20] sm:$0xff]
    %v1645 = vld [vmem:[#allocation2 + $0x1b28] sm:$0xff]
    %v1646 = vld [vmem:[#allocation2 + $0x1b30] sm:$0xff]
    %v1647 = vld [vmem:[#allocation2 + $0x1b38] sm:$0xff]
    %v1648 = vld [vmem:[#allocation2 + $0x1b40] sm:$0xff]
    %v1649 = vld [vmem:[#allocation2 + $0x1b48] sm:$0xff]
    %v1650 = vld [vmem:[#allocation2 + $0x1b50] sm:$0xff]
    %v1651 = vld [vmem:[#allocation2 + $0x1b58] sm:$0xff]
    %v1652 = vld [vmem:[#allocation2 + $0x1b60] sm:$0xff]
    %v1653 = vld [vmem:[#allocation2 + $0x1b68] sm:$0xff]
    %v1654 = vld [vmem:[#allocation2 + $0x1b70] sm:$0xff]
    %v1655 = vld [vmem:[#allocation2 + $0x1b78] sm:$0xff]
    %v1656 = vld [vmem:[#allocation2 + $0x1b80] sm:$0xff]
    %v1657 = vld [vmem:[#allocation2 + $0x1b88] sm:$0xff]
    %v1658 = vld [vmem:[#allocation2 + $0x1b90] sm:$0xff]
    %v1659 = vld [vmem:[#allocation2 + $0x1b98] sm:$0xff]
    %v1660 = vld [vmem:[#allocation2 + $0x1ba0] sm:$0xff]
    %v1661 = vld [vmem:[#allocation2 + $0x1ba8] sm:$0xff]
    %v1662 = vld [vmem:[#allocation2 + $0x1bb0] sm:$0xff]
    %v1663 = vld [vmem:[#allocation2 + $0x1bb8] sm:$0xff]
    %v1664 = vld [vmem:[#allocation2 + $0x1bc0] sm:$0xff]
    %v1665 = vld [vmem:[#allocation2 + $0x1bc8] sm:$0xff]
    %v1666 = vld [vmem:[#allocation2 + $0x1bd0] sm:$0xff]
    %v1667 = vld [vmem:[#allocation2 + $0x1bd8] sm:$0xff]
    %v1668 = vld [vmem:[#allocation2 + $0x1be0] sm:$0xff]
    %v1669 = vld [vmem:[#allocation2 + $0x1be8] sm:$0xff]
    %v1670 = vld [vmem:[#allocation2 + $0x1bf0] sm:$0xff]
    %v1671 = vld [vmem:[#allocation2 + $0x1bf8] sm:$0xff]
    %v1672 = vld [vmem:[#allocation2 + $0x1c00] sm:$0xff]
    %v1673 = vld [vmem:[#allocation2 + $0x1c08] sm:$0xff]
    %v1674 = vld [vmem:[#allocation2 + $0x1c10] sm:$0xff]
    %v1675 = vld [vmem:[#allocation2 + $0x1c18] sm:$0xff]
    %v1676 = vld [vmem:[#allocation2 + $0x1c20] sm:$0xff]
    %v1677 = vld [vmem:[#allocation2 + $0x1c28] sm:$0xff]
    %v1678 = vld [vmem:[#allocation2 + $0x1c30] sm:$0xff]
    %v1679 = vld [vmem:[#allocation2 + $0x1c38] sm:$0xff]
    %v1680 = vld [vmem:[#allocation2 + $0x1c40] sm:$0xff]
    %v1681 = vld [vmem:[#allocation2 + $0x1c48] sm:$0xff]
    %v1682 = vld [vmem:[#allocation2 + $0x1c50] sm:$0xff]
    %v1683 = vld [vmem:[#allocation2 + $0x1c58] sm:$0xff]
    %v1684 = vld [vmem:[#allocation2 + $0x1c60] sm:$0xff]
    %v1685 = vld [vmem:[#allocation2 + $0x1c68] sm:$0xff]
    %v1686 = vld [vmem:[#allocation2 + $0x1c70] sm:$0xff]
    %v1687 = vld [vmem:[#allocation2 + $0x1c78] sm:$0xff]
    %v1688 = vld [vmem:[#allocation2 + $0x1c80] sm:$0xff]
    %v1689 = vld [vmem:[#allocation2 + $0x1c88] sm:$0xff]
    %v1690 = vld [vmem:[#allocation2 + $0x1c90] sm:$0xff]
    %v1691 = vld [vmem:[#allocation2 + $0x1c98] sm:$0xff]
    %v1692 = vld [vmem:[#allocation2 + $0x1ca0] sm:$0xff]
    %v1693 = vld [vmem:[#allocation2 + $0x1ca8] sm:$0xff]
    %v1694 = vld [vmem:[#allocation2 + $0x1cb0] sm:$0xff]
    %v1695 = vld [vmem:[#allocation2 + $0x1cb8] sm:$0xff]
    %v1696 = vld [vmem:[#allocation2 + $0x1cc0] sm:$0xff]
    %v1697 = vld [vmem:[#allocation2 + $0x1cc8] sm:$0xff]
    %v1698 = vld [vmem:[#allocation2 + $0x1cd0] sm:$0xff]
    %v1699 = vld [vmem:[#allocation2 + $0x1cd8] sm:$0xff]
    %v1700 = vld [vmem:[#allocation2 + $0x1ce0] sm:$0xff]
    %v1701 = vld [vmem:[#allocation2 + $0x1ce8] sm:$0xff]
    %v1702 = vld [vmem:[#allocation2 + $0x1cf0] sm:$0xff]
    %v1703 = vld [vmem:[#allocation2 + $0x1cf8] sm:$0xff]
    %v1704 = vld [vmem:[#allocation2 + $0x1d00] sm:$0xff]
    %v1705 = vld [vmem:[#allocation2 + $0x1d08] sm:$0xff]
    %v1706 = vld [vmem:[#allocation2 + $0x1d10] sm:$0xff]
    %v1707 = vld [vmem:[#allocation2 + $0x1d18] sm:$0xff]
    %v1708 = vld [vmem:[#allocation2 + $0x1d20] sm:$0xff]
    %v1709 = vld [vmem:[#allocation2 + $0x1d28] sm:$0xff]
    %v1710 = vld [vmem:[#allocation2 + $0x1d30] sm:$0xff]
    %v1711 = vld [vmem:[#allocation2 + $0x1d38] sm:$0xff]
    %v1712 = vld [vmem:[#allocation2 + $0x1d40] sm:$0xff]
    %v1713 = vld [vmem:[#allocation2 + $0x1d48] sm:$0xff]
    %v1714 = vld [vmem:[#allocation2 + $0x1d50] sm:$0xff]
    %v1715 = vld [vmem:[#allocation2 + $0x1d58] sm:$0xff]
    %v1716 = vld [vmem:[#allocation2 + $0x1d60] sm:$0xff]
    %v1717 = vld [vmem:[#allocation2 + $0x1d68] sm:$0xff]
    %v1718 = vld [vmem:[#allocation2 + $0x1d70] sm:$0xff]
    %v1719 = vld [vmem:[#allocation2 + $0x1d78] sm:$0xff]
    %v1720 = vld [vmem:[#allocation2 + $0x1d80] sm:$0xff]
    %v1721 = vld [vmem:[#allocation2 + $0x1d88] sm:$0xff]
    %v1722 = vld [vmem:[#allocation2 + $0x1d90] sm:$0xff]
    %v1723 = vld [vmem:[#allocation2 + $0x1d98] sm:$0xff]
    %v1724 = vld [vmem:[#allocation2 + $0x1da0] sm:$0xff]
    %v1725 = vld [vmem:[#allocation2 + $0x1da8] sm:$0xff]
    %v1726 = vld [vmem:[#allocation2 + $0x1db0] sm:$0xff]
    %v1727 = vld [vmem:[#allocation2 + $0x1db8] sm:$0xff]
    %v1728 = vld [vmem:[#allocation2 + $0x1dc0] sm:$0xff]
    %v1729 = vld [vmem:[#allocation2 + $0x1dc8] sm:$0xff]
    %v1730 = vld [vmem:[#allocation2 + $0x1dd0] sm:$0xff]
    %v1731 = vld [vmem:[#allocation2 + $0x1dd8] sm:$0xff]
    %v1732 = vld [vmem:[#allocation2 + $0x1de0] sm:$0xff]
    %v1733 = vld [vmem:[#allocation2 + $0x1de8] sm:$0xff]
    %v1734 = vld [vmem:[#allocation2 + $0x1df0] sm:$0xff]
    %v1735 = vld [vmem:[#allocation2 + $0x1df8] sm:$0xff]
    %v1736 = vld [vmem:[#allocation2 + $0x1e00] sm:$0xff]
    %v1737 = vld [vmem:[#allocation2 + $0x1e08] sm:$0xff]
    %v1738 = vld [vmem:[#allocation2 + $0x1e10] sm:$0xff]
    %v1739 = vld [vmem:[#allocation2 + $0x1e18] sm:$0xff]
    %v1740 = vld [vmem:[#allocation2 + $0x1e20] sm:$0xff]
    %v1741 = vld [vmem:[#allocation2 + $0x1e28] sm:$0xff]
    %v1742 = vld [vmem:[#allocation2 + $0x1e30] sm:$0xff]
    %v1743 = vld [vmem:[#allocation2 + $0x1e38] sm:$0xff]
    %v1744 = vld [vmem:[#allocation2 + $0x1e40] sm:$0xff]
    %v1745 = vld [vmem:[#allocation2 + $0x1e48] sm:$0xff]
    %v1746 = vld [vmem:[#allocation2 + $0x1e50] sm:$0xff]
    %v1747 = vld [vmem:[#allocation2 + $0x1e58] sm:$0xff]
    %v1748 = vld [vmem:[#allocation2 + $0x1e60] sm:$0xff]
    %v1749 = vld [vmem:[#allocation2 + $0x1e68] sm:$0xff]
    %v1750 = vld [vmem:[#allocation2 + $0x1e70] sm:$0xff]
    %v1751 = vld [vmem:[#allocation2 + $0x1e78] sm:$0xff]
    %v1752 = vld [vmem:[#allocation2 + $0x1e80] sm:$0xff]
    %v1753 = vld [vmem:[#allocation2 + $0x1e88] sm:$0xff]
    %v1754 = vld [vmem:[#allocation2 + $0x1e90] sm:$0xff]
    %v1755 = vld [vmem:[#allocation2 + $0x1e98] sm:$0xff]
    %v1756 = vld [vmem:[#allocation2 + $0x1ea0] sm:$0xff]
    %v1757 = vld [vmem:[#allocation2 + $0x1ea8] sm:$0xff]
    %v1758 = vld [vmem:[#allocation2 + $0x1eb0] sm:$0xff]
    %v1759 = vld [vmem:[#allocation2 + $0x1eb8] sm:$0xff]
    %v1760 = vld [vmem:[#allocation2 + $0x1ec0] sm:$0xff]
    %v1761 = vld [vmem:[#allocation2 + $0x1ec8] sm:$0xff]
    %v1762 = vld [vmem:[#allocation2 + $0x1ed0] sm:$0xff]
    %v1763 = vld [vmem:[#allocation2 + $0x1ed8] sm:$0xff]
    %v1764 = vld [vmem:[#allocation2 + $0x1ee0] sm:$0xff]
    %v1765 = vld [vmem:[#allocation2 + $0x1ee8] sm:$0xff]
    %v1766 = vld [vmem:[#allocation2 + $0x1ef0] sm:$0xff]
    %v1767 = vld [vmem:[#allocation2 + $0x1ef8] sm:$0xff]
    %v1768 = vld [vmem:[#allocation2 + $0x1f00] sm:$0xff]
    %v1769 = vld [vmem:[#allocation2 + $0x1f08] sm:$0xff]
    %v1770 = vld [vmem:[#allocation2 + $0x1f10] sm:$0xff]
    %v1771 = vld [vmem:[#allocation2 + $0x1f18] sm:$0xff]
    %v1772 = vld [vmem:[#allocation2 + $0x1f20] sm:$0xff]
    %v1773 = vld [vmem:[#allocation2 + $0x1f28] sm:$0xff]
    %v1774 = vld [vmem:[#allocation2 + $0x1f30] sm:$0xff]
    %v1775 = vld [vmem:[#allocation2 + $0x1f38] sm:$0xff]
    %v1776 = vld [vmem:[#allocation2 + $0x1f40] sm:$0xff]
    %v1777 = vld [vmem:[#allocation2 + $0x1f48] sm:$0xff]
    %v1778 = vld [vmem:[#allocation2 + $0x1f50] sm:$0xff]
    %v1779 = vld [vmem:[#allocation2 + $0x1f58] sm:$0xff]
    %v1780 = vld [vmem:[#allocation2 + $0x1f60] sm:$0xff]
    %v1781 = vld [vmem:[#allocation2 + $0x1f68] sm:$0xff]
    %v1782 = vld [vmem:[#allocation2 + $0x1f70] sm:$0xff]
    %v1783 = vld [vmem:[#allocation2 + $0x1f78] sm:$0xff]
    %v1784 = vld [vmem:[#allocation2 + $0x1f80] sm:$0xff]
    %v1785 = vld [vmem:[#allocation2 + $0x1f88] sm:$0xff]
    %v1786 = vld [vmem:[#allocation2 + $0x1f90] sm:$0xff]
    %v1787 = vld [vmem:[#allocation2 + $0x1f98] sm:$0xff]
    %v1788 = vld [vmem:[#allocation2 + $0x1fa0] sm:$0xff]
    %v1789 = vld [vmem:[#allocation2 + $0x1fa8] sm:$0xff]
    %v1790 = vld [vmem:[#allocation2 + $0x1fb0] sm:$0xff]
    %v1791 = vld [vmem:[#allocation2 + $0x1fb8] sm:$0xff]
    %v1792 = vld [vmem:[#allocation2 + $0x1fc0] sm:$0xff]
    %v1793 = vld [vmem:[#allocation2 + $0x1fc8] sm:$0xff]
    %v1794 = vld [vmem:[#allocation2 + $0x1fd0] sm:$0xff]
    %v1795 = vld [vmem:[#allocation2 + $0x1fd8] sm:$0xff]
    %v1796 = vld [vmem:[#allocation2 + $0x1fe0] sm:$0xff]
    %v1797 = vld [vmem:[#allocation2 + $0x1fe8] sm:$0xff]
    %v1798 = vld [vmem:[#allocation2 + $0x1ff0] sm:$0xff]
    %v1799 = vld [vmem:[#allocation2 + $0x1ff8] sm:$0xff]
    %v1800 = vld [vmem:[#allocation5] sm:$0xff]
    %v1801 = vld [vmem:[#allocation5 + $0x8] sm:$0xff]
    %v1802 = vld [vmem:[#allocation5 + $0x10] sm:$0xff]
    %v1803 = vld [vmem:[#allocation5 + $0x18] sm:$0xff]
    %v1808 = vlaneseq
    %v1809 = vshrl.u32 %v1808, 7
    %v1810 = vsub.s32 0, %v1809
    %v1811 = vrot.slane %v1800, %v1810
    %v1812 = vlaneseq
    %v1813 = vshrl.u32 %v1812, 7
    %v1814 = vsub.s32 1, %v1813
    %v1815 = vrot.slane %v1800, %v1814
    %v1816 = vlaneseq
    %v1817 = vshrl.u32 %v1816, 7
    %v1818 = vsub.s32 2, %v1817
    %v1819 = vrot.slane %v1800, %v1818
    %v1820 = vlaneseq
    %v1821 = vshrl.u32 %v1820, 7
    %v1822 = vsub.s32 3, %v1821
    %v1823 = vrot.slane %v1800, %v1822
    %v1824 = vlaneseq
    %v1825 = vshrl.u32 %v1824, 7
    %v1826 = vsub.s32 4, %v1825
    %v1827 = vrot.slane %v1800, %v1826
    %v1828 = vlaneseq
    %v1829 = vshrl.u32 %v1828, 7
    %v1830 = vsub.s32 5, %v1829
    %v1831 = vrot.slane %v1800, %v1830
    %v1832 = vlaneseq
    %v1833 = vshrl.u32 %v1832, 7
    %v1834 = vsub.s32 6, %v1833
    %v1835 = vrot.slane %v1800, %v1834
    %v1836 = vlaneseq
    %v1837 = vshrl.u32 %v1836, 7
    %v1838 = vsub.s32 7, %v1837
    %v1839 = vrot.slane %v1800, %v1838
    %v1840 = vlaneseq
    %v1841 = vshrl.u32 %v1840, 7
    %v1842 = vsub.s32 0, %v1841
    %v1843 = vrot.slane %v1801, %v1842
    %v1844 = vlaneseq
    %v1845 = vshrl.u32 %v1844, 7
    %v1846 = vsub.s32 1, %v1845
    %v1847 = vrot.slane %v1801, %v1846
    %v1848 = vlaneseq
    %v1849 = vshrl.u32 %v1848, 7
    %v1850 = vsub.s32 2, %v1849
    %v1851 = vrot.slane %v1801, %v1850
    %v1852 = vlaneseq
    %v1853 = vshrl.u32 %v1852, 7
    %v1854 = vsub.s32 3, %v1853
    %v1855 = vrot.slane %v1801, %v1854
    %v1856 = vlaneseq
    %v1857 = vshrl.u32 %v1856, 7
    %v1858 = vsub.s32 4, %v1857
    %v1859 = vrot.slane %v1801, %v1858
    %v1860 = vlaneseq
    %v1861 = vshrl.u32 %v1860, 7
    %v1862 = vsub.s32 5, %v1861
    %v1863 = vrot.slane %v1801, %v1862
    %v1864 = vlaneseq
    %v1865 = vshrl.u32 %v1864, 7
    %v1866 = vsub.s32 6, %v1865
    %v1867 = vrot.slane %v1801, %v1866
    %v1868 = vlaneseq
    %v1869 = vshrl.u32 %v1868, 7
    %v1870 = vsub.s32 7, %v1869
    %v1871 = vrot.slane %v1801, %v1870
    %v1872 = vlaneseq
    %v1873 = vshrl.u32 %v1872, 7
    %v1874 = vsub.s32 0, %v1873
    %v1875 = vrot.slane %v1802, %v1874
    %v1876 = vlaneseq
    %v1877 = vshrl.u32 %v1876, 7
    %v1878 = vsub.s32 1, %v1877
    %v1879 = vrot.slane %v1802, %v1878
    %v1880 = vlaneseq
    %v1881 = vshrl.u32 %v1880, 7
    %v1882 = vsub.s32 2, %v1881
    %v1883 = vrot.slane %v1802, %v1882
    %v1884 = vlaneseq
    %v1885 = vshrl.u32 %v1884, 7
    %v1886 = vsub.s32 3, %v1885
    %v1887 = vrot.slane %v1802, %v1886
    %v1888 = vlaneseq
    %v1889 = vshrl.u32 %v1888, 7
    %v1890 = vsub.s32 4, %v1889
    %v1891 = vrot.slane %v1802, %v1890
    %v1892 = vlaneseq
    %v1893 = vshrl.u32 %v1892, 7
    %v1894 = vsub.s32 5, %v1893
    %v1895 = vrot.slane %v1802, %v1894
    %v1896 = vlaneseq
    %v1897 = vshrl.u32 %v1896, 7
    %v1898 = vsub.s32 6, %v1897
    %v1899 = vrot.slane %v1802, %v1898
    %v1900 = vlaneseq
    %v1901 = vshrl.u32 %v1900, 7
    %v1902 = vsub.s32 7, %v1901
    %v1903 = vrot.slane %v1802, %v1902
    %v1904 = vlaneseq
    %v1905 = vshrl.u32 %v1904, 7
    %v1906 = vsub.s32 0, %v1905
    %v1907 = vrot.slane %v1803, %v1906
    %v1908 = vlaneseq
    %v1909 = vshrl.u32 %v1908, 7
    %v1910 = vsub.s32 1, %v1909
    %v1911 = vrot.slane %v1803, %v1910
    %v1912 = vlaneseq
    %v1913 = vshrl.u32 %v1912, 7
    %v1914 = vsub.s32 2, %v1913
    %v1915 = vrot.slane %v1803, %v1914
    %v1916 = vlaneseq
    %v1917 = vshrl.u32 %v1916, 7
    %v1918 = vsub.s32 3, %v1917
    %v1919 = vrot.slane %v1803, %v1918
    %v1920 = vlaneseq
    %v1921 = vshrl.u32 %v1920, 7
    %v1922 = vsub.s32 4, %v1921
    %v1923 = vrot.slane %v1803, %v1922
    %v1924 = vlaneseq
    %v1925 = vshrl.u32 %v1924, 7
    %v1926 = vsub.s32 5, %v1925
    %v1927 = vrot.slane %v1803, %v1926
    %v1928 = vlaneseq
    %v1929 = vshrl.u32 %v1928, 7
    %v1930 = vsub.s32 6, %v1929
    %v1931 = vrot.slane %v1803, %v1930
    %v1932 = vlaneseq
    %v1933 = vshrl.u32 %v1932, 7
    %v1934 = vsub.s32 7, %v1933
    %v1935 = vrot.slane %v1803, %v1934
    %v2032 = vunpack.c.l.b16 %v712
    %v2033 = vunpack.c.h.b16 %v712
    %v2034 = vunpack.c.l.b16 %v713
    %v2035 = vunpack.c.h.b16 %v713
    %v2036 = vunpack.c.l.b16 %v714
    %v2037 = vunpack.c.h.b16 %v714
    %v2038 = vunpack.c.l.b16 %v715
    %v2039 = vunpack.c.h.b16 %v715
    %v2040 = vunpack.c.l.b16 %v716
    %v2041 = vunpack.c.h.b16 %v716
    %v2042 = vunpack.c.l.b16 %v717
    %v2043 = vunpack.c.h.b16 %v717
    %v2044 = vunpack.c.l.b16 %v718
    %v2045 = vunpack.c.h.b16 %v718
    %v2046 = vunpack.c.l.b16 %v719
    %v2047 = vunpack.c.h.b16 %v719
    %v2048 = vunpack.c.l.b16 %v720
    %v2049 = vunpack.c.h.b16 %v720
    %v2050 = vunpack.c.l.b16 %v721
    %v2051 = vunpack.c.h.b16 %v721
    %v2052 = vunpack.c.l.b16 %v722
    %v2053 = vunpack.c.h.b16 %v722
    %v2054 = vunpack.c.l.b16 %v723
    %v2055 = vunpack.c.h.b16 %v723
    %v2056 = vunpack.c.l.b16 %v724
    %v2057 = vunpack.c.h.b16 %v724
    %v2058 = vunpack.c.l.b16 %v725
    %v2059 = vunpack.c.h.b16 %v725
    %v2060 = vunpack.c.l.b16 %v726
    %v2061 = vunpack.c.h.b16 %v726
    %v2062 = vunpack.c.l.b16 %v727
    %v2063 = vunpack.c.h.b16 %v727
    %v2064 = vunpack.c.l.b16 %v728
    %v2065 = vunpack.c.h.b16 %v728
    %v2066 = vunpack.c.l.b16 %v729
    %v2067 = vunpack.c.h.b16 %v729
    %v2068 = vunpack.c.l.b16 %v730
    %v2069 = vunpack.c.h.b16 %v730
    %v2070 = vunpack.c.l.b16 %v731
    %v2071 = vunpack.c.h.b16 %v731
    %v2072 = vunpack.c.l.b16 %v732
    %v2073 = vunpack.c.h.b16 %v732
    %v2074 = vunpack.c.l.b16 %v733
    %v2075 = vunpack.c.h.b16 %v733
    %v2076 = vunpack.c.l.b16 %v734
    %v2077 = vunpack.c.h.b16 %v734
    %v2078 = vunpack.c.l.b16 %v735
    %v2079 = vunpack.c.h.b16 %v735
    %v2080 = vunpack.c.l.b16 %v736
    %v2081 = vunpack.c.h.b16 %v736
    %v2082 = vunpack.c.l.b16 %v737
    %v2083 = vunpack.c.h.b16 %v737
    %v2084 = vunpack.c.l.b16 %v738
    %v2085 = vunpack.c.h.b16 %v738
    %v2086 = vunpack.c.l.b16 %v739
    %v2087 = vunpack.c.h.b16 %v739
    %v2088 = vunpack.c.l.b16 %v740
    %v2089 = vunpack.c.h.b16 %v740
    %v2090 = vunpack.c.l.b16 %v741
    %v2091 = vunpack.c.h.b16 %v741
    %v2092 = vunpack.c.l.b16 %v742
    %v2093 = vunpack.c.h.b16 %v742
    %v2094 = vunpack.c.l.b16 %v743
    %v2095 = vunpack.c.h.b16 %v743
    %v2096 = vunpack.c.l.b16 %v744
    %v2097 = vunpack.c.h.b16 %v744
    %v2098 = vunpack.c.l.b16 %v745
    %v2099 = vunpack.c.h.b16 %v745
    %v2100 = vunpack.c.l.b16 %v746
    %v2101 = vunpack.c.h.b16 %v746
    %v2102 = vunpack.c.l.b16 %v747
    %v2103 = vunpack.c.h.b16 %v747
    %v2104 = vunpack.c.l.b16 %v748
    %v2105 = vunpack.c.h.b16 %v748
    %v2106 = vunpack.c.l.b16 %v749
    %v2107 = vunpack.c.h.b16 %v749
    %v2108 = vunpack.c.l.b16 %v750
    %v2109 = vunpack.c.h.b16 %v750
    %v2110 = vunpack.c.l.b16 %v751
    %v2111 = vunpack.c.h.b16 %v751
    %v2112 = vunpack.c.l.b16 %v752
    %v2113 = vunpack.c.h.b16 %v752
    %v2114 = vunpack.c.l.b16 %v753
    %v2115 = vunpack.c.h.b16 %v753
    %v2116 = vunpack.c.l.b16 %v754
    %v2117 = vunpack.c.h.b16 %v754
    %v2118 = vunpack.c.l.b16 %v755
    %v2119 = vunpack.c.h.b16 %v755
    %v2120 = vunpack.c.l.b16 %v756
    %v2121 = vunpack.c.h.b16 %v756
    %v2122 = vunpack.c.l.b16 %v757
    %v2123 = vunpack.c.h.b16 %v757
    %v2124 = vunpack.c.l.b16 %v758
    %v2125 = vunpack.c.h.b16 %v758
    %v2126 = vunpack.c.l.b16 %v759
    %v2127 = vunpack.c.h.b16 %v759
    %v2128 = vunpack.c.l.b16 %v760
    %v2129 = vunpack.c.h.b16 %v760
    %v2130 = vunpack.c.l.b16 %v761
    %v2131 = vunpack.c.h.b16 %v761
    %v2132 = vunpack.c.l.b16 %v762
    %v2133 = vunpack.c.h.b16 %v762
    %v2134 = vunpack.c.l.b16 %v763
    %v2135 = vunpack.c.h.b16 %v763
    %v2136 = vunpack.c.l.b16 %v764
    %v2137 = vunpack.c.h.b16 %v764
    %v2138 = vunpack.c.l.b16 %v765
    %v2139 = vunpack.c.h.b16 %v765
    %v2140 = vunpack.c.l.b16 %v766
    %v2141 = vunpack.c.h.b16 %v766
    %v2142 = vunpack.c.l.b16 %v767
    %v2143 = vunpack.c.h.b16 %v767
    %v2144 = vunpack.c.l.b16 %v768
    %v2145 = vunpack.c.h.b16 %v768
    %v2146 = vunpack.c.l.b16 %v769
    %v2147 = vunpack.c.h.b16 %v769
    %v2148 = vunpack.c.l.b16 %v770
    %v2149 = vunpack.c.h.b16 %v770
    %v2150 = vunpack.c.l.b16 %v771
    %v2151 = vunpack.c.h.b16 %v771
    %v2152 = vunpack.c.l.b16 %v772
    %v2153 = vunpack.c.h.b16 %v772
    %v2154 = vunpack.c.l.b16 %v773
    %v2155 = vunpack.c.h.b16 %v773
    %v2156 = vunpack.c.l.b16 %v774
    %v2157 = vunpack.c.h.b16 %v774
    %v2158 = vunpack.c.l.b16 %v775
    %v2159 = vunpack.c.h.b16 %v775
    %v2160 = vlaneseq
    %v2161 = vand.u32 %v2160, 127
    %v2162 = vlaneseq
    %v2163 = vshrl.u32 %v2162, 7
    %v2164 = vsub.s32 %v2161, %v2163
    %v2165 = vrot.slane %v2032, %v2164
    %v2166 = vadd.s32 %v2161, 4294967288
    %v2167 = vlaneseq
    %v2168 = vshrl.u32 %v2167, 7
    %v2169 = vsub.s32 %v2166, %v2168
    %v2170 = vrot.slane %v2033, %v2169
    %vm2171 = vcmask 130112
    %v2172 = vsel %vm2171, %v2170, %v2165
    %v2173 = vadd.s32 %v2161, 4294967280
    %v2174 = vlaneseq
    %v2175 = vshrl.u32 %v2174, 7
    %v2176 = vsub.s32 %v2173, %v2175
    %v2177 = vrot.slane %v2034, %v2176
    %vm2178 = vcmask 195712
    %v2179 = vsel %vm2178, %v2177, %v2172
    %v2180 = vadd.s32 %v2161, 4294967272
    %v2181 = vlaneseq
    %v2182 = vshrl.u32 %v2181, 7
    %v2183 = vsub.s32 %v2180, %v2182
    %v2184 = vrot.slane %v2035, %v2183
    %vm2185 = vcmask 261312
    %v2186 = vsel %vm2185, %v2184, %v2179
    %v2187 = vadd.s32 %v2161, 4294967264
    %v2188 = vlaneseq
    %v2189 = vshrl.u32 %v2188, 7
    %v2190 = vsub.s32 %v2187, %v2189
    %v2191 = vrot.slane %v2036, %v2190
    %vm2192 = vcmask 326912
    %v2193 = vsel %vm2192, %v2191, %v2186
    %v2194 = vadd.s32 %v2161, 4294967256
    %v2195 = vlaneseq
    %v2196 = vshrl.u32 %v2195, 7
    %v2197 = vsub.s32 %v2194, %v2196
    %v2198 = vrot.slane %v2037, %v2197
    %vm2199 = vcmask 392512
    %v2200 = vsel %vm2199, %v2198, %v2193
    %v2201 = vadd.s32 %v2161, 4294967248
    %v2202 = vlaneseq
    %v2203 = vshrl.u32 %v2202, 7
    %v2204 = vsub.s32 %v2201, %v2203
    %v2205 = vrot.slane %v2038, %v2204
    %vm2206 = vcmask 458112
    %v2207 = vsel %vm2206, %v2205, %v2200
    %v2208 = vadd.s32 %v2161, 4294967240
    %v2209 = vlaneseq
    %v2210 = vshrl.u32 %v2209, 7
    %v2211 = vsub.s32 %v2208, %v2210
    %v2212 = vrot.slane %v2039, %v2211
    %vm2213 = vcmask 523712
    %v2214 = vsel %vm2213, %v2212, %v2207
    %v2215 = vadd.s32 %v2161, 4294967232
    %v2216 = vlaneseq
    %v2217 = vshrl.u32 %v2216, 7
    %v2218 = vsub.s32 %v2215, %v2217
    %v2219 = vrot.slane %v2040, %v2218
    %vm2220 = vcmask 589312
    %v2221 = vsel %vm2220, %v2219, %v2214
    %v2222 = vadd.s32 %v2161, 4294967224
    %v2223 = vlaneseq
    %v2224 = vshrl.u32 %v2223, 7
    %v2225 = vsub.s32 %v2222, %v2224
    %v2226 = vrot.slane %v2041, %v2225
    %vm2227 = vcmask 654912
    %v2228 = vsel %vm2227, %v2226, %v2221
    %v2229 = vadd.s32 %v2161, 4294967216
    %v2230 = vlaneseq
    %v2231 = vshrl.u32 %v2230, 7
    %v2232 = vsub.s32 %v2229, %v2231
    %v2233 = vrot.slane %v2042, %v2232
    %vm2234 = vcmask 720512
    %v2235 = vsel %vm2234, %v2233, %v2228
    %v2236 = vadd.s32 %v2161, 4294967208
    %v2237 = vlaneseq
    %v2238 = vshrl.u32 %v2237, 7
    %v2239 = vsub.s32 %v2236, %v2238
    %v2240 = vrot.slane %v2043, %v2239
    %vm2241 = vcmask 786112
    %v2242 = vsel %vm2241, %v2240, %v2235
    %v2243 = vadd.s32 %v2161, 4294967200
    %v2244 = vlaneseq
    %v2245 = vshrl.u32 %v2244, 7
    %v2246 = vsub.s32 %v2243, %v2245
    %v2247 = vrot.slane %v2044, %v2246
    %vm2248 = vcmask 851712
    %v2249 = vsel %vm2248, %v2247, %v2242
    %v2250 = vadd.s32 %v2161, 4294967192
    %v2251 = vlaneseq
    %v2252 = vshrl.u32 %v2251, 7
    %v2253 = vsub.s32 %v2250, %v2252
    %v2254 = vrot.slane %v2045, %v2253
    %vm2255 = vcmask 917312
    %v2256 = vsel %vm2255, %v2254, %v2249
    %v2257 = vadd.s32 %v2161, 4294967184
    %v2258 = vlaneseq
    %v2259 = vshrl.u32 %v2258, 7
    %v2260 = vsub.s32 %v2257, %v2259
    %v2261 = vrot.slane %v2046, %v2260
    %vm2262 = vcmask 982912
    %v2263 = vsel %vm2262, %v2261, %v2256
    %v2264 = vadd.s32 %v2161, 4294967176
    %v2265 = vlaneseq
    %v2266 = vshrl.u32 %v2265, 7
    %v2267 = vsub.s32 %v2264, %v2266
    %v2268 = vrot.slane %v2047, %v2267
    %vm2269 = vcmask 1048512
    %v2270 = vsel %vm2269, %v2268, %v2263
    %v2271 = vlaneseq
    %v2272 = vshrl.u32 %v2271, 7
    %v2273 = vsub.s32 %v2161, %v2272
    %v2274 = vrot.slane %v2048, %v2273
    %v2275 = vlaneseq
    %v2276 = vshrl.u32 %v2275, 7
    %v2277 = vsub.s32 %v2166, %v2276
    %v2278 = vrot.slane %v2049, %v2277
    %v2279 = vsel %vm2171, %v2278, %v2274
    %v2280 = vlaneseq
    %v2281 = vshrl.u32 %v2280, 7
    %v2282 = vsub.s32 %v2173, %v2281
    %v2283 = vrot.slane %v2050, %v2282
    %v2284 = vsel %vm2178, %v2283, %v2279
    %v2285 = vlaneseq
    %v2286 = vshrl.u32 %v2285, 7
    %v2287 = vsub.s32 %v2180, %v2286
    %v2288 = vrot.slane %v2051, %v2287
    %v2289 = vsel %vm2185, %v2288, %v2284
    %v2290 = vlaneseq
    %v2291 = vshrl.u32 %v2290, 7
    %v2292 = vsub.s32 %v2187, %v2291
    %v2293 = vrot.slane %v2052, %v2292
    %v2294 = vsel %vm2192, %v2293, %v2289
    %v2295 = vlaneseq
    %v2296 = vshrl.u32 %v2295, 7
    %v2297 = vsub.s32 %v2194, %v2296
    %v2298 = vrot.slane %v2053, %v2297
    %v2299 = vsel %vm2199, %v2298, %v2294
    %v2300 = vlaneseq
    %v2301 = vshrl.u32 %v2300, 7
    %v2302 = vsub.s32 %v2201, %v2301
    %v2303 = vrot.slane %v2054, %v2302
    %v2304 = vsel %vm2206, %v2303, %v2299
    %v2305 = vlaneseq
    %v2306 = vshrl.u32 %v2305, 7
    %v2307 = vsub.s32 %v2208, %v2306
    %v2308 = vrot.slane %v2055, %v2307
    %v2309 = vsel %vm2213, %v2308, %v2304
    %v2310 = vlaneseq
    %v2311 = vshrl.u32 %v2310, 7
    %v2312 = vsub.s32 %v2215, %v2311
    %v2313 = vrot.slane %v2056, %v2312
    %v2314 = vsel %vm2220, %v2313, %v2309
    %v2315 = vlaneseq
    %v2316 = vshrl.u32 %v2315, 7
    %v2317 = vsub.s32 %v2222, %v2316
    %v2318 = vrot.slane %v2057, %v2317
    %v2319 = vsel %vm2227, %v2318, %v2314
    %v2320 = vlaneseq
    %v2321 = vshrl.u32 %v2320, 7
    %v2322 = vsub.s32 %v2229, %v2321
    %v2323 = vrot.slane %v2058, %v2322
    %v2324 = vsel %vm2234, %v2323, %v2319
    %v2325 = vlaneseq
    %v2326 = vshrl.u32 %v2325, 7
    %v2327 = vsub.s32 %v2236, %v2326
    %v2328 = vrot.slane %v2059, %v2327
    %v2329 = vsel %vm2241, %v2328, %v2324
    %v2330 = vlaneseq
    %v2331 = vshrl.u32 %v2330, 7
    %v2332 = vsub.s32 %v2243, %v2331
    %v2333 = vrot.slane %v2060, %v2332
    %v2334 = vsel %vm2248, %v2333, %v2329
    %v2335 = vlaneseq
    %v2336 = vshrl.u32 %v2335, 7
    %v2337 = vsub.s32 %v2250, %v2336
    %v2338 = vrot.slane %v2061, %v2337
    %v2339 = vsel %vm2255, %v2338, %v2334
    %v2340 = vlaneseq
    %v2341 = vshrl.u32 %v2340, 7
    %v2342 = vsub.s32 %v2257, %v2341
    %v2343 = vrot.slane %v2062, %v2342
    %v2344 = vsel %vm2262, %v2343, %v2339
    %v2345 = vlaneseq
    %v2346 = vshrl.u32 %v2345, 7
    %v2347 = vsub.s32 %v2264, %v2346
    %v2348 = vrot.slane %v2063, %v2347
    %v2349 = vsel %vm2269, %v2348, %v2344
    %v2350 = vlaneseq
    %v2351 = vshrl.u32 %v2350, 7
    %v2352 = vsub.s32 %v2161, %v2351
    %v2353 = vrot.slane %v2064, %v2352
    %v2354 = vlaneseq
    %v2355 = vshrl.u32 %v2354, 7
    %v2356 = vsub.s32 %v2166, %v2355
    %v2357 = vrot.slane %v2065, %v2356
    %v2358 = vsel %vm2171, %v2357, %v2353
    %v2359 = vlaneseq
    %v2360 = vshrl.u32 %v2359, 7
    %v2361 = vsub.s32 %v2173, %v2360
    %v2362 = vrot.slane %v2066, %v2361
    %v2363 = vsel %vm2178, %v2362, %v2358
    %v2364 = vlaneseq
    %v2365 = vshrl.u32 %v2364, 7
    %v2366 = vsub.s32 %v2180, %v2365
    %v2367 = vrot.slane %v2067, %v2366
    %v2368 = vsel %vm2185, %v2367, %v2363
    %v2369 = vlaneseq
    %v2370 = vshrl.u32 %v2369, 7
    %v2371 = vsub.s32 %v2187, %v2370
    %v2372 = vrot.slane %v2068, %v2371
    %v2373 = vsel %vm2192, %v2372, %v2368
    %v2374 = vlaneseq
    %v2375 = vshrl.u32 %v2374, 7
    %v2376 = vsub.s32 %v2194, %v2375
    %v2377 = vrot.slane %v2069, %v2376
    %v2378 = vsel %vm2199, %v2377, %v2373
    %v2379 = vlaneseq
    %v2380 = vshrl.u32 %v2379, 7
    %v2381 = vsub.s32 %v2201, %v2380
    %v2382 = vrot.slane %v2070, %v2381
    %v2383 = vsel %vm2206, %v2382, %v2378
    %v2384 = vlaneseq
    %v2385 = vshrl.u32 %v2384, 7
    %v2386 = vsub.s32 %v2208, %v2385
    %v2387 = vrot.slane %v2071, %v2386
    %v2388 = vsel %vm2213, %v2387, %v2383
    %v2389 = vlaneseq
    %v2390 = vshrl.u32 %v2389, 7
    %v2391 = vsub.s32 %v2215, %v2390
    %v2392 = vrot.slane %v2072, %v2391
    %v2393 = vsel %vm2220, %v2392, %v2388
    %v2394 = vlaneseq
    %v2395 = vshrl.u32 %v2394, 7
    %v2396 = vsub.s32 %v2222, %v2395
    %v2397 = vrot.slane %v2073, %v2396
    %v2398 = vsel %vm2227, %v2397, %v2393
    %v2399 = vlaneseq
    %v2400 = vshrl.u32 %v2399, 7
    %v2401 = vsub.s32 %v2229, %v2400
    %v2402 = vrot.slane %v2074, %v2401
    %v2403 = vsel %vm2234, %v2402, %v2398
    %v2404 = vlaneseq
    %v2405 = vshrl.u32 %v2404, 7
    %v2406 = vsub.s32 %v2236, %v2405
    %v2407 = vrot.slane %v2075, %v2406
    %v2408 = vsel %vm2241, %v2407, %v2403
    %v2409 = vlaneseq
    %v2410 = vshrl.u32 %v2409, 7
    %v2411 = vsub.s32 %v2243, %v2410
    %v2412 = vrot.slane %v2076, %v2411
    %v2413 = vsel %vm2248, %v2412, %v2408
    %v2414 = vlaneseq
    %v2415 = vshrl.u32 %v2414, 7
    %v2416 = vsub.s32 %v2250, %v2415
    %v2417 = vrot.slane %v2077, %v2416
    %v2418 = vsel %vm2255, %v2417, %v2413
    %v2419 = vlaneseq
    %v2420 = vshrl.u32 %v2419, 7
    %v2421 = vsub.s32 %v2257, %v2420
    %v2422 = vrot.slane %v2078, %v2421
    %v2423 = vsel %vm2262, %v2422, %v2418
    %v2424 = vlaneseq
    %v2425 = vshrl.u32 %v2424, 7
    %v2426 = vsub.s32 %v2264, %v2425
    %v2427 = vrot.slane %v2079, %v2426
    %v2428 = vsel %vm2269, %v2427, %v2423
    %v2429 = vlaneseq
    %v2430 = vshrl.u32 %v2429, 7
    %v2431 = vsub.s32 %v2161, %v2430
    %v2432 = vrot.slane %v2080, %v2431
    %v2433 = vlaneseq
    %v2434 = vshrl.u32 %v2433, 7
    %v2435 = vsub.s32 %v2166, %v2434
    %v2436 = vrot.slane %v2081, %v2435
    %v2437 = vsel %vm2171, %v2436, %v2432
    %v2438 = vlaneseq
    %v2439 = vshrl.u32 %v2438, 7
    %v2440 = vsub.s32 %v2173, %v2439
    %v2441 = vrot.slane %v2082, %v2440
    %v2442 = vsel %vm2178, %v2441, %v2437
    %v2443 = vlaneseq
    %v2444 = vshrl.u32 %v2443, 7
    %v2445 = vsub.s32 %v2180, %v2444
    %v2446 = vrot.slane %v2083, %v2445
    %v2447 = vsel %vm2185, %v2446, %v2442
    %v2448 = vlaneseq
    %v2449 = vshrl.u32 %v2448, 7
    %v2450 = vsub.s32 %v2187, %v2449
    %v2451 = vrot.slane %v2084, %v2450
    %v2452 = vsel %vm2192, %v2451, %v2447
    %v2453 = vlaneseq
    %v2454 = vshrl.u32 %v2453, 7
    %v2455 = vsub.s32 %v2194, %v2454
    %v2456 = vrot.slane %v2085, %v2455
    %v2457 = vsel %vm2199, %v2456, %v2452
    %v2458 = vlaneseq
    %v2459 = vshrl.u32 %v2458, 7
    %v2460 = vsub.s32 %v2201, %v2459
    %v2461 = vrot.slane %v2086, %v2460
    %v2462 = vsel %vm2206, %v2461, %v2457
    %v2463 = vlaneseq
    %v2464 = vshrl.u32 %v2463, 7
    %v2465 = vsub.s32 %v2208, %v2464
    %v2466 = vrot.slane %v2087, %v2465
    %v2467 = vsel %vm2213, %v2466, %v2462
    %v2468 = vlaneseq
    %v2469 = vshrl.u32 %v2468, 7
    %v2470 = vsub.s32 %v2215, %v2469
    %v2471 = vrot.slane %v2088, %v2470
    %v2472 = vsel %vm2220, %v2471, %v2467
    %v2473 = vlaneseq
    %v2474 = vshrl.u32 %v2473, 7
    %v2475 = vsub.s32 %v2222, %v2474
    %v2476 = vrot.slane %v2089, %v2475
    %v2477 = vsel %vm2227, %v2476, %v2472
    %v2478 = vlaneseq
    %v2479 = vshrl.u32 %v2478, 7
    %v2480 = vsub.s32 %v2229, %v2479
    %v2481 = vrot.slane %v2090, %v2480
    %v2482 = vsel %vm2234, %v2481, %v2477
    %v2483 = vlaneseq
    %v2484 = vshrl.u32 %v2483, 7
    %v2485 = vsub.s32 %v2236, %v2484
    %v2486 = vrot.slane %v2091, %v2485
    %v2487 = vsel %vm2241, %v2486, %v2482
    %v2488 = vlaneseq
    %v2489 = vshrl.u32 %v2488, 7
    %v2490 = vsub.s32 %v2243, %v2489
    %v2491 = vrot.slane %v2092, %v2490
    %v2492 = vsel %vm2248, %v2491, %v2487
    %v2493 = vlaneseq
    %v2494 = vshrl.u32 %v2493, 7
    %v2495 = vsub.s32 %v2250, %v2494
    %v2496 = vrot.slane %v2093, %v2495
    %v2497 = vsel %vm2255, %v2496, %v2492
    %v2498 = vlaneseq
    %v2499 = vshrl.u32 %v2498, 7
    %v2500 = vsub.s32 %v2257, %v2499
    %v2501 = vrot.slane %v2094, %v2500
    %v2502 = vsel %vm2262, %v2501, %v2497
    %v2503 = vlaneseq
    %v2504 = vshrl.u32 %v2503, 7
    %v2505 = vsub.s32 %v2264, %v2504
    %v2506 = vrot.slane %v2095, %v2505
    %v2507 = vsel %vm2269, %v2506, %v2502
    %v2508 = vlaneseq
    %v2509 = vshrl.u32 %v2508, 7
    %v2510 = vsub.s32 %v2161, %v2509
    %v2511 = vrot.slane %v2096, %v2510
    %v2512 = vlaneseq
    %v2513 = vshrl.u32 %v2512, 7
    %v2514 = vsub.s32 %v2166, %v2513
    %v2515 = vrot.slane %v2097, %v2514
    %v2516 = vsel %vm2171, %v2515, %v2511
    %v2517 = vlaneseq
    %v2518 = vshrl.u32 %v2517, 7
    %v2519 = vsub.s32 %v2173, %v2518
    %v2520 = vrot.slane %v2098, %v2519
    %v2521 = vsel %vm2178, %v2520, %v2516
    %v2522 = vlaneseq
    %v2523 = vshrl.u32 %v2522, 7
    %v2524 = vsub.s32 %v2180, %v2523
    %v2525 = vrot.slane %v2099, %v2524
    %v2526 = vsel %vm2185, %v2525, %v2521
    %v2527 = vlaneseq
    %v2528 = vshrl.u32 %v2527, 7
    %v2529 = vsub.s32 %v2187, %v2528
    %v2530 = vrot.slane %v2100, %v2529
    %v2531 = vsel %vm2192, %v2530, %v2526
    %v2532 = vlaneseq
    %v2533 = vshrl.u32 %v2532, 7
    %v2534 = vsub.s32 %v2194, %v2533
    %v2535 = vrot.slane %v2101, %v2534
    %v2536 = vsel %vm2199, %v2535, %v2531
    %v2537 = vlaneseq
    %v2538 = vshrl.u32 %v2537, 7
    %v2539 = vsub.s32 %v2201, %v2538
    %v2540 = vrot.slane %v2102, %v2539
    %v2541 = vsel %vm2206, %v2540, %v2536
    %v2542 = vlaneseq
    %v2543 = vshrl.u32 %v2542, 7
    %v2544 = vsub.s32 %v2208, %v2543
    %v2545 = vrot.slane %v2103, %v2544
    %v2546 = vsel %vm2213, %v2545, %v2541
    %v2547 = vlaneseq
    %v2548 = vshrl.u32 %v2547, 7
    %v2549 = vsub.s32 %v2215, %v2548
    %v2550 = vrot.slane %v2104, %v2549
    %v2551 = vsel %vm2220, %v2550, %v2546
    %v2552 = vlaneseq
    %v2553 = vshrl.u32 %v2552, 7
    %v2554 = vsub.s32 %v2222, %v2553
    %v2555 = vrot.slane %v2105, %v2554
    %v2556 = vsel %vm2227, %v2555, %v2551
    %v2557 = vlaneseq
    %v2558 = vshrl.u32 %v2557, 7
    %v2559 = vsub.s32 %v2229, %v2558
    %v2560 = vrot.slane %v2106, %v2559
    %v2561 = vsel %vm2234, %v2560, %v2556
    %v2562 = vlaneseq
    %v2563 = vshrl.u32 %v2562, 7
    %v2564 = vsub.s32 %v2236, %v2563
    %v2565 = vrot.slane %v2107, %v2564
    %v2566 = vsel %vm2241, %v2565, %v2561
    %v2567 = vlaneseq
    %v2568 = vshrl.u32 %v2567, 7
    %v2569 = vsub.s32 %v2243, %v2568
    %v2570 = vrot.slane %v2108, %v2569
    %v2571 = vsel %vm2248, %v2570, %v2566
    %v2572 = vlaneseq
    %v2573 = vshrl.u32 %v2572, 7
    %v2574 = vsub.s32 %v2250, %v2573
    %v2575 = vrot.slane %v2109, %v2574
    %v2576 = vsel %vm2255, %v2575, %v2571
    %v2577 = vlaneseq
    %v2578 = vshrl.u32 %v2577, 7
    %v2579 = vsub.s32 %v2257, %v2578
    %v2580 = vrot.slane %v2110, %v2579
    %v2581 = vsel %vm2262, %v2580, %v2576
    %v2582 = vlaneseq
    %v2583 = vshrl.u32 %v2582, 7
    %v2584 = vsub.s32 %v2264, %v2583
    %v2585 = vrot.slane %v2111, %v2584
    %v2586 = vsel %vm2269, %v2585, %v2581
    %v2587 = vlaneseq
    %v2588 = vshrl.u32 %v2587, 7
    %v2589 = vsub.s32 %v2161, %v2588
    %v2590 = vrot.slane %v2112, %v2589
    %v2591 = vlaneseq
    %v2592 = vshrl.u32 %v2591, 7
    %v2593 = vsub.s32 %v2166, %v2592
    %v2594 = vrot.slane %v2113, %v2593
    %v2595 = vsel %vm2171, %v2594, %v2590
    %v2596 = vlaneseq
    %v2597 = vshrl.u32 %v2596, 7
    %v2598 = vsub.s32 %v2173, %v2597
    %v2599 = vrot.slane %v2114, %v2598
    %v2600 = vsel %vm2178, %v2599, %v2595
    %v2601 = vlaneseq
    %v2602 = vshrl.u32 %v2601, 7
    %v2603 = vsub.s32 %v2180, %v2602
    %v2604 = vrot.slane %v2115, %v2603
    %v2605 = vsel %vm2185, %v2604, %v2600
    %v2606 = vlaneseq
    %v2607 = vshrl.u32 %v2606, 7
    %v2608 = vsub.s32 %v2187, %v2607
    %v2609 = vrot.slane %v2116, %v2608
    %v2610 = vsel %vm2192, %v2609, %v2605
    %v2611 = vlaneseq
    %v2612 = vshrl.u32 %v2611, 7
    %v2613 = vsub.s32 %v2194, %v2612
    %v2614 = vrot.slane %v2117, %v2613
    %v2615 = vsel %vm2199, %v2614, %v2610
    %v2616 = vlaneseq
    %v2617 = vshrl.u32 %v2616, 7
    %v2618 = vsub.s32 %v2201, %v2617
    %v2619 = vrot.slane %v2118, %v2618
    %v2620 = vsel %vm2206, %v2619, %v2615
    %v2621 = vlaneseq
    %v2622 = vshrl.u32 %v2621, 7
    %v2623 = vsub.s32 %v2208, %v2622
    %v2624 = vrot.slane %v2119, %v2623
    %v2625 = vsel %vm2213, %v2624, %v2620
    %v2626 = vlaneseq
    %v2627 = vshrl.u32 %v2626, 7
    %v2628 = vsub.s32 %v2215, %v2627
    %v2629 = vrot.slane %v2120, %v2628
    %v2630 = vsel %vm2220, %v2629, %v2625
    %v2631 = vlaneseq
    %v2632 = vshrl.u32 %v2631, 7
    %v2633 = vsub.s32 %v2222, %v2632
    %v2634 = vrot.slane %v2121, %v2633
    %v2635 = vsel %vm2227, %v2634, %v2630
    %v2636 = vlaneseq
    %v2637 = vshrl.u32 %v2636, 7
    %v2638 = vsub.s32 %v2229, %v2637
    %v2639 = vrot.slane %v2122, %v2638
    %v2640 = vsel %vm2234, %v2639, %v2635
    %v2641 = vlaneseq
    %v2642 = vshrl.u32 %v2641, 7
    %v2643 = vsub.s32 %v2236, %v2642
    %v2644 = vrot.slane %v2123, %v2643
    %v2645 = vsel %vm2241, %v2644, %v2640
    %v2646 = vlaneseq
    %v2647 = vshrl.u32 %v2646, 7
    %v2648 = vsub.s32 %v2243, %v2647
    %v2649 = vrot.slane %v2124, %v2648
    %v2650 = vsel %vm2248, %v2649, %v2645
    %v2651 = vlaneseq
    %v2652 = vshrl.u32 %v2651, 7
    %v2653 = vsub.s32 %v2250, %v2652
    %v2654 = vrot.slane %v2125, %v2653
    %v2655 = vsel %vm2255, %v2654, %v2650
    %v2656 = vlaneseq
    %v2657 = vshrl.u32 %v2656, 7
    %v2658 = vsub.s32 %v2257, %v2657
    %v2659 = vrot.slane %v2126, %v2658
    %v2660 = vsel %vm2262, %v2659, %v2655
    %v2661 = vlaneseq
    %v2662 = vshrl.u32 %v2661, 7
    %v2663 = vsub.s32 %v2264, %v2662
    %v2664 = vrot.slane %v2127, %v2663
    %v2665 = vsel %vm2269, %v2664, %v2660
    %v2666 = vlaneseq
    %v2667 = vshrl.u32 %v2666, 7
    %v2668 = vsub.s32 %v2161, %v2667
    %v2669 = vrot.slane %v2128, %v2668
    %v2670 = vlaneseq
    %v2671 = vshrl.u32 %v2670, 7
    %v2672 = vsub.s32 %v2166, %v2671
    %v2673 = vrot.slane %v2129, %v2672
    %v2674 = vsel %vm2171, %v2673, %v2669
    %v2675 = vlaneseq
    %v2676 = vshrl.u32 %v2675, 7
    %v2677 = vsub.s32 %v2173, %v2676
    %v2678 = vrot.slane %v2130, %v2677
    %v2679 = vsel %vm2178, %v2678, %v2674
    %v2680 = vlaneseq
    %v2681 = vshrl.u32 %v2680, 7
    %v2682 = vsub.s32 %v2180, %v2681
    %v2683 = vrot.slane %v2131, %v2682
    %v2684 = vsel %vm2185, %v2683, %v2679
    %v2685 = vlaneseq
    %v2686 = vshrl.u32 %v2685, 7
    %v2687 = vsub.s32 %v2187, %v2686
    %v2688 = vrot.slane %v2132, %v2687
    %v2689 = vsel %vm2192, %v2688, %v2684
    %v2690 = vlaneseq
    %v2691 = vshrl.u32 %v2690, 7
    %v2692 = vsub.s32 %v2194, %v2691
    %v2693 = vrot.slane %v2133, %v2692
    %v2694 = vsel %vm2199, %v2693, %v2689
    %v2695 = vlaneseq
    %v2696 = vshrl.u32 %v2695, 7
    %v2697 = vsub.s32 %v2201, %v2696
    %v2698 = vrot.slane %v2134, %v2697
    %v2699 = vsel %vm2206, %v2698, %v2694
    %v2700 = vlaneseq
    %v2701 = vshrl.u32 %v2700, 7
    %v2702 = vsub.s32 %v2208, %v2701
    %v2703 = vrot.slane %v2135, %v2702
    %v2704 = vsel %vm2213, %v2703, %v2699
    %v2705 = vlaneseq
    %v2706 = vshrl.u32 %v2705, 7
    %v2707 = vsub.s32 %v2215, %v2706
    %v2708 = vrot.slane %v2136, %v2707
    %v2709 = vsel %vm2220, %v2708, %v2704
    %v2710 = vlaneseq
    %v2711 = vshrl.u32 %v2710, 7
    %v2712 = vsub.s32 %v2222, %v2711
    %v2713 = vrot.slane %v2137, %v2712
    %v2714 = vsel %vm2227, %v2713, %v2709
    %v2715 = vlaneseq
    %v2716 = vshrl.u32 %v2715, 7
    %v2717 = vsub.s32 %v2229, %v2716
    %v2718 = vrot.slane %v2138, %v2717
    %v2719 = vsel %vm2234, %v2718, %v2714
    %v2720 = vlaneseq
    %v2721 = vshrl.u32 %v2720, 7
    %v2722 = vsub.s32 %v2236, %v2721
    %v2723 = vrot.slane %v2139, %v2722
    %v2724 = vsel %vm2241, %v2723, %v2719
    %v2725 = vlaneseq
    %v2726 = vshrl.u32 %v2725, 7
    %v2727 = vsub.s32 %v2243, %v2726
    %v2728 = vrot.slane %v2140, %v2727
    %v2729 = vsel %vm2248, %v2728, %v2724
    %v2730 = vlaneseq
    %v2731 = vshrl.u32 %v2730, 7
    %v2732 = vsub.s32 %v2250, %v2731
    %v2733 = vrot.slane %v2141, %v2732
    %v2734 = vsel %vm2255, %v2733, %v2729
    %v2735 = vlaneseq
    %v2736 = vshrl.u32 %v2735, 7
    %v2737 = vsub.s32 %v2257, %v2736
    %v2738 = vrot.slane %v2142, %v2737
    %v2739 = vsel %vm2262, %v2738, %v2734
    %v2740 = vlaneseq
    %v2741 = vshrl.u32 %v2740, 7
    %v2742 = vsub.s32 %v2264, %v2741
    %v2743 = vrot.slane %v2143, %v2742
    %v2744 = vsel %vm2269, %v2743, %v2739
    %v2745 = vlaneseq
    %v2746 = vshrl.u32 %v2745, 7
    %v2747 = vsub.s32 %v2161, %v2746
    %v2748 = vrot.slane %v2144, %v2747
    %v2749 = vlaneseq
    %v2750 = vshrl.u32 %v2749, 7
    %v2751 = vsub.s32 %v2166, %v2750
    %v2752 = vrot.slane %v2145, %v2751
    %v2753 = vsel %vm2171, %v2752, %v2748
    %v2754 = vlaneseq
    %v2755 = vshrl.u32 %v2754, 7
    %v2756 = vsub.s32 %v2173, %v2755
    %v2757 = vrot.slane %v2146, %v2756
    %v2758 = vsel %vm2178, %v2757, %v2753
    %v2759 = vlaneseq
    %v2760 = vshrl.u32 %v2759, 7
    %v2761 = vsub.s32 %v2180, %v2760
    %v2762 = vrot.slane %v2147, %v2761
    %v2763 = vsel %vm2185, %v2762, %v2758
    %v2764 = vlaneseq
    %v2765 = vshrl.u32 %v2764, 7
    %v2766 = vsub.s32 %v2187, %v2765
    %v2767 = vrot.slane %v2148, %v2766
    %v2768 = vsel %vm2192, %v2767, %v2763
    %v2769 = vlaneseq
    %v2770 = vshrl.u32 %v2769, 7
    %v2771 = vsub.s32 %v2194, %v2770
    %v2772 = vrot.slane %v2149, %v2771
    %v2773 = vsel %vm2199, %v2772, %v2768
    %v2774 = vlaneseq
    %v2775 = vshrl.u32 %v2774, 7
    %v2776 = vsub.s32 %v2201, %v2775
    %v2777 = vrot.slane %v2150, %v2776
    %v2778 = vsel %vm2206, %v2777, %v2773
    %v2779 = vlaneseq
    %v2780 = vshrl.u32 %v2779, 7
    %v2781 = vsub.s32 %v2208, %v2780
    %v2782 = vrot.slane %v2151, %v2781
    %v2783 = vsel %vm2213, %v2782, %v2778
    %v2784 = vlaneseq
    %v2785 = vshrl.u32 %v2784, 7
    %v2786 = vsub.s32 %v2215, %v2785
    %v2787 = vrot.slane %v2152, %v2786
    %v2788 = vsel %vm2220, %v2787, %v2783
    %v2789 = vlaneseq
    %v2790 = vshrl.u32 %v2789, 7
    %v2791 = vsub.s32 %v2222, %v2790
    %v2792 = vrot.slane %v2153, %v2791
    %v2793 = vsel %vm2227, %v2792, %v2788
    %v2794 = vlaneseq
    %v2795 = vshrl.u32 %v2794, 7
    %v2796 = vsub.s32 %v2229, %v2795
    %v2797 = vrot.slane %v2154, %v2796
    %v2798 = vsel %vm2234, %v2797, %v2793
    %v2799 = vlaneseq
    %v2800 = vshrl.u32 %v2799, 7
    %v2801 = vsub.s32 %v2236, %v2800
    %v2802 = vrot.slane %v2155, %v2801
    %v2803 = vsel %vm2241, %v2802, %v2798
    %v2804 = vlaneseq
    %v2805 = vshrl.u32 %v2804, 7
    %v2806 = vsub.s32 %v2243, %v2805
    %v2807 = vrot.slane %v2156, %v2806
    %v2808 = vsel %vm2248, %v2807, %v2803
    %v2809 = vlaneseq
    %v2810 = vshrl.u32 %v2809, 7
    %v2811 = vsub.s32 %v2250, %v2810
    %v2812 = vrot.slane %v2157, %v2811
    %v2813 = vsel %vm2255, %v2812, %v2808
    %v2814 = vlaneseq
    %v2815 = vshrl.u32 %v2814, 7
    %v2816 = vsub.s32 %v2257, %v2815
    %v2817 = vrot.slane %v2158, %v2816
    %v2818 = vsel %vm2262, %v2817, %v2813
    %v2819 = vlaneseq
    %v2820 = vshrl.u32 %v2819, 7
    %v2821 = vsub.s32 %v2264, %v2820
    %v2822 = vrot.slane %v2159, %v2821
    %v2823 = vsel %vm2269, %v2822, %v2818
    %vm2824 = vcmask 1041409
    %v2825 = vsel %vm2824, %v2586, %v2270
    %v2826 = vsel %vm2824, %v2665, %v2349
    %v2827 = vsel %vm2824, %v2744, %v2428
    %v2828 = vsel %vm2824, %v2823, %v2507
    %v2829 = vpack.c.b16 %v2825, %v2825
    %v2830 = vpack.c.b16 %v2826, %v2826
    %v2831 = vpack.c.b16 %v2827, %v2827
    %v2832 = vpack.c.b16 %v2828, %v2828
    %v3861 = vunpack.c.l.b16 %v776
    %v3862 = vunpack.c.h.b16 %v776
    %v3863 = vunpack.c.l.b16 %v777
    %v3864 = vunpack.c.h.b16 %v777
    %v3865 = vunpack.c.l.b16 %v778
    %v3866 = vunpack.c.h.b16 %v778
    %v3867 = vunpack.c.l.b16 %v779
    %v3868 = vunpack.c.h.b16 %v779
    %v3869 = vunpack.c.l.b16 %v780
    %v3870 = vunpack.c.h.b16 %v780
    %v3871 = vunpack.c.l.b16 %v781
    %v3872 = vunpack.c.h.b16 %v781
    %v3873 = vunpack.c.l.b16 %v782
    %v3874 = vunpack.c.h.b16 %v782
    %v3875 = vunpack.c.l.b16 %v783
    %v3876 = vunpack.c.h.b16 %v783
    %v3877 = vunpack.c.l.b16 %v784
    %v3878 = vunpack.c.h.b16 %v784
    %v3879 = vunpack.c.l.b16 %v785
    %v3880 = vunpack.c.h.b16 %v785
    %v3881 = vunpack.c.l.b16 %v786
    %v3882 = vunpack.c.h.b16 %v786
    %v3883 = vunpack.c.l.b16 %v787
    %v3884 = vunpack.c.h.b16 %v787
    %v3885 = vunpack.c.l.b16 %v788
    %v3886 = vunpack.c.h.b16 %v788
    %v3887 = vunpack.c.l.b16 %v789
    %v3888 = vunpack.c.h.b16 %v789
    %v3889 = vunpack.c.l.b16 %v790
    %v3890 = vunpack.c.h.b16 %v790
    %v3891 = vunpack.c.l.b16 %v791
    %v3892 = vunpack.c.h.b16 %v791
    %v3893 = vunpack.c.l.b16 %v792
    %v3894 = vunpack.c.h.b16 %v792
    %v3895 = vunpack.c.l.b16 %v793
    %v3896 = vunpack.c.h.b16 %v793
    %v3897 = vunpack.c.l.b16 %v794
    %v3898 = vunpack.c.h.b16 %v794
    %v3899 = vunpack.c.l.b16 %v795
    %v3900 = vunpack.c.h.b16 %v795
    %v3901 = vunpack.c.l.b16 %v796
    %v3902 = vunpack.c.h.b16 %v796
    %v3903 = vunpack.c.l.b16 %v797
    %v3904 = vunpack.c.h.b16 %v797
    %v3905 = vunpack.c.l.b16 %v798
    %v3906 = vunpack.c.h.b16 %v798
    %v3907 = vunpack.c.l.b16 %v799
    %v3908 = vunpack.c.h.b16 %v799
    %v3909 = vunpack.c.l.b16 %v800
    %v3910 = vunpack.c.h.b16 %v800
    %v3911 = vunpack.c.l.b16 %v801
    %v3912 = vunpack.c.h.b16 %v801
    %v3913 = vunpack.c.l.b16 %v802
    %v3914 = vunpack.c.h.b16 %v802
    %v3915 = vunpack.c.l.b16 %v803
    %v3916 = vunpack.c.h.b16 %v803
    %v3917 = vunpack.c.l.b16 %v804
    %v3918 = vunpack.c.h.b16 %v804
    %v3919 = vunpack.c.l.b16 %v805
    %v3920 = vunpack.c.h.b16 %v805
    %v3921 = vunpack.c.l.b16 %v806
    %v3922 = vunpack.c.h.b16 %v806
    %v3923 = vunpack.c.l.b16 %v807
    %v3924 = vunpack.c.h.b16 %v807
    %v3925 = vunpack.c.l.b16 %v808
    %v3926 = vunpack.c.h.b16 %v808
    %v3927 = vunpack.c.l.b16 %v809
    %v3928 = vunpack.c.h.b16 %v809
    %v3929 = vunpack.c.l.b16 %v810
    %v3930 = vunpack.c.h.b16 %v810
    %v3931 = vunpack.c.l.b16 %v811
    %v3932 = vunpack.c.h.b16 %v811
    %v3933 = vunpack.c.l.b16 %v812
    %v3934 = vunpack.c.h.b16 %v812
    %v3935 = vunpack.c.l.b16 %v813
    %v3936 = vunpack.c.h.b16 %v813
    %v3937 = vunpack.c.l.b16 %v814
    %v3938 = vunpack.c.h.b16 %v814
    %v3939 = vunpack.c.l.b16 %v815
    %v3940 = vunpack.c.h.b16 %v815
    %v3941 = vunpack.c.l.b16 %v816
    %v3942 = vunpack.c.h.b16 %v816
    %v3943 = vunpack.c.l.b16 %v817
    %v3944 = vunpack.c.h.b16 %v817
    %v3945 = vunpack.c.l.b16 %v818
    %v3946 = vunpack.c.h.b16 %v818
    %v3947 = vunpack.c.l.b16 %v819
    %v3948 = vunpack.c.h.b16 %v819
    %v3949 = vunpack.c.l.b16 %v820
    %v3950 = vunpack.c.h.b16 %v820
    %v3951 = vunpack.c.l.b16 %v821
    %v3952 = vunpack.c.h.b16 %v821
    %v3953 = vunpack.c.l.b16 %v822
    %v3954 = vunpack.c.h.b16 %v822
    %v3955 = vunpack.c.l.b16 %v823
    %v3956 = vunpack.c.h.b16 %v823
    %v3957 = vunpack.c.l.b16 %v824
    %v3958 = vunpack.c.h.b16 %v824
    %v3959 = vunpack.c.l.b16 %v825
    %v3960 = vunpack.c.h.b16 %v825
    %v3961 = vunpack.c.l.b16 %v826
    %v3962 = vunpack.c.h.b16 %v826
    %v3963 = vunpack.c.l.b16 %v827
    %v3964 = vunpack.c.h.b16 %v827
    %v3965 = vunpack.c.l.b16 %v828
    %v3966 = vunpack.c.h.b16 %v828
    %v3967 = vunpack.c.l.b16 %v829
    %v3968 = vunpack.c.h.b16 %v829
    %v3969 = vunpack.c.l.b16 %v830
    %v3970 = vunpack.c.h.b16 %v830
    %v3971 = vunpack.c.l.b16 %v831
    %v3972 = vunpack.c.h.b16 %v831
    %v3973 = vunpack.c.l.b16 %v832
    %v3974 = vunpack.c.h.b16 %v832
    %v3975 = vunpack.c.l.b16 %v833
    %v3976 = vunpack.c.h.b16 %v833
    %v3977 = vunpack.c.l.b16 %v834
    %v3978 = vunpack.c.h.b16 %v834
    %v3979 = vunpack.c.l.b16 %v835
    %v3980 = vunpack.c.h.b16 %v835
    %v3981 = vunpack.c.l.b16 %v836
    %v3982 = vunpack.c.h.b16 %v836
    %v3983 = vunpack.c.l.b16 %v837
    %v3984 = vunpack.c.h.b16 %v837
    %v3985 = vunpack.c.l.b16 %v838
    %v3986 = vunpack.c.h.b16 %v838
    %v3987 = vunpack.c.l.b16 %v839
    %v3988 = vunpack.c.h.b16 %v839
    %v3989 = vunpack.c.l.b16 %v840
    %v3990 = vunpack.c.h.b16 %v840
    %v3991 = vunpack.c.l.b16 %v841
    %v3992 = vunpack.c.h.b16 %v841
    %v3993 = vunpack.c.l.b16 %v842
    %v3994 = vunpack.c.h.b16 %v842
    %v3995 = vunpack.c.l.b16 %v843
    %v3996 = vunpack.c.h.b16 %v843
    %v3997 = vunpack.c.l.b16 %v844
    %v3998 = vunpack.c.h.b16 %v844
    %v3999 = vunpack.c.l.b16 %v845
    %v4000 = vunpack.c.h.b16 %v845
    %v4001 = vunpack.c.l.b16 %v846
    %v4002 = vunpack.c.h.b16 %v846
    %v4003 = vunpack.c.l.b16 %v847
    %v4004 = vunpack.c.h.b16 %v847
    %v4005 = vunpack.c.l.b16 %v848
    %v4006 = vunpack.c.h.b16 %v848
    %v4007 = vunpack.c.l.b16 %v849
    %v4008 = vunpack.c.h.b16 %v849
    %v4009 = vunpack.c.l.b16 %v850
    %v4010 = vunpack.c.h.b16 %v850
    %v4011 = vunpack.c.l.b16 %v851
    %v4012 = vunpack.c.h.b16 %v851
    %v4013 = vunpack.c.l.b16 %v852
    %v4014 = vunpack.c.h.b16 %v852
    %v4015 = vunpack.c.l.b16 %v853
    %v4016 = vunpack.c.h.b16 %v853
    %v4017 = vunpack.c.l.b16 %v854
    %v4018 = vunpack.c.h.b16 %v854
    %v4019 = vunpack.c.l.b16 %v855
    %v4020 = vunpack.c.h.b16 %v855
    %v4021 = vunpack.c.l.b16 %v856
    %v4022 = vunpack.c.h.b16 %v856
    %v4023 = vunpack.c.l.b16 %v857
    %v4024 = vunpack.c.h.b16 %v857
    %v4025 = vunpack.c.l.b16 %v858
    %v4026 = vunpack.c.h.b16 %v858
    %v4027 = vunpack.c.l.b16 %v859
    %v4028 = vunpack.c.h.b16 %v859
    %v4029 = vunpack.c.l.b16 %v860
    %v4030 = vunpack.c.h.b16 %v860
    %v4031 = vunpack.c.l.b16 %v861
    %v4032 = vunpack.c.h.b16 %v861
    %v4033 = vunpack.c.l.b16 %v862
    %v4034 = vunpack.c.h.b16 %v862
    %v4035 = vunpack.c.l.b16 %v863
    %v4036 = vunpack.c.h.b16 %v863
    %v4037 = vunpack.c.l.b16 %v864
    %v4038 = vunpack.c.h.b16 %v864
    %v4039 = vunpack.c.l.b16 %v865
    %v4040 = vunpack.c.h.b16 %v865
    %v4041 = vunpack.c.l.b16 %v866
    %v4042 = vunpack.c.h.b16 %v866
    %v4043 = vunpack.c.l.b16 %v867
    %v4044 = vunpack.c.h.b16 %v867
    %v4045 = vunpack.c.l.b16 %v868
    %v4046 = vunpack.c.h.b16 %v868
    %v4047 = vunpack.c.l.b16 %v869
    %v4048 = vunpack.c.h.b16 %v869
    %v4049 = vunpack.c.l.b16 %v870
    %v4050 = vunpack.c.h.b16 %v870
    %v4051 = vunpack.c.l.b16 %v871
    %v4052 = vunpack.c.h.b16 %v871
    %v4053 = vunpack.c.l.b16 %v872
    %v4054 = vunpack.c.h.b16 %v872
    %v4055 = vunpack.c.l.b16 %v873
    %v4056 = vunpack.c.h.b16 %v873
    %v4057 = vunpack.c.l.b16 %v874
    %v4058 = vunpack.c.h.b16 %v874
    %v4059 = vunpack.c.l.b16 %v875
    %v4060 = vunpack.c.h.b16 %v875
    %v4061 = vunpack.c.l.b16 %v876
    %v4062 = vunpack.c.h.b16 %v876
    %v4063 = vunpack.c.l.b16 %v877
    %v4064 = vunpack.c.h.b16 %v877
    %v4065 = vunpack.c.l.b16 %v878
    %v4066 = vunpack.c.h.b16 %v878
    %v4067 = vunpack.c.l.b16 %v879
    %v4068 = vunpack.c.h.b16 %v879
    %v4069 = vunpack.c.l.b16 %v880
    %v4070 = vunpack.c.h.b16 %v880
    %v4071 = vunpack.c.l.b16 %v881
    %v4072 = vunpack.c.h.b16 %v881
    %v4073 = vunpack.c.l.b16 %v882
    %v4074 = vunpack.c.h.b16 %v882
    %v4075 = vunpack.c.l.b16 %v883
    %v4076 = vunpack.c.h.b16 %v883
    %v4077 = vunpack.c.l.b16 %v884
    %v4078 = vunpack.c.h.b16 %v884
    %v4079 = vunpack.c.l.b16 %v885
    %v4080 = vunpack.c.h.b16 %v885
    %v4081 = vunpack.c.l.b16 %v886
    %v4082 = vunpack.c.h.b16 %v886
    %v4083 = vunpack.c.l.b16 %v887
    %v4084 = vunpack.c.h.b16 %v887
    %v4085 = vunpack.c.l.b16 %v888
    %v4086 = vunpack.c.h.b16 %v888
    %v4087 = vunpack.c.l.b16 %v889
    %v4088 = vunpack.c.h.b16 %v889
    %v4089 = vunpack.c.l.b16 %v890
    %v4090 = vunpack.c.h.b16 %v890
    %v4091 = vunpack.c.l.b16 %v891
    %v4092 = vunpack.c.h.b16 %v891
    %v4093 = vunpack.c.l.b16 %v892
    %v4094 = vunpack.c.h.b16 %v892
    %v4095 = vunpack.c.l.b16 %v893
    %v4096 = vunpack.c.h.b16 %v893
    %v4097 = vunpack.c.l.b16 %v894
    %v4098 = vunpack.c.h.b16 %v894
    %v4099 = vunpack.c.l.b16 %v895
    %v4100 = vunpack.c.h.b16 %v895
    %v4101 = vunpack.c.l.b16 %v896
    %v4102 = vunpack.c.h.b16 %v896
    %v4103 = vunpack.c.l.b16 %v897
    %v4104 = vunpack.c.h.b16 %v897
    %v4105 = vunpack.c.l.b16 %v898
    %v4106 = vunpack.c.h.b16 %v898
    %v4107 = vunpack.c.l.b16 %v899
    %v4108 = vunpack.c.h.b16 %v899
    %v4109 = vunpack.c.l.b16 %v900
    %v4110 = vunpack.c.h.b16 %v900
    %v4111 = vunpack.c.l.b16 %v901
    %v4112 = vunpack.c.h.b16 %v901
    %v4113 = vunpack.c.l.b16 %v902
    %v4114 = vunpack.c.h.b16 %v902
    %v4115 = vunpack.c.l.b16 %v903
    %v4116 = vunpack.c.h.b16 %v903
    %v4117 = vunpack.c.l.b16 %v904
    %v4118 = vunpack.c.h.b16 %v904
    %v4119 = vunpack.c.l.b16 %v905
    %v4120 = vunpack.c.h.b16 %v905
    %v4121 = vunpack.c.l.b16 %v906
    %v4122 = vunpack.c.h.b16 %v906
    %v4123 = vunpack.c.l.b16 %v907
    %v4124 = vunpack.c.h.b16 %v907
    %v4125 = vunpack.c.l.b16 %v908
    %v4126 = vunpack.c.h.b16 %v908
    %v4127 = vunpack.c.l.b16 %v909
    %v4128 = vunpack.c.h.b16 %v909
    %v4129 = vunpack.c.l.b16 %v910
    %v4130 = vunpack.c.h.b16 %v910
    %v4131 = vunpack.c.l.b16 %v911
    %v4132 = vunpack.c.h.b16 %v911
    %v4133 = vunpack.c.l.b16 %v912
    %v4134 = vunpack.c.h.b16 %v912
    %v4135 = vunpack.c.l.b16 %v913
    %v4136 = vunpack.c.h.b16 %v913
    %v4137 = vunpack.c.l.b16 %v914
    %v4138 = vunpack.c.h.b16 %v914
    %v4139 = vunpack.c.l.b16 %v915
    %v4140 = vunpack.c.h.b16 %v915
    %v4141 = vunpack.c.l.b16 %v916
    %v4142 = vunpack.c.h.b16 %v916
    %v4143 = vunpack.c.l.b16 %v917
    %v4144 = vunpack.c.h.b16 %v917
    %v4145 = vunpack.c.l.b16 %v918
    %v4146 = vunpack.c.h.b16 %v918
    %v4147 = vunpack.c.l.b16 %v919
    %v4148 = vunpack.c.h.b16 %v919
    %v4149 = vunpack.c.l.b16 %v920
    %v4150 = vunpack.c.h.b16 %v920
    %v4151 = vunpack.c.l.b16 %v921
    %v4152 = vunpack.c.h.b16 %v921
    %v4153 = vunpack.c.l.b16 %v922
    %v4154 = vunpack.c.h.b16 %v922
    %v4155 = vunpack.c.l.b16 %v923
    %v4156 = vunpack.c.h.b16 %v923
    %v4157 = vunpack.c.l.b16 %v924
    %v4158 = vunpack.c.h.b16 %v924
    %v4159 = vunpack.c.l.b16 %v925
    %v4160 = vunpack.c.h.b16 %v925
    %v4161 = vunpack.c.l.b16 %v926
    %v4162 = vunpack.c.h.b16 %v926
    %v4163 = vunpack.c.l.b16 %v927
    %v4164 = vunpack.c.h.b16 %v927
    %v4165 = vunpack.c.l.b16 %v928
    %v4166 = vunpack.c.h.b16 %v928
    %v4167 = vunpack.c.l.b16 %v929
    %v4168 = vunpack.c.h.b16 %v929
    %v4169 = vunpack.c.l.b16 %v930
    %v4170 = vunpack.c.h.b16 %v930
    %v4171 = vunpack.c.l.b16 %v931
    %v4172 = vunpack.c.h.b16 %v931
    %v4173 = vunpack.c.l.b16 %v932
    %v4174 = vunpack.c.h.b16 %v932
    %v4175 = vunpack.c.l.b16 %v933
    %v4176 = vunpack.c.h.b16 %v933
    %v4177 = vunpack.c.l.b16 %v934
    %v4178 = vunpack.c.h.b16 %v934
    %v4179 = vunpack.c.l.b16 %v935
    %v4180 = vunpack.c.h.b16 %v935
    %v4181 = vunpack.c.l.b16 %v936
    %v4182 = vunpack.c.h.b16 %v936
    %v4183 = vunpack.c.l.b16 %v937
    %v4184 = vunpack.c.h.b16 %v937
    %v4185 = vunpack.c.l.b16 %v938
    %v4186 = vunpack.c.h.b16 %v938
    %v4187 = vunpack.c.l.b16 %v939
    %v4188 = vunpack.c.h.b16 %v939
    %v4189 = vunpack.c.l.b16 %v940
    %v4190 = vunpack.c.h.b16 %v940
    %v4191 = vunpack.c.l.b16 %v941
    %v4192 = vunpack.c.h.b16 %v941
    %v4193 = vunpack.c.l.b16 %v942
    %v4194 = vunpack.c.h.b16 %v942
    %v4195 = vunpack.c.l.b16 %v943
    %v4196 = vunpack.c.h.b16 %v943
    %v4197 = vunpack.c.l.b16 %v944
    %v4198 = vunpack.c.h.b16 %v944
    %v4199 = vunpack.c.l.b16 %v945
    %v4200 = vunpack.c.h.b16 %v945
    %v4201 = vunpack.c.l.b16 %v946
    %v4202 = vunpack.c.h.b16 %v946
    %v4203 = vunpack.c.l.b16 %v947
    %v4204 = vunpack.c.h.b16 %v947
    %v4205 = vunpack.c.l.b16 %v948
    %v4206 = vunpack.c.h.b16 %v948
    %v4207 = vunpack.c.l.b16 %v949
    %v4208 = vunpack.c.h.b16 %v949
    %v4209 = vunpack.c.l.b16 %v950
    %v4210 = vunpack.c.h.b16 %v950
    %v4211 = vunpack.c.l.b16 %v951
    %v4212 = vunpack.c.h.b16 %v951
    %v4213 = vunpack.c.l.b16 %v952
    %v4214 = vunpack.c.h.b16 %v952
    %v4215 = vunpack.c.l.b16 %v953
    %v4216 = vunpack.c.h.b16 %v953
    %v4217 = vunpack.c.l.b16 %v954
    %v4218 = vunpack.c.h.b16 %v954
    %v4219 = vunpack.c.l.b16 %v955
    %v4220 = vunpack.c.h.b16 %v955
    %v4221 = vunpack.c.l.b16 %v956
    %v4222 = vunpack.c.h.b16 %v956
    %v4223 = vunpack.c.l.b16 %v957
    %v4224 = vunpack.c.h.b16 %v957
    %v4225 = vunpack.c.l.b16 %v958
    %v4226 = vunpack.c.h.b16 %v958
    %v4227 = vunpack.c.l.b16 %v959
    %v4228 = vunpack.c.h.b16 %v959
    %v4229 = vunpack.c.l.b16 %v960
    %v4230 = vunpack.c.h.b16 %v960
    %v4231 = vunpack.c.l.b16 %v961
    %v4232 = vunpack.c.h.b16 %v961
    %v4233 = vunpack.c.l.b16 %v962
    %v4234 = vunpack.c.h.b16 %v962
    %v4235 = vunpack.c.l.b16 %v963
    %v4236 = vunpack.c.h.b16 %v963
    %v4237 = vunpack.c.l.b16 %v964
    %v4238 = vunpack.c.h.b16 %v964
    %v4239 = vunpack.c.l.b16 %v965
    %v4240 = vunpack.c.h.b16 %v965
    %v4241 = vunpack.c.l.b16 %v966
    %v4242 = vunpack.c.h.b16 %v966
    %v4243 = vunpack.c.l.b16 %v967
    %v4244 = vunpack.c.h.b16 %v967
    %v4245 = vunpack.c.l.b16 %v968
    %v4246 = vunpack.c.h.b16 %v968
    %v4247 = vunpack.c.l.b16 %v969
    %v4248 = vunpack.c.h.b16 %v969
    %v4249 = vunpack.c.l.b16 %v970
    %v4250 = vunpack.c.h.b16 %v970
    %v4251 = vunpack.c.l.b16 %v971
    %v4252 = vunpack.c.h.b16 %v971
    %v4253 = vunpack.c.l.b16 %v972
    %v4254 = vunpack.c.h.b16 %v972
    %v4255 = vunpack.c.l.b16 %v973
    %v4256 = vunpack.c.h.b16 %v973
    %v4257 = vunpack.c.l.b16 %v974
    %v4258 = vunpack.c.h.b16 %v974
    %v4259 = vunpack.c.l.b16 %v975
    %v4260 = vunpack.c.h.b16 %v975
    %v4261 = vunpack.c.l.b16 %v976
    %v4262 = vunpack.c.h.b16 %v976
    %v4263 = vunpack.c.l.b16 %v977
    %v4264 = vunpack.c.h.b16 %v977
    %v4265 = vunpack.c.l.b16 %v978
    %v4266 = vunpack.c.h.b16 %v978
    %v4267 = vunpack.c.l.b16 %v979
    %v4268 = vunpack.c.h.b16 %v979
    %v4269 = vunpack.c.l.b16 %v980
    %v4270 = vunpack.c.h.b16 %v980
    %v4271 = vunpack.c.l.b16 %v981
    %v4272 = vunpack.c.h.b16 %v981
    %v4273 = vunpack.c.l.b16 %v982
    %v4274 = vunpack.c.h.b16 %v982
    %v4275 = vunpack.c.l.b16 %v983
    %v4276 = vunpack.c.h.b16 %v983
    %v4277 = vunpack.c.l.b16 %v984
    %v4278 = vunpack.c.h.b16 %v984
    %v4279 = vunpack.c.l.b16 %v985
    %v4280 = vunpack.c.h.b16 %v985
    %v4281 = vunpack.c.l.b16 %v986
    %v4282 = vunpack.c.h.b16 %v986
    %v4283 = vunpack.c.l.b16 %v987
    %v4284 = vunpack.c.h.b16 %v987
    %v4285 = vunpack.c.l.b16 %v988
    %v4286 = vunpack.c.h.b16 %v988
    %v4287 = vunpack.c.l.b16 %v989
    %v4288 = vunpack.c.h.b16 %v989
    %v4289 = vunpack.c.l.b16 %v990
    %v4290 = vunpack.c.h.b16 %v990
    %v4291 = vunpack.c.l.b16 %v991
    %v4292 = vunpack.c.h.b16 %v991
    %v4293 = vunpack.c.l.b16 %v992
    %v4294 = vunpack.c.h.b16 %v992
    %v4295 = vunpack.c.l.b16 %v993
    %v4296 = vunpack.c.h.b16 %v993
    %v4297 = vunpack.c.l.b16 %v994
    %v4298 = vunpack.c.h.b16 %v994
    %v4299 = vunpack.c.l.b16 %v995
    %v4300 = vunpack.c.h.b16 %v995
    %v4301 = vunpack.c.l.b16 %v996
    %v4302 = vunpack.c.h.b16 %v996
    %v4303 = vunpack.c.l.b16 %v997
    %v4304 = vunpack.c.h.b16 %v997
    %v4305 = vunpack.c.l.b16 %v998
    %v4306 = vunpack.c.h.b16 %v998
    %v4307 = vunpack.c.l.b16 %v999
    %v4308 = vunpack.c.h.b16 %v999
    %v4309 = vunpack.c.l.b16 %v1000
    %v4310 = vunpack.c.h.b16 %v1000
    %v4311 = vunpack.c.l.b16 %v1001
    %v4312 = vunpack.c.h.b16 %v1001
    %v4313 = vunpack.c.l.b16 %v1002
    %v4314 = vunpack.c.h.b16 %v1002
    %v4315 = vunpack.c.l.b16 %v1003
    %v4316 = vunpack.c.h.b16 %v1003
    %v4317 = vunpack.c.l.b16 %v1004
    %v4318 = vunpack.c.h.b16 %v1004
    %v4319 = vunpack.c.l.b16 %v1005
    %v4320 = vunpack.c.h.b16 %v1005
    %v4321 = vunpack.c.l.b16 %v1006
    %v4322 = vunpack.c.h.b16 %v1006
    %v4323 = vunpack.c.l.b16 %v1007
    %v4324 = vunpack.c.h.b16 %v1007
    %v4325 = vunpack.c.l.b16 %v1008
    %v4326 = vunpack.c.h.b16 %v1008
    %v4327 = vunpack.c.l.b16 %v1009
    %v4328 = vunpack.c.h.b16 %v1009
    %v4329 = vunpack.c.l.b16 %v1010
    %v4330 = vunpack.c.h.b16 %v1010
    %v4331 = vunpack.c.l.b16 %v1011
    %v4332 = vunpack.c.h.b16 %v1011
    %v4333 = vunpack.c.l.b16 %v1012
    %v4334 = vunpack.c.h.b16 %v1012
    %v4335 = vunpack.c.l.b16 %v1013
    %v4336 = vunpack.c.h.b16 %v1013
    %v4337 = vunpack.c.l.b16 %v1014
    %v4338 = vunpack.c.h.b16 %v1014
    %v4339 = vunpack.c.l.b16 %v1015
    %v4340 = vunpack.c.h.b16 %v1015
    %v4341 = vunpack.c.l.b16 %v1016
    %v4342 = vunpack.c.h.b16 %v1016
    %v4343 = vunpack.c.l.b16 %v1017
    %v4344 = vunpack.c.h.b16 %v1017
    %v4345 = vunpack.c.l.b16 %v1018
    %v4346 = vunpack.c.h.b16 %v1018
    %v4347 = vunpack.c.l.b16 %v1019
    %v4348 = vunpack.c.h.b16 %v1019
    %v4349 = vunpack.c.l.b16 %v1020
    %v4350 = vunpack.c.h.b16 %v1020
    %v4351 = vunpack.c.l.b16 %v1021
    %v4352 = vunpack.c.h.b16 %v1021
    %v4353 = vunpack.c.l.b16 %v1022
    %v4354 = vunpack.c.h.b16 %v1022
    %v4355 = vunpack.c.l.b16 %v1023
    %v4356 = vunpack.c.h.b16 %v1023
    %v4357 = vunpack.c.l.b16 %v1024
    %v4358 = vunpack.c.h.b16 %v1024
    %v4359 = vunpack.c.l.b16 %v1025
    %v4360 = vunpack.c.h.b16 %v1025
    %v4361 = vunpack.c.l.b16 %v1026
    %v4362 = vunpack.c.h.b16 %v1026
    %v4363 = vunpack.c.l.b16 %v1027
    %v4364 = vunpack.c.h.b16 %v1027
    %v4365 = vunpack.c.l.b16 %v1028
    %v4366 = vunpack.c.h.b16 %v1028
    %v4367 = vunpack.c.l.b16 %v1029
    %v4368 = vunpack.c.h.b16 %v1029
    %v4369 = vunpack.c.l.b16 %v1030
    %v4370 = vunpack.c.h.b16 %v1030
    %v4371 = vunpack.c.l.b16 %v1031
    %v4372 = vunpack.c.h.b16 %v1031
    %v4373 = vunpack.c.l.b16 %v1032
    %v4374 = vunpack.c.h.b16 %v1032
    %v4375 = vunpack.c.l.b16 %v1033
    %v4376 = vunpack.c.h.b16 %v1033
    %v4377 = vunpack.c.l.b16 %v1034
    %v4378 = vunpack.c.h.b16 %v1034
    %v4379 = vunpack.c.l.b16 %v1035
    %v4380 = vunpack.c.h.b16 %v1035
    %v4381 = vunpack.c.l.b16 %v1036
    %v4382 = vunpack.c.h.b16 %v1036
    %v4383 = vunpack.c.l.b16 %v1037
    %v4384 = vunpack.c.h.b16 %v1037
    %v4385 = vunpack.c.l.b16 %v1038
    %v4386 = vunpack.c.h.b16 %v1038
    %v4387 = vunpack.c.l.b16 %v1039
    %v4388 = vunpack.c.h.b16 %v1039
    %v4389 = vunpack.c.l.b16 %v1040
    %v4390 = vunpack.c.h.b16 %v1040
    %v4391 = vunpack.c.l.b16 %v1041
    %v4392 = vunpack.c.h.b16 %v1041
    %v4393 = vunpack.c.l.b16 %v1042
    %v4394 = vunpack.c.h.b16 %v1042
    %v4395 = vunpack.c.l.b16 %v1043
    %v4396 = vunpack.c.h.b16 %v1043
    %v4397 = vunpack.c.l.b16 %v1044
    %v4398 = vunpack.c.h.b16 %v1044
    %v4399 = vunpack.c.l.b16 %v1045
    %v4400 = vunpack.c.h.b16 %v1045
    %v4401 = vunpack.c.l.b16 %v1046
    %v4402 = vunpack.c.h.b16 %v1046
    %v4403 = vunpack.c.l.b16 %v1047
    %v4404 = vunpack.c.h.b16 %v1047
    %v4405 = vunpack.c.l.b16 %v1048
    %v4406 = vunpack.c.h.b16 %v1048
    %v4407 = vunpack.c.l.b16 %v1049
    %v4408 = vunpack.c.h.b16 %v1049
    %v4409 = vunpack.c.l.b16 %v1050
    %v4410 = vunpack.c.h.b16 %v1050
    %v4411 = vunpack.c.l.b16 %v1051
    %v4412 = vunpack.c.h.b16 %v1051
    %v4413 = vunpack.c.l.b16 %v1052
    %v4414 = vunpack.c.h.b16 %v1052
    %v4415 = vunpack.c.l.b16 %v1053
    %v4416 = vunpack.c.h.b16 %v1053
    %v4417 = vunpack.c.l.b16 %v1054
    %v4418 = vunpack.c.h.b16 %v1054
    %v4419 = vunpack.c.l.b16 %v1055
    %v4420 = vunpack.c.h.b16 %v1055
    %v4421 = vunpack.c.l.b16 %v1056
    %v4422 = vunpack.c.h.b16 %v1056
    %v4423 = vunpack.c.l.b16 %v1057
    %v4424 = vunpack.c.h.b16 %v1057
    %v4425 = vunpack.c.l.b16 %v1058
    %v4426 = vunpack.c.h.b16 %v1058
    %v4427 = vunpack.c.l.b16 %v1059
    %v4428 = vunpack.c.h.b16 %v1059
    %v4429 = vunpack.c.l.b16 %v1060
    %v4430 = vunpack.c.h.b16 %v1060
    %v4431 = vunpack.c.l.b16 %v1061
    %v4432 = vunpack.c.h.b16 %v1061
    %v4433 = vunpack.c.l.b16 %v1062
    %v4434 = vunpack.c.h.b16 %v1062
    %v4435 = vunpack.c.l.b16 %v1063
    %v4436 = vunpack.c.h.b16 %v1063
    %v4437 = vunpack.c.l.b16 %v1064
    %v4438 = vunpack.c.h.b16 %v1064
    %v4439 = vunpack.c.l.b16 %v1065
    %v4440 = vunpack.c.h.b16 %v1065
    %v4441 = vunpack.c.l.b16 %v1066
    %v4442 = vunpack.c.h.b16 %v1066
    %v4443 = vunpack.c.l.b16 %v1067
    %v4444 = vunpack.c.h.b16 %v1067
    %v4445 = vunpack.c.l.b16 %v1068
    %v4446 = vunpack.c.h.b16 %v1068
    %v4447 = vunpack.c.l.b16 %v1069
    %v4448 = vunpack.c.h.b16 %v1069
    %v4449 = vunpack.c.l.b16 %v1070
    %v4450 = vunpack.c.h.b16 %v1070
    %v4451 = vunpack.c.l.b16 %v1071
    %v4452 = vunpack.c.h.b16 %v1071
    %v4453 = vunpack.c.l.b16 %v1072
    %v4454 = vunpack.c.h.b16 %v1072
    %v4455 = vunpack.c.l.b16 %v1073
    %v4456 = vunpack.c.h.b16 %v1073
    %v4457 = vunpack.c.l.b16 %v1074
    %v4458 = vunpack.c.h.b16 %v1074
    %v4459 = vunpack.c.l.b16 %v1075
    %v4460 = vunpack.c.h.b16 %v1075
    %v4461 = vunpack.c.l.b16 %v1076
    %v4462 = vunpack.c.h.b16 %v1076
    %v4463 = vunpack.c.l.b16 %v1077
    %v4464 = vunpack.c.h.b16 %v1077
    %v4465 = vunpack.c.l.b16 %v1078
    %v4466 = vunpack.c.h.b16 %v1078
    %v4467 = vunpack.c.l.b16 %v1079
    %v4468 = vunpack.c.h.b16 %v1079
    %v4469 = vunpack.c.l.b16 %v1080
    %v4470 = vunpack.c.h.b16 %v1080
    %v4471 = vunpack.c.l.b16 %v1081
    %v4472 = vunpack.c.h.b16 %v1081
    %v4473 = vunpack.c.l.b16 %v1082
    %v4474 = vunpack.c.h.b16 %v1082
    %v4475 = vunpack.c.l.b16 %v1083
    %v4476 = vunpack.c.h.b16 %v1083
    %v4477 = vunpack.c.l.b16 %v1084
    %v4478 = vunpack.c.h.b16 %v1084
    %v4479 = vunpack.c.l.b16 %v1085
    %v4480 = vunpack.c.h.b16 %v1085
    %v4481 = vunpack.c.l.b16 %v1086
    %v4482 = vunpack.c.h.b16 %v1086
    %v4483 = vunpack.c.l.b16 %v1087
    %v4484 = vunpack.c.h.b16 %v1087
    %v4485 = vunpack.c.l.b16 %v1088
    %v4486 = vunpack.c.h.b16 %v1088
    %v4487 = vunpack.c.l.b16 %v1089
    %v4488 = vunpack.c.h.b16 %v1089
    %v4489 = vunpack.c.l.b16 %v1090
    %v4490 = vunpack.c.h.b16 %v1090
    %v4491 = vunpack.c.l.b16 %v1091
    %v4492 = vunpack.c.h.b16 %v1091
    %v4493 = vunpack.c.l.b16 %v1092
    %v4494 = vunpack.c.h.b16 %v1092
    %v4495 = vunpack.c.l.b16 %v1093
    %v4496 = vunpack.c.h.b16 %v1093
    %v4497 = vunpack.c.l.b16 %v1094
    %v4498 = vunpack.c.h.b16 %v1094
    %v4499 = vunpack.c.l.b16 %v1095
    %v4500 = vunpack.c.h.b16 %v1095
    %v4501 = vunpack.c.l.b16 %v1096
    %v4502 = vunpack.c.h.b16 %v1096
    %v4503 = vunpack.c.l.b16 %v1097
    %v4504 = vunpack.c.h.b16 %v1097
    %v4505 = vunpack.c.l.b16 %v1098
    %v4506 = vunpack.c.h.b16 %v1098
    %v4507 = vunpack.c.l.b16 %v1099
    %v4508 = vunpack.c.h.b16 %v1099
    %v4509 = vunpack.c.l.b16 %v1100
    %v4510 = vunpack.c.h.b16 %v1100
    %v4511 = vunpack.c.l.b16 %v1101
    %v4512 = vunpack.c.h.b16 %v1101
    %v4513 = vunpack.c.l.b16 %v1102
    %v4514 = vunpack.c.h.b16 %v1102
    %v4515 = vunpack.c.l.b16 %v1103
    %v4516 = vunpack.c.h.b16 %v1103
    %v4517 = vunpack.c.l.b16 %v1104
    %v4518 = vunpack.c.h.b16 %v1104
    %v4519 = vunpack.c.l.b16 %v1105
    %v4520 = vunpack.c.h.b16 %v1105
    %v4521 = vunpack.c.l.b16 %v1106
    %v4522 = vunpack.c.h.b16 %v1106
    %v4523 = vunpack.c.l.b16 %v1107
    %v4524 = vunpack.c.h.b16 %v1107
    %v4525 = vunpack.c.l.b16 %v1108
    %v4526 = vunpack.c.h.b16 %v1108
    %v4527 = vunpack.c.l.b16 %v1109
    %v4528 = vunpack.c.h.b16 %v1109
    %v4529 = vunpack.c.l.b16 %v1110
    %v4530 = vunpack.c.h.b16 %v1110
    %v4531 = vunpack.c.l.b16 %v1111
    %v4532 = vunpack.c.h.b16 %v1111
    %v4533 = vunpack.c.l.b16 %v1112
    %v4534 = vunpack.c.h.b16 %v1112
    %v4535 = vunpack.c.l.b16 %v1113
    %v4536 = vunpack.c.h.b16 %v1113
    %v4537 = vunpack.c.l.b16 %v1114
    %v4538 = vunpack.c.h.b16 %v1114
    %v4539 = vunpack.c.l.b16 %v1115
    %v4540 = vunpack.c.h.b16 %v1115
    %v4541 = vunpack.c.l.b16 %v1116
    %v4542 = vunpack.c.h.b16 %v1116
    %v4543 = vunpack.c.l.b16 %v1117
    %v4544 = vunpack.c.h.b16 %v1117
    %v4545 = vunpack.c.l.b16 %v1118
    %v4546 = vunpack.c.h.b16 %v1118
    %v4547 = vunpack.c.l.b16 %v1119
    %v4548 = vunpack.c.h.b16 %v1119
    %v4549 = vunpack.c.l.b16 %v1120
    %v4550 = vunpack.c.h.b16 %v1120
    %v4551 = vunpack.c.l.b16 %v1121
    %v4552 = vunpack.c.h.b16 %v1121
    %v4553 = vunpack.c.l.b16 %v1122
    %v4554 = vunpack.c.h.b16 %v1122
    %v4555 = vunpack.c.l.b16 %v1123
    %v4556 = vunpack.c.h.b16 %v1123
    %v4557 = vunpack.c.l.b16 %v1124
    %v4558 = vunpack.c.h.b16 %v1124
    %v4559 = vunpack.c.l.b16 %v1125
    %v4560 = vunpack.c.h.b16 %v1125
    %v4561 = vunpack.c.l.b16 %v1126
    %v4562 = vunpack.c.h.b16 %v1126
    %v4563 = vunpack.c.l.b16 %v1127
    %v4564 = vunpack.c.h.b16 %v1127
    %v4565 = vunpack.c.l.b16 %v1128
    %v4566 = vunpack.c.h.b16 %v1128
    %v4567 = vunpack.c.l.b16 %v1129
    %v4568 = vunpack.c.h.b16 %v1129
    %v4569 = vunpack.c.l.b16 %v1130
    %v4570 = vunpack.c.h.b16 %v1130
    %v4571 = vunpack.c.l.b16 %v1131
    %v4572 = vunpack.c.h.b16 %v1131
    %v4573 = vunpack.c.l.b16 %v1132
    %v4574 = vunpack.c.h.b16 %v1132
    %v4575 = vunpack.c.l.b16 %v1133
    %v4576 = vunpack.c.h.b16 %v1133
    %v4577 = vunpack.c.l.b16 %v1134
    %v4578 = vunpack.c.h.b16 %v1134
    %v4579 = vunpack.c.l.b16 %v1135
    %v4580 = vunpack.c.h.b16 %v1135
    %v4581 = vunpack.c.l.b16 %v1136
    %v4582 = vunpack.c.h.b16 %v1136
    %v4583 = vunpack.c.l.b16 %v1137
    %v4584 = vunpack.c.h.b16 %v1137
    %v4585 = vunpack.c.l.b16 %v1138
    %v4586 = vunpack.c.h.b16 %v1138
    %v4587 = vunpack.c.l.b16 %v1139
    %v4588 = vunpack.c.h.b16 %v1139
    %v4589 = vunpack.c.l.b16 %v1140
    %v4590 = vunpack.c.h.b16 %v1140
    %v4591 = vunpack.c.l.b16 %v1141
    %v4592 = vunpack.c.h.b16 %v1141
    %v4593 = vunpack.c.l.b16 %v1142
    %v4594 = vunpack.c.h.b16 %v1142
    %v4595 = vunpack.c.l.b16 %v1143
    %v4596 = vunpack.c.h.b16 %v1143
    %v4597 = vunpack.c.l.b16 %v1144
    %v4598 = vunpack.c.h.b16 %v1144
    %v4599 = vunpack.c.l.b16 %v1145
    %v4600 = vunpack.c.h.b16 %v1145
    %v4601 = vunpack.c.l.b16 %v1146
    %v4602 = vunpack.c.h.b16 %v1146
    %v4603 = vunpack.c.l.b16 %v1147
    %v4604 = vunpack.c.h.b16 %v1147
    %v4605 = vunpack.c.l.b16 %v1148
    %v4606 = vunpack.c.h.b16 %v1148
    %v4607 = vunpack.c.l.b16 %v1149
    %v4608 = vunpack.c.h.b16 %v1149
    %v4609 = vunpack.c.l.b16 %v1150
    %v4610 = vunpack.c.h.b16 %v1150
    %v4611 = vunpack.c.l.b16 %v1151
    %v4612 = vunpack.c.h.b16 %v1151
    %v4613 = vunpack.c.l.b16 %v1152
    %v4614 = vunpack.c.h.b16 %v1152
    %v4615 = vunpack.c.l.b16 %v1153
    %v4616 = vunpack.c.h.b16 %v1153
    %v4617 = vunpack.c.l.b16 %v1154
    %v4618 = vunpack.c.h.b16 %v1154
    %v4619 = vunpack.c.l.b16 %v1155
    %v4620 = vunpack.c.h.b16 %v1155
    %v4621 = vunpack.c.l.b16 %v1156
    %v4622 = vunpack.c.h.b16 %v1156
    %v4623 = vunpack.c.l.b16 %v1157
    %v4624 = vunpack.c.h.b16 %v1157
    %v4625 = vunpack.c.l.b16 %v1158
    %v4626 = vunpack.c.h.b16 %v1158
    %v4627 = vunpack.c.l.b16 %v1159
    %v4628 = vunpack.c.h.b16 %v1159
    %v4629 = vunpack.c.l.b16 %v1160
    %v4630 = vunpack.c.h.b16 %v1160
    %v4631 = vunpack.c.l.b16 %v1161
    %v4632 = vunpack.c.h.b16 %v1161
    %v4633 = vunpack.c.l.b16 %v1162
    %v4634 = vunpack.c.h.b16 %v1162
    %v4635 = vunpack.c.l.b16 %v1163
    %v4636 = vunpack.c.h.b16 %v1163
    %v4637 = vunpack.c.l.b16 %v1164
    %v4638 = vunpack.c.h.b16 %v1164
    %v4639 = vunpack.c.l.b16 %v1165
    %v4640 = vunpack.c.h.b16 %v1165
    %v4641 = vunpack.c.l.b16 %v1166
    %v4642 = vunpack.c.h.b16 %v1166
    %v4643 = vunpack.c.l.b16 %v1167
    %v4644 = vunpack.c.h.b16 %v1167
    %v4645 = vunpack.c.l.b16 %v1168
    %v4646 = vunpack.c.h.b16 %v1168
    %v4647 = vunpack.c.l.b16 %v1169
    %v4648 = vunpack.c.h.b16 %v1169
    %v4649 = vunpack.c.l.b16 %v1170
    %v4650 = vunpack.c.h.b16 %v1170
    %v4651 = vunpack.c.l.b16 %v1171
    %v4652 = vunpack.c.h.b16 %v1171
    %v4653 = vunpack.c.l.b16 %v1172
    %v4654 = vunpack.c.h.b16 %v1172
    %v4655 = vunpack.c.l.b16 %v1173
    %v4656 = vunpack.c.h.b16 %v1173
    %v4657 = vunpack.c.l.b16 %v1174
    %v4658 = vunpack.c.h.b16 %v1174
    %v4659 = vunpack.c.l.b16 %v1175
    %v4660 = vunpack.c.h.b16 %v1175
    %v4661 = vunpack.c.l.b16 %v1176
    %v4662 = vunpack.c.h.b16 %v1176
    %v4663 = vunpack.c.l.b16 %v1177
    %v4664 = vunpack.c.h.b16 %v1177
    %v4665 = vunpack.c.l.b16 %v1178
    %v4666 = vunpack.c.h.b16 %v1178
    %v4667 = vunpack.c.l.b16 %v1179
    %v4668 = vunpack.c.h.b16 %v1179
    %v4669 = vunpack.c.l.b16 %v1180
    %v4670 = vunpack.c.h.b16 %v1180
    %v4671 = vunpack.c.l.b16 %v1181
    %v4672 = vunpack.c.h.b16 %v1181
    %v4673 = vunpack.c.l.b16 %v1182
    %v4674 = vunpack.c.h.b16 %v1182
    %v4675 = vunpack.c.l.b16 %v1183
    %v4676 = vunpack.c.h.b16 %v1183
    %v4677 = vunpack.c.l.b16 %v1184
    %v4678 = vunpack.c.h.b16 %v1184
    %v4679 = vunpack.c.l.b16 %v1185
    %v4680 = vunpack.c.h.b16 %v1185
    %v4681 = vunpack.c.l.b16 %v1186
    %v4682 = vunpack.c.h.b16 %v1186
    %v4683 = vunpack.c.l.b16 %v1187
    %v4684 = vunpack.c.h.b16 %v1187
    %v4685 = vunpack.c.l.b16 %v1188
    %v4686 = vunpack.c.h.b16 %v1188
    %v4687 = vunpack.c.l.b16 %v1189
    %v4688 = vunpack.c.h.b16 %v1189
    %v4689 = vunpack.c.l.b16 %v1190
    %v4690 = vunpack.c.h.b16 %v1190
    %v4691 = vunpack.c.l.b16 %v1191
    %v4692 = vunpack.c.h.b16 %v1191
    %v4693 = vunpack.c.l.b16 %v1192
    %v4694 = vunpack.c.h.b16 %v1192
    %v4695 = vunpack.c.l.b16 %v1193
    %v4696 = vunpack.c.h.b16 %v1193
    %v4697 = vunpack.c.l.b16 %v1194
    %v4698 = vunpack.c.h.b16 %v1194
    %v4699 = vunpack.c.l.b16 %v1195
    %v4700 = vunpack.c.h.b16 %v1195
    %v4701 = vunpack.c.l.b16 %v1196
    %v4702 = vunpack.c.h.b16 %v1196
    %v4703 = vunpack.c.l.b16 %v1197
    %v4704 = vunpack.c.h.b16 %v1197
    %v4705 = vunpack.c.l.b16 %v1198
    %v4706 = vunpack.c.h.b16 %v1198
    %v4707 = vunpack.c.l.b16 %v1199
    %v4708 = vunpack.c.h.b16 %v1199
    %v4709 = vunpack.c.l.b16 %v1200
    %v4710 = vunpack.c.h.b16 %v1200
    %v4711 = vunpack.c.l.b16 %v1201
    %v4712 = vunpack.c.h.b16 %v1201
    %v4713 = vunpack.c.l.b16 %v1202
    %v4714 = vunpack.c.h.b16 %v1202
    %v4715 = vunpack.c.l.b16 %v1203
    %v4716 = vunpack.c.h.b16 %v1203
    %v4717 = vunpack.c.l.b16 %v1204
    %v4718 = vunpack.c.h.b16 %v1204
    %v4719 = vunpack.c.l.b16 %v1205
    %v4720 = vunpack.c.h.b16 %v1205
    %v4721 = vunpack.c.l.b16 %v1206
    %v4722 = vunpack.c.h.b16 %v1206
    %v4723 = vunpack.c.l.b16 %v1207
    %v4724 = vunpack.c.h.b16 %v1207
    %v4725 = vunpack.c.l.b16 %v1208
    %v4726 = vunpack.c.h.b16 %v1208
    %v4727 = vunpack.c.l.b16 %v1209
    %v4728 = vunpack.c.h.b16 %v1209
    %v4729 = vunpack.c.l.b16 %v1210
    %v4730 = vunpack.c.h.b16 %v1210
    %v4731 = vunpack.c.l.b16 %v1211
    %v4732 = vunpack.c.h.b16 %v1211
    %v4733 = vunpack.c.l.b16 %v1212
    %v4734 = vunpack.c.h.b16 %v1212
    %v4735 = vunpack.c.l.b16 %v1213
    %v4736 = vunpack.c.h.b16 %v1213
    %v4737 = vunpack.c.l.b16 %v1214
    %v4738 = vunpack.c.h.b16 %v1214
    %v4739 = vunpack.c.l.b16 %v1215
    %v4740 = vunpack.c.h.b16 %v1215
    %v4741 = vunpack.c.l.b16 %v1216
    %v4742 = vunpack.c.h.b16 %v1216
    %v4743 = vunpack.c.l.b16 %v1217
    %v4744 = vunpack.c.h.b16 %v1217
    %v4745 = vunpack.c.l.b16 %v1218
    %v4746 = vunpack.c.h.b16 %v1218
    %v4747 = vunpack.c.l.b16 %v1219
    %v4748 = vunpack.c.h.b16 %v1219
    %v4749 = vunpack.c.l.b16 %v1220
    %v4750 = vunpack.c.h.b16 %v1220
    %v4751 = vunpack.c.l.b16 %v1221
    %v4752 = vunpack.c.h.b16 %v1221
    %v4753 = vunpack.c.l.b16 %v1222
    %v4754 = vunpack.c.h.b16 %v1222
    %v4755 = vunpack.c.l.b16 %v1223
    %v4756 = vunpack.c.h.b16 %v1223
    %v4757 = vunpack.c.l.b16 %v1224
    %v4758 = vunpack.c.h.b16 %v1224
    %v4759 = vunpack.c.l.b16 %v1225
    %v4760 = vunpack.c.h.b16 %v1225
    %v4761 = vunpack.c.l.b16 %v1226
    %v4762 = vunpack.c.h.b16 %v1226
    %v4763 = vunpack.c.l.b16 %v1227
    %v4764 = vunpack.c.h.b16 %v1227
    %v4765 = vunpack.c.l.b16 %v1228
    %v4766 = vunpack.c.h.b16 %v1228
    %v4767 = vunpack.c.l.b16 %v1229
    %v4768 = vunpack.c.h.b16 %v1229
    %v4769 = vunpack.c.l.b16 %v1230
    %v4770 = vunpack.c.h.b16 %v1230
    %v4771 = vunpack.c.l.b16 %v1231
    %v4772 = vunpack.c.h.b16 %v1231
    %v4773 = vunpack.c.l.b16 %v1232
    %v4774 = vunpack.c.h.b16 %v1232
    %v4775 = vunpack.c.l.b16 %v1233
    %v4776 = vunpack.c.h.b16 %v1233
    %v4777 = vunpack.c.l.b16 %v1234
    %v4778 = vunpack.c.h.b16 %v1234
    %v4779 = vunpack.c.l.b16 %v1235
    %v4780 = vunpack.c.h.b16 %v1235
    %v4781 = vunpack.c.l.b16 %v1236
    %v4782 = vunpack.c.h.b16 %v1236
    %v4783 = vunpack.c.l.b16 %v1237
    %v4784 = vunpack.c.h.b16 %v1237
    %v4785 = vunpack.c.l.b16 %v1238
    %v4786 = vunpack.c.h.b16 %v1238
    %v4787 = vunpack.c.l.b16 %v1239
    %v4788 = vunpack.c.h.b16 %v1239
    %v4789 = vunpack.c.l.b16 %v1240
    %v4790 = vunpack.c.h.b16 %v1240
    %v4791 = vunpack.c.l.b16 %v1241
    %v4792 = vunpack.c.h.b16 %v1241
    %v4793 = vunpack.c.l.b16 %v1242
    %v4794 = vunpack.c.h.b16 %v1242
    %v4795 = vunpack.c.l.b16 %v1243
    %v4796 = vunpack.c.h.b16 %v1243
    %v4797 = vunpack.c.l.b16 %v1244
    %v4798 = vunpack.c.h.b16 %v1244
    %v4799 = vunpack.c.l.b16 %v1245
    %v4800 = vunpack.c.h.b16 %v1245
    %v4801 = vunpack.c.l.b16 %v1246
    %v4802 = vunpack.c.h.b16 %v1246
    %v4803 = vunpack.c.l.b16 %v1247
    %v4804 = vunpack.c.h.b16 %v1247
    %v4805 = vunpack.c.l.b16 %v1248
    %v4806 = vunpack.c.h.b16 %v1248
    %v4807 = vunpack.c.l.b16 %v1249
    %v4808 = vunpack.c.h.b16 %v1249
    %v4809 = vunpack.c.l.b16 %v1250
    %v4810 = vunpack.c.h.b16 %v1250
    %v4811 = vunpack.c.l.b16 %v1251
    %v4812 = vunpack.c.h.b16 %v1251
    %v4813 = vunpack.c.l.b16 %v1252
    %v4814 = vunpack.c.h.b16 %v1252
    %v4815 = vunpack.c.l.b16 %v1253
    %v4816 = vunpack.c.h.b16 %v1253
    %v4817 = vunpack.c.l.b16 %v1254
    %v4818 = vunpack.c.h.b16 %v1254
    %v4819 = vunpack.c.l.b16 %v1255
    %v4820 = vunpack.c.h.b16 %v1255
    %v4821 = vunpack.c.l.b16 %v1256
    %v4822 = vunpack.c.h.b16 %v1256
    %v4823 = vunpack.c.l.b16 %v1257
    %v4824 = vunpack.c.h.b16 %v1257
    %v4825 = vunpack.c.l.b16 %v1258
    %v4826 = vunpack.c.h.b16 %v1258
    %v4827 = vunpack.c.l.b16 %v1259
    %v4828 = vunpack.c.h.b16 %v1259
    %v4829 = vunpack.c.l.b16 %v1260
    %v4830 = vunpack.c.h.b16 %v1260
    %v4831 = vunpack.c.l.b16 %v1261
    %v4832 = vunpack.c.h.b16 %v1261
    %v4833 = vunpack.c.l.b16 %v1262
    %v4834 = vunpack.c.h.b16 %v1262
    %v4835 = vunpack.c.l.b16 %v1263
    %v4836 = vunpack.c.h.b16 %v1263
    %v4837 = vunpack.c.l.b16 %v1264
    %v4838 = vunpack.c.h.b16 %v1264
    %v4839 = vunpack.c.l.b16 %v1265
    %v4840 = vunpack.c.h.b16 %v1265
    %v4841 = vunpack.c.l.b16 %v1266
    %v4842 = vunpack.c.h.b16 %v1266
    %v4843 = vunpack.c.l.b16 %v1267
    %v4844 = vunpack.c.h.b16 %v1267
    %v4845 = vunpack.c.l.b16 %v1268
    %v4846 = vunpack.c.h.b16 %v1268
    %v4847 = vunpack.c.l.b16 %v1269
    %v4848 = vunpack.c.h.b16 %v1269
    %v4849 = vunpack.c.l.b16 %v1270
    %v4850 = vunpack.c.h.b16 %v1270
    %v4851 = vunpack.c.l.b16 %v1271
    %v4852 = vunpack.c.h.b16 %v1271
    %v4853 = vunpack.c.l.b16 %v1272
    %v4854 = vunpack.c.h.b16 %v1272
    %v4855 = vunpack.c.l.b16 %v1273
    %v4856 = vunpack.c.h.b16 %v1273
    %v4857 = vunpack.c.l.b16 %v1274
    %v4858 = vunpack.c.h.b16 %v1274
    %v4859 = vunpack.c.l.b16 %v1275
    %v4860 = vunpack.c.h.b16 %v1275
    %v4861 = vunpack.c.l.b16 %v1276
    %v4862 = vunpack.c.h.b16 %v1276
    %v4863 = vunpack.c.l.b16 %v1277
    %v4864 = vunpack.c.h.b16 %v1277
    %v4865 = vunpack.c.l.b16 %v1278
    %v4866 = vunpack.c.h.b16 %v1278
    %v4867 = vunpack.c.l.b16 %v1279
    %v4868 = vunpack.c.h.b16 %v1279
    %v4869 = vunpack.c.l.b16 %v1280
    %v4870 = vunpack.c.h.b16 %v1280
    %v4871 = vunpack.c.l.b16 %v1281
    %v4872 = vunpack.c.h.b16 %v1281
    %v4873 = vunpack.c.l.b16 %v1282
    %v4874 = vunpack.c.h.b16 %v1282
    %v4875 = vunpack.c.l.b16 %v1283
    %v4876 = vunpack.c.h.b16 %v1283
    %v4877 = vunpack.c.l.b16 %v1284
    %v4878 = vunpack.c.h.b16 %v1284
    %v4879 = vunpack.c.l.b16 %v1285
    %v4880 = vunpack.c.h.b16 %v1285
    %v4881 = vunpack.c.l.b16 %v1286
    %v4882 = vunpack.c.h.b16 %v1286
    %v4883 = vunpack.c.l.b16 %v1287
    %v4884 = vunpack.c.h.b16 %v1287
    %v4885 = vunpack.c.l.b16 %v1288
    %v4886 = vunpack.c.h.b16 %v1288
    %v4887 = vunpack.c.l.b16 %v1289
    %v4888 = vunpack.c.h.b16 %v1289
    %v4889 = vunpack.c.l.b16 %v1290
    %v4890 = vunpack.c.h.b16 %v1290
    %v4891 = vunpack.c.l.b16 %v1291
    %v4892 = vunpack.c.h.b16 %v1291
    %v4893 = vunpack.c.l.b16 %v1292
    %v4894 = vunpack.c.h.b16 %v1292
    %v4895 = vunpack.c.l.b16 %v1293
    %v4896 = vunpack.c.h.b16 %v1293
    %v4897 = vunpack.c.l.b16 %v1294
    %v4898 = vunpack.c.h.b16 %v1294
    %v4899 = vunpack.c.l.b16 %v1295
    %v4900 = vunpack.c.h.b16 %v1295
    %v4901 = vunpack.c.l.b16 %v1296
    %v4902 = vunpack.c.h.b16 %v1296
    %v4903 = vunpack.c.l.b16 %v1297
    %v4904 = vunpack.c.h.b16 %v1297
    %v4905 = vunpack.c.l.b16 %v1298
    %v4906 = vunpack.c.h.b16 %v1298
    %v4907 = vunpack.c.l.b16 %v1299
    %v4908 = vunpack.c.h.b16 %v1299
    %v4909 = vunpack.c.l.b16 %v1300
    %v4910 = vunpack.c.h.b16 %v1300
    %v4911 = vunpack.c.l.b16 %v1301
    %v4912 = vunpack.c.h.b16 %v1301
    %v4913 = vunpack.c.l.b16 %v1302
    %v4914 = vunpack.c.h.b16 %v1302
    %v4915 = vunpack.c.l.b16 %v1303
    %v4916 = vunpack.c.h.b16 %v1303
    %v4917 = vunpack.c.l.b16 %v1304
    %v4918 = vunpack.c.h.b16 %v1304
    %v4919 = vunpack.c.l.b16 %v1305
    %v4920 = vunpack.c.h.b16 %v1305
    %v4921 = vunpack.c.l.b16 %v1306
    %v4922 = vunpack.c.h.b16 %v1306
    %v4923 = vunpack.c.l.b16 %v1307
    %v4924 = vunpack.c.h.b16 %v1307
    %v4925 = vunpack.c.l.b16 %v1308
    %v4926 = vunpack.c.h.b16 %v1308
    %v4927 = vunpack.c.l.b16 %v1309
    %v4928 = vunpack.c.h.b16 %v1309
    %v4929 = vunpack.c.l.b16 %v1310
    %v4930 = vunpack.c.h.b16 %v1310
    %v4931 = vunpack.c.l.b16 %v1311
    %v4932 = vunpack.c.h.b16 %v1311
    %v4933 = vunpack.c.l.b16 %v1312
    %v4934 = vunpack.c.h.b16 %v1312
    %v4935 = vunpack.c.l.b16 %v1313
    %v4936 = vunpack.c.h.b16 %v1313
    %v4937 = vunpack.c.l.b16 %v1314
    %v4938 = vunpack.c.h.b16 %v1314
    %v4939 = vunpack.c.l.b16 %v1315
    %v4940 = vunpack.c.h.b16 %v1315
    %v4941 = vunpack.c.l.b16 %v1316
    %v4942 = vunpack.c.h.b16 %v1316
    %v4943 = vunpack.c.l.b16 %v1317
    %v4944 = vunpack.c.h.b16 %v1317
    %v4945 = vunpack.c.l.b16 %v1318
    %v4946 = vunpack.c.h.b16 %v1318
    %v4947 = vunpack.c.l.b16 %v1319
    %v4948 = vunpack.c.h.b16 %v1319
    %v4949 = vunpack.c.l.b16 %v1320
    %v4950 = vunpack.c.h.b16 %v1320
    %v4951 = vunpack.c.l.b16 %v1321
    %v4952 = vunpack.c.h.b16 %v1321
    %v4953 = vunpack.c.l.b16 %v1322
    %v4954 = vunpack.c.h.b16 %v1322
    %v4955 = vunpack.c.l.b16 %v1323
    %v4956 = vunpack.c.h.b16 %v1323
    %v4957 = vunpack.c.l.b16 %v1324
    %v4958 = vunpack.c.h.b16 %v1324
    %v4959 = vunpack.c.l.b16 %v1325
    %v4960 = vunpack.c.h.b16 %v1325
    %v4961 = vunpack.c.l.b16 %v1326
    %v4962 = vunpack.c.h.b16 %v1326
    %v4963 = vunpack.c.l.b16 %v1327
    %v4964 = vunpack.c.h.b16 %v1327
    %v4965 = vunpack.c.l.b16 %v1328
    %v4966 = vunpack.c.h.b16 %v1328
    %v4967 = vunpack.c.l.b16 %v1329
    %v4968 = vunpack.c.h.b16 %v1329
    %v4969 = vunpack.c.l.b16 %v1330
    %v4970 = vunpack.c.h.b16 %v1330
    %v4971 = vunpack.c.l.b16 %v1331
    %v4972 = vunpack.c.h.b16 %v1331
    %v4973 = vunpack.c.l.b16 %v1332
    %v4974 = vunpack.c.h.b16 %v1332
    %v4975 = vunpack.c.l.b16 %v1333
    %v4976 = vunpack.c.h.b16 %v1333
    %v4977 = vunpack.c.l.b16 %v1334
    %v4978 = vunpack.c.h.b16 %v1334
    %v4979 = vunpack.c.l.b16 %v1335
    %v4980 = vunpack.c.h.b16 %v1335
    %v4981 = vunpack.c.l.b16 %v1336
    %v4982 = vunpack.c.h.b16 %v1336
    %v4983 = vunpack.c.l.b16 %v1337
    %v4984 = vunpack.c.h.b16 %v1337
    %v4985 = vunpack.c.l.b16 %v1338
    %v4986 = vunpack.c.h.b16 %v1338
    %v4987 = vunpack.c.l.b16 %v1339
    %v4988 = vunpack.c.h.b16 %v1339
    %v4989 = vunpack.c.l.b16 %v1340
    %v4990 = vunpack.c.h.b16 %v1340
    %v4991 = vunpack.c.l.b16 %v1341
    %v4992 = vunpack.c.h.b16 %v1341
    %v4993 = vunpack.c.l.b16 %v1342
    %v4994 = vunpack.c.h.b16 %v1342
    %v4995 = vunpack.c.l.b16 %v1343
    %v4996 = vunpack.c.h.b16 %v1343
    %v4997 = vunpack.c.l.b16 %v1344
    %v4998 = vunpack.c.h.b16 %v1344
    %v4999 = vunpack.c.l.b16 %v1345
    %v5000 = vunpack.c.h.b16 %v1345
    %v5001 = vunpack.c.l.b16 %v1346
    %v5002 = vunpack.c.h.b16 %v1346
    %v5003 = vunpack.c.l.b16 %v1347
    %v5004 = vunpack.c.h.b16 %v1347
    %v5005 = vunpack.c.l.b16 %v1348
    %v5006 = vunpack.c.h.b16 %v1348
    %v5007 = vunpack.c.l.b16 %v1349
    %v5008 = vunpack.c.h.b16 %v1349
    %v5009 = vunpack.c.l.b16 %v1350
    %v5010 = vunpack.c.h.b16 %v1350
    %v5011 = vunpack.c.l.b16 %v1351
    %v5012 = vunpack.c.h.b16 %v1351
    %v5013 = vunpack.c.l.b16 %v1352
    %v5014 = vunpack.c.h.b16 %v1352
    %v5015 = vunpack.c.l.b16 %v1353
    %v5016 = vunpack.c.h.b16 %v1353
    %v5017 = vunpack.c.l.b16 %v1354
    %v5018 = vunpack.c.h.b16 %v1354
    %v5019 = vunpack.c.l.b16 %v1355
    %v5020 = vunpack.c.h.b16 %v1355
    %v5021 = vunpack.c.l.b16 %v1356
    %v5022 = vunpack.c.h.b16 %v1356
    %v5023 = vunpack.c.l.b16 %v1357
    %v5024 = vunpack.c.h.b16 %v1357
    %v5025 = vunpack.c.l.b16 %v1358
    %v5026 = vunpack.c.h.b16 %v1358
    %v5027 = vunpack.c.l.b16 %v1359
    %v5028 = vunpack.c.h.b16 %v1359
    %v5029 = vunpack.c.l.b16 %v1360
    %v5030 = vunpack.c.h.b16 %v1360
    %v5031 = vunpack.c.l.b16 %v1361
    %v5032 = vunpack.c.h.b16 %v1361
    %v5033 = vunpack.c.l.b16 %v1362
    %v5034 = vunpack.c.h.b16 %v1362
    %v5035 = vunpack.c.l.b16 %v1363
    %v5036 = vunpack.c.h.b16 %v1363
    %v5037 = vunpack.c.l.b16 %v1364
    %v5038 = vunpack.c.h.b16 %v1364
    %v5039 = vunpack.c.l.b16 %v1365
    %v5040 = vunpack.c.h.b16 %v1365
    %v5041 = vunpack.c.l.b16 %v1366
    %v5042 = vunpack.c.h.b16 %v1366
    %v5043 = vunpack.c.l.b16 %v1367
    %v5044 = vunpack.c.h.b16 %v1367
    %v5045 = vunpack.c.l.b16 %v1368
    %v5046 = vunpack.c.h.b16 %v1368
    %v5047 = vunpack.c.l.b16 %v1369
    %v5048 = vunpack.c.h.b16 %v1369
    %v5049 = vunpack.c.l.b16 %v1370
    %v5050 = vunpack.c.h.b16 %v1370
    %v5051 = vunpack.c.l.b16 %v1371
    %v5052 = vunpack.c.h.b16 %v1371
    %v5053 = vunpack.c.l.b16 %v1372
    %v5054 = vunpack.c.h.b16 %v1372
    %v5055 = vunpack.c.l.b16 %v1373
    %v5056 = vunpack.c.h.b16 %v1373
    %v5057 = vunpack.c.l.b16 %v1374
    %v5058 = vunpack.c.h.b16 %v1374
    %v5059 = vunpack.c.l.b16 %v1375
    %v5060 = vunpack.c.h.b16 %v1375
    %v5061 = vunpack.c.l.b16 %v1376
    %v5062 = vunpack.c.h.b16 %v1376
    %v5063 = vunpack.c.l.b16 %v1377
    %v5064 = vunpack.c.h.b16 %v1377
    %v5065 = vunpack.c.l.b16 %v1378
    %v5066 = vunpack.c.h.b16 %v1378
    %v5067 = vunpack.c.l.b16 %v1379
    %v5068 = vunpack.c.h.b16 %v1379
    %v5069 = vunpack.c.l.b16 %v1380
    %v5070 = vunpack.c.h.b16 %v1380
    %v5071 = vunpack.c.l.b16 %v1381
    %v5072 = vunpack.c.h.b16 %v1381
    %v5073 = vunpack.c.l.b16 %v1382
    %v5074 = vunpack.c.h.b16 %v1382
    %v5075 = vunpack.c.l.b16 %v1383
    %v5076 = vunpack.c.h.b16 %v1383
    %v5077 = vunpack.c.l.b16 %v1384
    %v5078 = vunpack.c.h.b16 %v1384
    %v5079 = vunpack.c.l.b16 %v1385
    %v5080 = vunpack.c.h.b16 %v1385
    %v5081 = vunpack.c.l.b16 %v1386
    %v5082 = vunpack.c.h.b16 %v1386
    %v5083 = vunpack.c.l.b16 %v1387
    %v5084 = vunpack.c.h.b16 %v1387
    %v5085 = vunpack.c.l.b16 %v1388
    %v5086 = vunpack.c.h.b16 %v1388
    %v5087 = vunpack.c.l.b16 %v1389
    %v5088 = vunpack.c.h.b16 %v1389
    %v5089 = vunpack.c.l.b16 %v1390
    %v5090 = vunpack.c.h.b16 %v1390
    %v5091 = vunpack.c.l.b16 %v1391
    %v5092 = vunpack.c.h.b16 %v1391
    %v5093 = vunpack.c.l.b16 %v1392
    %v5094 = vunpack.c.h.b16 %v1392
    %v5095 = vunpack.c.l.b16 %v1393
    %v5096 = vunpack.c.h.b16 %v1393
    %v5097 = vunpack.c.l.b16 %v1394
    %v5098 = vunpack.c.h.b16 %v1394
    %v5099 = vunpack.c.l.b16 %v1395
    %v5100 = vunpack.c.h.b16 %v1395
    %v5101 = vunpack.c.l.b16 %v1396
    %v5102 = vunpack.c.h.b16 %v1396
    %v5103 = vunpack.c.l.b16 %v1397
    %v5104 = vunpack.c.h.b16 %v1397
    %v5105 = vunpack.c.l.b16 %v1398
    %v5106 = vunpack.c.h.b16 %v1398
    %v5107 = vunpack.c.l.b16 %v1399
    %v5108 = vunpack.c.h.b16 %v1399
    %v5109 = vunpack.c.l.b16 %v1400
    %v5110 = vunpack.c.h.b16 %v1400
    %v5111 = vunpack.c.l.b16 %v1401
    %v5112 = vunpack.c.h.b16 %v1401
    %v5113 = vunpack.c.l.b16 %v1402
    %v5114 = vunpack.c.h.b16 %v1402
    %v5115 = vunpack.c.l.b16 %v1403
    %v5116 = vunpack.c.h.b16 %v1403
    %v5117 = vunpack.c.l.b16 %v1404
    %v5118 = vunpack.c.h.b16 %v1404
    %v5119 = vunpack.c.l.b16 %v1405
    %v5120 = vunpack.c.h.b16 %v1405
    %v5121 = vunpack.c.l.b16 %v1406
    %v5122 = vunpack.c.h.b16 %v1406
    %v5123 = vunpack.c.l.b16 %v1407
    %v5124 = vunpack.c.h.b16 %v1407
    %v5125 = vunpack.c.l.b16 %v1408
    %v5126 = vunpack.c.h.b16 %v1408
    %v5127 = vunpack.c.l.b16 %v1409
    %v5128 = vunpack.c.h.b16 %v1409
    %v5129 = vunpack.c.l.b16 %v1410
    %v5130 = vunpack.c.h.b16 %v1410
    %v5131 = vunpack.c.l.b16 %v1411
    %v5132 = vunpack.c.h.b16 %v1411
    %v5133 = vunpack.c.l.b16 %v1412
    %v5134 = vunpack.c.h.b16 %v1412
    %v5135 = vunpack.c.l.b16 %v1413
    %v5136 = vunpack.c.h.b16 %v1413
    %v5137 = vunpack.c.l.b16 %v1414
    %v5138 = vunpack.c.h.b16 %v1414
    %v5139 = vunpack.c.l.b16 %v1415
    %v5140 = vunpack.c.h.b16 %v1415
    %v5141 = vunpack.c.l.b16 %v1416
    %v5142 = vunpack.c.h.b16 %v1416
    %v5143 = vunpack.c.l.b16 %v1417
    %v5144 = vunpack.c.h.b16 %v1417
    %v5145 = vunpack.c.l.b16 %v1418
    %v5146 = vunpack.c.h.b16 %v1418
    %v5147 = vunpack.c.l.b16 %v1419
    %v5148 = vunpack.c.h.b16 %v1419
    %v5149 = vunpack.c.l.b16 %v1420
    %v5150 = vunpack.c.h.b16 %v1420
    %v5151 = vunpack.c.l.b16 %v1421
    %v5152 = vunpack.c.h.b16 %v1421
    %v5153 = vunpack.c.l.b16 %v1422
    %v5154 = vunpack.c.h.b16 %v1422
    %v5155 = vunpack.c.l.b16 %v1423
    %v5156 = vunpack.c.h.b16 %v1423
    %v5157 = vunpack.c.l.b16 %v1424
    %v5158 = vunpack.c.h.b16 %v1424
    %v5159 = vunpack.c.l.b16 %v1425
    %v5160 = vunpack.c.h.b16 %v1425
    %v5161 = vunpack.c.l.b16 %v1426
    %v5162 = vunpack.c.h.b16 %v1426
    %v5163 = vunpack.c.l.b16 %v1427
    %v5164 = vunpack.c.h.b16 %v1427
    %v5165 = vunpack.c.l.b16 %v1428
    %v5166 = vunpack.c.h.b16 %v1428
    %v5167 = vunpack.c.l.b16 %v1429
    %v5168 = vunpack.c.h.b16 %v1429
    %v5169 = vunpack.c.l.b16 %v1430
    %v5170 = vunpack.c.h.b16 %v1430
    %v5171 = vunpack.c.l.b16 %v1431
    %v5172 = vunpack.c.h.b16 %v1431
    %v5173 = vunpack.c.l.b16 %v1432
    %v5174 = vunpack.c.h.b16 %v1432
    %v5175 = vunpack.c.l.b16 %v1433
    %v5176 = vunpack.c.h.b16 %v1433
    %v5177 = vunpack.c.l.b16 %v1434
    %v5178 = vunpack.c.h.b16 %v1434
    %v5179 = vunpack.c.l.b16 %v1435
    %v5180 = vunpack.c.h.b16 %v1435
    %v5181 = vunpack.c.l.b16 %v1436
    %v5182 = vunpack.c.h.b16 %v1436
    %v5183 = vunpack.c.l.b16 %v1437
    %v5184 = vunpack.c.h.b16 %v1437
    %v5185 = vunpack.c.l.b16 %v1438
    %v5186 = vunpack.c.h.b16 %v1438
    %v5187 = vunpack.c.l.b16 %v1439
    %v5188 = vunpack.c.h.b16 %v1439
    %v5189 = vunpack.c.l.b16 %v1440
    %v5190 = vunpack.c.h.b16 %v1440
    %v5191 = vunpack.c.l.b16 %v1441
    %v5192 = vunpack.c.h.b16 %v1441
    %v5193 = vunpack.c.l.b16 %v1442
    %v5194 = vunpack.c.h.b16 %v1442
    %v5195 = vunpack.c.l.b16 %v1443
    %v5196 = vunpack.c.h.b16 %v1443
    %v5197 = vunpack.c.l.b16 %v1444
    %v5198 = vunpack.c.h.b16 %v1444
    %v5199 = vunpack.c.l.b16 %v1445
    %v5200 = vunpack.c.h.b16 %v1445
    %v5201 = vunpack.c.l.b16 %v1446
    %v5202 = vunpack.c.h.b16 %v1446
    %v5203 = vunpack.c.l.b16 %v1447
    %v5204 = vunpack.c.h.b16 %v1447
    %v5205 = vunpack.c.l.b16 %v1448
    %v5206 = vunpack.c.h.b16 %v1448
    %v5207 = vunpack.c.l.b16 %v1449
    %v5208 = vunpack.c.h.b16 %v1449
    %v5209 = vunpack.c.l.b16 %v1450
    %v5210 = vunpack.c.h.b16 %v1450
    %v5211 = vunpack.c.l.b16 %v1451
    %v5212 = vunpack.c.h.b16 %v1451
    %v5213 = vunpack.c.l.b16 %v1452
    %v5214 = vunpack.c.h.b16 %v1452
    %v5215 = vunpack.c.l.b16 %v1453
    %v5216 = vunpack.c.h.b16 %v1453
    %v5217 = vunpack.c.l.b16 %v1454
    %v5218 = vunpack.c.h.b16 %v1454
    %v5219 = vunpack.c.l.b16 %v1455
    %v5220 = vunpack.c.h.b16 %v1455
    %v5221 = vunpack.c.l.b16 %v1456
    %v5222 = vunpack.c.h.b16 %v1456
    %v5223 = vunpack.c.l.b16 %v1457
    %v5224 = vunpack.c.h.b16 %v1457
    %v5225 = vunpack.c.l.b16 %v1458
    %v5226 = vunpack.c.h.b16 %v1458
    %v5227 = vunpack.c.l.b16 %v1459
    %v5228 = vunpack.c.h.b16 %v1459
    %v5229 = vunpack.c.l.b16 %v1460
    %v5230 = vunpack.c.h.b16 %v1460
    %v5231 = vunpack.c.l.b16 %v1461
    %v5232 = vunpack.c.h.b16 %v1461
    %v5233 = vunpack.c.l.b16 %v1462
    %v5234 = vunpack.c.h.b16 %v1462
    %v5235 = vunpack.c.l.b16 %v1463
    %v5236 = vunpack.c.h.b16 %v1463
    %v5237 = vunpack.c.l.b16 %v1464
    %v5238 = vunpack.c.h.b16 %v1464
    %v5239 = vunpack.c.l.b16 %v1465
    %v5240 = vunpack.c.h.b16 %v1465
    %v5241 = vunpack.c.l.b16 %v1466
    %v5242 = vunpack.c.h.b16 %v1466
    %v5243 = vunpack.c.l.b16 %v1467
    %v5244 = vunpack.c.h.b16 %v1467
    %v5245 = vunpack.c.l.b16 %v1468
    %v5246 = vunpack.c.h.b16 %v1468
    %v5247 = vunpack.c.l.b16 %v1469
    %v5248 = vunpack.c.h.b16 %v1469
    %v5249 = vunpack.c.l.b16 %v1470
    %v5250 = vunpack.c.h.b16 %v1470
    %v5251 = vunpack.c.l.b16 %v1471
    %v5252 = vunpack.c.h.b16 %v1471
    %v5253 = vunpack.c.l.b16 %v1472
    %v5254 = vunpack.c.h.b16 %v1472
    %v5255 = vunpack.c.l.b16 %v1473
    %v5256 = vunpack.c.h.b16 %v1473
    %v5257 = vunpack.c.l.b16 %v1474
    %v5258 = vunpack.c.h.b16 %v1474
    %v5259 = vunpack.c.l.b16 %v1475
    %v5260 = vunpack.c.h.b16 %v1475
    %v5261 = vunpack.c.l.b16 %v1476
    %v5262 = vunpack.c.h.b16 %v1476
    %v5263 = vunpack.c.l.b16 %v1477
    %v5264 = vunpack.c.h.b16 %v1477
    %v5265 = vunpack.c.l.b16 %v1478
    %v5266 = vunpack.c.h.b16 %v1478
    %v5267 = vunpack.c.l.b16 %v1479
    %v5268 = vunpack.c.h.b16 %v1479
    %v5269 = vunpack.c.l.b16 %v1480
    %v5270 = vunpack.c.h.b16 %v1480
    %v5271 = vunpack.c.l.b16 %v1481
    %v5272 = vunpack.c.h.b16 %v1481
    %v5273 = vunpack.c.l.b16 %v1482
    %v5274 = vunpack.c.h.b16 %v1482
    %v5275 = vunpack.c.l.b16 %v1483
    %v5276 = vunpack.c.h.b16 %v1483
    %v5277 = vunpack.c.l.b16 %v1484
    %v5278 = vunpack.c.h.b16 %v1484
    %v5279 = vunpack.c.l.b16 %v1485
    %v5280 = vunpack.c.h.b16 %v1485
    %v5281 = vunpack.c.l.b16 %v1486
    %v5282 = vunpack.c.h.b16 %v1486
    %v5283 = vunpack.c.l.b16 %v1487
    %v5284 = vunpack.c.h.b16 %v1487
    %v5285 = vunpack.c.l.b16 %v1488
    %v5286 = vunpack.c.h.b16 %v1488
    %v5287 = vunpack.c.l.b16 %v1489
    %v5288 = vunpack.c.h.b16 %v1489
    %v5289 = vunpack.c.l.b16 %v1490
    %v5290 = vunpack.c.h.b16 %v1490
    %v5291 = vunpack.c.l.b16 %v1491
    %v5292 = vunpack.c.h.b16 %v1491
    %v5293 = vunpack.c.l.b16 %v1492
    %v5294 = vunpack.c.h.b16 %v1492
    %v5295 = vunpack.c.l.b16 %v1493
    %v5296 = vunpack.c.h.b16 %v1493
    %v5297 = vunpack.c.l.b16 %v1494
    %v5298 = vunpack.c.h.b16 %v1494
    %v5299 = vunpack.c.l.b16 %v1495
    %v5300 = vunpack.c.h.b16 %v1495
    %v5301 = vunpack.c.l.b16 %v1496
    %v5302 = vunpack.c.h.b16 %v1496
    %v5303 = vunpack.c.l.b16 %v1497
    %v5304 = vunpack.c.h.b16 %v1497
    %v5305 = vunpack.c.l.b16 %v1498
    %v5306 = vunpack.c.h.b16 %v1498
    %v5307 = vunpack.c.l.b16 %v1499
    %v5308 = vunpack.c.h.b16 %v1499
    %v5309 = vunpack.c.l.b16 %v1500
    %v5310 = vunpack.c.h.b16 %v1500
    %v5311 = vunpack.c.l.b16 %v1501
    %v5312 = vunpack.c.h.b16 %v1501
    %v5313 = vunpack.c.l.b16 %v1502
    %v5314 = vunpack.c.h.b16 %v1502
    %v5315 = vunpack.c.l.b16 %v1503
    %v5316 = vunpack.c.h.b16 %v1503
    %v5317 = vunpack.c.l.b16 %v1504
    %v5318 = vunpack.c.h.b16 %v1504
    %v5319 = vunpack.c.l.b16 %v1505
    %v5320 = vunpack.c.h.b16 %v1505
    %v5321 = vunpack.c.l.b16 %v1506
    %v5322 = vunpack.c.h.b16 %v1506
    %v5323 = vunpack.c.l.b16 %v1507
    %v5324 = vunpack.c.h.b16 %v1507
    %v5325 = vunpack.c.l.b16 %v1508
    %v5326 = vunpack.c.h.b16 %v1508
    %v5327 = vunpack.c.l.b16 %v1509
    %v5328 = vunpack.c.h.b16 %v1509
    %v5329 = vunpack.c.l.b16 %v1510
    %v5330 = vunpack.c.h.b16 %v1510
    %v5331 = vunpack.c.l.b16 %v1511
    %v5332 = vunpack.c.h.b16 %v1511
    %v5333 = vunpack.c.l.b16 %v1512
    %v5334 = vunpack.c.h.b16 %v1512
    %v5335 = vunpack.c.l.b16 %v1513
    %v5336 = vunpack.c.h.b16 %v1513
    %v5337 = vunpack.c.l.b16 %v1514
    %v5338 = vunpack.c.h.b16 %v1514
    %v5339 = vunpack.c.l.b16 %v1515
    %v5340 = vunpack.c.h.b16 %v1515
    %v5341 = vunpack.c.l.b16 %v1516
    %v5342 = vunpack.c.h.b16 %v1516
    %v5343 = vunpack.c.l.b16 %v1517
    %v5344 = vunpack.c.h.b16 %v1517
    %v5345 = vunpack.c.l.b16 %v1518
    %v5346 = vunpack.c.h.b16 %v1518
    %v5347 = vunpack.c.l.b16 %v1519
    %v5348 = vunpack.c.h.b16 %v1519
    %v5349 = vunpack.c.l.b16 %v1520
    %v5350 = vunpack.c.h.b16 %v1520
    %v5351 = vunpack.c.l.b16 %v1521
    %v5352 = vunpack.c.h.b16 %v1521
    %v5353 = vunpack.c.l.b16 %v1522
    %v5354 = vunpack.c.h.b16 %v1522
    %v5355 = vunpack.c.l.b16 %v1523
    %v5356 = vunpack.c.h.b16 %v1523
    %v5357 = vunpack.c.l.b16 %v1524
    %v5358 = vunpack.c.h.b16 %v1524
    %v5359 = vunpack.c.l.b16 %v1525
    %v5360 = vunpack.c.h.b16 %v1525
    %v5361 = vunpack.c.l.b16 %v1526
    %v5362 = vunpack.c.h.b16 %v1526
    %v5363 = vunpack.c.l.b16 %v1527
    %v5364 = vunpack.c.h.b16 %v1527
    %v5365 = vunpack.c.l.b16 %v1528
    %v5366 = vunpack.c.h.b16 %v1528
    %v5367 = vunpack.c.l.b16 %v1529
    %v5368 = vunpack.c.h.b16 %v1529
    %v5369 = vunpack.c.l.b16 %v1530
    %v5370 = vunpack.c.h.b16 %v1530
    %v5371 = vunpack.c.l.b16 %v1531
    %v5372 = vunpack.c.h.b16 %v1531
    %v5373 = vunpack.c.l.b16 %v1532
    %v5374 = vunpack.c.h.b16 %v1532
    %v5375 = vunpack.c.l.b16 %v1533
    %v5376 = vunpack.c.h.b16 %v1533
    %v5377 = vunpack.c.l.b16 %v1534
    %v5378 = vunpack.c.h.b16 %v1534
    %v5379 = vunpack.c.l.b16 %v1535
    %v5380 = vunpack.c.h.b16 %v1535
    %v5381 = vunpack.c.l.b16 %v1536
    %v5382 = vunpack.c.h.b16 %v1536
    %v5383 = vunpack.c.l.b16 %v1537
    %v5384 = vunpack.c.h.b16 %v1537
    %v5385 = vunpack.c.l.b16 %v1538
    %v5386 = vunpack.c.h.b16 %v1538
    %v5387 = vunpack.c.l.b16 %v1539
    %v5388 = vunpack.c.h.b16 %v1539
    %v5389 = vunpack.c.l.b16 %v1540
    %v5390 = vunpack.c.h.b16 %v1540
    %v5391 = vunpack.c.l.b16 %v1541
    %v5392 = vunpack.c.h.b16 %v1541
    %v5393 = vunpack.c.l.b16 %v1542
    %v5394 = vunpack.c.h.b16 %v1542
    %v5395 = vunpack.c.l.b16 %v1543
    %v5396 = vunpack.c.h.b16 %v1543
    %v5397 = vunpack.c.l.b16 %v1544
    %v5398 = vunpack.c.h.b16 %v1544
    %v5399 = vunpack.c.l.b16 %v1545
    %v5400 = vunpack.c.h.b16 %v1545
    %v5401 = vunpack.c.l.b16 %v1546
    %v5402 = vunpack.c.h.b16 %v1546
    %v5403 = vunpack.c.l.b16 %v1547
    %v5404 = vunpack.c.h.b16 %v1547
    %v5405 = vunpack.c.l.b16 %v1548
    %v5406 = vunpack.c.h.b16 %v1548
    %v5407 = vunpack.c.l.b16 %v1549
    %v5408 = vunpack.c.h.b16 %v1549
    %v5409 = vunpack.c.l.b16 %v1550
    %v5410 = vunpack.c.h.b16 %v1550
    %v5411 = vunpack.c.l.b16 %v1551
    %v5412 = vunpack.c.h.b16 %v1551
    %v5413 = vunpack.c.l.b16 %v1552
    %v5414 = vunpack.c.h.b16 %v1552
    %v5415 = vunpack.c.l.b16 %v1553
    %v5416 = vunpack.c.h.b16 %v1553
    %v5417 = vunpack.c.l.b16 %v1554
    %v5418 = vunpack.c.h.b16 %v1554
    %v5419 = vunpack.c.l.b16 %v1555
    %v5420 = vunpack.c.h.b16 %v1555
    %v5421 = vunpack.c.l.b16 %v1556
    %v5422 = vunpack.c.h.b16 %v1556
    %v5423 = vunpack.c.l.b16 %v1557
    %v5424 = vunpack.c.h.b16 %v1557
    %v5425 = vunpack.c.l.b16 %v1558
    %v5426 = vunpack.c.h.b16 %v1558
    %v5427 = vunpack.c.l.b16 %v1559
    %v5428 = vunpack.c.h.b16 %v1559
    %v5429 = vunpack.c.l.b16 %v1560
    %v5430 = vunpack.c.h.b16 %v1560
    %v5431 = vunpack.c.l.b16 %v1561
    %v5432 = vunpack.c.h.b16 %v1561
    %v5433 = vunpack.c.l.b16 %v1562
    %v5434 = vunpack.c.h.b16 %v1562
    %v5435 = vunpack.c.l.b16 %v1563
    %v5436 = vunpack.c.h.b16 %v1563
    %v5437 = vunpack.c.l.b16 %v1564
    %v5438 = vunpack.c.h.b16 %v1564
    %v5439 = vunpack.c.l.b16 %v1565
    %v5440 = vunpack.c.h.b16 %v1565
    %v5441 = vunpack.c.l.b16 %v1566
    %v5442 = vunpack.c.h.b16 %v1566
    %v5443 = vunpack.c.l.b16 %v1567
    %v5444 = vunpack.c.h.b16 %v1567
    %v5445 = vunpack.c.l.b16 %v1568
    %v5446 = vunpack.c.h.b16 %v1568
    %v5447 = vunpack.c.l.b16 %v1569
    %v5448 = vunpack.c.h.b16 %v1569
    %v5449 = vunpack.c.l.b16 %v1570
    %v5450 = vunpack.c.h.b16 %v1570
    %v5451 = vunpack.c.l.b16 %v1571
    %v5452 = vunpack.c.h.b16 %v1571
    %v5453 = vunpack.c.l.b16 %v1572
    %v5454 = vunpack.c.h.b16 %v1572
    %v5455 = vunpack.c.l.b16 %v1573
    %v5456 = vunpack.c.h.b16 %v1573
    %v5457 = vunpack.c.l.b16 %v1574
    %v5458 = vunpack.c.h.b16 %v1574
    %v5459 = vunpack.c.l.b16 %v1575
    %v5460 = vunpack.c.h.b16 %v1575
    %v5461 = vunpack.c.l.b16 %v1576
    %v5462 = vunpack.c.h.b16 %v1576
    %v5463 = vunpack.c.l.b16 %v1577
    %v5464 = vunpack.c.h.b16 %v1577
    %v5465 = vunpack.c.l.b16 %v1578
    %v5466 = vunpack.c.h.b16 %v1578
    %v5467 = vunpack.c.l.b16 %v1579
    %v5468 = vunpack.c.h.b16 %v1579
    %v5469 = vunpack.c.l.b16 %v1580
    %v5470 = vunpack.c.h.b16 %v1580
    %v5471 = vunpack.c.l.b16 %v1581
    %v5472 = vunpack.c.h.b16 %v1581
    %v5473 = vunpack.c.l.b16 %v1582
    %v5474 = vunpack.c.h.b16 %v1582
    %v5475 = vunpack.c.l.b16 %v1583
    %v5476 = vunpack.c.h.b16 %v1583
    %v5477 = vunpack.c.l.b16 %v1584
    %v5478 = vunpack.c.h.b16 %v1584
    %v5479 = vunpack.c.l.b16 %v1585
    %v5480 = vunpack.c.h.b16 %v1585
    %v5481 = vunpack.c.l.b16 %v1586
    %v5482 = vunpack.c.h.b16 %v1586
    %v5483 = vunpack.c.l.b16 %v1587
    %v5484 = vunpack.c.h.b16 %v1587
    %v5485 = vunpack.c.l.b16 %v1588
    %v5486 = vunpack.c.h.b16 %v1588
    %v5487 = vunpack.c.l.b16 %v1589
    %v5488 = vunpack.c.h.b16 %v1589
    %v5489 = vunpack.c.l.b16 %v1590
    %v5490 = vunpack.c.h.b16 %v1590
    %v5491 = vunpack.c.l.b16 %v1591
    %v5492 = vunpack.c.h.b16 %v1591
    %v5493 = vunpack.c.l.b16 %v1592
    %v5494 = vunpack.c.h.b16 %v1592
    %v5495 = vunpack.c.l.b16 %v1593
    %v5496 = vunpack.c.h.b16 %v1593
    %v5497 = vunpack.c.l.b16 %v1594
    %v5498 = vunpack.c.h.b16 %v1594
    %v5499 = vunpack.c.l.b16 %v1595
    %v5500 = vunpack.c.h.b16 %v1595
    %v5501 = vunpack.c.l.b16 %v1596
    %v5502 = vunpack.c.h.b16 %v1596
    %v5503 = vunpack.c.l.b16 %v1597
    %v5504 = vunpack.c.h.b16 %v1597
    %v5505 = vunpack.c.l.b16 %v1598
    %v5506 = vunpack.c.h.b16 %v1598
    %v5507 = vunpack.c.l.b16 %v1599
    %v5508 = vunpack.c.h.b16 %v1599
    %v5509 = vunpack.c.l.b16 %v1600
    %v5510 = vunpack.c.h.b16 %v1600
    %v5511 = vunpack.c.l.b16 %v1601
    %v5512 = vunpack.c.h.b16 %v1601
    %v5513 = vunpack.c.l.b16 %v1602
    %v5514 = vunpack.c.h.b16 %v1602
    %v5515 = vunpack.c.l.b16 %v1603
    %v5516 = vunpack.c.h.b16 %v1603
    %v5517 = vunpack.c.l.b16 %v1604
    %v5518 = vunpack.c.h.b16 %v1604
    %v5519 = vunpack.c.l.b16 %v1605
    %v5520 = vunpack.c.h.b16 %v1605
    %v5521 = vunpack.c.l.b16 %v1606
    %v5522 = vunpack.c.h.b16 %v1606
    %v5523 = vunpack.c.l.b16 %v1607
    %v5524 = vunpack.c.h.b16 %v1607
    %v5525 = vunpack.c.l.b16 %v1608
    %v5526 = vunpack.c.h.b16 %v1608
    %v5527 = vunpack.c.l.b16 %v1609
    %v5528 = vunpack.c.h.b16 %v1609
    %v5529 = vunpack.c.l.b16 %v1610
    %v5530 = vunpack.c.h.b16 %v1610
    %v5531 = vunpack.c.l.b16 %v1611
    %v5532 = vunpack.c.h.b16 %v1611
    %v5533 = vunpack.c.l.b16 %v1612
    %v5534 = vunpack.c.h.b16 %v1612
    %v5535 = vunpack.c.l.b16 %v1613
    %v5536 = vunpack.c.h.b16 %v1613
    %v5537 = vunpack.c.l.b16 %v1614
    %v5538 = vunpack.c.h.b16 %v1614
    %v5539 = vunpack.c.l.b16 %v1615
    %v5540 = vunpack.c.h.b16 %v1615
    %v5541 = vunpack.c.l.b16 %v1616
    %v5542 = vunpack.c.h.b16 %v1616
    %v5543 = vunpack.c.l.b16 %v1617
    %v5544 = vunpack.c.h.b16 %v1617
    %v5545 = vunpack.c.l.b16 %v1618
    %v5546 = vunpack.c.h.b16 %v1618
    %v5547 = vunpack.c.l.b16 %v1619
    %v5548 = vunpack.c.h.b16 %v1619
    %v5549 = vunpack.c.l.b16 %v1620
    %v5550 = vunpack.c.h.b16 %v1620
    %v5551 = vunpack.c.l.b16 %v1621
    %v5552 = vunpack.c.h.b16 %v1621
    %v5553 = vunpack.c.l.b16 %v1622
    %v5554 = vunpack.c.h.b16 %v1622
    %v5555 = vunpack.c.l.b16 %v1623
    %v5556 = vunpack.c.h.b16 %v1623
    %v5557 = vunpack.c.l.b16 %v1624
    %v5558 = vunpack.c.h.b16 %v1624
    %v5559 = vunpack.c.l.b16 %v1625
    %v5560 = vunpack.c.h.b16 %v1625
    %v5561 = vunpack.c.l.b16 %v1626
    %v5562 = vunpack.c.h.b16 %v1626
    %v5563 = vunpack.c.l.b16 %v1627
    %v5564 = vunpack.c.h.b16 %v1627
    %v5565 = vunpack.c.l.b16 %v1628
    %v5566 = vunpack.c.h.b16 %v1628
    %v5567 = vunpack.c.l.b16 %v1629
    %v5568 = vunpack.c.h.b16 %v1629
    %v5569 = vunpack.c.l.b16 %v1630
    %v5570 = vunpack.c.h.b16 %v1630
    %v5571 = vunpack.c.l.b16 %v1631
    %v5572 = vunpack.c.h.b16 %v1631
    %v5573 = vunpack.c.l.b16 %v1632
    %v5574 = vunpack.c.h.b16 %v1632
    %v5575 = vunpack.c.l.b16 %v1633
    %v5576 = vunpack.c.h.b16 %v1633
    %v5577 = vunpack.c.l.b16 %v1634
    %v5578 = vunpack.c.h.b16 %v1634
    %v5579 = vunpack.c.l.b16 %v1635
    %v5580 = vunpack.c.h.b16 %v1635
    %v5581 = vunpack.c.l.b16 %v1636
    %v5582 = vunpack.c.h.b16 %v1636
    %v5583 = vunpack.c.l.b16 %v1637
    %v5584 = vunpack.c.h.b16 %v1637
    %v5585 = vunpack.c.l.b16 %v1638
    %v5586 = vunpack.c.h.b16 %v1638
    %v5587 = vunpack.c.l.b16 %v1639
    %v5588 = vunpack.c.h.b16 %v1639
    %v5589 = vunpack.c.l.b16 %v1640
    %v5590 = vunpack.c.h.b16 %v1640
    %v5591 = vunpack.c.l.b16 %v1641
    %v5592 = vunpack.c.h.b16 %v1641
    %v5593 = vunpack.c.l.b16 %v1642
    %v5594 = vunpack.c.h.b16 %v1642
    %v5595 = vunpack.c.l.b16 %v1643
    %v5596 = vunpack.c.h.b16 %v1643
    %v5597 = vunpack.c.l.b16 %v1644
    %v5598 = vunpack.c.h.b16 %v1644
    %v5599 = vunpack.c.l.b16 %v1645
    %v5600 = vunpack.c.h.b16 %v1645
    %v5601 = vunpack.c.l.b16 %v1646
    %v5602 = vunpack.c.h.b16 %v1646
    %v5603 = vunpack.c.l.b16 %v1647
    %v5604 = vunpack.c.h.b16 %v1647
    %v5605 = vunpack.c.l.b16 %v1648
    %v5606 = vunpack.c.h.b16 %v1648
    %v5607 = vunpack.c.l.b16 %v1649
    %v5608 = vunpack.c.h.b16 %v1649
    %v5609 = vunpack.c.l.b16 %v1650
    %v5610 = vunpack.c.h.b16 %v1650
    %v5611 = vunpack.c.l.b16 %v1651
    %v5612 = vunpack.c.h.b16 %v1651
    %v5613 = vunpack.c.l.b16 %v1652
    %v5614 = vunpack.c.h.b16 %v1652
    %v5615 = vunpack.c.l.b16 %v1653
    %v5616 = vunpack.c.h.b16 %v1653
    %v5617 = vunpack.c.l.b16 %v1654
    %v5618 = vunpack.c.h.b16 %v1654
    %v5619 = vunpack.c.l.b16 %v1655
    %v5620 = vunpack.c.h.b16 %v1655
    %v5621 = vunpack.c.l.b16 %v1656
    %v5622 = vunpack.c.h.b16 %v1656
    %v5623 = vunpack.c.l.b16 %v1657
    %v5624 = vunpack.c.h.b16 %v1657
    %v5625 = vunpack.c.l.b16 %v1658
    %v5626 = vunpack.c.h.b16 %v1658
    %v5627 = vunpack.c.l.b16 %v1659
    %v5628 = vunpack.c.h.b16 %v1659
    %v5629 = vunpack.c.l.b16 %v1660
    %v5630 = vunpack.c.h.b16 %v1660
    %v5631 = vunpack.c.l.b16 %v1661
    %v5632 = vunpack.c.h.b16 %v1661
    %v5633 = vunpack.c.l.b16 %v1662
    %v5634 = vunpack.c.h.b16 %v1662
    %v5635 = vunpack.c.l.b16 %v1663
    %v5636 = vunpack.c.h.b16 %v1663
    %v5637 = vunpack.c.l.b16 %v1664
    %v5638 = vunpack.c.h.b16 %v1664
    %v5639 = vunpack.c.l.b16 %v1665
    %v5640 = vunpack.c.h.b16 %v1665
    %v5641 = vunpack.c.l.b16 %v1666
    %v5642 = vunpack.c.h.b16 %v1666
    %v5643 = vunpack.c.l.b16 %v1667
    %v5644 = vunpack.c.h.b16 %v1667
    %v5645 = vunpack.c.l.b16 %v1668
    %v5646 = vunpack.c.h.b16 %v1668
    %v5647 = vunpack.c.l.b16 %v1669
    %v5648 = vunpack.c.h.b16 %v1669
    %v5649 = vunpack.c.l.b16 %v1670
    %v5650 = vunpack.c.h.b16 %v1670
    %v5651 = vunpack.c.l.b16 %v1671
    %v5652 = vunpack.c.h.b16 %v1671
    %v5653 = vunpack.c.l.b16 %v1672
    %v5654 = vunpack.c.h.b16 %v1672
    %v5655 = vunpack.c.l.b16 %v1673
    %v5656 = vunpack.c.h.b16 %v1673
    %v5657 = vunpack.c.l.b16 %v1674
    %v5658 = vunpack.c.h.b16 %v1674
    %v5659 = vunpack.c.l.b16 %v1675
    %v5660 = vunpack.c.h.b16 %v1675
    %v5661 = vunpack.c.l.b16 %v1676
    %v5662 = vunpack.c.h.b16 %v1676
    %v5663 = vunpack.c.l.b16 %v1677
    %v5664 = vunpack.c.h.b16 %v1677
    %v5665 = vunpack.c.l.b16 %v1678
    %v5666 = vunpack.c.h.b16 %v1678
    %v5667 = vunpack.c.l.b16 %v1679
    %v5668 = vunpack.c.h.b16 %v1679
    %v5669 = vunpack.c.l.b16 %v1680
    %v5670 = vunpack.c.h.b16 %v1680
    %v5671 = vunpack.c.l.b16 %v1681
    %v5672 = vunpack.c.h.b16 %v1681
    %v5673 = vunpack.c.l.b16 %v1682
    %v5674 = vunpack.c.h.b16 %v1682
    %v5675 = vunpack.c.l.b16 %v1683
    %v5676 = vunpack.c.h.b16 %v1683
    %v5677 = vunpack.c.l.b16 %v1684
    %v5678 = vunpack.c.h.b16 %v1684
    %v5679 = vunpack.c.l.b16 %v1685
    %v5680 = vunpack.c.h.b16 %v1685
    %v5681 = vunpack.c.l.b16 %v1686
    %v5682 = vunpack.c.h.b16 %v1686
    %v5683 = vunpack.c.l.b16 %v1687
    %v5684 = vunpack.c.h.b16 %v1687
    %v5685 = vunpack.c.l.b16 %v1688
    %v5686 = vunpack.c.h.b16 %v1688
    %v5687 = vunpack.c.l.b16 %v1689
    %v5688 = vunpack.c.h.b16 %v1689
    %v5689 = vunpack.c.l.b16 %v1690
    %v5690 = vunpack.c.h.b16 %v1690
    %v5691 = vunpack.c.l.b16 %v1691
    %v5692 = vunpack.c.h.b16 %v1691
    %v5693 = vunpack.c.l.b16 %v1692
    %v5694 = vunpack.c.h.b16 %v1692
    %v5695 = vunpack.c.l.b16 %v1693
    %v5696 = vunpack.c.h.b16 %v1693
    %v5697 = vunpack.c.l.b16 %v1694
    %v5698 = vunpack.c.h.b16 %v1694
    %v5699 = vunpack.c.l.b16 %v1695
    %v5700 = vunpack.c.h.b16 %v1695
    %v5701 = vunpack.c.l.b16 %v1696
    %v5702 = vunpack.c.h.b16 %v1696
    %v5703 = vunpack.c.l.b16 %v1697
    %v5704 = vunpack.c.h.b16 %v1697
    %v5705 = vunpack.c.l.b16 %v1698
    %v5706 = vunpack.c.h.b16 %v1698
    %v5707 = vunpack.c.l.b16 %v1699
    %v5708 = vunpack.c.h.b16 %v1699
    %v5709 = vunpack.c.l.b16 %v1700
    %v5710 = vunpack.c.h.b16 %v1700
    %v5711 = vunpack.c.l.b16 %v1701
    %v5712 = vunpack.c.h.b16 %v1701
    %v5713 = vunpack.c.l.b16 %v1702
    %v5714 = vunpack.c.h.b16 %v1702
    %v5715 = vunpack.c.l.b16 %v1703
    %v5716 = vunpack.c.h.b16 %v1703
    %v5717 = vunpack.c.l.b16 %v1704
    %v5718 = vunpack.c.h.b16 %v1704
    %v5719 = vunpack.c.l.b16 %v1705
    %v5720 = vunpack.c.h.b16 %v1705
    %v5721 = vunpack.c.l.b16 %v1706
    %v5722 = vunpack.c.h.b16 %v1706
    %v5723 = vunpack.c.l.b16 %v1707
    %v5724 = vunpack.c.h.b16 %v1707
    %v5725 = vunpack.c.l.b16 %v1708
    %v5726 = vunpack.c.h.b16 %v1708
    %v5727 = vunpack.c.l.b16 %v1709
    %v5728 = vunpack.c.h.b16 %v1709
    %v5729 = vunpack.c.l.b16 %v1710
    %v5730 = vunpack.c.h.b16 %v1710
    %v5731 = vunpack.c.l.b16 %v1711
    %v5732 = vunpack.c.h.b16 %v1711
    %v5733 = vunpack.c.l.b16 %v1712
    %v5734 = vunpack.c.h.b16 %v1712
    %v5735 = vunpack.c.l.b16 %v1713
    %v5736 = vunpack.c.h.b16 %v1713
    %v5737 = vunpack.c.l.b16 %v1714
    %v5738 = vunpack.c.h.b16 %v1714
    %v5739 = vunpack.c.l.b16 %v1715
    %v5740 = vunpack.c.h.b16 %v1715
    %v5741 = vunpack.c.l.b16 %v1716
    %v5742 = vunpack.c.h.b16 %v1716
    %v5743 = vunpack.c.l.b16 %v1717
    %v5744 = vunpack.c.h.b16 %v1717
    %v5745 = vunpack.c.l.b16 %v1718
    %v5746 = vunpack.c.h.b16 %v1718
    %v5747 = vunpack.c.l.b16 %v1719
    %v5748 = vunpack.c.h.b16 %v1719
    %v5749 = vunpack.c.l.b16 %v1720
    %v5750 = vunpack.c.h.b16 %v1720
    %v5751 = vunpack.c.l.b16 %v1721
    %v5752 = vunpack.c.h.b16 %v1721
    %v5753 = vunpack.c.l.b16 %v1722
    %v5754 = vunpack.c.h.b16 %v1722
    %v5755 = vunpack.c.l.b16 %v1723
    %v5756 = vunpack.c.h.b16 %v1723
    %v5757 = vunpack.c.l.b16 %v1724
    %v5758 = vunpack.c.h.b16 %v1724
    %v5759 = vunpack.c.l.b16 %v1725
    %v5760 = vunpack.c.h.b16 %v1725
    %v5761 = vunpack.c.l.b16 %v1726
    %v5762 = vunpack.c.h.b16 %v1726
    %v5763 = vunpack.c.l.b16 %v1727
    %v5764 = vunpack.c.h.b16 %v1727
    %v5765 = vunpack.c.l.b16 %v1728
    %v5766 = vunpack.c.h.b16 %v1728
    %v5767 = vunpack.c.l.b16 %v1729
    %v5768 = vunpack.c.h.b16 %v1729
    %v5769 = vunpack.c.l.b16 %v1730
    %v5770 = vunpack.c.h.b16 %v1730
    %v5771 = vunpack.c.l.b16 %v1731
    %v5772 = vunpack.c.h.b16 %v1731
    %v5773 = vunpack.c.l.b16 %v1732
    %v5774 = vunpack.c.h.b16 %v1732
    %v5775 = vunpack.c.l.b16 %v1733
    %v5776 = vunpack.c.h.b16 %v1733
    %v5777 = vunpack.c.l.b16 %v1734
    %v5778 = vunpack.c.h.b16 %v1734
    %v5779 = vunpack.c.l.b16 %v1735
    %v5780 = vunpack.c.h.b16 %v1735
    %v5781 = vunpack.c.l.b16 %v1736
    %v5782 = vunpack.c.h.b16 %v1736
    %v5783 = vunpack.c.l.b16 %v1737
    %v5784 = vunpack.c.h.b16 %v1737
    %v5785 = vunpack.c.l.b16 %v1738
    %v5786 = vunpack.c.h.b16 %v1738
    %v5787 = vunpack.c.l.b16 %v1739
    %v5788 = vunpack.c.h.b16 %v1739
    %v5789 = vunpack.c.l.b16 %v1740
    %v5790 = vunpack.c.h.b16 %v1740
    %v5791 = vunpack.c.l.b16 %v1741
    %v5792 = vunpack.c.h.b16 %v1741
    %v5793 = vunpack.c.l.b16 %v1742
    %v5794 = vunpack.c.h.b16 %v1742
    %v5795 = vunpack.c.l.b16 %v1743
    %v5796 = vunpack.c.h.b16 %v1743
    %v5797 = vunpack.c.l.b16 %v1744
    %v5798 = vunpack.c.h.b16 %v1744
    %v5799 = vunpack.c.l.b16 %v1745
    %v5800 = vunpack.c.h.b16 %v1745
    %v5801 = vunpack.c.l.b16 %v1746
    %v5802 = vunpack.c.h.b16 %v1746
    %v5803 = vunpack.c.l.b16 %v1747
    %v5804 = vunpack.c.h.b16 %v1747
    %v5805 = vunpack.c.l.b16 %v1748
    %v5806 = vunpack.c.h.b16 %v1748
    %v5807 = vunpack.c.l.b16 %v1749
    %v5808 = vunpack.c.h.b16 %v1749
    %v5809 = vunpack.c.l.b16 %v1750
    %v5810 = vunpack.c.h.b16 %v1750
    %v5811 = vunpack.c.l.b16 %v1751
    %v5812 = vunpack.c.h.b16 %v1751
    %v5813 = vunpack.c.l.b16 %v1752
    %v5814 = vunpack.c.h.b16 %v1752
    %v5815 = vunpack.c.l.b16 %v1753
    %v5816 = vunpack.c.h.b16 %v1753
    %v5817 = vunpack.c.l.b16 %v1754
    %v5818 = vunpack.c.h.b16 %v1754
    %v5819 = vunpack.c.l.b16 %v1755
    %v5820 = vunpack.c.h.b16 %v1755
    %v5821 = vunpack.c.l.b16 %v1756
    %v5822 = vunpack.c.h.b16 %v1756
    %v5823 = vunpack.c.l.b16 %v1757
    %v5824 = vunpack.c.h.b16 %v1757
    %v5825 = vunpack.c.l.b16 %v1758
    %v5826 = vunpack.c.h.b16 %v1758
    %v5827 = vunpack.c.l.b16 %v1759
    %v5828 = vunpack.c.h.b16 %v1759
    %v5829 = vunpack.c.l.b16 %v1760
    %v5830 = vunpack.c.h.b16 %v1760
    %v5831 = vunpack.c.l.b16 %v1761
    %v5832 = vunpack.c.h.b16 %v1761
    %v5833 = vunpack.c.l.b16 %v1762
    %v5834 = vunpack.c.h.b16 %v1762
    %v5835 = vunpack.c.l.b16 %v1763
    %v5836 = vunpack.c.h.b16 %v1763
    %v5837 = vunpack.c.l.b16 %v1764
    %v5838 = vunpack.c.h.b16 %v1764
    %v5839 = vunpack.c.l.b16 %v1765
    %v5840 = vunpack.c.h.b16 %v1765
    %v5841 = vunpack.c.l.b16 %v1766
    %v5842 = vunpack.c.h.b16 %v1766
    %v5843 = vunpack.c.l.b16 %v1767
    %v5844 = vunpack.c.h.b16 %v1767
    %v5845 = vunpack.c.l.b16 %v1768
    %v5846 = vunpack.c.h.b16 %v1768
    %v5847 = vunpack.c.l.b16 %v1769
    %v5848 = vunpack.c.h.b16 %v1769
    %v5849 = vunpack.c.l.b16 %v1770
    %v5850 = vunpack.c.h.b16 %v1770
    %v5851 = vunpack.c.l.b16 %v1771
    %v5852 = vunpack.c.h.b16 %v1771
    %v5853 = vunpack.c.l.b16 %v1772
    %v5854 = vunpack.c.h.b16 %v1772
    %v5855 = vunpack.c.l.b16 %v1773
    %v5856 = vunpack.c.h.b16 %v1773
    %v5857 = vunpack.c.l.b16 %v1774
    %v5858 = vunpack.c.h.b16 %v1774
    %v5859 = vunpack.c.l.b16 %v1775
    %v5860 = vunpack.c.h.b16 %v1775
    %v5861 = vunpack.c.l.b16 %v1776
    %v5862 = vunpack.c.h.b16 %v1776
    %v5863 = vunpack.c.l.b16 %v1777
    %v5864 = vunpack.c.h.b16 %v1777
    %v5865 = vunpack.c.l.b16 %v1778
    %v5866 = vunpack.c.h.b16 %v1778
    %v5867 = vunpack.c.l.b16 %v1779
    %v5868 = vunpack.c.h.b16 %v1779
    %v5869 = vunpack.c.l.b16 %v1780
    %v5870 = vunpack.c.h.b16 %v1780
    %v5871 = vunpack.c.l.b16 %v1781
    %v5872 = vunpack.c.h.b16 %v1781
    %v5873 = vunpack.c.l.b16 %v1782
    %v5874 = vunpack.c.h.b16 %v1782
    %v5875 = vunpack.c.l.b16 %v1783
    %v5876 = vunpack.c.h.b16 %v1783
    %v5877 = vunpack.c.l.b16 %v1784
    %v5878 = vunpack.c.h.b16 %v1784
    %v5879 = vunpack.c.l.b16 %v1785
    %v5880 = vunpack.c.h.b16 %v1785
    %v5881 = vunpack.c.l.b16 %v1786
    %v5882 = vunpack.c.h.b16 %v1786
    %v5883 = vunpack.c.l.b16 %v1787
    %v5884 = vunpack.c.h.b16 %v1787
    %v5885 = vunpack.c.l.b16 %v1788
    %v5886 = vunpack.c.h.b16 %v1788
    %v5887 = vunpack.c.l.b16 %v1789
    %v5888 = vunpack.c.h.b16 %v1789
    %v5889 = vunpack.c.l.b16 %v1790
    %v5890 = vunpack.c.h.b16 %v1790
    %v5891 = vunpack.c.l.b16 %v1791
    %v5892 = vunpack.c.h.b16 %v1791
    %v5893 = vunpack.c.l.b16 %v1792
    %v5894 = vunpack.c.h.b16 %v1792
    %v5895 = vunpack.c.l.b16 %v1793
    %v5896 = vunpack.c.h.b16 %v1793
    %v5897 = vunpack.c.l.b16 %v1794
    %v5898 = vunpack.c.h.b16 %v1794
    %v5899 = vunpack.c.l.b16 %v1795
    %v5900 = vunpack.c.h.b16 %v1795
    %v5901 = vunpack.c.l.b16 %v1796
    %v5902 = vunpack.c.h.b16 %v1796
    %v5903 = vunpack.c.l.b16 %v1797
    %v5904 = vunpack.c.h.b16 %v1797
    %v5905 = vunpack.c.l.b16 %v1798
    %v5906 = vunpack.c.h.b16 %v1798
    %v5907 = vunpack.c.l.b16 %v1799
    %v5908 = vunpack.c.h.b16 %v1799
    %v5909 = vpack.c.b16 %v3893, %v3861
    %v5910 = vpack.c.b16 %v3894, %v3862
    %v5911 = vpack.c.b16 %v3895, %v3863
    %v5912 = vpack.c.b16 %v3896, %v3864
    %v5913 = vpack.c.b16 %v3897, %v3865
    %v5914 = vpack.c.b16 %v3898, %v3866
    %v5915 = vpack.c.b16 %v3899, %v3867
    %v5916 = vpack.c.b16 %v3900, %v3868
    %v5917 = vpack.c.b16 %v3901, %v3869
    %v5918 = vpack.c.b16 %v3902, %v3870
    %v5919 = vpack.c.b16 %v3903, %v3871
    %v5920 = vpack.c.b16 %v3904, %v3872
    %v5921 = vpack.c.b16 %v3905, %v3873
    %v5922 = vpack.c.b16 %v3906, %v3874
    %v5923 = vpack.c.b16 %v3907, %v3875
    %v5924 = vpack.c.b16 %v3908, %v3876
    %v5925 = vpack.c.b16 %v3909, %v3877
    %v5926 = vpack.c.b16 %v3910, %v3878
    %v5927 = vpack.c.b16 %v3911, %v3879
    %v5928 = vpack.c.b16 %v3912, %v3880
    %v5929 = vpack.c.b16 %v3913, %v3881
    %v5930 = vpack.c.b16 %v3914, %v3882
    %v5931 = vpack.c.b16 %v3915, %v3883
    %v5932 = vpack.c.b16 %v3916, %v3884
    %v5933 = vpack.c.b16 %v3917, %v3885
    %v5934 = vpack.c.b16 %v3918, %v3886
    %v5935 = vpack.c.b16 %v3919, %v3887
    %v5936 = vpack.c.b16 %v3920, %v3888
    %v5937 = vpack.c.b16 %v3921, %v3889
    %v5938 = vpack.c.b16 %v3922, %v3890
    %v5939 = vpack.c.b16 %v3923, %v3891
    %v5940 = vpack.c.b16 %v3924, %v3892
    %v5941 = vpack.c.b16 %v3957, %v3925
    %v5942 = vpack.c.b16 %v3958, %v3926
    %v5943 = vpack.c.b16 %v3959, %v3927
    %v5944 = vpack.c.b16 %v3960, %v3928
    %v5945 = vpack.c.b16 %v3961, %v3929
    %v5946 = vpack.c.b16 %v3962, %v3930
    %v5947 = vpack.c.b16 %v3963, %v3931
    %v5948 = vpack.c.b16 %v3964, %v3932
    %v5949 = vpack.c.b16 %v3965, %v3933
    %v5950 = vpack.c.b16 %v3966, %v3934
    %v5951 = vpack.c.b16 %v3967, %v3935
    %v5952 = vpack.c.b16 %v3968, %v3936
    %v5953 = vpack.c.b16 %v3969, %v3937
    %v5954 = vpack.c.b16 %v3970, %v3938
    %v5955 = vpack.c.b16 %v3971, %v3939
    %v5956 = vpack.c.b16 %v3972, %v3940
    %v5957 = vpack.c.b16 %v3973, %v3941
    %v5958 = vpack.c.b16 %v3974, %v3942
    %v5959 = vpack.c.b16 %v3975, %v3943
    %v5960 = vpack.c.b16 %v3976, %v3944
    %v5961 = vpack.c.b16 %v3977, %v3945
    %v5962 = vpack.c.b16 %v3978, %v3946
    %v5963 = vpack.c.b16 %v3979, %v3947
    %v5964 = vpack.c.b16 %v3980, %v3948
    %v5965 = vpack.c.b16 %v3981, %v3949
    %v5966 = vpack.c.b16 %v3982, %v3950
    %v5967 = vpack.c.b16 %v3983, %v3951
    %v5968 = vpack.c.b16 %v3984, %v3952
    %v5969 = vpack.c.b16 %v3985, %v3953
    %v5970 = vpack.c.b16 %v3986, %v3954
    %v5971 = vpack.c.b16 %v3987, %v3955
    %v5972 = vpack.c.b16 %v3988, %v3956
    %v5973 = vpack.c.b16 %v4021, %v3989
    %v5974 = vpack.c.b16 %v4022, %v3990
    %v5975 = vpack.c.b16 %v4023, %v3991
    %v5976 = vpack.c.b16 %v4024, %v3992
    %v5977 = vpack.c.b16 %v4025, %v3993
    %v5978 = vpack.c.b16 %v4026, %v3994
    %v5979 = vpack.c.b16 %v4027, %v3995
    %v5980 = vpack.c.b16 %v4028, %v3996
    %v5981 = vpack.c.b16 %v4029, %v3997
    %v5982 = vpack.c.b16 %v4030, %v3998
    %v5983 = vpack.c.b16 %v4031, %v3999
    %v5984 = vpack.c.b16 %v4032, %v4000
    %v5985 = vpack.c.b16 %v4033, %v4001
    %v5986 = vpack.c.b16 %v4034, %v4002
    %v5987 = vpack.c.b16 %v4035, %v4003
    %v5988 = vpack.c.b16 %v4036, %v4004
    %v5989 = vpack.c.b16 %v4037, %v4005
    %v5990 = vpack.c.b16 %v4038, %v4006
    %v5991 = vpack.c.b16 %v4039, %v4007
    %v5992 = vpack.c.b16 %v4040, %v4008
    %v5993 = vpack.c.b16 %v4041, %v4009
    %v5994 = vpack.c.b16 %v4042, %v4010
    %v5995 = vpack.c.b16 %v4043, %v4011
    %v5996 = vpack.c.b16 %v4044, %v4012
    %v5997 = vpack.c.b16 %v4045, %v4013
    %v5998 = vpack.c.b16 %v4046, %v4014
    %v5999 = vpack.c.b16 %v4047, %v4015
    %v6000 = vpack.c.b16 %v4048, %v4016
    %v6001 = vpack.c.b16 %v4049, %v4017
    %v6002 = vpack.c.b16 %v4050, %v4018
    %v6003 = vpack.c.b16 %v4051, %v4019
    %v6004 = vpack.c.b16 %v4052, %v4020
    %v6005 = vpack.c.b16 %v4085, %v4053
    %v6006 = vpack.c.b16 %v4086, %v4054
    %v6007 = vpack.c.b16 %v4087, %v4055
    %v6008 = vpack.c.b16 %v4088, %v4056
    %v6009 = vpack.c.b16 %v4089, %v4057
    %v6010 = vpack.c.b16 %v4090, %v4058
    %v6011 = vpack.c.b16 %v4091, %v4059
    %v6012 = vpack.c.b16 %v4092, %v4060
    %v6013 = vpack.c.b16 %v4093, %v4061
    %v6014 = vpack.c.b16 %v4094, %v4062
    %v6015 = vpack.c.b16 %v4095, %v4063
    %v6016 = vpack.c.b16 %v4096, %v4064
    %v6017 = vpack.c.b16 %v4097, %v4065
    %v6018 = vpack.c.b16 %v4098, %v4066
    %v6019 = vpack.c.b16 %v4099, %v4067
    %v6020 = vpack.c.b16 %v4100, %v4068
    %v6021 = vpack.c.b16 %v4101, %v4069
    %v6022 = vpack.c.b16 %v4102, %v4070
    %v6023 = vpack.c.b16 %v4103, %v4071
    %v6024 = vpack.c.b16 %v4104, %v4072
    %v6025 = vpack.c.b16 %v4105, %v4073
    %v6026 = vpack.c.b16 %v4106, %v4074
    %v6027 = vpack.c.b16 %v4107, %v4075
    %v6028 = vpack.c.b16 %v4108, %v4076
    %v6029 = vpack.c.b16 %v4109, %v4077
    %v6030 = vpack.c.b16 %v4110, %v4078
    %v6031 = vpack.c.b16 %v4111, %v4079
    %v6032 = vpack.c.b16 %v4112, %v4080
    %v6033 = vpack.c.b16 %v4113, %v4081
    %v6034 = vpack.c.b16 %v4114, %v4082
    %v6035 = vpack.c.b16 %v4115, %v4083
    %v6036 = vpack.c.b16 %v4116, %v4084
    %v6037 = vpack.c.b16 %v4149, %v4117
    %v6038 = vpack.c.b16 %v4150, %v4118
    %v6039 = vpack.c.b16 %v4151, %v4119
    %v6040 = vpack.c.b16 %v4152, %v4120
    %v6041 = vpack.c.b16 %v4153, %v4121
    %v6042 = vpack.c.b16 %v4154, %v4122
    %v6043 = vpack.c.b16 %v4155, %v4123
    %v6044 = vpack.c.b16 %v4156, %v4124
    %v6045 = vpack.c.b16 %v4157, %v4125
    %v6046 = vpack.c.b16 %v4158, %v4126
    %v6047 = vpack.c.b16 %v4159, %v4127
    %v6048 = vpack.c.b16 %v4160, %v4128
    %v6049 = vpack.c.b16 %v4161, %v4129
    %v6050 = vpack.c.b16 %v4162, %v4130
    %v6051 = vpack.c.b16 %v4163, %v4131
    %v6052 = vpack.c.b16 %v4164, %v4132
    %v6053 = vpack.c.b16 %v4165, %v4133
    %v6054 = vpack.c.b16 %v4166, %v4134
    %v6055 = vpack.c.b16 %v4167, %v4135
    %v6056 = vpack.c.b16 %v4168, %v4136
    %v6057 = vpack.c.b16 %v4169, %v4137
    %v6058 = vpack.c.b16 %v4170, %v4138
    %v6059 = vpack.c.b16 %v4171, %v4139
    %v6060 = vpack.c.b16 %v4172, %v4140
    %v6061 = vpack.c.b16 %v4173, %v4141
    %v6062 = vpack.c.b16 %v4174, %v4142
    %v6063 = vpack.c.b16 %v4175, %v4143
    %v6064 = vpack.c.b16 %v4176, %v4144
    %v6065 = vpack.c.b16 %v4177, %v4145
    %v6066 = vpack.c.b16 %v4178, %v4146
    %v6067 = vpack.c.b16 %v4179, %v4147
    %v6068 = vpack.c.b16 %v4180, %v4148
    %v6069 = vpack.c.b16 %v4213, %v4181
    %v6070 = vpack.c.b16 %v4214, %v4182
    %v6071 = vpack.c.b16 %v4215, %v4183
    %v6072 = vpack.c.b16 %v4216, %v4184
    %v6073 = vpack.c.b16 %v4217, %v4185
    %v6074 = vpack.c.b16 %v4218, %v4186
    %v6075 = vpack.c.b16 %v4219, %v4187
    %v6076 = vpack.c.b16 %v4220, %v4188
    %v6077 = vpack.c.b16 %v4221, %v4189
    %v6078 = vpack.c.b16 %v4222, %v4190
    %v6079 = vpack.c.b16 %v4223, %v4191
    %v6080 = vpack.c.b16 %v4224, %v4192
    %v6081 = vpack.c.b16 %v4225, %v4193
    %v6082 = vpack.c.b16 %v4226, %v4194
    %v6083 = vpack.c.b16 %v4227, %v4195
    %v6084 = vpack.c.b16 %v4228, %v4196
    %v6085 = vpack.c.b16 %v4229, %v4197
    %v6086 = vpack.c.b16 %v4230, %v4198
    %v6087 = vpack.c.b16 %v4231, %v4199
    %v6088 = vpack.c.b16 %v4232, %v4200
    %v6089 = vpack.c.b16 %v4233, %v4201
    %v6090 = vpack.c.b16 %v4234, %v4202
    %v6091 = vpack.c.b16 %v4235, %v4203
    %v6092 = vpack.c.b16 %v4236, %v4204
    %v6093 = vpack.c.b16 %v4237, %v4205
    %v6094 = vpack.c.b16 %v4238, %v4206
    %v6095 = vpack.c.b16 %v4239, %v4207
    %v6096 = vpack.c.b16 %v4240, %v4208
    %v6097 = vpack.c.b16 %v4241, %v4209
    %v6098 = vpack.c.b16 %v4242, %v4210
    %v6099 = vpack.c.b16 %v4243, %v4211
    %v6100 = vpack.c.b16 %v4244, %v4212
    %v6101 = vpack.c.b16 %v4277, %v4245
    %v6102 = vpack.c.b16 %v4278, %v4246
    %v6103 = vpack.c.b16 %v4279, %v4247
    %v6104 = vpack.c.b16 %v4280, %v4248
    %v6105 = vpack.c.b16 %v4281, %v4249
    %v6106 = vpack.c.b16 %v4282, %v4250
    %v6107 = vpack.c.b16 %v4283, %v4251
    %v6108 = vpack.c.b16 %v4284, %v4252
    %v6109 = vpack.c.b16 %v4285, %v4253
    %v6110 = vpack.c.b16 %v4286, %v4254
    %v6111 = vpack.c.b16 %v4287, %v4255
    %v6112 = vpack.c.b16 %v4288, %v4256
    %v6113 = vpack.c.b16 %v4289, %v4257
    %v6114 = vpack.c.b16 %v4290, %v4258
    %v6115 = vpack.c.b16 %v4291, %v4259
    %v6116 = vpack.c.b16 %v4292, %v4260
    %v6117 = vpack.c.b16 %v4293, %v4261
    %v6118 = vpack.c.b16 %v4294, %v4262
    %v6119 = vpack.c.b16 %v4295, %v4263
    %v6120 = vpack.c.b16 %v4296, %v4264
    %v6121 = vpack.c.b16 %v4297, %v4265
    %v6122 = vpack.c.b16 %v4298, %v4266
    %v6123 = vpack.c.b16 %v4299, %v4267
    %v6124 = vpack.c.b16 %v4300, %v4268
    %v6125 = vpack.c.b16 %v4301, %v4269
    %v6126 = vpack.c.b16 %v4302, %v4270
    %v6127 = vpack.c.b16 %v4303, %v4271
    %v6128 = vpack.c.b16 %v4304, %v4272
    %v6129 = vpack.c.b16 %v4305, %v4273
    %v6130 = vpack.c.b16 %v4306, %v4274
    %v6131 = vpack.c.b16 %v4307, %v4275
    %v6132 = vpack.c.b16 %v4308, %v4276
    %v6133 = vpack.c.b16 %v4341, %v4309
    %v6134 = vpack.c.b16 %v4342, %v4310
    %v6135 = vpack.c.b16 %v4343, %v4311
    %v6136 = vpack.c.b16 %v4344, %v4312
    %v6137 = vpack.c.b16 %v4345, %v4313
    %v6138 = vpack.c.b16 %v4346, %v4314
    %v6139 = vpack.c.b16 %v4347, %v4315
    %v6140 = vpack.c.b16 %v4348, %v4316
    %v6141 = vpack.c.b16 %v4349, %v4317
    %v6142 = vpack.c.b16 %v4350, %v4318
    %v6143 = vpack.c.b16 %v4351, %v4319
    %v6144 = vpack.c.b16 %v4352, %v4320
    %v6145 = vpack.c.b16 %v4353, %v4321
    %v6146 = vpack.c.b16 %v4354, %v4322
    %v6147 = vpack.c.b16 %v4355, %v4323
    %v6148 = vpack.c.b16 %v4356, %v4324
    %v6149 = vpack.c.b16 %v4357, %v4325
    %v6150 = vpack.c.b16 %v4358, %v4326
    %v6151 = vpack.c.b16 %v4359, %v4327
    %v6152 = vpack.c.b16 %v4360, %v4328
    %v6153 = vpack.c.b16 %v4361, %v4329
    %v6154 = vpack.c.b16 %v4362, %v4330
    %v6155 = vpack.c.b16 %v4363, %v4331
    %v6156 = vpack.c.b16 %v4364, %v4332
    %v6157 = vpack.c.b16 %v4365, %v4333
    %v6158 = vpack.c.b16 %v4366, %v4334
    %v6159 = vpack.c.b16 %v4367, %v4335
    %v6160 = vpack.c.b16 %v4368, %v4336
    %v6161 = vpack.c.b16 %v4369, %v4337
    %v6162 = vpack.c.b16 %v4370, %v4338
    %v6163 = vpack.c.b16 %v4371, %v4339
    %v6164 = vpack.c.b16 %v4372, %v4340
    %v6165 = vpack.c.b16 %v4405, %v4373
    %v6166 = vpack.c.b16 %v4406, %v4374
    %v6167 = vpack.c.b16 %v4407, %v4375
    %v6168 = vpack.c.b16 %v4408, %v4376
    %v6169 = vpack.c.b16 %v4409, %v4377
    %v6170 = vpack.c.b16 %v4410, %v4378
    %v6171 = vpack.c.b16 %v4411, %v4379
    %v6172 = vpack.c.b16 %v4412, %v4380
    %v6173 = vpack.c.b16 %v4413, %v4381
    %v6174 = vpack.c.b16 %v4414, %v4382
    %v6175 = vpack.c.b16 %v4415, %v4383
    %v6176 = vpack.c.b16 %v4416, %v4384
    %v6177 = vpack.c.b16 %v4417, %v4385
    %v6178 = vpack.c.b16 %v4418, %v4386
    %v6179 = vpack.c.b16 %v4419, %v4387
    %v6180 = vpack.c.b16 %v4420, %v4388
    %v6181 = vpack.c.b16 %v4421, %v4389
    %v6182 = vpack.c.b16 %v4422, %v4390
    %v6183 = vpack.c.b16 %v4423, %v4391
    %v6184 = vpack.c.b16 %v4424, %v4392
    %v6185 = vpack.c.b16 %v4425, %v4393
    %v6186 = vpack.c.b16 %v4426, %v4394
    %v6187 = vpack.c.b16 %v4427, %v4395
    %v6188 = vpack.c.b16 %v4428, %v4396
    %v6189 = vpack.c.b16 %v4429, %v4397
    %v6190 = vpack.c.b16 %v4430, %v4398
    %v6191 = vpack.c.b16 %v4431, %v4399
    %v6192 = vpack.c.b16 %v4432, %v4400
    %v6193 = vpack.c.b16 %v4433, %v4401
    %v6194 = vpack.c.b16 %v4434, %v4402
    %v6195 = vpack.c.b16 %v4435, %v4403
    %v6196 = vpack.c.b16 %v4436, %v4404
    %v6197 = vpack.c.b16 %v4469, %v4437
    %v6198 = vpack.c.b16 %v4470, %v4438
    %v6199 = vpack.c.b16 %v4471, %v4439
    %v6200 = vpack.c.b16 %v4472, %v4440
    %v6201 = vpack.c.b16 %v4473, %v4441
    %v6202 = vpack.c.b16 %v4474, %v4442
    %v6203 = vpack.c.b16 %v4475, %v4443
    %v6204 = vpack.c.b16 %v4476, %v4444
    %v6205 = vpack.c.b16 %v4477, %v4445
    %v6206 = vpack.c.b16 %v4478, %v4446
    %v6207 = vpack.c.b16 %v4479, %v4447
    %v6208 = vpack.c.b16 %v4480, %v4448
    %v6209 = vpack.c.b16 %v4481, %v4449
    %v6210 = vpack.c.b16 %v4482, %v4450
    %v6211 = vpack.c.b16 %v4483, %v4451
    %v6212 = vpack.c.b16 %v4484, %v4452
    %v6213 = vpack.c.b16 %v4485, %v4453
    %v6214 = vpack.c.b16 %v4486, %v4454
    %v6215 = vpack.c.b16 %v4487, %v4455
    %v6216 = vpack.c.b16 %v4488, %v4456
    %v6217 = vpack.c.b16 %v4489, %v4457
    %v6218 = vpack.c.b16 %v4490, %v4458
    %v6219 = vpack.c.b16 %v4491, %v4459
    %v6220 = vpack.c.b16 %v4492, %v4460
    %v6221 = vpack.c.b16 %v4493, %v4461
    %v6222 = vpack.c.b16 %v4494, %v4462
    %v6223 = vpack.c.b16 %v4495, %v4463
    %v6224 = vpack.c.b16 %v4496, %v4464
    %v6225 = vpack.c.b16 %v4497, %v4465
    %v6226 = vpack.c.b16 %v4498, %v4466
    %v6227 = vpack.c.b16 %v4499, %v4467
    %v6228 = vpack.c.b16 %v4500, %v4468
    %v6229 = vpack.c.b16 %v4533, %v4501
    %v6230 = vpack.c.b16 %v4534, %v4502
    %v6231 = vpack.c.b16 %v4535, %v4503
    %v6232 = vpack.c.b16 %v4536, %v4504
    %v6233 = vpack.c.b16 %v4537, %v4505
    %v6234 = vpack.c.b16 %v4538, %v4506
    %v6235 = vpack.c.b16 %v4539, %v4507
    %v6236 = vpack.c.b16 %v4540, %v4508
    %v6237 = vpack.c.b16 %v4541, %v4509
    %v6238 = vpack.c.b16 %v4542, %v4510
    %v6239 = vpack.c.b16 %v4543, %v4511
    %v6240 = vpack.c.b16 %v4544, %v4512
    %v6241 = vpack.c.b16 %v4545, %v4513
    %v6242 = vpack.c.b16 %v4546, %v4514
    %v6243 = vpack.c.b16 %v4547, %v4515
    %v6244 = vpack.c.b16 %v4548, %v4516
    %v6245 = vpack.c.b16 %v4549, %v4517
    %v6246 = vpack.c.b16 %v4550, %v4518
    %v6247 = vpack.c.b16 %v4551, %v4519
    %v6248 = vpack.c.b16 %v4552, %v4520
    %v6249 = vpack.c.b16 %v4553, %v4521
    %v6250 = vpack.c.b16 %v4554, %v4522
    %v6251 = vpack.c.b16 %v4555, %v4523
    %v6252 = vpack.c.b16 %v4556, %v4524
    %v6253 = vpack.c.b16 %v4557, %v4525
    %v6254 = vpack.c.b16 %v4558, %v4526
    %v6255 = vpack.c.b16 %v4559, %v4527
    %v6256 = vpack.c.b16 %v4560, %v4528
    %v6257 = vpack.c.b16 %v4561, %v4529
    %v6258 = vpack.c.b16 %v4562, %v4530
    %v6259 = vpack.c.b16 %v4563, %v4531
    %v6260 = vpack.c.b16 %v4564, %v4532
    %v6261 = vpack.c.b16 %v4597, %v4565
    %v6262 = vpack.c.b16 %v4598, %v4566
    %v6263 = vpack.c.b16 %v4599, %v4567
    %v6264 = vpack.c.b16 %v4600, %v4568
    %v6265 = vpack.c.b16 %v4601, %v4569
    %v6266 = vpack.c.b16 %v4602, %v4570
    %v6267 = vpack.c.b16 %v4603, %v4571
    %v6268 = vpack.c.b16 %v4604, %v4572
    %v6269 = vpack.c.b16 %v4605, %v4573
    %v6270 = vpack.c.b16 %v4606, %v4574
    %v6271 = vpack.c.b16 %v4607, %v4575
    %v6272 = vpack.c.b16 %v4608, %v4576
    %v6273 = vpack.c.b16 %v4609, %v4577
    %v6274 = vpack.c.b16 %v4610, %v4578
    %v6275 = vpack.c.b16 %v4611, %v4579
    %v6276 = vpack.c.b16 %v4612, %v4580
    %v6277 = vpack.c.b16 %v4613, %v4581
    %v6278 = vpack.c.b16 %v4614, %v4582
    %v6279 = vpack.c.b16 %v4615, %v4583
    %v6280 = vpack.c.b16 %v4616, %v4584
    %v6281 = vpack.c.b16 %v4617, %v4585
    %v6282 = vpack.c.b16 %v4618, %v4586
    %v6283 = vpack.c.b16 %v4619, %v4587
    %v6284 = vpack.c.b16 %v4620, %v4588
    %v6285 = vpack.c.b16 %v4621, %v4589
    %v6286 = vpack.c.b16 %v4622, %v4590
    %v6287 = vpack.c.b16 %v4623, %v4591
    %v6288 = vpack.c.b16 %v4624, %v4592
    %v6289 = vpack.c.b16 %v4625, %v4593
    %v6290 = vpack.c.b16 %v4626, %v4594
    %v6291 = vpack.c.b16 %v4627, %v4595
    %v6292 = vpack.c.b16 %v4628, %v4596
    %v6293 = vpack.c.b16 %v4661, %v4629
    %v6294 = vpack.c.b16 %v4662, %v4630
    %v6295 = vpack.c.b16 %v4663, %v4631
    %v6296 = vpack.c.b16 %v4664, %v4632
    %v6297 = vpack.c.b16 %v4665, %v4633
    %v6298 = vpack.c.b16 %v4666, %v4634
    %v6299 = vpack.c.b16 %v4667, %v4635
    %v6300 = vpack.c.b16 %v4668, %v4636
    %v6301 = vpack.c.b16 %v4669, %v4637
    %v6302 = vpack.c.b16 %v4670, %v4638
    %v6303 = vpack.c.b16 %v4671, %v4639
    %v6304 = vpack.c.b16 %v4672, %v4640
    %v6305 = vpack.c.b16 %v4673, %v4641
    %v6306 = vpack.c.b16 %v4674, %v4642
    %v6307 = vpack.c.b16 %v4675, %v4643
    %v6308 = vpack.c.b16 %v4676, %v4644
    %v6309 = vpack.c.b16 %v4677, %v4645
    %v6310 = vpack.c.b16 %v4678, %v4646
    %v6311 = vpack.c.b16 %v4679, %v4647
    %v6312 = vpack.c.b16 %v4680, %v4648
    %v6313 = vpack.c.b16 %v4681, %v4649
    %v6314 = vpack.c.b16 %v4682, %v4650
    %v6315 = vpack.c.b16 %v4683, %v4651
    %v6316 = vpack.c.b16 %v4684, %v4652
    %v6317 = vpack.c.b16 %v4685, %v4653
    %v6318 = vpack.c.b16 %v4686, %v4654
    %v6319 = vpack.c.b16 %v4687, %v4655
    %v6320 = vpack.c.b16 %v4688, %v4656
    %v6321 = vpack.c.b16 %v4689, %v4657
    %v6322 = vpack.c.b16 %v4690, %v4658
    %v6323 = vpack.c.b16 %v4691, %v4659
    %v6324 = vpack.c.b16 %v4692, %v4660
    %v6325 = vpack.c.b16 %v4725, %v4693
    %v6326 = vpack.c.b16 %v4726, %v4694
    %v6327 = vpack.c.b16 %v4727, %v4695
    %v6328 = vpack.c.b16 %v4728, %v4696
    %v6329 = vpack.c.b16 %v4729, %v4697
    %v6330 = vpack.c.b16 %v4730, %v4698
    %v6331 = vpack.c.b16 %v4731, %v4699
    %v6332 = vpack.c.b16 %v4732, %v4700
    %v6333 = vpack.c.b16 %v4733, %v4701
    %v6334 = vpack.c.b16 %v4734, %v4702
    %v6335 = vpack.c.b16 %v4735, %v4703
    %v6336 = vpack.c.b16 %v4736, %v4704
    %v6337 = vpack.c.b16 %v4737, %v4705
    %v6338 = vpack.c.b16 %v4738, %v4706
    %v6339 = vpack.c.b16 %v4739, %v4707
    %v6340 = vpack.c.b16 %v4740, %v4708
    %v6341 = vpack.c.b16 %v4741, %v4709
    %v6342 = vpack.c.b16 %v4742, %v4710
    %v6343 = vpack.c.b16 %v4743, %v4711
    %v6344 = vpack.c.b16 %v4744, %v4712
    %v6345 = vpack.c.b16 %v4745, %v4713
    %v6346 = vpack.c.b16 %v4746, %v4714
    %v6347 = vpack.c.b16 %v4747, %v4715
    %v6348 = vpack.c.b16 %v4748, %v4716
    %v6349 = vpack.c.b16 %v4749, %v4717
    %v6350 = vpack.c.b16 %v4750, %v4718
    %v6351 = vpack.c.b16 %v4751, %v4719
    %v6352 = vpack.c.b16 %v4752, %v4720
    %v6353 = vpack.c.b16 %v4753, %v4721
    %v6354 = vpack.c.b16 %v4754, %v4722
    %v6355 = vpack.c.b16 %v4755, %v4723
    %v6356 = vpack.c.b16 %v4756, %v4724
    %v6357 = vpack.c.b16 %v4789, %v4757
    %v6358 = vpack.c.b16 %v4790, %v4758
    %v6359 = vpack.c.b16 %v4791, %v4759
    %v6360 = vpack.c.b16 %v4792, %v4760
    %v6361 = vpack.c.b16 %v4793, %v4761
    %v6362 = vpack.c.b16 %v4794, %v4762
    %v6363 = vpack.c.b16 %v4795, %v4763
    %v6364 = vpack.c.b16 %v4796, %v4764
    %v6365 = vpack.c.b16 %v4797, %v4765
    %v6366 = vpack.c.b16 %v4798, %v4766
    %v6367 = vpack.c.b16 %v4799, %v4767
    %v6368 = vpack.c.b16 %v4800, %v4768
    %v6369 = vpack.c.b16 %v4801, %v4769
    %v6370 = vpack.c.b16 %v4802, %v4770
    %v6371 = vpack.c.b16 %v4803, %v4771
    %v6372 = vpack.c.b16 %v4804, %v4772
    %v6373 = vpack.c.b16 %v4805, %v4773
    %v6374 = vpack.c.b16 %v4806, %v4774
    %v6375 = vpack.c.b16 %v4807, %v4775
    %v6376 = vpack.c.b16 %v4808, %v4776
    %v6377 = vpack.c.b16 %v4809, %v4777
    %v6378 = vpack.c.b16 %v4810, %v4778
    %v6379 = vpack.c.b16 %v4811, %v4779
    %v6380 = vpack.c.b16 %v4812, %v4780
    %v6381 = vpack.c.b16 %v4813, %v4781
    %v6382 = vpack.c.b16 %v4814, %v4782
    %v6383 = vpack.c.b16 %v4815, %v4783
    %v6384 = vpack.c.b16 %v4816, %v4784
    %v6385 = vpack.c.b16 %v4817, %v4785
    %v6386 = vpack.c.b16 %v4818, %v4786
    %v6387 = vpack.c.b16 %v4819, %v4787
    %v6388 = vpack.c.b16 %v4820, %v4788
    %v6389 = vpack.c.b16 %v4853, %v4821
    %v6390 = vpack.c.b16 %v4854, %v4822
    %v6391 = vpack.c.b16 %v4855, %v4823
    %v6392 = vpack.c.b16 %v4856, %v4824
    %v6393 = vpack.c.b16 %v4857, %v4825
    %v6394 = vpack.c.b16 %v4858, %v4826
    %v6395 = vpack.c.b16 %v4859, %v4827
    %v6396 = vpack.c.b16 %v4860, %v4828
    %v6397 = vpack.c.b16 %v4861, %v4829
    %v6398 = vpack.c.b16 %v4862, %v4830
    %v6399 = vpack.c.b16 %v4863, %v4831
    %v6400 = vpack.c.b16 %v4864, %v4832
    %v6401 = vpack.c.b16 %v4865, %v4833
    %v6402 = vpack.c.b16 %v4866, %v4834
    %v6403 = vpack.c.b16 %v4867, %v4835
    %v6404 = vpack.c.b16 %v4868, %v4836
    %v6405 = vpack.c.b16 %v4869, %v4837
    %v6406 = vpack.c.b16 %v4870, %v4838
    %v6407 = vpack.c.b16 %v4871, %v4839
    %v6408 = vpack.c.b16 %v4872, %v4840
    %v6409 = vpack.c.b16 %v4873, %v4841
    %v6410 = vpack.c.b16 %v4874, %v4842
    %v6411 = vpack.c.b16 %v4875, %v4843
    %v6412 = vpack.c.b16 %v4876, %v4844
    %v6413 = vpack.c.b16 %v4877, %v4845
    %v6414 = vpack.c.b16 %v4878, %v4846
    %v6415 = vpack.c.b16 %v4879, %v4847
    %v6416 = vpack.c.b16 %v4880, %v4848
    %v6417 = vpack.c.b16 %v4881, %v4849
    %v6418 = vpack.c.b16 %v4882, %v4850
    %v6419 = vpack.c.b16 %v4883, %v4851
    %v6420 = vpack.c.b16 %v4884, %v4852
    %v6421 = vpack.c.b16 %v4917, %v4885
    %v6422 = vpack.c.b16 %v4918, %v4886
    %v6423 = vpack.c.b16 %v4919, %v4887
    %v6424 = vpack.c.b16 %v4920, %v4888
    %v6425 = vpack.c.b16 %v4921, %v4889
    %v6426 = vpack.c.b16 %v4922, %v4890
    %v6427 = vpack.c.b16 %v4923, %v4891
    %v6428 = vpack.c.b16 %v4924, %v4892
    %v6429 = vpack.c.b16 %v4925, %v4893
    %v6430 = vpack.c.b16 %v4926, %v4894
    %v6431 = vpack.c.b16 %v4927, %v4895
    %v6432 = vpack.c.b16 %v4928, %v4896
    %v6433 = vpack.c.b16 %v4929, %v4897
    %v6434 = vpack.c.b16 %v4930, %v4898
    %v6435 = vpack.c.b16 %v4931, %v4899
    %v6436 = vpack.c.b16 %v4932, %v4900
    %v6437 = vpack.c.b16 %v4933, %v4901
    %v6438 = vpack.c.b16 %v4934, %v4902
    %v6439 = vpack.c.b16 %v4935, %v4903
    %v6440 = vpack.c.b16 %v4936, %v4904
    %v6441 = vpack.c.b16 %v4937, %v4905
    %v6442 = vpack.c.b16 %v4938, %v4906
    %v6443 = vpack.c.b16 %v4939, %v4907
    %v6444 = vpack.c.b16 %v4940, %v4908
    %v6445 = vpack.c.b16 %v4941, %v4909
    %v6446 = vpack.c.b16 %v4942, %v4910
    %v6447 = vpack.c.b16 %v4943, %v4911
    %v6448 = vpack.c.b16 %v4944, %v4912
    %v6449 = vpack.c.b16 %v4945, %v4913
    %v6450 = vpack.c.b16 %v4946, %v4914
    %v6451 = vpack.c.b16 %v4947, %v4915
    %v6452 = vpack.c.b16 %v4948, %v4916
    %v6453 = vpack.c.b16 %v4981, %v4949
    %v6454 = vpack.c.b16 %v4982, %v4950
    %v6455 = vpack.c.b16 %v4983, %v4951
    %v6456 = vpack.c.b16 %v4984, %v4952
    %v6457 = vpack.c.b16 %v4985, %v4953
    %v6458 = vpack.c.b16 %v4986, %v4954
    %v6459 = vpack.c.b16 %v4987, %v4955
    %v6460 = vpack.c.b16 %v4988, %v4956
    %v6461 = vpack.c.b16 %v4989, %v4957
    %v6462 = vpack.c.b16 %v4990, %v4958
    %v6463 = vpack.c.b16 %v4991, %v4959
    %v6464 = vpack.c.b16 %v4992, %v4960
    %v6465 = vpack.c.b16 %v4993, %v4961
    %v6466 = vpack.c.b16 %v4994, %v4962
    %v6467 = vpack.c.b16 %v4995, %v4963
    %v6468 = vpack.c.b16 %v4996, %v4964
    %v6469 = vpack.c.b16 %v4997, %v4965
    %v6470 = vpack.c.b16 %v4998, %v4966
    %v6471 = vpack.c.b16 %v4999, %v4967
    %v6472 = vpack.c.b16 %v5000, %v4968
    %v6473 = vpack.c.b16 %v5001, %v4969
    %v6474 = vpack.c.b16 %v5002, %v4970
    %v6475 = vpack.c.b16 %v5003, %v4971
    %v6476 = vpack.c.b16 %v5004, %v4972
    %v6477 = vpack.c.b16 %v5005, %v4973
    %v6478 = vpack.c.b16 %v5006, %v4974
    %v6479 = vpack.c.b16 %v5007, %v4975
    %v6480 = vpack.c.b16 %v5008, %v4976
    %v6481 = vpack.c.b16 %v5009, %v4977
    %v6482 = vpack.c.b16 %v5010, %v4978
    %v6483 = vpack.c.b16 %v5011, %v4979
    %v6484 = vpack.c.b16 %v5012, %v4980
    %v6485 = vpack.c.b16 %v5045, %v5013
    %v6486 = vpack.c.b16 %v5046, %v5014
    %v6487 = vpack.c.b16 %v5047, %v5015
    %v6488 = vpack.c.b16 %v5048, %v5016
    %v6489 = vpack.c.b16 %v5049, %v5017
    %v6490 = vpack.c.b16 %v5050, %v5018
    %v6491 = vpack.c.b16 %v5051, %v5019
    %v6492 = vpack.c.b16 %v5052, %v5020
    %v6493 = vpack.c.b16 %v5053, %v5021
    %v6494 = vpack.c.b16 %v5054, %v5022
    %v6495 = vpack.c.b16 %v5055, %v5023
    %v6496 = vpack.c.b16 %v5056, %v5024
    %v6497 = vpack.c.b16 %v5057, %v5025
    %v6498 = vpack.c.b16 %v5058, %v5026
    %v6499 = vpack.c.b16 %v5059, %v5027
    %v6500 = vpack.c.b16 %v5060, %v5028
    %v6501 = vpack.c.b16 %v5061, %v5029
    %v6502 = vpack.c.b16 %v5062, %v5030
    %v6503 = vpack.c.b16 %v5063, %v5031
    %v6504 = vpack.c.b16 %v5064, %v5032
    %v6505 = vpack.c.b16 %v5065, %v5033
    %v6506 = vpack.c.b16 %v5066, %v5034
    %v6507 = vpack.c.b16 %v5067, %v5035
    %v6508 = vpack.c.b16 %v5068, %v5036
    %v6509 = vpack.c.b16 %v5069, %v5037
    %v6510 = vpack.c.b16 %v5070, %v5038
    %v6511 = vpack.c.b16 %v5071, %v5039
    %v6512 = vpack.c.b16 %v5072, %v5040
    %v6513 = vpack.c.b16 %v5073, %v5041
    %v6514 = vpack.c.b16 %v5074, %v5042
    %v6515 = vpack.c.b16 %v5075, %v5043
    %v6516 = vpack.c.b16 %v5076, %v5044
    %v6517 = vpack.c.b16 %v5109, %v5077
    %v6518 = vpack.c.b16 %v5110, %v5078
    %v6519 = vpack.c.b16 %v5111, %v5079
    %v6520 = vpack.c.b16 %v5112, %v5080
    %v6521 = vpack.c.b16 %v5113, %v5081
    %v6522 = vpack.c.b16 %v5114, %v5082
    %v6523 = vpack.c.b16 %v5115, %v5083
    %v6524 = vpack.c.b16 %v5116, %v5084
    %v6525 = vpack.c.b16 %v5117, %v5085
    %v6526 = vpack.c.b16 %v5118, %v5086
    %v6527 = vpack.c.b16 %v5119, %v5087
    %v6528 = vpack.c.b16 %v5120, %v5088
    %v6529 = vpack.c.b16 %v5121, %v5089
    %v6530 = vpack.c.b16 %v5122, %v5090
    %v6531 = vpack.c.b16 %v5123, %v5091
    %v6532 = vpack.c.b16 %v5124, %v5092
    %v6533 = vpack.c.b16 %v5125, %v5093
    %v6534 = vpack.c.b16 %v5126, %v5094
    %v6535 = vpack.c.b16 %v5127, %v5095
    %v6536 = vpack.c.b16 %v5128, %v5096
    %v6537 = vpack.c.b16 %v5129, %v5097
    %v6538 = vpack.c.b16 %v5130, %v5098
    %v6539 = vpack.c.b16 %v5131, %v5099
    %v6540 = vpack.c.b16 %v5132, %v5100
    %v6541 = vpack.c.b16 %v5133, %v5101
    %v6542 = vpack.c.b16 %v5134, %v5102
    %v6543 = vpack.c.b16 %v5135, %v5103
    %v6544 = vpack.c.b16 %v5136, %v5104
    %v6545 = vpack.c.b16 %v5137, %v5105
    %v6546 = vpack.c.b16 %v5138, %v5106
    %v6547 = vpack.c.b16 %v5139, %v5107
    %v6548 = vpack.c.b16 %v5140, %v5108
    %v6549 = vpack.c.b16 %v5173, %v5141
    %v6550 = vpack.c.b16 %v5174, %v5142
    %v6551 = vpack.c.b16 %v5175, %v5143
    %v6552 = vpack.c.b16 %v5176, %v5144
    %v6553 = vpack.c.b16 %v5177, %v5145
    %v6554 = vpack.c.b16 %v5178, %v5146
    %v6555 = vpack.c.b16 %v5179, %v5147
    %v6556 = vpack.c.b16 %v5180, %v5148
    %v6557 = vpack.c.b16 %v5181, %v5149
    %v6558 = vpack.c.b16 %v5182, %v5150
    %v6559 = vpack.c.b16 %v5183, %v5151
    %v6560 = vpack.c.b16 %v5184, %v5152
    %v6561 = vpack.c.b16 %v5185, %v5153
    %v6562 = vpack.c.b16 %v5186, %v5154
    %v6563 = vpack.c.b16 %v5187, %v5155
    %v6564 = vpack.c.b16 %v5188, %v5156
    %v6565 = vpack.c.b16 %v5189, %v5157
    %v6566 = vpack.c.b16 %v5190, %v5158
    %v6567 = vpack.c.b16 %v5191, %v5159
    %v6568 = vpack.c.b16 %v5192, %v5160
    %v6569 = vpack.c.b16 %v5193, %v5161
    %v6570 = vpack.c.b16 %v5194, %v5162
    %v6571 = vpack.c.b16 %v5195, %v5163
    %v6572 = vpack.c.b16 %v5196, %v5164
    %v6573 = vpack.c.b16 %v5197, %v5165
    %v6574 = vpack.c.b16 %v5198, %v5166
    %v6575 = vpack.c.b16 %v5199, %v5167
    %v6576 = vpack.c.b16 %v5200, %v5168
    %v6577 = vpack.c.b16 %v5201, %v5169
    %v6578 = vpack.c.b16 %v5202, %v5170
    %v6579 = vpack.c.b16 %v5203, %v5171
    %v6580 = vpack.c.b16 %v5204, %v5172
    %v6581 = vpack.c.b16 %v5237, %v5205
    %v6582 = vpack.c.b16 %v5238, %v5206
    %v6583 = vpack.c.b16 %v5239, %v5207
    %v6584 = vpack.c.b16 %v5240, %v5208
    %v6585 = vpack.c.b16 %v5241, %v5209
    %v6586 = vpack.c.b16 %v5242, %v5210
    %v6587 = vpack.c.b16 %v5243, %v5211
    %v6588 = vpack.c.b16 %v5244, %v5212
    %v6589 = vpack.c.b16 %v5245, %v5213
    %v6590 = vpack.c.b16 %v5246, %v5214
    %v6591 = vpack.c.b16 %v5247, %v5215
    %v6592 = vpack.c.b16 %v5248, %v5216
    %v6593 = vpack.c.b16 %v5249, %v5217
    %v6594 = vpack.c.b16 %v5250, %v5218
    %v6595 = vpack.c.b16 %v5251, %v5219
    %v6596 = vpack.c.b16 %v5252, %v5220
    %v6597 = vpack.c.b16 %v5253, %v5221
    %v6598 = vpack.c.b16 %v5254, %v5222
    %v6599 = vpack.c.b16 %v5255, %v5223
    %v6600 = vpack.c.b16 %v5256, %v5224
    %v6601 = vpack.c.b16 %v5257, %v5225
    %v6602 = vpack.c.b16 %v5258, %v5226
    %v6603 = vpack.c.b16 %v5259, %v5227
    %v6604 = vpack.c.b16 %v5260, %v5228
    %v6605 = vpack.c.b16 %v5261, %v5229
    %v6606 = vpack.c.b16 %v5262, %v5230
    %v6607 = vpack.c.b16 %v5263, %v5231
    %v6608 = vpack.c.b16 %v5264, %v5232
    %v6609 = vpack.c.b16 %v5265, %v5233
    %v6610 = vpack.c.b16 %v5266, %v5234
    %v6611 = vpack.c.b16 %v5267, %v5235
    %v6612 = vpack.c.b16 %v5268, %v5236
    %v6613 = vpack.c.b16 %v5301, %v5269
    %v6614 = vpack.c.b16 %v5302, %v5270
    %v6615 = vpack.c.b16 %v5303, %v5271
    %v6616 = vpack.c.b16 %v5304, %v5272
    %v6617 = vpack.c.b16 %v5305, %v5273
    %v6618 = vpack.c.b16 %v5306, %v5274
    %v6619 = vpack.c.b16 %v5307, %v5275
    %v6620 = vpack.c.b16 %v5308, %v5276
    %v6621 = vpack.c.b16 %v5309, %v5277
    %v6622 = vpack.c.b16 %v5310, %v5278
    %v6623 = vpack.c.b16 %v5311, %v5279
    %v6624 = vpack.c.b16 %v5312, %v5280
    %v6625 = vpack.c.b16 %v5313, %v5281
    %v6626 = vpack.c.b16 %v5314, %v5282
    %v6627 = vpack.c.b16 %v5315, %v5283
    %v6628 = vpack.c.b16 %v5316, %v5284
    %v6629 = vpack.c.b16 %v5317, %v5285
    %v6630 = vpack.c.b16 %v5318, %v5286
    %v6631 = vpack.c.b16 %v5319, %v5287
    %v6632 = vpack.c.b16 %v5320, %v5288
    %v6633 = vpack.c.b16 %v5321, %v5289
    %v6634 = vpack.c.b16 %v5322, %v5290
    %v6635 = vpack.c.b16 %v5323, %v5291
    %v6636 = vpack.c.b16 %v5324, %v5292
    %v6637 = vpack.c.b16 %v5325, %v5293
    %v6638 = vpack.c.b16 %v5326, %v5294
    %v6639 = vpack.c.b16 %v5327, %v5295
    %v6640 = vpack.c.b16 %v5328, %v5296
    %v6641 = vpack.c.b16 %v5329, %v5297
    %v6642 = vpack.c.b16 %v5330, %v5298
    %v6643 = vpack.c.b16 %v5331, %v5299
    %v6644 = vpack.c.b16 %v5332, %v5300
    %v6645 = vpack.c.b16 %v5365, %v5333
    %v6646 = vpack.c.b16 %v5366, %v5334
    %v6647 = vpack.c.b16 %v5367, %v5335
    %v6648 = vpack.c.b16 %v5368, %v5336
    %v6649 = vpack.c.b16 %v5369, %v5337
    %v6650 = vpack.c.b16 %v5370, %v5338
    %v6651 = vpack.c.b16 %v5371, %v5339
    %v6652 = vpack.c.b16 %v5372, %v5340
    %v6653 = vpack.c.b16 %v5373, %v5341
    %v6654 = vpack.c.b16 %v5374, %v5342
    %v6655 = vpack.c.b16 %v5375, %v5343
    %v6656 = vpack.c.b16 %v5376, %v5344
    %v6657 = vpack.c.b16 %v5377, %v5345
    %v6658 = vpack.c.b16 %v5378, %v5346
    %v6659 = vpack.c.b16 %v5379, %v5347
    %v6660 = vpack.c.b16 %v5380, %v5348
    %v6661 = vpack.c.b16 %v5381, %v5349
    %v6662 = vpack.c.b16 %v5382, %v5350
    %v6663 = vpack.c.b16 %v5383, %v5351
    %v6664 = vpack.c.b16 %v5384, %v5352
    %v6665 = vpack.c.b16 %v5385, %v5353
    %v6666 = vpack.c.b16 %v5386, %v5354
    %v6667 = vpack.c.b16 %v5387, %v5355
    %v6668 = vpack.c.b16 %v5388, %v5356
    %v6669 = vpack.c.b16 %v5389, %v5357
    %v6670 = vpack.c.b16 %v5390, %v5358
    %v6671 = vpack.c.b16 %v5391, %v5359
    %v6672 = vpack.c.b16 %v5392, %v5360
    %v6673 = vpack.c.b16 %v5393, %v5361
    %v6674 = vpack.c.b16 %v5394, %v5362
    %v6675 = vpack.c.b16 %v5395, %v5363
    %v6676 = vpack.c.b16 %v5396, %v5364
    %v6677 = vpack.c.b16 %v5429, %v5397
    %v6678 = vpack.c.b16 %v5430, %v5398
    %v6679 = vpack.c.b16 %v5431, %v5399
    %v6680 = vpack.c.b16 %v5432, %v5400
    %v6681 = vpack.c.b16 %v5433, %v5401
    %v6682 = vpack.c.b16 %v5434, %v5402
    %v6683 = vpack.c.b16 %v5435, %v5403
    %v6684 = vpack.c.b16 %v5436, %v5404
    %v6685 = vpack.c.b16 %v5437, %v5405
    %v6686 = vpack.c.b16 %v5438, %v5406
    %v6687 = vpack.c.b16 %v5439, %v5407
    %v6688 = vpack.c.b16 %v5440, %v5408
    %v6689 = vpack.c.b16 %v5441, %v5409
    %v6690 = vpack.c.b16 %v5442, %v5410
    %v6691 = vpack.c.b16 %v5443, %v5411
    %v6692 = vpack.c.b16 %v5444, %v5412
    %v6693 = vpack.c.b16 %v5445, %v5413
    %v6694 = vpack.c.b16 %v5446, %v5414
    %v6695 = vpack.c.b16 %v5447, %v5415
    %v6696 = vpack.c.b16 %v5448, %v5416
    %v6697 = vpack.c.b16 %v5449, %v5417
    %v6698 = vpack.c.b16 %v5450, %v5418
    %v6699 = vpack.c.b16 %v5451, %v5419
    %v6700 = vpack.c.b16 %v5452, %v5420
    %v6701 = vpack.c.b16 %v5453, %v5421
    %v6702 = vpack.c.b16 %v5454, %v5422
    %v6703 = vpack.c.b16 %v5455, %v5423
    %v6704 = vpack.c.b16 %v5456, %v5424
    %v6705 = vpack.c.b16 %v5457, %v5425
    %v6706 = vpack.c.b16 %v5458, %v5426
    %v6707 = vpack.c.b16 %v5459, %v5427
    %v6708 = vpack.c.b16 %v5460, %v5428
    %v6709 = vpack.c.b16 %v5493, %v5461
    %v6710 = vpack.c.b16 %v5494, %v5462
    %v6711 = vpack.c.b16 %v5495, %v5463
    %v6712 = vpack.c.b16 %v5496, %v5464
    %v6713 = vpack.c.b16 %v5497, %v5465
    %v6714 = vpack.c.b16 %v5498, %v5466
    %v6715 = vpack.c.b16 %v5499, %v5467
    %v6716 = vpack.c.b16 %v5500, %v5468
    %v6717 = vpack.c.b16 %v5501, %v5469
    %v6718 = vpack.c.b16 %v5502, %v5470
    %v6719 = vpack.c.b16 %v5503, %v5471
    %v6720 = vpack.c.b16 %v5504, %v5472
    %v6721 = vpack.c.b16 %v5505, %v5473
    %v6722 = vpack.c.b16 %v5506, %v5474
    %v6723 = vpack.c.b16 %v5507, %v5475
    %v6724 = vpack.c.b16 %v5508, %v5476
    %v6725 = vpack.c.b16 %v5509, %v5477
    %v6726 = vpack.c.b16 %v5510, %v5478
    %v6727 = vpack.c.b16 %v5511, %v5479
    %v6728 = vpack.c.b16 %v5512, %v5480
    %v6729 = vpack.c.b16 %v5513, %v5481
    %v6730 = vpack.c.b16 %v5514, %v5482
    %v6731 = vpack.c.b16 %v5515, %v5483
    %v6732 = vpack.c.b16 %v5516, %v5484
    %v6733 = vpack.c.b16 %v5517, %v5485
    %v6734 = vpack.c.b16 %v5518, %v5486
    %v6735 = vpack.c.b16 %v5519, %v5487
    %v6736 = vpack.c.b16 %v5520, %v5488
    %v6737 = vpack.c.b16 %v5521, %v5489
    %v6738 = vpack.c.b16 %v5522, %v5490
    %v6739 = vpack.c.b16 %v5523, %v5491
    %v6740 = vpack.c.b16 %v5524, %v5492
    %v6741 = vpack.c.b16 %v5557, %v5525
    %v6742 = vpack.c.b16 %v5558, %v5526
    %v6743 = vpack.c.b16 %v5559, %v5527
    %v6744 = vpack.c.b16 %v5560, %v5528
    %v6745 = vpack.c.b16 %v5561, %v5529
    %v6746 = vpack.c.b16 %v5562, %v5530
    %v6747 = vpack.c.b16 %v5563, %v5531
    %v6748 = vpack.c.b16 %v5564, %v5532
    %v6749 = vpack.c.b16 %v5565, %v5533
    %v6750 = vpack.c.b16 %v5566, %v5534
    %v6751 = vpack.c.b16 %v5567, %v5535
    %v6752 = vpack.c.b16 %v5568, %v5536
    %v6753 = vpack.c.b16 %v5569, %v5537
    %v6754 = vpack.c.b16 %v5570, %v5538
    %v6755 = vpack.c.b16 %v5571, %v5539
    %v6756 = vpack.c.b16 %v5572, %v5540
    %v6757 = vpack.c.b16 %v5573, %v5541
    %v6758 = vpack.c.b16 %v5574, %v5542
    %v6759 = vpack.c.b16 %v5575, %v5543
    %v6760 = vpack.c.b16 %v5576, %v5544
    %v6761 = vpack.c.b16 %v5577, %v5545
    %v6762 = vpack.c.b16 %v5578, %v5546
    %v6763 = vpack.c.b16 %v5579, %v5547
    %v6764 = vpack.c.b16 %v5580, %v5548
    %v6765 = vpack.c.b16 %v5581, %v5549
    %v6766 = vpack.c.b16 %v5582, %v5550
    %v6767 = vpack.c.b16 %v5583, %v5551
    %v6768 = vpack.c.b16 %v5584, %v5552
    %v6769 = vpack.c.b16 %v5585, %v5553
    %v6770 = vpack.c.b16 %v5586, %v5554
    %v6771 = vpack.c.b16 %v5587, %v5555
    %v6772 = vpack.c.b16 %v5588, %v5556
    %v6773 = vpack.c.b16 %v5621, %v5589
    %v6774 = vpack.c.b16 %v5622, %v5590
    %v6775 = vpack.c.b16 %v5623, %v5591
    %v6776 = vpack.c.b16 %v5624, %v5592
    %v6777 = vpack.c.b16 %v5625, %v5593
    %v6778 = vpack.c.b16 %v5626, %v5594
    %v6779 = vpack.c.b16 %v5627, %v5595
    %v6780 = vpack.c.b16 %v5628, %v5596
    %v6781 = vpack.c.b16 %v5629, %v5597
    %v6782 = vpack.c.b16 %v5630, %v5598
    %v6783 = vpack.c.b16 %v5631, %v5599
    %v6784 = vpack.c.b16 %v5632, %v5600
    %v6785 = vpack.c.b16 %v5633, %v5601
    %v6786 = vpack.c.b16 %v5634, %v5602
    %v6787 = vpack.c.b16 %v5635, %v5603
    %v6788 = vpack.c.b16 %v5636, %v5604
    %v6789 = vpack.c.b16 %v5637, %v5605
    %v6790 = vpack.c.b16 %v5638, %v5606
    %v6791 = vpack.c.b16 %v5639, %v5607
    %v6792 = vpack.c.b16 %v5640, %v5608
    %v6793 = vpack.c.b16 %v5641, %v5609
    %v6794 = vpack.c.b16 %v5642, %v5610
    %v6795 = vpack.c.b16 %v5643, %v5611
    %v6796 = vpack.c.b16 %v5644, %v5612
    %v6797 = vpack.c.b16 %v5645, %v5613
    %v6798 = vpack.c.b16 %v5646, %v5614
    %v6799 = vpack.c.b16 %v5647, %v5615
    %v6800 = vpack.c.b16 %v5648, %v5616
    %v6801 = vpack.c.b16 %v5649, %v5617
    %v6802 = vpack.c.b16 %v5650, %v5618
    %v6803 = vpack.c.b16 %v5651, %v5619
    %v6804 = vpack.c.b16 %v5652, %v5620
    %v6805 = vpack.c.b16 %v5685, %v5653
    %v6806 = vpack.c.b16 %v5686, %v5654
    %v6807 = vpack.c.b16 %v5687, %v5655
    %v6808 = vpack.c.b16 %v5688, %v5656
    %v6809 = vpack.c.b16 %v5689, %v5657
    %v6810 = vpack.c.b16 %v5690, %v5658
    %v6811 = vpack.c.b16 %v5691, %v5659
    %v6812 = vpack.c.b16 %v5692, %v5660
    %v6813 = vpack.c.b16 %v5693, %v5661
    %v6814 = vpack.c.b16 %v5694, %v5662
    %v6815 = vpack.c.b16 %v5695, %v5663
    %v6816 = vpack.c.b16 %v5696, %v5664
    %v6817 = vpack.c.b16 %v5697, %v5665
    %v6818 = vpack.c.b16 %v5698, %v5666
    %v6819 = vpack.c.b16 %v5699, %v5667
    %v6820 = vpack.c.b16 %v5700, %v5668
    %v6821 = vpack.c.b16 %v5701, %v5669
    %v6822 = vpack.c.b16 %v5702, %v5670
    %v6823 = vpack.c.b16 %v5703, %v5671
    %v6824 = vpack.c.b16 %v5704, %v5672
    %v6825 = vpack.c.b16 %v5705, %v5673
    %v6826 = vpack.c.b16 %v5706, %v5674
    %v6827 = vpack.c.b16 %v5707, %v5675
    %v6828 = vpack.c.b16 %v5708, %v5676
    %v6829 = vpack.c.b16 %v5709, %v5677
    %v6830 = vpack.c.b16 %v5710, %v5678
    %v6831 = vpack.c.b16 %v5711, %v5679
    %v6832 = vpack.c.b16 %v5712, %v5680
    %v6833 = vpack.c.b16 %v5713, %v5681
    %v6834 = vpack.c.b16 %v5714, %v5682
    %v6835 = vpack.c.b16 %v5715, %v5683
    %v6836 = vpack.c.b16 %v5716, %v5684
    %v6837 = vpack.c.b16 %v5749, %v5717
    %v6838 = vpack.c.b16 %v5750, %v5718
    %v6839 = vpack.c.b16 %v5751, %v5719
    %v6840 = vpack.c.b16 %v5752, %v5720
    %v6841 = vpack.c.b16 %v5753, %v5721
    %v6842 = vpack.c.b16 %v5754, %v5722
    %v6843 = vpack.c.b16 %v5755, %v5723
    %v6844 = vpack.c.b16 %v5756, %v5724
    %v6845 = vpack.c.b16 %v5757, %v5725
    %v6846 = vpack.c.b16 %v5758, %v5726
    %v6847 = vpack.c.b16 %v5759, %v5727
    %v6848 = vpack.c.b16 %v5760, %v5728
    %v6849 = vpack.c.b16 %v5761, %v5729
    %v6850 = vpack.c.b16 %v5762, %v5730
    %v6851 = vpack.c.b16 %v5763, %v5731
    %v6852 = vpack.c.b16 %v5764, %v5732
    %v6853 = vpack.c.b16 %v5765, %v5733
    %v6854 = vpack.c.b16 %v5766, %v5734
    %v6855 = vpack.c.b16 %v5767, %v5735
    %v6856 = vpack.c.b16 %v5768, %v5736
    %v6857 = vpack.c.b16 %v5769, %v5737
    %v6858 = vpack.c.b16 %v5770, %v5738
    %v6859 = vpack.c.b16 %v5771, %v5739
    %v6860 = vpack.c.b16 %v5772, %v5740
    %v6861 = vpack.c.b16 %v5773, %v5741
    %v6862 = vpack.c.b16 %v5774, %v5742
    %v6863 = vpack.c.b16 %v5775, %v5743
    %v6864 = vpack.c.b16 %v5776, %v5744
    %v6865 = vpack.c.b16 %v5777, %v5745
    %v6866 = vpack.c.b16 %v5778, %v5746
    %v6867 = vpack.c.b16 %v5779, %v5747
    %v6868 = vpack.c.b16 %v5780, %v5748
    %v6869 = vpack.c.b16 %v5813, %v5781
    %v6870 = vpack.c.b16 %v5814, %v5782
    %v6871 = vpack.c.b16 %v5815, %v5783
    %v6872 = vpack.c.b16 %v5816, %v5784
    %v6873 = vpack.c.b16 %v5817, %v5785
    %v6874 = vpack.c.b16 %v5818, %v5786
    %v6875 = vpack.c.b16 %v5819, %v5787
    %v6876 = vpack.c.b16 %v5820, %v5788
    %v6877 = vpack.c.b16 %v5821, %v5789
    %v6878 = vpack.c.b16 %v5822, %v5790
    %v6879 = vpack.c.b16 %v5823, %v5791
    %v6880 = vpack.c.b16 %v5824, %v5792
    %v6881 = vpack.c.b16 %v5825, %v5793
    %v6882 = vpack.c.b16 %v5826, %v5794
    %v6883 = vpack.c.b16 %v5827, %v5795
    %v6884 = vpack.c.b16 %v5828, %v5796
    %v6885 = vpack.c.b16 %v5829, %v5797
    %v6886 = vpack.c.b16 %v5830, %v5798
    %v6887 = vpack.c.b16 %v5831, %v5799
    %v6888 = vpack.c.b16 %v5832, %v5800
    %v6889 = vpack.c.b16 %v5833, %v5801
    %v6890 = vpack.c.b16 %v5834, %v5802
    %v6891 = vpack.c.b16 %v5835, %v5803
    %v6892 = vpack.c.b16 %v5836, %v5804
    %v6893 = vpack.c.b16 %v5837, %v5805
    %v6894 = vpack.c.b16 %v5838, %v5806
    %v6895 = vpack.c.b16 %v5839, %v5807
    %v6896 = vpack.c.b16 %v5840, %v5808
    %v6897 = vpack.c.b16 %v5841, %v5809
    %v6898 = vpack.c.b16 %v5842, %v5810
    %v6899 = vpack.c.b16 %v5843, %v5811
    %v6900 = vpack.c.b16 %v5844, %v5812
    %v6901 = vpack.c.b16 %v5877, %v5845
    %v6902 = vpack.c.b16 %v5878, %v5846
    %v6903 = vpack.c.b16 %v5879, %v5847
    %v6904 = vpack.c.b16 %v5880, %v5848
    %v6905 = vpack.c.b16 %v5881, %v5849
    %v6906 = vpack.c.b16 %v5882, %v5850
    %v6907 = vpack.c.b16 %v5883, %v5851
    %v6908 = vpack.c.b16 %v5884, %v5852
    %v6909 = vpack.c.b16 %v5885, %v5853
    %v6910 = vpack.c.b16 %v5886, %v5854
    %v6911 = vpack.c.b16 %v5887, %v5855
    %v6912 = vpack.c.b16 %v5888, %v5856
    %v6913 = vpack.c.b16 %v5889, %v5857
    %v6914 = vpack.c.b16 %v5890, %v5858
    %v6915 = vpack.c.b16 %v5891, %v5859
    %v6916 = vpack.c.b16 %v5892, %v5860
    %v6917 = vpack.c.b16 %v5893, %v5861
    %v6918 = vpack.c.b16 %v5894, %v5862
    %v6919 = vpack.c.b16 %v5895, %v5863
    %v6920 = vpack.c.b16 %v5896, %v5864
    %v6921 = vpack.c.b16 %v5897, %v5865
    %v6922 = vpack.c.b16 %v5898, %v5866
    %v6923 = vpack.c.b16 %v5899, %v5867
    %v6924 = vpack.c.b16 %v5900, %v5868
    %v6925 = vpack.c.b16 %v5901, %v5869
    %v6926 = vpack.c.b16 %v5902, %v5870
    %v6927 = vpack.c.b16 %v5903, %v5871
    %v6928 = vpack.c.b16 %v5904, %v5872
    %v6929 = vpack.c.b16 %v5905, %v5873
    %v6930 = vpack.c.b16 %v5906, %v5874
    %v6931 = vpack.c.b16 %v5907, %v5875
    %v6932 = vpack.c.b16 %v5908, %v5876
    %7957 = vmatprep.subr.bf16.mxu0 %v5910
    %7958 = vmatpush1.bf16.msra.mxu0 %v5909
    %7959 = vmatprep.subr.bf16.mxu0 %v5942
    %7960 = vmatpush1.bf16.msra.mxu0 %v5941
    %7961 = vmatprep.subr.bf16.mxu0 %v5974
    %7962 = vmatpush1.bf16.msra.mxu0 %v5973
    %7963 = vmatprep.subr.bf16.mxu0 %v6006
    %7964 = vmatpush1.bf16.msra.mxu0 %v6005
    %7965 = vmatprep.subr.bf16.mxu0 %v6038
    %7966 = vmatpush1.bf16.msra.mxu0 %v6037
    %7967 = vmatprep.subr.bf16.mxu0 %v6070
    %7968 = vmatpush1.bf16.msra.mxu0 %v6069
    %7969 = vmatprep.subr.bf16.mxu0 %v6102
    %7970 = vmatpush1.bf16.msra.mxu0 %v6101
    %7971 = vmatprep.subr.bf16.mxu0 %v6134
    %7972 = vmatpush1.bf16.msra.mxu0 %v6133
    %7973 = vmatprep.subr.bf16.mxu0 %v6166
    %7974 = vmatpush1.bf16.msra.mxu0 %v6165
    %7975 = vmatprep.subr.bf16.mxu0 %v6198
    %7976 = vmatpush1.bf16.msra.mxu0 %v6197
    %7977 = vmatprep.subr.bf16.mxu0 %v6230
    %7978 = vmatpush1.bf16.msra.mxu0 %v6229
    %7979 = vmatprep.subr.bf16.mxu0 %v6262
    %7980 = vmatpush1.bf16.msra.mxu0 %v6261
    %7981 = vmatprep.subr.bf16.mxu0 %v6294
    %7982 = vmatpush1.bf16.msra.mxu0 %v6293
    %7983 = vmatprep.subr.bf16.mxu0 %v6326
    %7984 = vmatpush1.bf16.msra.mxu0 %v6325
    %7985 = vmatprep.subr.bf16.mxu0 %v6358
    %7986 = vmatpush1.bf16.msra.mxu0 %v6357
    %7987 = vmatprep.subr.bf16.mxu0 %v6390
    %7988 = vmatpush1.bf16.msra.mxu0 %v6389
    %7989 = vmatprep.mubr.bf16.mxu0 %v2830
    %7990 = vmatmul.mubr.bf16.gmra.mrb[0].mxu0 %v2829
    %v7991 = vpop.f32.mrb[0].mxu0
    %v7992 = vadd.f32 %v1811, %v7991
    %v7993 = vpop.f32.mrb[0].mxu0
    %v7994 = vadd.f32 %v1815, %v7993
    %v7995 = vpop.f32.mrb[0].mxu0
    %v7996 = vpop.f32.mrb[0].mxu0
    %7997 = vdwg.mxu0
    %7998 = vmatprep.subr.bf16.mxu0 %v6422
    %7999 = vmatpush1.bf16.msra.mxu0 %v6421
    %8000 = vmatprep.subr.bf16.mxu0 %v6454
    %8001 = vmatpush1.bf16.msra.mxu0 %v6453
    %8002 = vmatprep.subr.bf16.mxu0 %v6486
    %8003 = vmatpush1.bf16.msra.mxu0 %v6485
    %8004 = vmatprep.subr.bf16.mxu0 %v6518
    %8005 = vmatpush1.bf16.msra.mxu0 %v6517
    %8006 = vmatprep.subr.bf16.mxu0 %v6550
    %8007 = vmatpush1.bf16.msra.mxu0 %v6549
    %8008 = vmatprep.subr.bf16.mxu0 %v6582
    %8009 = vmatpush1.bf16.msra.mxu0 %v6581
    %8010 = vmatprep.subr.bf16.mxu0 %v6614
    %8011 = vmatpush1.bf16.msra.mxu0 %v6613
    %8012 = vmatprep.subr.bf16.mxu0 %v6646
    %8013 = vmatpush1.bf16.msra.mxu0 %v6645
    %8014 = vmatprep.subr.bf16.mxu0 %v6678
    %8015 = vmatpush1.bf16.msra.mxu0 %v6677
    %8016 = vmatprep.subr.bf16.mxu0 %v6710
    %8017 = vmatpush1.bf16.msra.mxu0 %v6709
    %8018 = vmatprep.subr.bf16.mxu0 %v6742
    %8019 = vmatpush1.bf16.msra.mxu0 %v6741
    %8020 = vmatprep.subr.bf16.mxu0 %v6774
    %8021 = vmatpush1.bf16.msra.mxu0 %v6773
    %8022 = vmatprep.subr.bf16.mxu0 %v6806
    %8023 = vmatpush1.bf16.msra.mxu0 %v6805
    %8024 = vmatprep.subr.bf16.mxu0 %v6838
    %8025 = vmatpush1.bf16.msra.mxu0 %v6837
    %8026 = vmatprep.subr.bf16.mxu0 %v6870
    %8027 = vmatpush1.bf16.msra.mxu0 %v6869
    %8028 = vmatprep.subr.bf16.mxu0 %v6902
    %8029 = vmatpush1.bf16.msra.mxu0 %v6901
    %8030 = vmatprep.mubr.bf16.mxu0 %v2832
    %8031 = vmatmul.mubr.bf16.gmra.mrb[0].mxu0 %v2831
    %v8032 = vpop.f32.mrb[0].mxu0
    %v8033 = vadd.f32 %v7992, %v8032
    %v8034 = vpop.f32.mrb[0].mxu0
    %v8035 = vadd.f32 %v7994, %v8034
    %v8036 = vpop.f32.mrb[0].mxu0
    %v8037 = vpop.f32.mrb[0].mxu0
    %8038 = vdwg.mxu0
    %8039 = vmatprep.subr.bf16.mxu0 %v5912
    %8040 = vmatpush1.bf16.msra.mxu0 %v5911
    %8041 = vmatprep.subr.bf16.mxu0 %v5944
    %8042 = vmatpush1.bf16.msra.mxu0 %v5943
    %8043 = vmatprep.subr.bf16.mxu0 %v5976
    %8044 = vmatpush1.bf16.msra.mxu0 %v5975
    %8045 = vmatprep.subr.bf16.mxu0 %v6008
    %8046 = vmatpush1.bf16.msra.mxu0 %v6007
    %8047 = vmatprep.subr.bf16.mxu0 %v6040
    %8048 = vmatpush1.bf16.msra.mxu0 %v6039
    %8049 = vmatprep.subr.bf16.mxu0 %v6072
    %8050 = vmatpush1.bf16.msra.mxu0 %v6071
    %8051 = vmatprep.subr.bf16.mxu0 %v6104
    %8052 = vmatpush1.bf16.msra.mxu0 %v6103
    %8053 = vmatprep.subr.bf16.mxu0 %v6136
    %8054 = vmatpush1.bf16.msra.mxu0 %v6135
    %8055 = vmatprep.subr.bf16.mxu0 %v6168
    %8056 = vmatpush1.bf16.msra.mxu0 %v6167
    %8057 = vmatprep.subr.bf16.mxu0 %v6200
    %8058 = vmatpush1.bf16.msra.mxu0 %v6199
    %8059 = vmatprep.subr.bf16.mxu0 %v6232
    %8060 = vmatpush1.bf16.msra.mxu0 %v6231
    %8061 = vmatprep.subr.bf16.mxu0 %v6264
    %8062 = vmatpush1.bf16.msra.mxu0 %v6263
    %8063 = vmatprep.subr.bf16.mxu0 %v6296
    %8064 = vmatpush1.bf16.msra.mxu0 %v6295
    %8065 = vmatprep.subr.bf16.mxu0 %v6328
    %8066 = vmatpush1.bf16.msra.mxu0 %v6327
    %8067 = vmatprep.subr.bf16.mxu0 %v6360
    %8068 = vmatpush1.bf16.msra.mxu0 %v6359
    %8069 = vmatprep.subr.bf16.mxu0 %v6392
    %8070 = vmatpush1.bf16.msra.mxu0 %v6391
    %8071 = vmatprep.mubr.bf16.mxu0 %v2830
    %8072 = vmatmul.mubr.bf16.gmra.mrb[0].mxu0 %v2829
    %v8073 = vpop.f32.mrb[0].mxu0
    %v8074 = vadd.f32 %v1819, %v8073
    %v8075 = vpop.f32.mrb[0].mxu0
    %v8076 = vadd.f32 %v1823, %v8075
    %v8077 = vpop.f32.mrb[0].mxu0
    %v8078 = vpop.f32.mrb[0].mxu0
    %8079 = vdwg.mxu0
    %8080 = vmatprep.subr.bf16.mxu0 %v6424
    %8081 = vmatpush1.bf16.msra.mxu0 %v6423
    %8082 = vmatprep.subr.bf16.mxu0 %v6456
    %8083 = vmatpush1.bf16.msra.mxu0 %v6455
    %8084 = vmatprep.subr.bf16.mxu0 %v6488
    %8085 = vmatpush1.bf16.msra.mxu0 %v6487
    %8086 = vmatprep.subr.bf16.mxu0 %v6520
    %8087 = vmatpush1.bf16.msra.mxu0 %v6519
    %8088 = vmatprep.subr.bf16.mxu0 %v6552
    %8089 = vmatpush1.bf16.msra.mxu0 %v6551
    %8090 = vmatprep.subr.bf16.mxu0 %v6584
    %8091 = vmatpush1.bf16.msra.mxu0 %v6583
    %8092 = vmatprep.subr.bf16.mxu0 %v6616
    %8093 = vmatpush1.bf16.msra.mxu0 %v6615
    %8094 = vmatprep.subr.bf16.mxu0 %v6648
    %8095 = vmatpush1.bf16.msra.mxu0 %v6647
    %8096 = vmatprep.subr.bf16.mxu0 %v6680
    %8097 = vmatpush1.bf16.msra.mxu0 %v6679
    %8098 = vmatprep.subr.bf16.mxu0 %v6712
    %8099 = vmatpush1.bf16.msra.mxu0 %v6711
    %8100 = vmatprep.subr.bf16.mxu0 %v6744
    %8101 = vmatpush1.bf16.msra.mxu0 %v6743
    %8102 = vmatprep.subr.bf16.mxu0 %v6776
    %8103 = vmatpush1.bf16.msra.mxu0 %v6775
    %8104 = vmatprep.subr.bf16.mxu0 %v6808
    %8105 = vmatpush1.bf16.msra.mxu0 %v6807
    %8106 = vmatprep.subr.bf16.mxu0 %v6840
    %8107 = vmatpush1.bf16.msra.mxu0 %v6839
    %8108 = vmatprep.subr.bf16.mxu0 %v6872
    %8109 = vmatpush1.bf16.msra.mxu0 %v6871
    %8110 = vmatprep.subr.bf16.mxu0 %v6904
    %8111 = vmatpush1.bf16.msra.mxu0 %v6903
    %8112 = vmatprep.mubr.bf16.mxu0 %v2832
    %8113 = vmatmul.mubr.bf16.gmra.mrb[0].mxu0 %v2831
    %v8114 = vpop.f32.mrb[0].mxu0
    %v8115 = vadd.f32 %v8074, %v8114
    %v8116 = vpop.f32.mrb[0].mxu0
    %v8117 = vadd.f32 %v8076, %v8116
    %v8118 = vpop.f32.mrb[0].mxu0
    %v8119 = vpop.f32.mrb[0].mxu0
    %8120 = vdwg.mxu0
    %8121 = vmatprep.subr.bf16.mxu0 %v5914
    %8122 = vmatpush1.bf16.msra.mxu0 %v5913
    %8123 = vmatprep.subr.bf16.mxu0 %v5946
    %8124 = vmatpush1.bf16.msra.mxu0 %v5945
    %8125 = vmatprep.subr.bf16.mxu0 %v5978
    %8126 = vmatpush1.bf16.msra.mxu0 %v5977
    %8127 = vmatprep.subr.bf16.mxu0 %v6010
    %8128 = vmatpush1.bf16.msra.mxu0 %v6009
    %8129 = vmatprep.subr.bf16.mxu0 %v6042
    %8130 = vmatpush1.bf16.msra.mxu0 %v6041
    %8131 = vmatprep.subr.bf16.mxu0 %v6074
    %8132 = vmatpush1.bf16.msra.mxu0 %v6073
    %8133 = vmatprep.subr.bf16.mxu0 %v6106
    %8134 = vmatpush1.bf16.msra.mxu0 %v6105
    %8135 = vmatprep.subr.bf16.mxu0 %v6138
    %8136 = vmatpush1.bf16.msra.mxu0 %v6137
    %8137 = vmatprep.subr.bf16.mxu0 %v6170
    %8138 = vmatpush1.bf16.msra.mxu0 %v6169
    %8139 = vmatprep.subr.bf16.mxu0 %v6202
    %8140 = vmatpush1.bf16.msra.mxu0 %v6201
    %8141 = vmatprep.subr.bf16.mxu0 %v6234
    %8142 = vmatpush1.bf16.msra.mxu0 %v6233
    %8143 = vmatprep.subr.bf16.mxu0 %v6266
    %8144 = vmatpush1.bf16.msra.mxu0 %v6265
    %8145 = vmatprep.subr.bf16.mxu0 %v6298
    %8146 = vmatpush1.bf16.msra.mxu0 %v6297
    %8147 = vmatprep.subr.bf16.mxu0 %v6330
    %8148 = vmatpush1.bf16.msra.mxu0 %v6329
    %8149 = vmatprep.subr.bf16.mxu0 %v6362
    %8150 = vmatpush1.bf16.msra.mxu0 %v6361
    %8151 = vmatprep.subr.bf16.mxu0 %v6394
    %8152 = vmatpush1.bf16.msra.mxu0 %v6393
    %8153 = vmatprep.mubr.bf16.mxu0 %v2830
    %8154 = vmatmul.mubr.bf16.gmra.mrb[0].mxu0 %v2829
    %v8155 = vpop.f32.mrb[0].mxu0
    %v8156 = vadd.f32 %v1827, %v8155
    %v8157 = vpop.f32.mrb[0].mxu0
    %v8158 = vadd.f32 %v1831, %v8157
    %v8159 = vpop.f32.mrb[0].mxu0
    %v8160 = vpop.f32.mrb[0].mxu0
    %8161 = vdwg.mxu0
    %8162 = vmatprep.subr.bf16.mxu0 %v6426
    %8163 = vmatpush1.bf16.msra.mxu0 %v6425
    %8164 = vmatprep.subr.bf16.mxu0 %v6458
    %8165 = vmatpush1.bf16.msra.mxu0 %v6457
    %8166 = vmatprep.subr.bf16.mxu0 %v6490
    %8167 = vmatpush1.bf16.msra.mxu0 %v6489
    %8168 = vmatprep.subr.bf16.mxu0 %v6522
    %8169 = vmatpush1.bf16.msra.mxu0 %v6521
    %8170 = vmatprep.subr.bf16.mxu0 %v6554
    %8171 = vmatpush1.bf16.msra.mxu0 %v6553
    %8172 = vmatprep.subr.bf16.mxu0 %v6586
    %8173 = vmatpush1.bf16.msra.mxu0 %v6585
    %8174 = vmatprep.subr.bf16.mxu0 %v6618
    %8175 = vmatpush1.bf16.msra.mxu0 %v6617
    %8176 = vmatprep.subr.bf16.mxu0 %v6650
    %8177 = vmatpush1.bf16.msra.mxu0 %v6649
    %8178 = vmatprep.subr.bf16.mxu0 %v6682
    %8179 = vmatpush1.bf16.msra.mxu0 %v6681
    %8180 = vmatprep.subr.bf16.mxu0 %v6714
    %8181 = vmatpush1.bf16.msra.mxu0 %v6713
    %8182 = vmatprep.subr.bf16.mxu0 %v6746
    %8183 = vmatpush1.bf16.msra.mxu0 %v6745
    %8184 = vmatprep.subr.bf16.mxu0 %v6778
    %8185 = vmatpush1.bf16.msra.mxu0 %v6777
    %8186 = vmatprep.subr.bf16.mxu0 %v6810
    %8187 = vmatpush1.bf16.msra.mxu0 %v6809
    %8188 = vmatprep.subr.bf16.mxu0 %v6842
    %8189 = vmatpush1.bf16.msra.mxu0 %v6841
    %8190 = vmatprep.subr.bf16.mxu0 %v6874
    %8191 = vmatpush1.bf16.msra.mxu0 %v6873
    %8192 = vmatprep.subr.bf16.mxu0 %v6906
    %8193 = vmatpush1.bf16.msra.mxu0 %v6905
    %8194 = vmatprep.mubr.bf16.mxu0 %v2832
    %8195 = vmatmul.mubr.bf16.gmra.mrb[0].mxu0 %v2831
    %v8196 = vpop.f32.mrb[0].mxu0
    %v8197 = vadd.f32 %v8156, %v8196
    %v8198 = vpop.f32.mrb[0].mxu0
    %v8199 = vadd.f32 %v8158, %v8198
    %v8200 = vpop.f32.mrb[0].mxu0
    %v8201 = vpop.f32.mrb[0].mxu0
    %8202 = vdwg.mxu0
    %8203 = vmatprep.subr.bf16.mxu0 %v5916
    %8204 = vmatpush1.bf16.msra.mxu0 %v5915
    %8205 = vmatprep.subr.bf16.mxu0 %v5948
    %8206 = vmatpush1.bf16.msra.mxu0 %v5947
    %8207 = vmatprep.subr.bf16.mxu0 %v5980
    %8208 = vmatpush1.bf16.msra.mxu0 %v5979
    %8209 = vmatprep.subr.bf16.mxu0 %v6012
    %8210 = vmatpush1.bf16.msra.mxu0 %v6011
    %8211 = vmatprep.subr.bf16.mxu0 %v6044
    %8212 = vmatpush1.bf16.msra.mxu0 %v6043
    %8213 = vmatprep.subr.bf16.mxu0 %v6076
    %8214 = vmatpush1.bf16.msra.mxu0 %v6075
    %8215 = vmatprep.subr.bf16.mxu0 %v6108
    %8216 = vmatpush1.bf16.msra.mxu0 %v6107
    %8217 = vmatprep.subr.bf16.mxu0 %v6140
    %8218 = vmatpush1.bf16.msra.mxu0 %v6139
    %8219 = vmatprep.subr.bf16.mxu0 %v6172
    %8220 = vmatpush1.bf16.msra.mxu0 %v6171
    %8221 = vmatprep.subr.bf16.mxu0 %v6204
    %8222 = vmatpush1.bf16.msra.mxu0 %v6203
    %8223 = vmatprep.subr.bf16.mxu0 %v6236
    %8224 = vmatpush1.bf16.msra.mxu0 %v6235
    %8225 = vmatprep.subr.bf16.mxu0 %v6268
    %8226 = vmatpush1.bf16.msra.mxu0 %v6267
    %8227 = vmatprep.subr.bf16.mxu0 %v6300
    %8228 = vmatpush1.bf16.msra.mxu0 %v6299
    %8229 = vmatprep.subr.bf16.mxu0 %v6332
    %8230 = vmatpush1.bf16.msra.mxu0 %v6331
    %8231 = vmatprep.subr.bf16.mxu0 %v6364
    %8232 = vmatpush1.bf16.msra.mxu0 %v6363
    %8233 = vmatprep.subr.bf16.mxu0 %v6396
    %8234 = vmatpush1.bf16.msra.mxu0 %v6395
    %8235 = vmatprep.mubr.bf16.mxu0 %v2830
    %8236 = vmatmul.mubr.bf16.gmra.mrb[0].mxu0 %v2829
    %v8237 = vpop.f32.mrb[0].mxu0
    %v8238 = vadd.f32 %v1835, %v8237
    %v8239 = vpop.f32.mrb[0].mxu0
    %v8240 = vadd.f32 %v1839, %v8239
    %v8241 = vpop.f32.mrb[0].mxu0
    %v8242 = vpop.f32.mrb[0].mxu0
    %8243 = vdwg.mxu0
    %8244 = vmatprep.subr.bf16.mxu0 %v6428
    %8245 = vmatpush1.bf16.msra.mxu0 %v6427
    %8246 = vmatprep.subr.bf16.mxu0 %v6460
    %8247 = vmatpush1.bf16.msra.mxu0 %v6459
    %8248 = vmatprep.subr.bf16.mxu0 %v6492
    %8249 = vmatpush1.bf16.msra.mxu0 %v6491
    %8250 = vmatprep.subr.bf16.mxu0 %v6524
    %8251 = vmatpush1.bf16.msra.mxu0 %v6523
    %8252 = vmatprep.subr.bf16.mxu0 %v6556
    %8253 = vmatpush1.bf16.msra.mxu0 %v6555
    %8254 = vmatprep.subr.bf16.mxu0 %v6588
    %8255 = vmatpush1.bf16.msra.mxu0 %v6587
    %8256 = vmatprep.subr.bf16.mxu0 %v6620
    %8257 = vmatpush1.bf16.msra.mxu0 %v6619
    %8258 = vmatprep.subr.bf16.mxu0 %v6652
    %8259 = vmatpush1.bf16.msra.mxu0 %v6651
    %8260 = vmatprep.subr.bf16.mxu0 %v6684
    %8261 = vmatpush1.bf16.msra.mxu0 %v6683
    %8262 = vmatprep.subr.bf16.mxu0 %v6716
    %8263 = vmatpush1.bf16.msra.mxu0 %v6715
    %8264 = vmatprep.subr.bf16.mxu0 %v6748
    %8265 = vmatpush1.bf16.msra.mxu0 %v6747
    %8266 = vmatprep.subr.bf16.mxu0 %v6780
    %8267 = vmatpush1.bf16.msra.mxu0 %v6779
    %8268 = vmatprep.subr.bf16.mxu0 %v6812
    %8269 = vmatpush1.bf16.msra.mxu0 %v6811
    %8270 = vmatprep.subr.bf16.mxu0 %v6844
    %8271 = vmatpush1.bf16.msra.mxu0 %v6843
    %8272 = vmatprep.subr.bf16.mxu0 %v6876
    %8273 = vmatpush1.bf16.msra.mxu0 %v6875
    %8274 = vmatprep.subr.bf16.mxu0 %v6908
    %8275 = vmatpush1.bf16.msra.mxu0 %v6907
    %8276 = vmatprep.mubr.bf16.mxu0 %v2832
    %8277 = vmatmul.mubr.bf16.gmra.mrb[0].mxu0 %v2831
    %v8278 = vpop.f32.mrb[0].mxu0
    %v8279 = vadd.f32 %v8238, %v8278
    %v8280 = vpop.f32.mrb[0].mxu0
    %v8281 = vadd.f32 %v8240, %v8280
    %v8282 = vpop.f32.mrb[0].mxu0
    %v8283 = vpop.f32.mrb[0].mxu0
    %8284 = vdwg.mxu0
    %8285 = vmatprep.subr.bf16.mxu0 %v5918
    %8286 = vmatpush1.bf16.msra.mxu0 %v5917
    %8287 = vmatprep.subr.bf16.mxu0 %v5950
    %8288 = vmatpush1.bf16.msra.mxu0 %v5949
    %8289 = vmatprep.subr.bf16.mxu0 %v5982
    %8290 = vmatpush1.bf16.msra.mxu0 %v5981
    %8291 = vmatprep.subr.bf16.mxu0 %v6014
    %8292 = vmatpush1.bf16.msra.mxu0 %v6013
    %8293 = vmatprep.subr.bf16.mxu0 %v6046
    %8294 = vmatpush1.bf16.msra.mxu0 %v6045
    %8295 = vmatprep.subr.bf16.mxu0 %v6078
    %8296 = vmatpush1.bf16.msra.mxu0 %v6077
    %8297 = vmatprep.subr.bf16.mxu0 %v6110
    %8298 = vmatpush1.bf16.msra.mxu0 %v6109
    %8299 = vmatprep.subr.bf16.mxu0 %v6142
    %8300 = vmatpush1.bf16.msra.mxu0 %v6141
    %8301 = vmatprep.subr.bf16.mxu0 %v6174
    %8302 = vmatpush1.bf16.msra.mxu0 %v6173
    %8303 = vmatprep.subr.bf16.mxu0 %v6206
    %8304 = vmatpush1.bf16.msra.mxu0 %v6205
    %8305 = vmatprep.subr.bf16.mxu0 %v6238
    %8306 = vmatpush1.bf16.msra.mxu0 %v6237
    %8307 = vmatprep.subr.bf16.mxu0 %v6270
    %8308 = vmatpush1.bf16.msra.mxu0 %v6269
    %8309 = vmatprep.subr.bf16.mxu0 %v6302
    %8310 = vmatpush1.bf16.msra.mxu0 %v6301
    %8311 = vmatprep.subr.bf16.mxu0 %v6334
    %8312 = vmatpush1.bf16.msra.mxu0 %v6333
    %8313 = vmatprep.subr.bf16.mxu0 %v6366
    %8314 = vmatpush1.bf16.msra.mxu0 %v6365
    %8315 = vmatprep.subr.bf16.mxu0 %v6398
    %8316 = vmatpush1.bf16.msra.mxu0 %v6397
    %8317 = vmatprep.mubr.bf16.mxu0 %v2830
    %8318 = vmatmul.mubr.bf16.gmra.mrb[0].mxu0 %v2829
    %v8319 = vpop.f32.mrb[0].mxu0
    %v8320 = vadd.f32 %v1843, %v8319
    %v8321 = vpop.f32.mrb[0].mxu0
    %v8322 = vadd.f32 %v1847, %v8321
    %v8323 = vpop.f32.mrb[0].mxu0
    %v8324 = vpop.f32.mrb[0].mxu0
    %8325 = vdwg.mxu0
    %8326 = vmatprep.subr.bf16.mxu0 %v6430
    %8327 = vmatpush1.bf16.msra.mxu0 %v6429
    %8328 = vmatprep.subr.bf16.mxu0 %v6462
    %8329 = vmatpush1.bf16.msra.mxu0 %v6461
    %8330 = vmatprep.subr.bf16.mxu0 %v6494
    %8331 = vmatpush1.bf16.msra.mxu0 %v6493
    %8332 = vmatprep.subr.bf16.mxu0 %v6526
    %8333 = vmatpush1.bf16.msra.mxu0 %v6525
    %8334 = vmatprep.subr.bf16.mxu0 %v6558
    %8335 = vmatpush1.bf16.msra.mxu0 %v6557
    %8336 = vmatprep.subr.bf16.mxu0 %v6590
    %8337 = vmatpush1.bf16.msra.mxu0 %v6589
    %8338 = vmatprep.subr.bf16.mxu0 %v6622
    %8339 = vmatpush1.bf16.msra.mxu0 %v6621
    %8340 = vmatprep.subr.bf16.mxu0 %v6654
    %8341 = vmatpush1.bf16.msra.mxu0 %v6653
    %8342 = vmatprep.subr.bf16.mxu0 %v6686
    %8343 = vmatpush1.bf16.msra.mxu0 %v6685
    %8344 = vmatprep.subr.bf16.mxu0 %v6718
    %8345 = vmatpush1.bf16.msra.mxu0 %v6717
    %8346 = vmatprep.subr.bf16.mxu0 %v6750
    %8347 = vmatpush1.bf16.msra.mxu0 %v6749
    %8348 = vmatprep.subr.bf16.mxu0 %v6782
    %8349 = vmatpush1.bf16.msra.mxu0 %v6781
    %8350 = vmatprep.subr.bf16.mxu0 %v6814
    %8351 = vmatpush1.bf16.msra.mxu0 %v6813
    %8352 = vmatprep.subr.bf16.mxu0 %v6846
    %8353 = vmatpush1.bf16.msra.mxu0 %v6845
    %8354 = vmatprep.subr.bf16.mxu0 %v6878
    %8355 = vmatpush1.bf16.msra.mxu0 %v6877
    %8356 = vmatprep.subr.bf16.mxu0 %v6910
    %8357 = vmatpush1.bf16.msra.mxu0 %v6909
    %8358 = vmatprep.mubr.bf16.mxu0 %v2832
    %8359 = vmatmul.mubr.bf16.gmra.mrb[0].mxu0 %v2831
    %v8360 = vpop.f32.mrb[0].mxu0
    %v8361 = vadd.f32 %v8320, %v8360
    %v8362 = vpop.f32.mrb[0].mxu0
    %v8363 = vadd.f32 %v8322, %v8362
    %v8364 = vpop.f32.mrb[0].mxu0
    %v8365 = vpop.f32.mrb[0].mxu0
    %8366 = vdwg.mxu0
    %8367 = vmatprep.subr.bf16.mxu0 %v5920
    %8368 = vmatpush1.bf16.msra.mxu0 %v5919
    %8369 = vmatprep.subr.bf16.mxu0 %v5952
    %8370 = vmatpush1.bf16.msra.mxu0 %v5951
    %8371 = vmatprep.subr.bf16.mxu0 %v5984
    %8372 = vmatpush1.bf16.msra.mxu0 %v5983
    %8373 = vmatprep.subr.bf16.mxu0 %v6016
    %8374 = vmatpush1.bf16.msra.mxu0 %v6015
    %8375 = vmatprep.subr.bf16.mxu0 %v6048
    %8376 = vmatpush1.bf16.msra.mxu0 %v6047
    %8377 = vmatprep.subr.bf16.mxu0 %v6080
    %8378 = vmatpush1.bf16.msra.mxu0 %v6079
    %8379 = vmatprep.subr.bf16.mxu0 %v6112
    %8380 = vmatpush1.bf16.msra.mxu0 %v6111
    %8381 = vmatprep.subr.bf16.mxu0 %v6144
    %8382 = vmatpush1.bf16.msra.mxu0 %v6143
    %8383 = vmatprep.subr.bf16.mxu0 %v6176
    %8384 = vmatpush1.bf16.msra.mxu0 %v6175
    %8385 = vmatprep.subr.bf16.mxu0 %v6208
    %8386 = vmatpush1.bf16.msra.mxu0 %v6207
    %8387 = vmatprep.subr.bf16.mxu0 %v6240
    %8388 = vmatpush1.bf16.msra.mxu0 %v6239
    %8389 = vmatprep.subr.bf16.mxu0 %v6272
    %8390 = vmatpush1.bf16.msra.mxu0 %v6271
    %8391 = vmatprep.subr.bf16.mxu0 %v6304
    %8392 = vmatpush1.bf16.msra.mxu0 %v6303
    %8393 = vmatprep.subr.bf16.mxu0 %v6336
    %8394 = vmatpush1.bf16.msra.mxu0 %v6335
    %8395 = vmatprep.subr.bf16.mxu0 %v6368
    %8396 = vmatpush1.bf16.msra.mxu0 %v6367
    %8397 = vmatprep.subr.bf16.mxu0 %v6400
    %8398 = vmatpush1.bf16.msra.mxu0 %v6399
    %8399 = vmatprep.mubr.bf16.mxu0 %v2830
    %8400 = vmatmul.mubr.bf16.gmra.mrb[0].mxu0 %v2829
    %v8401 = vpop.f32.mrb[0].mxu0
    %v8402 = vadd.f32 %v1851, %v8401
    %v8403 = vpop.f32.mrb[0].mxu0
    %v8404 = vadd.f32 %v1855, %v8403
    %v8405 = vpop.f32.mrb[0].mxu0
    %v8406 = vpop.f32.mrb[0].mxu0
    %8407 = vdwg.mxu0
    %8408 = vmatprep.subr.bf16.mxu0 %v6432
    %8409 = vmatpush1.bf16.msra.mxu0 %v6431
    %8410 = vmatprep.subr.bf16.mxu0 %v6464
    %8411 = vmatpush1.bf16.msra.mxu0 %v6463
    %8412 = vmatprep.subr.bf16.mxu0 %v6496
    %8413 = vmatpush1.bf16.msra.mxu0 %v6495
    %8414 = vmatprep.subr.bf16.mxu0 %v6528
    %8415 = vmatpush1.bf16.msra.mxu0 %v6527
    %8416 = vmatprep.subr.bf16.mxu0 %v6560
    %8417 = vmatpush1.bf16.msra.mxu0 %v6559
    %8418 = vmatprep.subr.bf16.mxu0 %v6592
    %8419 = vmatpush1.bf16.msra.mxu0 %v6591
    %8420 = vmatprep.subr.bf16.mxu0 %v6624
    %8421 = vmatpush1.bf16.msra.mxu0 %v6623
    %8422 = vmatprep.subr.bf16.mxu0 %v6656
    %8423 = vmatpush1.bf16.msra.mxu0 %v6655
    %8424 = vmatprep.subr.bf16.mxu0 %v6688
    %8425 = vmatpush1.bf16.msra.mxu0 %v6687
    %8426 = vmatprep.subr.bf16.mxu0 %v6720
    %8427 = vmatpush1.bf16.msra.mxu0 %v6719
    %8428 = vmatprep.subr.bf16.mxu0 %v6752
    %8429 = vmatpush1.bf16.msra.mxu0 %v6751
    %8430 = vmatprep.subr.bf16.mxu0 %v6784
    %8431 = vmatpush1.bf16.msra.mxu0 %v6783
    %8432 = vmatprep.subr.bf16.mxu0 %v6816
    %8433 = vmatpush1.bf16.msra.mxu0 %v6815
    %8434 = vmatprep.subr.bf16.mxu0 %v6848
    %8435 = vmatpush1.bf16.msra.mxu0 %v6847
    %8436 = vmatprep.subr.bf16.mxu0 %v6880
    %8437 = vmatpush1.bf16.msra.mxu0 %v6879
    %8438 = vmatprep.subr.bf16.mxu0 %v6912
    %8439 = vmatpush1.bf16.msra.mxu0 %v6911
    %8440 = vmatprep.mubr.bf16.mxu0 %v2832
    %8441 = vmatmul.mubr.bf16.gmra.mrb[0].mxu0 %v2831
    %v8442 = vpop.f32.mrb[0].mxu0
    %v8443 = vadd.f32 %v8402, %v8442
    %v8444 = vpop.f32.mrb[0].mxu0
    %v8445 = vadd.f32 %v8404, %v8444
    %v8446 = vpop.f32.mrb[0].mxu0
    %v8447 = vpop.f32.mrb[0].mxu0
    %8448 = vdwg.mxu0
    %8449 = vmatprep.subr.bf16.mxu0 %v5922
    %8450 = vmatpush1.bf16.msra.mxu0 %v5921
    %8451 = vmatprep.subr.bf16.mxu0 %v5954
    %8452 = vmatpush1.bf16.msra.mxu0 %v5953
    %8453 = vmatprep.subr.bf16.mxu0 %v5986
    %8454 = vmatpush1.bf16.msra.mxu0 %v5985
    %8455 = vmatprep.subr.bf16.mxu0 %v6018
    %8456 = vmatpush1.bf16.msra.mxu0 %v6017
    %8457 = vmatprep.subr.bf16.mxu0 %v6050
    %8458 = vmatpush1.bf16.msra.mxu0 %v6049
    %8459 = vmatprep.subr.bf16.mxu0 %v6082
    %8460 = vmatpush1.bf16.msra.mxu0 %v6081
    %8461 = vmatprep.subr.bf16.mxu0 %v6114
    %8462 = vmatpush1.bf16.msra.mxu0 %v6113
    %8463 = vmatprep.subr.bf16.mxu0 %v6146
    %8464 = vmatpush1.bf16.msra.mxu0 %v6145
    %8465 = vmatprep.subr.bf16.mxu0 %v6178
    %8466 = vmatpush1.bf16.msra.mxu0 %v6177
    %8467 = vmatprep.subr.bf16.mxu0 %v6210
    %8468 = vmatpush1.bf16.msra.mxu0 %v6209
    %8469 = vmatprep.subr.bf16.mxu0 %v6242
    %8470 = vmatpush1.bf16.msra.mxu0 %v6241
    %8471 = vmatprep.subr.bf16.mxu0 %v6274
    %8472 = vmatpush1.bf16.msra.mxu0 %v6273
    %8473 = vmatprep.subr.bf16.mxu0 %v6306
    %8474 = vmatpush1.bf16.msra.mxu0 %v6305
    %8475 = vmatprep.subr.bf16.mxu0 %v6338
    %8476 = vmatpush1.bf16.msra.mxu0 %v6337
    %8477 = vmatprep.subr.bf16.mxu0 %v6370
    %8478 = vmatpush1.bf16.msra.mxu0 %v6369
    %8479 = vmatprep.subr.bf16.mxu0 %v6402
    %8480 = vmatpush1.bf16.msra.mxu0 %v6401
    %8481 = vmatprep.mubr.bf16.mxu0 %v2830
    %8482 = vmatmul.mubr.bf16.gmra.mrb[0].mxu0 %v2829
    %v8483 = vpop.f32.mrb[0].mxu0
    %v8484 = vadd.f32 %v1859, %v8483
    %v8485 = vpop.f32.mrb[0].mxu0
    %v8486 = vadd.f32 %v1863, %v8485
    %v8487 = vpop.f32.mrb[0].mxu0
    %v8488 = vpop.f32.mrb[0].mxu0
    %8489 = vdwg.mxu0
    %8490 = vmatprep.subr.bf16.mxu0 %v6434
    %8491 = vmatpush1.bf16.msra.mxu0 %v6433
    %8492 = vmatprep.subr.bf16.mxu0 %v6466
    %8493 = vmatpush1.bf16.msra.mxu0 %v6465
    %8494 = vmatprep.subr.bf16.mxu0 %v6498
    %8495 = vmatpush1.bf16.msra.mxu0 %v6497
    %8496 = vmatprep.subr.bf16.mxu0 %v6530
    %8497 = vmatpush1.bf16.msra.mxu0 %v6529
    %8498 = vmatprep.subr.bf16.mxu0 %v6562
    %8499 = vmatpush1.bf16.msra.mxu0 %v6561
    %8500 = vmatprep.subr.bf16.mxu0 %v6594
    %8501 = vmatpush1.bf16.msra.mxu0 %v6593
    %8502 = vmatprep.subr.bf16.mxu0 %v6626
    %8503 = vmatpush1.bf16.msra.mxu0 %v6625
    %8504 = vmatprep.subr.bf16.mxu0 %v6658
    %8505 = vmatpush1.bf16.msra.mxu0 %v6657
    %8506 = vmatprep.subr.bf16.mxu0 %v6690
    %8507 = vmatpush1.bf16.msra.mxu0 %v6689
    %8508 = vmatprep.subr.bf16.mxu0 %v6722
    %8509 = vmatpush1.bf16.msra.mxu0 %v6721
    %8510 = vmatprep.subr.bf16.mxu0 %v6754
    %8511 = vmatpush1.bf16.msra.mxu0 %v6753
    %8512 = vmatprep.subr.bf16.mxu0 %v6786
    %8513 = vmatpush1.bf16.msra.mxu0 %v6785
    %8514 = vmatprep.subr.bf16.mxu0 %v6818
    %8515 = vmatpush1.bf16.msra.mxu0 %v6817
    %8516 = vmatprep.subr.bf16.mxu0 %v6850
    %8517 = vmatpush1.bf16.msra.mxu0 %v6849
    %8518 = vmatprep.subr.bf16.mxu0 %v6882
    %8519 = vmatpush1.bf16.msra.mxu0 %v6881
    %8520 = vmatprep.subr.bf16.mxu0 %v6914
    %8521 = vmatpush1.bf16.msra.mxu0 %v6913
    %8522 = vmatprep.mubr.bf16.mxu0 %v2832
    %8523 = vmatmul.mubr.bf16.gmra.mrb[0].mxu0 %v2831
    %v8524 = vpop.f32.mrb[0].mxu0
    %v8525 = vadd.f32 %v8484, %v8524
    %v8526 = vpop.f32.mrb[0].mxu0
    %v8527 = vadd.f32 %v8486, %v8526
    %v8528 = vpop.f32.mrb[0].mxu0
    %v8529 = vpop.f32.mrb[0].mxu0
    %8530 = vdwg.mxu0
    %8531 = vmatprep.subr.bf16.mxu0 %v5924
    %8532 = vmatpush1.bf16.msra.mxu0 %v5923
    %8533 = vmatprep.subr.bf16.mxu0 %v5956
    %8534 = vmatpush1.bf16.msra.mxu0 %v5955
    %8535 = vmatprep.subr.bf16.mxu0 %v5988
    %8536 = vmatpush1.bf16.msra.mxu0 %v5987
    %8537 = vmatprep.subr.bf16.mxu0 %v6020
    %8538 = vmatpush1.bf16.msra.mxu0 %v6019
    %8539 = vmatprep.subr.bf16.mxu0 %v6052
    %8540 = vmatpush1.bf16.msra.mxu0 %v6051
    %8541 = vmatprep.subr.bf16.mxu0 %v6084
    %8542 = vmatpush1.bf16.msra.mxu0 %v6083
    %8543 = vmatprep.subr.bf16.mxu0 %v6116
    %8544 = vmatpush1.bf16.msra.mxu0 %v6115
    %8545 = vmatprep.subr.bf16.mxu0 %v6148
    %8546 = vmatpush1.bf16.msra.mxu0 %v6147
    %8547 = vmatprep.subr.bf16.mxu0 %v6180
    %8548 = vmatpush1.bf16.msra.mxu0 %v6179
    %8549 = vmatprep.subr.bf16.mxu0 %v6212
    %8550 = vmatpush1.bf16.msra.mxu0 %v6211
    %8551 = vmatprep.subr.bf16.mxu0 %v6244
    %8552 = vmatpush1.bf16.msra.mxu0 %v6243
    %8553 = vmatprep.subr.bf16.mxu0 %v6276
    %8554 = vmatpush1.bf16.msra.mxu0 %v6275
    %8555 = vmatprep.subr.bf16.mxu0 %v6308
    %8556 = vmatpush1.bf16.msra.mxu0 %v6307
    %8557 = vmatprep.subr.bf16.mxu0 %v6340
    %8558 = vmatpush1.bf16.msra.mxu0 %v6339
    %8559 = vmatprep.subr.bf16.mxu0 %v6372
    %8560 = vmatpush1.bf16.msra.mxu0 %v6371
    %8561 = vmatprep.subr.bf16.mxu0 %v6404
    %8562 = vmatpush1.bf16.msra.mxu0 %v6403
    %8563 = vmatprep.mubr.bf16.mxu0 %v2830
    %8564 = vmatmul.mubr.bf16.gmra.mrb[0].mxu0 %v2829
    %v8565 = vpop.f32.mrb[0].mxu0
    %v8566 = vadd.f32 %v1867, %v8565
    %v8567 = vpop.f32.mrb[0].mxu0
    %v8568 = vadd.f32 %v1871, %v8567
    %v8569 = vpop.f32.mrb[0].mxu0
    %v8570 = vpop.f32.mrb[0].mxu0
    %8571 = vdwg.mxu0
    %8572 = vmatprep.subr.bf16.mxu0 %v6436
    %8573 = vmatpush1.bf16.msra.mxu0 %v6435
    %8574 = vmatprep.subr.bf16.mxu0 %v6468
    %8575 = vmatpush1.bf16.msra.mxu0 %v6467
    %8576 = vmatprep.subr.bf16.mxu0 %v6500
    %8577 = vmatpush1.bf16.msra.mxu0 %v6499
    %8578 = vmatprep.subr.bf16.mxu0 %v6532
    %8579 = vmatpush1.bf16.msra.mxu0 %v6531
    %8580 = vmatprep.subr.bf16.mxu0 %v6564
    %8581 = vmatpush1.bf16.msra.mxu0 %v6563
    %8582 = vmatprep.subr.bf16.mxu0 %v6596
    %8583 = vmatpush1.bf16.msra.mxu0 %v6595
    %8584 = vmatprep.subr.bf16.mxu0 %v6628
    %8585 = vmatpush1.bf16.msra.mxu0 %v6627
    %8586 = vmatprep.subr.bf16.mxu0 %v6660
    %8587 = vmatpush1.bf16.msra.mxu0 %v6659
    %8588 = vmatprep.subr.bf16.mxu0 %v6692
    %8589 = vmatpush1.bf16.msra.mxu0 %v6691
    %8590 = vmatprep.subr.bf16.mxu0 %v6724
    %8591 = vmatpush1.bf16.msra.mxu0 %v6723
    %8592 = vmatprep.subr.bf16.mxu0 %v6756
    %8593 = vmatpush1.bf16.msra.mxu0 %v6755
    %8594 = vmatprep.subr.bf16.mxu0 %v6788
    %8595 = vmatpush1.bf16.msra.mxu0 %v6787
    %8596 = vmatprep.subr.bf16.mxu0 %v6820
    %8597 = vmatpush1.bf16.msra.mxu0 %v6819
    %8598 = vmatprep.subr.bf16.mxu0 %v6852
    %8599 = vmatpush1.bf16.msra.mxu0 %v6851
    %8600 = vmatprep.subr.bf16.mxu0 %v6884
    %8601 = vmatpush1.bf16.msra.mxu0 %v6883
    %8602 = vmatprep.subr.bf16.mxu0 %v6916
    %8603 = vmatpush1.bf16.msra.mxu0 %v6915
    %8604 = vmatprep.mubr.bf16.mxu0 %v2832
    %8605 = vmatmul.mubr.bf16.gmra.mrb[0].mxu0 %v2831
    %v8606 = vpop.f32.mrb[0].mxu0
    %v8607 = vadd.f32 %v8566, %v8606
    %v8608 = vpop.f32.mrb[0].mxu0
    %v8609 = vadd.f32 %v8568, %v8608
    %v8610 = vpop.f32.mrb[0].mxu0
    %v8611 = vpop.f32.mrb[0].mxu0
    %8612 = vdwg.mxu0
    %8613 = vmatprep.subr.bf16.mxu0 %v5926
    %8614 = vmatpush1.bf16.msra.mxu0 %v5925
    %8615 = vmatprep.subr.bf16.mxu0 %v5958
    %8616 = vmatpush1.bf16.msra.mxu0 %v5957
    %8617 = vmatprep.subr.bf16.mxu0 %v5990
    %8618 = vmatpush1.bf16.msra.mxu0 %v5989
    %8619 = vmatprep.subr.bf16.mxu0 %v6022
    %8620 = vmatpush1.bf16.msra.mxu0 %v6021
    %8621 = vmatprep.subr.bf16.mxu0 %v6054
    %8622 = vmatpush1.bf16.msra.mxu0 %v6053
    %8623 = vmatprep.subr.bf16.mxu0 %v6086
    %8624 = vmatpush1.bf16.msra.mxu0 %v6085
    %8625 = vmatprep.subr.bf16.mxu0 %v6118
    %8626 = vmatpush1.bf16.msra.mxu0 %v6117
    %8627 = vmatprep.subr.bf16.mxu0 %v6150
    %8628 = vmatpush1.bf16.msra.mxu0 %v6149
    %8629 = vmatprep.subr.bf16.mxu0 %v6182
    %8630 = vmatpush1.bf16.msra.mxu0 %v6181
    %8631 = vmatprep.subr.bf16.mxu0 %v6214
    %8632 = vmatpush1.bf16.msra.mxu0 %v6213
    %8633 = vmatprep.subr.bf16.mxu0 %v6246
    %8634 = vmatpush1.bf16.msra.mxu0 %v6245
    %8635 = vmatprep.subr.bf16.mxu0 %v6278
    %8636 = vmatpush1.bf16.msra.mxu0 %v6277
    %8637 = vmatprep.subr.bf16.mxu0 %v6310
    %8638 = vmatpush1.bf16.msra.mxu0 %v6309
    %8639 = vmatprep.subr.bf16.mxu0 %v6342
    %8640 = vmatpush1.bf16.msra.mxu0 %v6341
    %8641 = vmatprep.subr.bf16.mxu0 %v6374
    %8642 = vmatpush1.bf16.msra.mxu0 %v6373
    %8643 = vmatprep.subr.bf16.mxu0 %v6406
    %8644 = vmatpush1.bf16.msra.mxu0 %v6405
    %8645 = vmatprep.mubr.bf16.mxu0 %v2830
    %8646 = vmatmul.mubr.bf16.gmra.mrb[0].mxu0 %v2829
    %v8647 = vpop.f32.mrb[0].mxu0
    %v8648 = vadd.f32 %v1875, %v8647
    %v8649 = vpop.f32.mrb[0].mxu0
    %v8650 = vadd.f32 %v1879, %v8649
    %v8651 = vpop.f32.mrb[0].mxu0
    %v8652 = vpop.f32.mrb[0].mxu0
    %8653 = vdwg.mxu0
    %8654 = vmatprep.subr.bf16.mxu0 %v6438
    %8655 = vmatpush1.bf16.msra.mxu0 %v6437
    %8656 = vmatprep.subr.bf16.mxu0 %v6470
    %8657 = vmatpush1.bf16.msra.mxu0 %v6469
    %8658 = vmatprep.subr.bf16.mxu0 %v6502
    %8659 = vmatpush1.bf16.msra.mxu0 %v6501
    %8660 = vmatprep.subr.bf16.mxu0 %v6534
    %8661 = vmatpush1.bf16.msra.mxu0 %v6533
    %8662 = vmatprep.subr.bf16.mxu0 %v6566
    %8663 = vmatpush1.bf16.msra.mxu0 %v6565
    %8664 = vmatprep.subr.bf16.mxu0 %v6598
    %8665 = vmatpush1.bf16.msra.mxu0 %v6597
    %8666 = vmatprep.subr.bf16.mxu0 %v6630
    %8667 = vmatpush1.bf16.msra.mxu0 %v6629
    %8668 = vmatprep.subr.bf16.mxu0 %v6662
    %8669 = vmatpush1.bf16.msra.mxu0 %v6661
    %8670 = vmatprep.subr.bf16.mxu0 %v6694
    %8671 = vmatpush1.bf16.msra.mxu0 %v6693
    %8672 = vmatprep.subr.bf16.mxu0 %v6726
    %8673 = vmatpush1.bf16.msra.mxu0 %v6725
    %8674 = vmatprep.subr.bf16.mxu0 %v6758
    %8675 = vmatpush1.bf16.msra.mxu0 %v6757
    %8676 = vmatprep.subr.bf16.mxu0 %v6790
    %8677 = vmatpush1.bf16.msra.mxu0 %v6789
    %8678 = vmatprep.subr.bf16.mxu0 %v6822
    %8679 = vmatpush1.bf16.msra.mxu0 %v6821
    %8680 = vmatprep.subr.bf16.mxu0 %v6854
    %8681 = vmatpush1.bf16.msra.mxu0 %v6853
    %8682 = vmatprep.subr.bf16.mxu0 %v6886
    %8683 = vmatpush1.bf16.msra.mxu0 %v6885
    %8684 = vmatprep.subr.bf16.mxu0 %v6918
    %8685 = vmatpush1.bf16.msra.mxu0 %v6917
    %8686 = vmatprep.mubr.bf16.mxu0 %v2832
    %8687 = vmatmul.mubr.bf16.gmra.mrb[0].mxu0 %v2831
    %v8688 = vpop.f32.mrb[0].mxu0
    %v8689 = vadd.f32 %v8648, %v8688
    %v8690 = vpop.f32.mrb[0].mxu0
    %v8691 = vadd.f32 %v8650, %v8690
    %v8692 = vpop.f32.mrb[0].mxu0
    %v8693 = vpop.f32.mrb[0].mxu0
    %8694 = vdwg.mxu0
    %8695 = vmatprep.subr.bf16.mxu0 %v5928
    %8696 = vmatpush1.bf16.msra.mxu0 %v5927
    %8697 = vmatprep.subr.bf16.mxu0 %v5960
    %8698 = vmatpush1.bf16.msra.mxu0 %v5959
    %8699 = vmatprep.subr.bf16.mxu0 %v5992
    %8700 = vmatpush1.bf16.msra.mxu0 %v5991
    %8701 = vmatprep.subr.bf16.mxu0 %v6024
    %8702 = vmatpush1.bf16.msra.mxu0 %v6023
    %8703 = vmatprep.subr.bf16.mxu0 %v6056
    %8704 = vmatpush1.bf16.msra.mxu0 %v6055
    %8705 = vmatprep.subr.bf16.mxu0 %v6088
    %8706 = vmatpush1.bf16.msra.mxu0 %v6087
    %8707 = vmatprep.subr.bf16.mxu0 %v6120
    %8708 = vmatpush1.bf16.msra.mxu0 %v6119
    %8709 = vmatprep.subr.bf16.mxu0 %v6152
    %8710 = vmatpush1.bf16.msra.mxu0 %v6151
    %8711 = vmatprep.subr.bf16.mxu0 %v6184
    %8712 = vmatpush1.bf16.msra.mxu0 %v6183
    %8713 = vmatprep.subr.bf16.mxu0 %v6216
    %8714 = vmatpush1.bf16.msra.mxu0 %v6215
    %8715 = vmatprep.subr.bf16.mxu0 %v6248
    %8716 = vmatpush1.bf16.msra.mxu0 %v6247
    %8717 = vmatprep.subr.bf16.mxu0 %v6280
    %8718 = vmatpush1.bf16.msra.mxu0 %v6279
    %8719 = vmatprep.subr.bf16.mxu0 %v6312
    %8720 = vmatpush1.bf16.msra.mxu0 %v6311
    %8721 = vmatprep.subr.bf16.mxu0 %v6344
    %8722 = vmatpush1.bf16.msra.mxu0 %v6343
    %8723 = vmatprep.subr.bf16.mxu0 %v6376
    %8724 = vmatpush1.bf16.msra.mxu0 %v6375
    %8725 = vmatprep.subr.bf16.mxu0 %v6408
    %8726 = vmatpush1.bf16.msra.mxu0 %v6407
    %8727 = vmatprep.mubr.bf16.mxu0 %v2830
    %8728 = vmatmul.mubr.bf16.gmra.mrb[0].mxu0 %v2829
    %v8729 = vpop.f32.mrb[0].mxu0
    %v8730 = vadd.f32 %v1883, %v8729
    %v8731 = vpop.f32.mrb[0].mxu0
    %v8732 = vadd.f32 %v1887, %v8731
    %v8733 = vpop.f32.mrb[0].mxu0
    %v8734 = vpop.f32.mrb[0].mxu0
    %8735 = vdwg.mxu0
    %8736 = vmatprep.subr.bf16.mxu0 %v6440
    %8737 = vmatpush1.bf16.msra.mxu0 %v6439
    %8738 = vmatprep.subr.bf16.mxu0 %v6472
    %8739 = vmatpush1.bf16.msra.mxu0 %v6471
    %8740 = vmatprep.subr.bf16.mxu0 %v6504
    %8741 = vmatpush1.bf16.msra.mxu0 %v6503
    %8742 = vmatprep.subr.bf16.mxu0 %v6536
    %8743 = vmatpush1.bf16.msra.mxu0 %v6535
    %8744 = vmatprep.subr.bf16.mxu0 %v6568
    %8745 = vmatpush1.bf16.msra.mxu0 %v6567
    %8746 = vmatprep.subr.bf16.mxu0 %v6600
    %8747 = vmatpush1.bf16.msra.mxu0 %v6599
    %8748 = vmatprep.subr.bf16.mxu0 %v6632
    %8749 = vmatpush1.bf16.msra.mxu0 %v6631
    %8750 = vmatprep.subr.bf16.mxu0 %v6664
    %8751 = vmatpush1.bf16.msra.mxu0 %v6663
    %8752 = vmatprep.subr.bf16.mxu0 %v6696
    %8753 = vmatpush1.bf16.msra.mxu0 %v6695
    %8754 = vmatprep.subr.bf16.mxu0 %v6728
    %8755 = vmatpush1.bf16.msra.mxu0 %v6727
    %8756 = vmatprep.subr.bf16.mxu0 %v6760
    %8757 = vmatpush1.bf16.msra.mxu0 %v6759
    %8758 = vmatprep.subr.bf16.mxu0 %v6792
    %8759 = vmatpush1.bf16.msra.mxu0 %v6791
    %8760 = vmatprep.subr.bf16.mxu0 %v6824
    %8761 = vmatpush1.bf16.msra.mxu0 %v6823
    %8762 = vmatprep.subr.bf16.mxu0 %v6856
    %8763 = vmatpush1.bf16.msra.mxu0 %v6855
    %8764 = vmatprep.subr.bf16.mxu0 %v6888
    %8765 = vmatpush1.bf16.msra.mxu0 %v6887
    %8766 = vmatprep.subr.bf16.mxu0 %v6920
    %8767 = vmatpush1.bf16.msra.mxu0 %v6919
    %8768 = vmatprep.mubr.bf16.mxu0 %v2832
    %8769 = vmatmul.mubr.bf16.gmra.mrb[0].mxu0 %v2831
    %v8770 = vpop.f32.mrb[0].mxu0
    %v8771 = vadd.f32 %v8730, %v8770
    %v8772 = vpop.f32.mrb[0].mxu0
    %v8773 = vadd.f32 %v8732, %v8772
    %v8774 = vpop.f32.mrb[0].mxu0
    %v8775 = vpop.f32.mrb[0].mxu0
    %8776 = vdwg.mxu0
    %8777 = vmatprep.subr.bf16.mxu0 %v5930
    %8778 = vmatpush1.bf16.msra.mxu0 %v5929
    %8779 = vmatprep.subr.bf16.mxu0 %v5962
    %8780 = vmatpush1.bf16.msra.mxu0 %v5961
    %8781 = vmatprep.subr.bf16.mxu0 %v5994
    %8782 = vmatpush1.bf16.msra.mxu0 %v5993
    %8783 = vmatprep.subr.bf16.mxu0 %v6026
    %8784 = vmatpush1.bf16.msra.mxu0 %v6025
    %8785 = vmatprep.subr.bf16.mxu0 %v6058
    %8786 = vmatpush1.bf16.msra.mxu0 %v6057
    %8787 = vmatprep.subr.bf16.mxu0 %v6090
    %8788 = vmatpush1.bf16.msra.mxu0 %v6089
    %8789 = vmatprep.subr.bf16.mxu0 %v6122
    %8790 = vmatpush1.bf16.msra.mxu0 %v6121
    %8791 = vmatprep.subr.bf16.mxu0 %v6154
    %8792 = vmatpush1.bf16.msra.mxu0 %v6153
    %8793 = vmatprep.subr.bf16.mxu0 %v6186
    %8794 = vmatpush1.bf16.msra.mxu0 %v6185
    %8795 = vmatprep.subr.bf16.mxu0 %v6218
    %8796 = vmatpush1.bf16.msra.mxu0 %v6217
    %8797 = vmatprep.subr.bf16.mxu0 %v6250
    %8798 = vmatpush1.bf16.msra.mxu0 %v6249
    %8799 = vmatprep.subr.bf16.mxu0 %v6282
    %8800 = vmatpush1.bf16.msra.mxu0 %v6281
    %8801 = vmatprep.subr.bf16.mxu0 %v6314
    %8802 = vmatpush1.bf16.msra.mxu0 %v6313
    %8803 = vmatprep.subr.bf16.mxu0 %v6346
    %8804 = vmatpush1.bf16.msra.mxu0 %v6345
    %8805 = vmatprep.subr.bf16.mxu0 %v6378
    %8806 = vmatpush1.bf16.msra.mxu0 %v6377
    %8807 = vmatprep.subr.bf16.mxu0 %v6410
    %8808 = vmatpush1.bf16.msra.mxu0 %v6409
    %8809 = vmatprep.mubr.bf16.mxu0 %v2830
    %8810 = vmatmul.mubr.bf16.gmra.mrb[0].mxu0 %v2829
    %v8811 = vpop.f32.mrb[0].mxu0
    %v8812 = vadd.f32 %v1891, %v8811
    %v8813 = vpop.f32.mrb[0].mxu0
    %v8814 = vadd.f32 %v1895, %v8813
    %v8815 = vpop.f32.mrb[0].mxu0
    %v8816 = vpop.f32.mrb[0].mxu0
    %8817 = vdwg.mxu0
    %8818 = vmatprep.subr.bf16.mxu0 %v6442
    %8819 = vmatpush1.bf16.msra.mxu0 %v6441
    %8820 = vmatprep.subr.bf16.mxu0 %v6474
    %8821 = vmatpush1.bf16.msra.mxu0 %v6473
    %8822 = vmatprep.subr.bf16.mxu0 %v6506
    %8823 = vmatpush1.bf16.msra.mxu0 %v6505
    %8824 = vmatprep.subr.bf16.mxu0 %v6538
    %8825 = vmatpush1.bf16.msra.mxu0 %v6537
    %8826 = vmatprep.subr.bf16.mxu0 %v6570
    %8827 = vmatpush1.bf16.msra.mxu0 %v6569
    %8828 = vmatprep.subr.bf16.mxu0 %v6602
    %8829 = vmatpush1.bf16.msra.mxu0 %v6601
    %8830 = vmatprep.subr.bf16.mxu0 %v6634
    %8831 = vmatpush1.bf16.msra.mxu0 %v6633
    %8832 = vmatprep.subr.bf16.mxu0 %v6666
    %8833 = vmatpush1.bf16.msra.mxu0 %v6665
    %8834 = vmatprep.subr.bf16.mxu0 %v6698
    %8835 = vmatpush1.bf16.msra.mxu0 %v6697
    %8836 = vmatprep.subr.bf16.mxu0 %v6730
    %8837 = vmatpush1.bf16.msra.mxu0 %v6729
    %8838 = vmatprep.subr.bf16.mxu0 %v6762
    %8839 = vmatpush1.bf16.msra.mxu0 %v6761
    %8840 = vmatprep.subr.bf16.mxu0 %v6794
    %8841 = vmatpush1.bf16.msra.mxu0 %v6793
    %8842 = vmatprep.subr.bf16.mxu0 %v6826
    %8843 = vmatpush1.bf16.msra.mxu0 %v6825
    %8844 = vmatprep.subr.bf16.mxu0 %v6858
    %8845 = vmatpush1.bf16.msra.mxu0 %v6857
    %8846 = vmatprep.subr.bf16.mxu0 %v6890
    %8847 = vmatpush1.bf16.msra.mxu0 %v6889
    %8848 = vmatprep.subr.bf16.mxu0 %v6922
    %8849 = vmatpush1.bf16.msra.mxu0 %v6921
    %8850 = vmatprep.mubr.bf16.mxu0 %v2832
    %8851 = vmatmul.mubr.bf16.gmra.mrb[0].mxu0 %v2831
    %v8852 = vpop.f32.mrb[0].mxu0
    %v8853 = vadd.f32 %v8812, %v8852
    %v8854 = vpop.f32.mrb[0].mxu0
    %v8855 = vadd.f32 %v8814, %v8854
    %v8856 = vpop.f32.mrb[0].mxu0
    %v8857 = vpop.f32.mrb[0].mxu0
    %8858 = vdwg.mxu0
    %8859 = vmatprep.subr.bf16.mxu0 %v5932
    %8860 = vmatpush1.bf16.msra.mxu0 %v5931
    %8861 = vmatprep.subr.bf16.mxu0 %v5964
    %8862 = vmatpush1.bf16.msra.mxu0 %v5963
    %8863 = vmatprep.subr.bf16.mxu0 %v5996
    %8864 = vmatpush1.bf16.msra.mxu0 %v5995
    %8865 = vmatprep.subr.bf16.mxu0 %v6028
    %8866 = vmatpush1.bf16.msra.mxu0 %v6027
    %8867 = vmatprep.subr.bf16.mxu0 %v6060
    %8868 = vmatpush1.bf16.msra.mxu0 %v6059
    %8869 = vmatprep.subr.bf16.mxu0 %v6092
    %8870 = vmatpush1.bf16.msra.mxu0 %v6091
    %8871 = vmatprep.subr.bf16.mxu0 %v6124
    %8872 = vmatpush1.bf16.msra.mxu0 %v6123
    %8873 = vmatprep.subr.bf16.mxu0 %v6156
    %8874 = vmatpush1.bf16.msra.mxu0 %v6155
    %8875 = vmatprep.subr.bf16.mxu0 %v6188
    %8876 = vmatpush1.bf16.msra.mxu0 %v6187
    %8877 = vmatprep.subr.bf16.mxu0 %v6220
    %8878 = vmatpush1.bf16.msra.mxu0 %v6219
    %8879 = vmatprep.subr.bf16.mxu0 %v6252
    %8880 = vmatpush1.bf16.msra.mxu0 %v6251
    %8881 = vmatprep.subr.bf16.mxu0 %v6284
    %8882 = vmatpush1.bf16.msra.mxu0 %v6283
    %8883 = vmatprep.subr.bf16.mxu0 %v6316
    %8884 = vmatpush1.bf16.msra.mxu0 %v6315
    %8885 = vmatprep.subr.bf16.mxu0 %v6348
    %8886 = vmatpush1.bf16.msra.mxu0 %v6347
    %8887 = vmatprep.subr.bf16.mxu0 %v6380
    %8888 = vmatpush1.bf16.msra.mxu0 %v6379
    %8889 = vmatprep.subr.bf16.mxu0 %v6412
    %8890 = vmatpush1.bf16.msra.mxu0 %v6411
    %8891 = vmatprep.mubr.bf16.mxu0 %v2830
    %8892 = vmatmul.mubr.bf16.gmra.mrb[0].mxu0 %v2829
    %v8893 = vpop.f32.mrb[0].mxu0
    %v8894 = vadd.f32 %v1899, %v8893
    %v8895 = vpop.f32.mrb[0].mxu0
    %v8896 = vadd.f32 %v1903, %v8895
    %v8897 = vpop.f32.mrb[0].mxu0
    %v8898 = vpop.f32.mrb[0].mxu0
    %8899 = vdwg.mxu0
    %8900 = vmatprep.subr.bf16.mxu0 %v6444
    %8901 = vmatpush1.bf16.msra.mxu0 %v6443
    %8902 = vmatprep.subr.bf16.mxu0 %v6476
    %8903 = vmatpush1.bf16.msra.mxu0 %v6475
    %8904 = vmatprep.subr.bf16.mxu0 %v6508
    %8905 = vmatpush1.bf16.msra.mxu0 %v6507
    %8906 = vmatprep.subr.bf16.mxu0 %v6540
    %8907 = vmatpush1.bf16.msra.mxu0 %v6539
    %8908 = vmatprep.subr.bf16.mxu0 %v6572
    %8909 = vmatpush1.bf16.msra.mxu0 %v6571
    %8910 = vmatprep.subr.bf16.mxu0 %v6604
    %8911 = vmatpush1.bf16.msra.mxu0 %v6603
    %8912 = vmatprep.subr.bf16.mxu0 %v6636
    %8913 = vmatpush1.bf16.msra.mxu0 %v6635
    %8914 = vmatprep.subr.bf16.mxu0 %v6668
    %8915 = vmatpush1.bf16.msra.mxu0 %v6667
    %8916 = vmatprep.subr.bf16.mxu0 %v6700
    %8917 = vmatpush1.bf16.msra.mxu0 %v6699
    %8918 = vmatprep.subr.bf16.mxu0 %v6732
    %8919 = vmatpush1.bf16.msra.mxu0 %v6731
    %8920 = vmatprep.subr.bf16.mxu0 %v6764
    %8921 = vmatpush1.bf16.msra.mxu0 %v6763
    %8922 = vmatprep.subr.bf16.mxu0 %v6796
    %8923 = vmatpush1.bf16.msra.mxu0 %v6795
    %8924 = vmatprep.subr.bf16.mxu0 %v6828
    %8925 = vmatpush1.bf16.msra.mxu0 %v6827
    %8926 = vmatprep.subr.bf16.mxu0 %v6860
    %8927 = vmatpush1.bf16.msra.mxu0 %v6859
    %8928 = vmatprep.subr.bf16.mxu0 %v6892
    %8929 = vmatpush1.bf16.msra.mxu0 %v6891
    %8930 = vmatprep.subr.bf16.mxu0 %v6924
    %8931 = vmatpush1.bf16.msra.mxu0 %v6923
    %8932 = vmatprep.mubr.bf16.mxu0 %v2832
    %8933 = vmatmul.mubr.bf16.gmra.mrb[0].mxu0 %v2831
    %v8934 = vpop.f32.mrb[0].mxu0
    %v8935 = vadd.f32 %v8894, %v8934
    %v8936 = vpop.f32.mrb[0].mxu0
    %v8937 = vadd.f32 %v8896, %v8936
    %v8938 = vpop.f32.mrb[0].mxu0
    %v8939 = vpop.f32.mrb[0].mxu0
    %8940 = vdwg.mxu0
    %8941 = vmatprep.subr.bf16.mxu0 %v5934
    %8942 = vmatpush1.bf16.msra.mxu0 %v5933
    %8943 = vmatprep.subr.bf16.mxu0 %v5966
    %8944 = vmatpush1.bf16.msra.mxu0 %v5965
    %8945 = vmatprep.subr.bf16.mxu0 %v5998
    %8946 = vmatpush1.bf16.msra.mxu0 %v5997
    %8947 = vmatprep.subr.bf16.mxu0 %v6030
    %8948 = vmatpush1.bf16.msra.mxu0 %v6029
    %8949 = vmatprep.subr.bf16.mxu0 %v6062
    %8950 = vmatpush1.bf16.msra.mxu0 %v6061
    %8951 = vmatprep.subr.bf16.mxu0 %v6094
    %8952 = vmatpush1.bf16.msra.mxu0 %v6093
    %8953 = vmatprep.subr.bf16.mxu0 %v6126
    %8954 = vmatpush1.bf16.msra.mxu0 %v6125
    %8955 = vmatprep.subr.bf16.mxu0 %v6158
    %8956 = vmatpush1.bf16.msra.mxu0 %v6157
    %8957 = vmatprep.subr.bf16.mxu0 %v6190
    %8958 = vmatpush1.bf16.msra.mxu0 %v6189
    %8959 = vmatprep.subr.bf16.mxu0 %v6222
    %8960 = vmatpush1.bf16.msra.mxu0 %v6221
    %8961 = vmatprep.subr.bf16.mxu0 %v6254
    %8962 = vmatpush1.bf16.msra.mxu0 %v6253
    %8963 = vmatprep.subr.bf16.mxu0 %v6286
    %8964 = vmatpush1.bf16.msra.mxu0 %v6285
    %8965 = vmatprep.subr.bf16.mxu0 %v6318
    %8966 = vmatpush1.bf16.msra.mxu0 %v6317
    %8967 = vmatprep.subr.bf16.mxu0 %v6350
    %8968 = vmatpush1.bf16.msra.mxu0 %v6349
    %8969 = vmatprep.subr.bf16.mxu0 %v6382
    %8970 = vmatpush1.bf16.msra.mxu0 %v6381
    %8971 = vmatprep.subr.bf16.mxu0 %v6414
    %8972 = vmatpush1.bf16.msra.mxu0 %v6413
    %8973 = vmatprep.mubr.bf16.mxu0 %v2830
    %8974 = vmatmul.mubr.bf16.gmra.mrb[0].mxu0 %v2829
    %v8975 = vpop.f32.mrb[0].mxu0
    %v8976 = vadd.f32 %v1907, %v8975
    %v8977 = vpop.f32.mrb[0].mxu0
    %v8978 = vadd.f32 %v1911, %v8977
    %v8979 = vpop.f32.mrb[0].mxu0
    %v8980 = vpop.f32.mrb[0].mxu0
    %8981 = vdwg.mxu0
    %8982 = vmatprep.subr.bf16.mxu0 %v6446
    %8983 = vmatpush1.bf16.msra.mxu0 %v6445
    %8984 = vmatprep.subr.bf16.mxu0 %v6478
    %8985 = vmatpush1.bf16.msra.mxu0 %v6477
    %8986 = vmatprep.subr.bf16.mxu0 %v6510
    %8987 = vmatpush1.bf16.msra.mxu0 %v6509
    %8988 = vmatprep.subr.bf16.mxu0 %v6542
    %8989 = vmatpush1.bf16.msra.mxu0 %v6541
    %8990 = vmatprep.subr.bf16.mxu0 %v6574
    %8991 = vmatpush1.bf16.msra.mxu0 %v6573
    %8992 = vmatprep.subr.bf16.mxu0 %v6606
    %8993 = vmatpush1.bf16.msra.mxu0 %v6605
    %8994 = vmatprep.subr.bf16.mxu0 %v6638
    %8995 = vmatpush1.bf16.msra.mxu0 %v6637
    %8996 = vmatprep.subr.bf16.mxu0 %v6670
    %8997 = vmatpush1.bf16.msra.mxu0 %v6669
    %8998 = vmatprep.subr.bf16.mxu0 %v6702
    %8999 = vmatpush1.bf16.msra.mxu0 %v6701
    %9000 = vmatprep.subr.bf16.mxu0 %v6734
    %9001 = vmatpush1.bf16.msra.mxu0 %v6733
    %9002 = vmatprep.subr.bf16.mxu0 %v6766
    %9003 = vmatpush1.bf16.msra.mxu0 %v6765
    %9004 = vmatprep.subr.bf16.mxu0 %v6798
    %9005 = vmatpush1.bf16.msra.mxu0 %v6797
    %9006 = vmatprep.subr.bf16.mxu0 %v6830
    %9007 = vmatpush1.bf16.msra.mxu0 %v6829
    %9008 = vmatprep.subr.bf16.mxu0 %v6862
    %9009 = vmatpush1.bf16.msra.mxu0 %v6861
    %9010 = vmatprep.subr.bf16.mxu0 %v6894
    %9011 = vmatpush1.bf16.msra.mxu0 %v6893
    %9012 = vmatprep.subr.bf16.mxu0 %v6926
    %9013 = vmatpush1.bf16.msra.mxu0 %v6925
    %9014 = vmatprep.mubr.bf16.mxu0 %v2832
    %9015 = vmatmul.mubr.bf16.gmra.mrb[0].mxu0 %v2831
    %v9016 = vpop.f32.mrb[0].mxu0
    %v9017 = vadd.f32 %v8976, %v9016
    %v9018 = vpop.f32.mrb[0].mxu0
    %v9019 = vadd.f32 %v8978, %v9018
    %v9020 = vpop.f32.mrb[0].mxu0
    %v9021 = vpop.f32.mrb[0].mxu0
    %9022 = vdwg.mxu0
    %9023 = vmatprep.subr.bf16.mxu0 %v5936
    %9024 = vmatpush1.bf16.msra.mxu0 %v5935
    %9025 = vmatprep.subr.bf16.mxu0 %v5968
    %9026 = vmatpush1.bf16.msra.mxu0 %v5967
    %9027 = vmatprep.subr.bf16.mxu0 %v6000
    %9028 = vmatpush1.bf16.msra.mxu0 %v5999
    %9029 = vmatprep.subr.bf16.mxu0 %v6032
    %9030 = vmatpush1.bf16.msra.mxu0 %v6031
    %9031 = vmatprep.subr.bf16.mxu0 %v6064
    %9032 = vmatpush1.bf16.msra.mxu0 %v6063
    %9033 = vmatprep.subr.bf16.mxu0 %v6096
    %9034 = vmatpush1.bf16.msra.mxu0 %v6095
    %9035 = vmatprep.subr.bf16.mxu0 %v6128
    %9036 = vmatpush1.bf16.msra.mxu0 %v6127
    %9037 = vmatprep.subr.bf16.mxu0 %v6160
    %9038 = vmatpush1.bf16.msra.mxu0 %v6159
    %9039 = vmatprep.subr.bf16.mxu0 %v6192
    %9040 = vmatpush1.bf16.msra.mxu0 %v6191
    %9041 = vmatprep.subr.bf16.mxu0 %v6224
    %9042 = vmatpush1.bf16.msra.mxu0 %v6223
    %9043 = vmatprep.subr.bf16.mxu0 %v6256
    %9044 = vmatpush1.bf16.msra.mxu0 %v6255
    %9045 = vmatprep.subr.bf16.mxu0 %v6288
    %9046 = vmatpush1.bf16.msra.mxu0 %v6287
    %9047 = vmatprep.subr.bf16.mxu0 %v6320
    %9048 = vmatpush1.bf16.msra.mxu0 %v6319
    %9049 = vmatprep.subr.bf16.mxu0 %v6352
    %9050 = vmatpush1.bf16.msra.mxu0 %v6351
    %9051 = vmatprep.subr.bf16.mxu0 %v6384
    %9052 = vmatpush1.bf16.msra.mxu0 %v6383
    %9053 = vmatprep.subr.bf16.mxu0 %v6416
    %9054 = vmatpush1.bf16.msra.mxu0 %v6415
    %9055 = vmatprep.mubr.bf16.mxu0 %v2830
    %9056 = vmatmul.mubr.bf16.gmra.mrb[0].mxu0 %v2829
    %v9057 = vpop.f32.mrb[0].mxu0
    %v9058 = vadd.f32 %v1915, %v9057
    %v9059 = vpop.f32.mrb[0].mxu0
    %v9060 = vadd.f32 %v1919, %v9059
    %v9061 = vpop.f32.mrb[0].mxu0
    %v9062 = vpop.f32.mrb[0].mxu0
    %9063 = vdwg.mxu0
    %9064 = vmatprep.subr.bf16.mxu0 %v6448
    %9065 = vmatpush1.bf16.msra.mxu0 %v6447
    %9066 = vmatprep.subr.bf16.mxu0 %v6480
    %9067 = vmatpush1.bf16.msra.mxu0 %v6479
    %9068 = vmatprep.subr.bf16.mxu0 %v6512
    %9069 = vmatpush1.bf16.msra.mxu0 %v6511
    %9070 = vmatprep.subr.bf16.mxu0 %v6544
    %9071 = vmatpush1.bf16.msra.mxu0 %v6543
    %9072 = vmatprep.subr.bf16.mxu0 %v6576
    %9073 = vmatpush1.bf16.msra.mxu0 %v6575
    %9074 = vmatprep.subr.bf16.mxu0 %v6608
    %9075 = vmatpush1.bf16.msra.mxu0 %v6607
    %9076 = vmatprep.subr.bf16.mxu0 %v6640
    %9077 = vmatpush1.bf16.msra.mxu0 %v6639
    %9078 = vmatprep.subr.bf16.mxu0 %v6672
    %9079 = vmatpush1.bf16.msra.mxu0 %v6671
    %9080 = vmatprep.subr.bf16.mxu0 %v6704
    %9081 = vmatpush1.bf16.msra.mxu0 %v6703
    %9082 = vmatprep.subr.bf16.mxu0 %v6736
    %9083 = vmatpush1.bf16.msra.mxu0 %v6735
    %9084 = vmatprep.subr.bf16.mxu0 %v6768
    %9085 = vmatpush1.bf16.msra.mxu0 %v6767
    %9086 = vmatprep.subr.bf16.mxu0 %v6800
    %9087 = vmatpush1.bf16.msra.mxu0 %v6799
    %9088 = vmatprep.subr.bf16.mxu0 %v6832
    %9089 = vmatpush1.bf16.msra.mxu0 %v6831
    %9090 = vmatprep.subr.bf16.mxu0 %v6864
    %9091 = vmatpush1.bf16.msra.mxu0 %v6863
    %9092 = vmatprep.subr.bf16.mxu0 %v6896
    %9093 = vmatpush1.bf16.msra.mxu0 %v6895
    %9094 = vmatprep.subr.bf16.mxu0 %v6928
    %9095 = vmatpush1.bf16.msra.mxu0 %v6927
    %9096 = vmatprep.mubr.bf16.mxu0 %v2832
    %9097 = vmatmul.mubr.bf16.gmra.mrb[0].mxu0 %v2831
    %v9098 = vpop.f32.mrb[0].mxu0
    %v9099 = vadd.f32 %v9058, %v9098
    %v9100 = vpop.f32.mrb[0].mxu0
    %v9101 = vadd.f32 %v9060, %v9100
    %v9102 = vpop.f32.mrb[0].mxu0
    %v9103 = vpop.f32.mrb[0].mxu0
    %9104 = vdwg.mxu0
    %9105 = vmatprep.subr.bf16.mxu0 %v5938
    %9106 = vmatpush1.bf16.msra.mxu0 %v5937
    %9107 = vmatprep.subr.bf16.mxu0 %v5970
    %9108 = vmatpush1.bf16.msra.mxu0 %v5969
    %9109 = vmatprep.subr.bf16.mxu0 %v6002
    %9110 = vmatpush1.bf16.msra.mxu0 %v6001
    %9111 = vmatprep.subr.bf16.mxu0 %v6034
    %9112 = vmatpush1.bf16.msra.mxu0 %v6033
    %9113 = vmatprep.subr.bf16.mxu0 %v6066
    %9114 = vmatpush1.bf16.msra.mxu0 %v6065
    %9115 = vmatprep.subr.bf16.mxu0 %v6098
    %9116 = vmatpush1.bf16.msra.mxu0 %v6097
    %9117 = vmatprep.subr.bf16.mxu0 %v6130
    %9118 = vmatpush1.bf16.msra.mxu0 %v6129
    %9119 = vmatprep.subr.bf16.mxu0 %v6162
    %9120 = vmatpush1.bf16.msra.mxu0 %v6161
    %9121 = vmatprep.subr.bf16.mxu0 %v6194
    %9122 = vmatpush1.bf16.msra.mxu0 %v6193
    %9123 = vmatprep.subr.bf16.mxu0 %v6226
    %9124 = vmatpush1.bf16.msra.mxu0 %v6225
    %9125 = vmatprep.subr.bf16.mxu0 %v6258
    %9126 = vmatpush1.bf16.msra.mxu0 %v6257
    %9127 = vmatprep.subr.bf16.mxu0 %v6290
    %9128 = vmatpush1.bf16.msra.mxu0 %v6289
    %9129 = vmatprep.subr.bf16.mxu0 %v6322
    %9130 = vmatpush1.bf16.msra.mxu0 %v6321
    %9131 = vmatprep.subr.bf16.mxu0 %v6354
    %9132 = vmatpush1.bf16.msra.mxu0 %v6353
    %9133 = vmatprep.subr.bf16.mxu0 %v6386
    %9134 = vmatpush1.bf16.msra.mxu0 %v6385
    %9135 = vmatprep.subr.bf16.mxu0 %v6418
    %9136 = vmatpush1.bf16.msra.mxu0 %v6417
    %9137 = vmatprep.mubr.bf16.mxu0 %v2830
    %9138 = vmatmul.mubr.bf16.gmra.mrb[0].mxu0 %v2829
    %v9139 = vpop.f32.mrb[0].mxu0
    %v9140 = vadd.f32 %v1923, %v9139
    %v9141 = vpop.f32.mrb[0].mxu0
    %v9142 = vadd.f32 %v1927, %v9141
    %v9143 = vpop.f32.mrb[0].mxu0
    %v9144 = vpop.f32.mrb[0].mxu0
    %9145 = vdwg.mxu0
    %9146 = vmatprep.subr.bf16.mxu0 %v6450
    %9147 = vmatpush1.bf16.msra.mxu0 %v6449
    %9148 = vmatprep.subr.bf16.mxu0 %v6482
    %9149 = vmatpush1.bf16.msra.mxu0 %v6481
    %9150 = vmatprep.subr.bf16.mxu0 %v6514
    %9151 = vmatpush1.bf16.msra.mxu0 %v6513
    %9152 = vmatprep.subr.bf16.mxu0 %v6546
    %9153 = vmatpush1.bf16.msra.mxu0 %v6545
    %9154 = vmatprep.subr.bf16.mxu0 %v6578
    %9155 = vmatpush1.bf16.msra.mxu0 %v6577
    %9156 = vmatprep.subr.bf16.mxu0 %v6610
    %9157 = vmatpush1.bf16.msra.mxu0 %v6609
    %9158 = vmatprep.subr.bf16.mxu0 %v6642
    %9159 = vmatpush1.bf16.msra.mxu0 %v6641
    %9160 = vmatprep.subr.bf16.mxu0 %v6674
    %9161 = vmatpush1.bf16.msra.mxu0 %v6673
    %9162 = vmatprep.subr.bf16.mxu0 %v6706
    %9163 = vmatpush1.bf16.msra.mxu0 %v6705
    %9164 = vmatprep.subr.bf16.mxu0 %v6738
    %9165 = vmatpush1.bf16.msra.mxu0 %v6737
    %9166 = vmatprep.subr.bf16.mxu0 %v6770
    %9167 = vmatpush1.bf16.msra.mxu0 %v6769
    %9168 = vmatprep.subr.bf16.mxu0 %v6802
    %9169 = vmatpush1.bf16.msra.mxu0 %v6801
    %9170 = vmatprep.subr.bf16.mxu0 %v6834
    %9171 = vmatpush1.bf16.msra.mxu0 %v6833
    %9172 = vmatprep.subr.bf16.mxu0 %v6866
    %9173 = vmatpush1.bf16.msra.mxu0 %v6865
    %9174 = vmatprep.subr.bf16.mxu0 %v6898
    %9175 = vmatpush1.bf16.msra.mxu0 %v6897
    %9176 = vmatprep.subr.bf16.mxu0 %v6930
    %9177 = vmatpush1.bf16.msra.mxu0 %v6929
    %9178 = vmatprep.mubr.bf16.mxu0 %v2832
    %9179 = vmatmul.mubr.bf16.gmra.mrb[0].mxu0 %v2831
    %v9180 = vpop.f32.mrb[0].mxu0
    %v9181 = vadd.f32 %v9140, %v9180
    %v9182 = vpop.f32.mrb[0].mxu0
    %v9183 = vadd.f32 %v9142, %v9182
    %v9184 = vpop.f32.mrb[0].mxu0
    %v9185 = vpop.f32.mrb[0].mxu0
    %9186 = vdwg.mxu0
    %9187 = vmatprep.subr.bf16.mxu0 %v5940
    %9188 = vmatpush1.bf16.msra.mxu0 %v5939
    %9189 = vmatprep.subr.bf16.mxu0 %v5972
    %9190 = vmatpush1.bf16.msra.mxu0 %v5971
    %9191 = vmatprep.subr.bf16.mxu0 %v6004
    %9192 = vmatpush1.bf16.msra.mxu0 %v6003
    %9193 = vmatprep.subr.bf16.mxu0 %v6036
    %9194 = vmatpush1.bf16.msra.mxu0 %v6035
    %9195 = vmatprep.subr.bf16.mxu0 %v6068
    %9196 = vmatpush1.bf16.msra.mxu0 %v6067
    %9197 = vmatprep.subr.bf16.mxu0 %v6100
    %9198 = vmatpush1.bf16.msra.mxu0 %v6099
    %9199 = vmatprep.subr.bf16.mxu0 %v6132
    %9200 = vmatpush1.bf16.msra.mxu0 %v6131
    %9201 = vmatprep.subr.bf16.mxu0 %v6164
    %9202 = vmatpush1.bf16.msra.mxu0 %v6163
    %9203 = vmatprep.subr.bf16.mxu0 %v6196
    %9204 = vmatpush1.bf16.msra.mxu0 %v6195
    %9205 = vmatprep.subr.bf16.mxu0 %v6228
    %9206 = vmatpush1.bf16.msra.mxu0 %v6227
    %9207 = vmatprep.subr.bf16.mxu0 %v6260
    %9208 = vmatpush1.bf16.msra.mxu0 %v6259
    %9209 = vmatprep.subr.bf16.mxu0 %v6292
    %9210 = vmatpush1.bf16.msra.mxu0 %v6291
    %9211 = vmatprep.subr.bf16.mxu0 %v6324
    %9212 = vmatpush1.bf16.msra.mxu0 %v6323
    %9213 = vmatprep.subr.bf16.mxu0 %v6356
    %9214 = vmatpush1.bf16.msra.mxu0 %v6355
    %9215 = vmatprep.subr.bf16.mxu0 %v6388
    %9216 = vmatpush1.bf16.msra.mxu0 %v6387
    %9217 = vmatprep.subr.bf16.mxu0 %v6420
    %9218 = vmatpush1.bf16.msra.mxu0 %v6419
    %9219 = vmatprep.mubr.bf16.mxu0 %v2830
    %9220 = vmatmul.mubr.bf16.gmra.mrb[0].mxu0 %v2829
    %v9221 = vpop.f32.mrb[0].mxu0
    %v9222 = vadd.f32 %v1931, %v9221
    %v9223 = vpop.f32.mrb[0].mxu0
    %v9224 = vadd.f32 %v1935, %v9223
    %v9225 = vpop.f32.mrb[0].mxu0
    %v9226 = vpop.f32.mrb[0].mxu0
    %9227 = vdwg.mxu0
    %9228 = vmatprep.subr.bf16.mxu0 %v6452
    %9229 = vmatpush1.bf16.msra.mxu0 %v6451
    %9230 = vmatprep.subr.bf16.mxu0 %v6484
    %9231 = vmatpush1.bf16.msra.mxu0 %v6483
    %9232 = vmatprep.subr.bf16.mxu0 %v6516
    %9233 = vmatpush1.bf16.msra.mxu0 %v6515
    %9234 = vmatprep.subr.bf16.mxu0 %v6548
    %9235 = vmatpush1.bf16.msra.mxu0 %v6547
    %9236 = vmatprep.subr.bf16.mxu0 %v6580
    %9237 = vmatpush1.bf16.msra.mxu0 %v6579
    %9238 = vmatprep.subr.bf16.mxu0 %v6612
    %9239 = vmatpush1.bf16.msra.mxu0 %v6611
    %9240 = vmatprep.subr.bf16.mxu0 %v6644
    %9241 = vmatpush1.bf16.msra.mxu0 %v6643
    %9242 = vmatprep.subr.bf16.mxu0 %v6676
    %9243 = vmatpush1.bf16.msra.mxu0 %v6675
    %9244 = vmatprep.subr.bf16.mxu0 %v6708
    %9245 = vmatpush1.bf16.msra.mxu0 %v6707
    %9246 = vmatprep.subr.bf16.mxu0 %v6740
    %9247 = vmatpush1.bf16.msra.mxu0 %v6739
    %9248 = vmatprep.subr.bf16.mxu0 %v6772
    %9249 = vmatpush1.bf16.msra.mxu0 %v6771
    %9250 = vmatprep.subr.bf16.mxu0 %v6804
    %9251 = vmatpush1.bf16.msra.mxu0 %v6803
    %9252 = vmatprep.subr.bf16.mxu0 %v6836
    %9253 = vmatpush1.bf16.msra.mxu0 %v6835
    %9254 = vmatprep.subr.bf16.mxu0 %v6868
    %9255 = vmatpush1.bf16.msra.mxu0 %v6867
    %9256 = vmatprep.subr.bf16.mxu0 %v6900
    %9257 = vmatpush1.bf16.msra.mxu0 %v6899
    %9258 = vmatprep.subr.bf16.mxu0 %v6932
    %9259 = vmatpush1.bf16.msra.mxu0 %v6931
    %9260 = vmatprep.mubr.bf16.mxu0 %v2832
    %9261 = vmatmul.mubr.bf16.gmra.mrb[0].mxu0 %v2831
    %v9262 = vpop.f32.mrb[0].mxu0
    %v9263 = vadd.f32 %v9222, %v9262
    %v9264 = vpop.f32.mrb[0].mxu0
    %v9265 = vadd.f32 %v9224, %v9264
    %v9266 = vpop.f32.mrb[0].mxu0
    %v9267 = vpop.f32.mrb[0].mxu0
    %9268 = vdwg.mxu0
    %v9269 = vmax.f32 %v8033, 0.0
    %v9270 = vmax.f32 %v8035, 0.0
    %v9271 = vmax.f32 %v8115, 0.0
    %v9272 = vmax.f32 %v8117, 0.0
    %v9273 = vmax.f32 %v8197, 0.0
    %v9274 = vmax.f32 %v8199, 0.0
    %v9275 = vmax.f32 %v8279, 0.0
    %v9276 = vmax.f32 %v8281, 0.0
    %v9277 = vmax.f32 %v8361, 0.0
    %v9278 = vmax.f32 %v8363, 0.0
    %v9279 = vmax.f32 %v8443, 0.0
    %v9280 = vmax.f32 %v8445, 0.0
    %v9281 = vmax.f32 %v8525, 0.0
    %v9282 = vmax.f32 %v8527, 0.0
    %v9283 = vmax.f32 %v8607, 0.0
    %v9284 = vmax.f32 %v8609, 0.0
    %v9285 = vmax.f32 %v8689, 0.0
    %v9286 = vmax.f32 %v8691, 0.0
    %v9287 = vmax.f32 %v8771, 0.0
    %v9288 = vmax.f32 %v8773, 0.0
    %v9289 = vmax.f32 %v8853, 0.0
    %v9290 = vmax.f32 %v8855, 0.0
    %v9291 = vmax.f32 %v8935, 0.0
    %v9292 = vmax.f32 %v8937, 0.0
    %v9293 = vmax.f32 %v9017, 0.0
    %v9294 = vmax.f32 %v9019, 0.0
    %v9295 = vmax.f32 %v9099, 0.0
    %v9296 = vmax.f32 %v9101, 0.0
    %v9297 = vmax.f32 %v9181, 0.0
    %v9298 = vmax.f32 %v9183, 0.0
    %v9299 = vmax.f32 %v9263, 0.0
    %v9300 = vmax.f32 %v9265, 0.0
    %v9301 = vld [vmem:[#allocation7] sm:$0x77]
    %v9302 = vld [vmem:[#allocation7 + $0x8] sm:$0x77]
    %v9303 = vld [vmem:[#allocation7 + $0x10] sm:$0x77]
    %v9304 = vld [vmem:[#allocation7 + $0x18] sm:$0x77]
    %v9305 = vld [vmem:[#allocation7 + $0x20] sm:$0x77]
    %v9306 = vld [vmem:[#allocation7 + $0x28] sm:$0x77]
    %v9307 = vld [vmem:[#allocation7 + $0x30] sm:$0x77]
    %v9308 = vld [vmem:[#allocation7 + $0x38] sm:$0x77]
    %v9309 = vld [vmem:[#allocation7 + $0x40] sm:$0x77]
    %v9310 = vld [vmem:[#allocation7 + $0x48] sm:$0x77]
    %v9311 = vld [vmem:[#allocation7 + $0x50] sm:$0x77]
    %v9312 = vld [vmem:[#allocation7 + $0x58] sm:$0x77]
    %v9313 = vld [vmem:[#allocation7 + $0x60] sm:$0x77]
    %v9314 = vld [vmem:[#allocation7 + $0x68] sm:$0x77]
    %v9315 = vld [vmem:[#allocation7 + $0x70] sm:$0x77]
    %v9316 = vld [vmem:[#allocation7 + $0x78] sm:$0x77]
    %v9317 = vld [vmem:[#allocation8] sm:$0x1]
    %v9319 = vlaneseq
    %v9320 = vshrl.u32 %v9319, 7
    %v9321 = vsub.s32 0, %v9320
    %v9322 = vrot.slane %v9317, %v9321
    %v9340 = vcombine.high %v9301, %v9301
    %v9341 = vcombine.high %v9302, %v9302
    %v9342 = vcombine.high %v9303, %v9303
    %v9343 = vcombine.high %v9304, %v9304
    %v9344 = vcombine.high %v9305, %v9305
    %v9345 = vcombine.high %v9306, %v9306
    %v9346 = vcombine.high %v9307, %v9307
    %v9347 = vcombine.high %v9308, %v9308
    %v9348 = vcombine.high %v9309, %v9309
    %v9349 = vcombine.high %v9310, %v9310
    %v9350 = vcombine.high %v9311, %v9311
    %v9351 = vcombine.high %v9312, %v9312
    %v9352 = vcombine.high %v9313, %v9313
    %v9353 = vcombine.high %v9314, %v9314
    %v9354 = vcombine.high %v9315, %v9315
    %v9355 = vcombine.high %v9316, %v9316
    %9372 = vmatprep.subr.mxu0 %v9340
    %9373 = vmatpush1.xpose.msra.mxu0 %v9301
    %9374 = vmatprep.subr.mxu0 0.0
    %9375 = vmatpush1.xpose.msra.mxu0 0.0
    %9376 = vmatprep.subr.mxu0 0.0
    %9377 = vmatpush1.xpose.msra.mxu0 0.0
    %9378 = vmatprep.subr.mxu0 0.0
    %9379 = vmatpush1.xpose.msra.mxu0 0.0
    %9380 = vmatprep.subr.mxu0 0.0
    %9381 = vmatpush1.xpose.msra.mxu0 0.0
    %9382 = vmatprep.subr.mxu0 0.0
    %9383 = vmatpush1.xpose.msra.mxu0 0.0
    %9384 = vmatprep.subr.mxu0 0.0
    %9385 = vmatpush1.xpose.msra.mxu0 0.0
    %9386 = vmatprep.subr.mxu0 0.0
    %9387 = vmatpush1.xpose.msra.mxu0 0.0
    %9388 = vmatprep.subr.mxu0 0.0
    %9389 = vmatpush1.xpose.msra.mxu0 0.0
    %9390 = vmatprep.subr.mxu0 0.0
    %9391 = vmatpush1.xpose.msra.mxu0 0.0
    %9392 = vmatprep.subr.mxu0 0.0
    %9393 = vmatpush1.xpose.msra.mxu0 0.0
    %9394 = vmatprep.subr.mxu0 0.0
    %9395 = vmatpush1.xpose.msra.mxu0 0.0
    %9396 = vmatprep.subr.mxu0 0.0
    %9397 = vmatpush1.xpose.msra.mxu0 0.0
    %9398 = vmatprep.subr.mxu0 0.0
    %9399 = vmatpush1.xpose.msra.mxu0 0.0
    %9400 = vmatprep.subr.mxu0 0.0
    %9401 = vmatpush1.xpose.msra.mxu0 0.0
    %9402 = vmatprep.subr.mxu0 0.0
    %9403 = vmatpush1.xpose.msra.mxu0 0.0
    %9404 = vmatprep.subr.mxu0 0.0
    %9405 = vmatpush1.xpose.msra.mxu0 0.0
    %9406 = vmatprep.subr.mxu0 0.0
    %9407 = vmatpush1.xpose.msra.mxu0 0.0
    %9408 = vmatprep.subr.mxu0 0.0
    %9409 = vmatpush1.xpose.msra.mxu0 0.0
    %9410 = vmatprep.subr.mxu0 0.0
    %9411 = vmatpush1.xpose.msra.mxu0 0.0
    %9412 = vmatprep.subr.mxu0 0.0
    %9413 = vmatpush1.xpose.msra.mxu0 0.0
    %9414 = vmatprep.subr.mxu0 0.0
    %9415 = vmatpush1.xpose.msra.mxu0 0.0
    %9416 = vmatprep.subr.mxu0 0.0
    %9417 = vmatpush1.xpose.msra.mxu0 0.0
    %9418 = vmatprep.subr.mxu0 0.0
    %9419 = vmatpush1.xpose.msra.mxu0 0.0
    %9420 = vmatprep.subr.mxu0 0.0
    %9421 = vmatpush1.xpose.msra.mxu0 0.0
    %9422 = vmatprep.subr.mxu0 0.0
    %9423 = vmatpush1.xpose.msra.mxu0 0.0
    %9424 = vmatprep.subr.mxu0 0.0
    %9425 = vmatpush1.xpose.msra.mxu0 0.0
    %9426 = vmatprep.subr.mxu0 0.0
    %9427 = vmatpush1.xpose.msra.mxu0 0.0
    %9428 = vmatprep.subr.mxu0 0.0
    %9429 = vmatpush1.xpose.msra.mxu0 0.0
    %9430 = vmatprep.subr.mxu0 0.0
    %9431 = vmatpush1.xpose.msra.mxu0 0.0
    %9432 = vmatprep.subr.mxu0 0.0
    %9433 = vmatpush1.xpose.msra.mxu0 0.0
    %9434 = vmatprep.subr.mxu0 0.0
    %9435 = vmatpush1.xpose.msra.mxu0 0.0
    %9436 = vmatprep.mubr.f32.mxu0 %v9270
    %9437 = vmatmul.mubr.f32.gmra.mrb[0].mxu0 %v9269
    %v9438 = vpop.f32.mrb[0].mxu0
    %v9439 = vadd.f32 %v9322, %v9438
    %v9440 = vpop.f32.mrb[0].mxu0
    %9441 = vdwg.mxu0
    %9442 = vmatprep.subr.mxu0 %v9341
    %9443 = vmatpush1.xpose.msra.mxu0 %v9302
    %9444 = vmatprep.subr.mxu0 0.0
    %9445 = vmatpush1.xpose.msra.mxu0 0.0
    %9446 = vmatprep.subr.mxu0 0.0
    %9447 = vmatpush1.xpose.msra.mxu0 0.0
    %9448 = vmatprep.subr.mxu0 0.0
    %9449 = vmatpush1.xpose.msra.mxu0 0.0
    %9450 = vmatprep.subr.mxu0 0.0
    %9451 = vmatpush1.xpose.msra.mxu0 0.0
    %9452 = vmatprep.subr.mxu0 0.0
    %9453 = vmatpush1.xpose.msra.mxu0 0.0
    %9454 = vmatprep.subr.mxu0 0.0
    %9455 = vmatpush1.xpose.msra.mxu0 0.0
    %9456 = vmatprep.subr.mxu0 0.0
    %9457 = vmatpush1.xpose.msra.mxu0 0.0
    %9458 = vmatprep.subr.mxu0 0.0
    %9459 = vmatpush1.xpose.msra.mxu0 0.0
    %9460 = vmatprep.subr.mxu0 0.0
    %9461 = vmatpush1.xpose.msra.mxu0 0.0
    %9462 = vmatprep.subr.mxu0 0.0
    %9463 = vmatpush1.xpose.msra.mxu0 0.0
    %9464 = vmatprep.subr.mxu0 0.0
    %9465 = vmatpush1.xpose.msra.mxu0 0.0
    %9466 = vmatprep.subr.mxu0 0.0
    %9467 = vmatpush1.xpose.msra.mxu0 0.0
    %9468 = vmatprep.subr.mxu0 0.0
    %9469 = vmatpush1.xpose.msra.mxu0 0.0
    %9470 = vmatprep.subr.mxu0 0.0
    %9471 = vmatpush1.xpose.msra.mxu0 0.0
    %9472 = vmatprep.subr.mxu0 0.0
    %9473 = vmatpush1.xpose.msra.mxu0 0.0
    %9474 = vmatprep.subr.mxu0 0.0
    %9475 = vmatpush1.xpose.msra.mxu0 0.0
    %9476 = vmatprep.subr.mxu0 0.0
    %9477 = vmatpush1.xpose.msra.mxu0 0.0
    %9478 = vmatprep.subr.mxu0 0.0
    %9479 = vmatpush1.xpose.msra.mxu0 0.0
    %9480 = vmatprep.subr.mxu0 0.0
    %9481 = vmatpush1.xpose.msra.mxu0 0.0
    %9482 = vmatprep.subr.mxu0 0.0
    %9483 = vmatpush1.xpose.msra.mxu0 0.0
    %9484 = vmatprep.subr.mxu0 0.0
    %9485 = vmatpush1.xpose.msra.mxu0 0.0
    %9486 = vmatprep.subr.mxu0 0.0
    %9487 = vmatpush1.xpose.msra.mxu0 0.0
    %9488 = vmatprep.subr.mxu0 0.0
    %9489 = vmatpush1.xpose.msra.mxu0 0.0
    %9490 = vmatprep.subr.mxu0 0.0
    %9491 = vmatpush1.xpose.msra.mxu0 0.0
    %9492 = vmatprep.subr.mxu0 0.0
    %9493 = vmatpush1.xpose.msra.mxu0 0.0
    %9494 = vmatprep.subr.mxu0 0.0
    %9495 = vmatpush1.xpose.msra.mxu0 0.0
    %9496 = vmatprep.subr.mxu0 0.0
    %9497 = vmatpush1.xpose.msra.mxu0 0.0
    %9498 = vmatprep.subr.mxu0 0.0
    %9499 = vmatpush1.xpose.msra.mxu0 0.0
    %9500 = vmatprep.subr.mxu0 0.0
    %9501 = vmatpush1.xpose.msra.mxu0 0.0
    %9502 = vmatprep.subr.mxu0 0.0
    %9503 = vmatpush1.xpose.msra.mxu0 0.0
    %9504 = vmatprep.subr.mxu0 0.0
    %9505 = vmatpush1.xpose.msra.mxu0 0.0
    %9506 = vmatprep.mubr.f32.mxu0 %v9272
    %9507 = vmatmul.mubr.f32.gmra.mrb[0].mxu0 %v9271
    %v9508 = vpop.f32.mrb[0].mxu0
    %v9509 = vadd.f32 %v9439, %v9508
    %v9510 = vpop.f32.mrb[0].mxu0
    %9511 = vdwg.mxu0
    %9512 = vmatprep.subr.mxu0 %v9342
    %9513 = vmatpush1.xpose.msra.mxu0 %v9303
    %9514 = vmatprep.subr.mxu0 0.0
    %9515 = vmatpush1.xpose.msra.mxu0 0.0
    %9516 = vmatprep.subr.mxu0 0.0
    %9517 = vmatpush1.xpose.msra.mxu0 0.0
    %9518 = vmatprep.subr.mxu0 0.0
    %9519 = vmatpush1.xpose.msra.mxu0 0.0
    %9520 = vmatprep.subr.mxu0 0.0
    %9521 = vmatpush1.xpose.msra.mxu0 0.0
    %9522 = vmatprep.subr.mxu0 0.0
    %9523 = vmatpush1.xpose.msra.mxu0 0.0
    %9524 = vmatprep.subr.mxu0 0.0
    %9525 = vmatpush1.xpose.msra.mxu0 0.0
    %9526 = vmatprep.subr.mxu0 0.0
    %9527 = vmatpush1.xpose.msra.mxu0 0.0
    %9528 = vmatprep.subr.mxu0 0.0
    %9529 = vmatpush1.xpose.msra.mxu0 0.0
    %9530 = vmatprep.subr.mxu0 0.0
    %9531 = vmatpush1.xpose.msra.mxu0 0.0
    %9532 = vmatprep.subr.mxu0 0.0
    %9533 = vmatpush1.xpose.msra.mxu0 0.0
    %9534 = vmatprep.subr.mxu0 0.0
    %9535 = vmatpush1.xpose.msra.mxu0 0.0
    %9536 = vmatprep.subr.mxu0 0.0
    %9537 = vmatpush1.xpose.msra.mxu0 0.0
    %9538 = vmatprep.subr.mxu0 0.0
    %9539 = vmatpush1.xpose.msra.mxu0 0.0
    %9540 = vmatprep.subr.mxu0 0.0
    %9541 = vmatpush1.xpose.msra.mxu0 0.0
    %9542 = vmatprep.subr.mxu0 0.0
    %9543 = vmatpush1.xpose.msra.mxu0 0.0
    %9544 = vmatprep.subr.mxu0 0.0
    %9545 = vmatpush1.xpose.msra.mxu0 0.0
    %9546 = vmatprep.subr.mxu0 0.0
    %9547 = vmatpush1.xpose.msra.mxu0 0.0
    %9548 = vmatprep.subr.mxu0 0.0
    %9549 = vmatpush1.xpose.msra.mxu0 0.0
    %9550 = vmatprep.subr.mxu0 0.0
    %9551 = vmatpush1.xpose.msra.mxu0 0.0
    %9552 = vmatprep.subr.mxu0 0.0
    %9553 = vmatpush1.xpose.msra.mxu0 0.0
    %9554 = vmatprep.subr.mxu0 0.0
    %9555 = vmatpush1.xpose.msra.mxu0 0.0
    %9556 = vmatprep.subr.mxu0 0.0
    %9557 = vmatpush1.xpose.msra.mxu0 0.0
    %9558 = vmatprep.subr.mxu0 0.0
    %9559 = vmatpush1.xpose.msra.mxu0 0.0
    %9560 = vmatprep.subr.mxu0 0.0
    %9561 = vmatpush1.xpose.msra.mxu0 0.0
    %9562 = vmatprep.subr.mxu0 0.0
    %9563 = vmatpush1.xpose.msra.mxu0 0.0
    %9564 = vmatprep.subr.mxu0 0.0
    %9565 = vmatpush1.xpose.msra.mxu0 0.0
    %9566 = vmatprep.subr.mxu0 0.0
    %9567 = vmatpush1.xpose.msra.mxu0 0.0
    %9568 = vmatprep.subr.mxu0 0.0
    %9569 = vmatpush1.xpose.msra.mxu0 0.0
    %9570 = vmatprep.subr.mxu0 0.0
    %9571 = vmatpush1.xpose.msra.mxu0 0.0
    %9572 = vmatprep.subr.mxu0 0.0
    %9573 = vmatpush1.xpose.msra.mxu0 0.0
    %9574 = vmatprep.subr.mxu0 0.0
    %9575 = vmatpush1.xpose.msra.mxu0 0.0
    %9576 = vmatprep.mubr.f32.mxu0 %v9274
    %9577 = vmatmul.mubr.f32.gmra.mrb[0].mxu0 %v9273
    %v9578 = vpop.f32.mrb[0].mxu0
    %v9579 = vadd.f32 %v9509, %v9578
    %v9580 = vpop.f32.mrb[0].mxu0
    %9581 = vdwg.mxu0
    %9582 = vmatprep.subr.mxu0 %v9343
    %9583 = vmatpush1.xpose.msra.mxu0 %v9304
    %9584 = vmatprep.subr.mxu0 0.0
    %9585 = vmatpush1.xpose.msra.mxu0 0.0
    %9586 = vmatprep.subr.mxu0 0.0
    %9587 = vmatpush1.xpose.msra.mxu0 0.0
    %9588 = vmatprep.subr.mxu0 0.0
    %9589 = vmatpush1.xpose.msra.mxu0 0.0
    %9590 = vmatprep.subr.mxu0 0.0
    %9591 = vmatpush1.xpose.msra.mxu0 0.0
    %9592 = vmatprep.subr.mxu0 0.0
    %9593 = vmatpush1.xpose.msra.mxu0 0.0
    %9594 = vmatprep.subr.mxu0 0.0
    %9595 = vmatpush1.xpose.msra.mxu0 0.0
    %9596 = vmatprep.subr.mxu0 0.0
    %9597 = vmatpush1.xpose.msra.mxu0 0.0
    %9598 = vmatprep.subr.mxu0 0.0
    %9599 = vmatpush1.xpose.msra.mxu0 0.0
    %9600 = vmatprep.subr.mxu0 0.0
    %9601 = vmatpush1.xpose.msra.mxu0 0.0
    %9602 = vmatprep.subr.mxu0 0.0
    %9603 = vmatpush1.xpose.msra.mxu0 0.0
    %9604 = vmatprep.subr.mxu0 0.0
    %9605 = vmatpush1.xpose.msra.mxu0 0.0
    %9606 = vmatprep.subr.mxu0 0.0
    %9607 = vmatpush1.xpose.msra.mxu0 0.0
    %9608 = vmatprep.subr.mxu0 0.0
    %9609 = vmatpush1.xpose.msra.mxu0 0.0
    %9610 = vmatprep.subr.mxu0 0.0
    %9611 = vmatpush1.xpose.msra.mxu0 0.0
    %9612 = vmatprep.subr.mxu0 0.0
    %9613 = vmatpush1.xpose.msra.mxu0 0.0
    %9614 = vmatprep.subr.mxu0 0.0
    %9615 = vmatpush1.xpose.msra.mxu0 0.0
    %9616 = vmatprep.subr.mxu0 0.0
    %9617 = vmatpush1.xpose.msra.mxu0 0.0
    %9618 = vmatprep.subr.mxu0 0.0
    %9619 = vmatpush1.xpose.msra.mxu0 0.0
    %9620 = vmatprep.subr.mxu0 0.0
    %9621 = vmatpush1.xpose.msra.mxu0 0.0
    %9622 = vmatprep.subr.mxu0 0.0
    %9623 = vmatpush1.xpose.msra.mxu0 0.0
    %9624 = vmatprep.subr.mxu0 0.0
    %9625 = vmatpush1.xpose.msra.mxu0 0.0
    %9626 = vmatprep.subr.mxu0 0.0
    %9627 = vmatpush1.xpose.msra.mxu0 0.0
    %9628 = vmatprep.subr.mxu0 0.0
    %9629 = vmatpush1.xpose.msra.mxu0 0.0
    %9630 = vmatprep.subr.mxu0 0.0
    %9631 = vmatpush1.xpose.msra.mxu0 0.0
    %9632 = vmatprep.subr.mxu0 0.0
    %9633 = vmatpush1.xpose.msra.mxu0 0.0
    %9634 = vmatprep.subr.mxu0 0.0
    %9635 = vmatpush1.xpose.msra.mxu0 0.0
    %9636 = vmatprep.subr.mxu0 0.0
    %9637 = vmatpush1.xpose.msra.mxu0 0.0
    %9638 = vmatprep.subr.mxu0 0.0
    %9639 = vmatpush1.xpose.msra.mxu0 0.0
    %9640 = vmatprep.subr.mxu0 0.0
    %9641 = vmatpush1.xpose.msra.mxu0 0.0
    %9642 = vmatprep.subr.mxu0 0.0
    %9643 = vmatpush1.xpose.msra.mxu0 0.0
    %9644 = vmatprep.subr.mxu0 0.0
    %9645 = vmatpush1.xpose.msra.mxu0 0.0
    %9646 = vmatprep.mubr.f32.mxu0 %v9276
    %9647 = vmatmul.mubr.f32.gmra.mrb[0].mxu0 %v9275
    %v9648 = vpop.f32.mrb[0].mxu0
    %v9649 = vadd.f32 %v9579, %v9648
    %v9650 = vpop.f32.mrb[0].mxu0
    %9651 = vdwg.mxu0
    %9652 = vmatprep.subr.mxu0 %v9344
    %9653 = vmatpush1.xpose.msra.mxu0 %v9305
    %9654 = vmatprep.subr.mxu0 0.0
    %9655 = vmatpush1.xpose.msra.mxu0 0.0
    %9656 = vmatprep.subr.mxu0 0.0
    %9657 = vmatpush1.xpose.msra.mxu0 0.0
    %9658 = vmatprep.subr.mxu0 0.0
    %9659 = vmatpush1.xpose.msra.mxu0 0.0
    %9660 = vmatprep.subr.mxu0 0.0
    %9661 = vmatpush1.xpose.msra.mxu0 0.0
    %9662 = vmatprep.subr.mxu0 0.0
    %9663 = vmatpush1.xpose.msra.mxu0 0.0
    %9664 = vmatprep.subr.mxu0 0.0
    %9665 = vmatpush1.xpose.msra.mxu0 0.0
    %9666 = vmatprep.subr.mxu0 0.0
    %9667 = vmatpush1.xpose.msra.mxu0 0.0
    %9668 = vmatprep.subr.mxu0 0.0
    %9669 = vmatpush1.xpose.msra.mxu0 0.0
    %9670 = vmatprep.subr.mxu0 0.0
    %9671 = vmatpush1.xpose.msra.mxu0 0.0
    %9672 = vmatprep.subr.mxu0 0.0
    %9673 = vmatpush1.xpose.msra.mxu0 0.0
    %9674 = vmatprep.subr.mxu0 0.0
    %9675 = vmatpush1.xpose.msra.mxu0 0.0
    %9676 = vmatprep.subr.mxu0 0.0
    %9677 = vmatpush1.xpose.msra.mxu0 0.0
    %9678 = vmatprep.subr.mxu0 0.0
    %9679 = vmatpush1.xpose.msra.mxu0 0.0
    %9680 = vmatprep.subr.mxu0 0.0
    %9681 = vmatpush1.xpose.msra.mxu0 0.0
    %9682 = vmatprep.subr.mxu0 0.0
    %9683 = vmatpush1.xpose.msra.mxu0 0.0
    %9684 = vmatprep.subr.mxu0 0.0
    %9685 = vmatpush1.xpose.msra.mxu0 0.0
    %9686 = vmatprep.subr.mxu0 0.0
    %9687 = vmatpush1.xpose.msra.mxu0 0.0
    %9688 = vmatprep.subr.mxu0 0.0
    %9689 = vmatpush1.xpose.msra.mxu0 0.0
    %9690 = vmatprep.subr.mxu0 0.0
    %9691 = vmatpush1.xpose.msra.mxu0 0.0
    %9692 = vmatprep.subr.mxu0 0.0
    %9693 = vmatpush1.xpose.msra.mxu0 0.0
    %9694 = vmatprep.subr.mxu0 0.0
    %9695 = vmatpush1.xpose.msra.mxu0 0.0
    %9696 = vmatprep.subr.mxu0 0.0
    %9697 = vmatpush1.xpose.msra.mxu0 0.0
    %9698 = vmatprep.subr.mxu0 0.0
    %9699 = vmatpush1.xpose.msra.mxu0 0.0
    %9700 = vmatprep.subr.mxu0 0.0
    %9701 = vmatpush1.xpose.msra.mxu0 0.0
    %9702 = vmatprep.subr.mxu0 0.0
    %9703 = vmatpush1.xpose.msra.mxu0 0.0
    %9704 = vmatprep.subr.mxu0 0.0
    %9705 = vmatpush1.xpose.msra.mxu0 0.0
    %9706 = vmatprep.subr.mxu0 0.0
    %9707 = vmatpush1.xpose.msra.mxu0 0.0
    %9708 = vmatprep.subr.mxu0 0.0
    %9709 = vmatpush1.xpose.msra.mxu0 0.0
    %9710 = vmatprep.subr.mxu0 0.0
    %9711 = vmatpush1.xpose.msra.mxu0 0.0
    %9712 = vmatprep.subr.mxu0 0.0
    %9713 = vmatpush1.xpose.msra.mxu0 0.0
    %9714 = vmatprep.subr.mxu0 0.0
    %9715 = vmatpush1.xpose.msra.mxu0 0.0
    %9716 = vmatprep.mubr.f32.mxu0 %v9278
    %9717 = vmatmul.mubr.f32.gmra.mrb[0].mxu0 %v9277
    %v9718 = vpop.f32.mrb[0].mxu0
    %v9719 = vadd.f32 %v9649, %v9718
    %v9720 = vpop.f32.mrb[0].mxu0
    %9721 = vdwg.mxu0
    %9722 = vmatprep.subr.mxu0 %v9345
    %9723 = vmatpush1.xpose.msra.mxu0 %v9306
    %9724 = vmatprep.subr.mxu0 0.0
    %9725 = vmatpush1.xpose.msra.mxu0 0.0
    %9726 = vmatprep.subr.mxu0 0.0
    %9727 = vmatpush1.xpose.msra.mxu0 0.0
    %9728 = vmatprep.subr.mxu0 0.0
    %9729 = vmatpush1.xpose.msra.mxu0 0.0
    %9730 = vmatprep.subr.mxu0 0.0
    %9731 = vmatpush1.xpose.msra.mxu0 0.0
    %9732 = vmatprep.subr.mxu0 0.0
    %9733 = vmatpush1.xpose.msra.mxu0 0.0
    %9734 = vmatprep.subr.mxu0 0.0
    %9735 = vmatpush1.xpose.msra.mxu0 0.0
    %9736 = vmatprep.subr.mxu0 0.0
    %9737 = vmatpush1.xpose.msra.mxu0 0.0
    %9738 = vmatprep.subr.mxu0 0.0
    %9739 = vmatpush1.xpose.msra.mxu0 0.0
    %9740 = vmatprep.subr.mxu0 0.0
    %9741 = vmatpush1.xpose.msra.mxu0 0.0
    %9742 = vmatprep.subr.mxu0 0.0
    %9743 = vmatpush1.xpose.msra.mxu0 0.0
    %9744 = vmatprep.subr.mxu0 0.0
    %9745 = vmatpush1.xpose.msra.mxu0 0.0
    %9746 = vmatprep.subr.mxu0 0.0
    %9747 = vmatpush1.xpose.msra.mxu0 0.0
    %9748 = vmatprep.subr.mxu0 0.0
    %9749 = vmatpush1.xpose.msra.mxu0 0.0
    %9750 = vmatprep.subr.mxu0 0.0
    %9751 = vmatpush1.xpose.msra.mxu0 0.0
    %9752 = vmatprep.subr.mxu0 0.0
    %9753 = vmatpush1.xpose.msra.mxu0 0.0
    %9754 = vmatprep.subr.mxu0 0.0
    %9755 = vmatpush1.xpose.msra.mxu0 0.0
    %9756 = vmatprep.subr.mxu0 0.0
    %9757 = vmatpush1.xpose.msra.mxu0 0.0
    %9758 = vmatprep.subr.mxu0 0.0
    %9759 = vmatpush1.xpose.msra.mxu0 0.0
    %9760 = vmatprep.subr.mxu0 0.0
    %9761 = vmatpush1.xpose.msra.mxu0 0.0
    %9762 = vmatprep.subr.mxu0 0.0
    %9763 = vmatpush1.xpose.msra.mxu0 0.0
    %9764 = vmatprep.subr.mxu0 0.0
    %9765 = vmatpush1.xpose.msra.mxu0 0.0
    %9766 = vmatprep.subr.mxu0 0.0
    %9767 = vmatpush1.xpose.msra.mxu0 0.0
    %9768 = vmatprep.subr.mxu0 0.0
    %9769 = vmatpush1.xpose.msra.mxu0 0.0
    %9770 = vmatprep.subr.mxu0 0.0
    %9771 = vmatpush1.xpose.msra.mxu0 0.0
    %9772 = vmatprep.subr.mxu0 0.0
    %9773 = vmatpush1.xpose.msra.mxu0 0.0
    %9774 = vmatprep.subr.mxu0 0.0
    %9775 = vmatpush1.xpose.msra.mxu0 0.0
    %9776 = vmatprep.subr.mxu0 0.0
    %9777 = vmatpush1.xpose.msra.mxu0 0.0
    %9778 = vmatprep.subr.mxu0 0.0
    %9779 = vmatpush1.xpose.msra.mxu0 0.0
    %9780 = vmatprep.subr.mxu0 0.0
    %9781 = vmatpush1.xpose.msra.mxu0 0.0
    %9782 = vmatprep.subr.mxu0 0.0
    %9783 = vmatpush1.xpose.msra.mxu0 0.0
    %9784 = vmatprep.subr.mxu0 0.0
    %9785 = vmatpush1.xpose.msra.mxu0 0.0
    %9786 = vmatprep.mubr.f32.mxu0 %v9280
    %9787 = vmatmul.mubr.f32.gmra.mrb[0].mxu0 %v9279
    %v9788 = vpop.f32.mrb[0].mxu0
    %v9789 = vadd.f32 %v9719, %v9788
    %v9790 = vpop.f32.mrb[0].mxu0
    %9791 = vdwg.mxu0
    %9792 = vmatprep.subr.mxu0 %v9346
    %9793 = vmatpush1.xpose.msra.mxu0 %v9307
    %9794 = vmatprep.subr.mxu0 0.0
    %9795 = vmatpush1.xpose.msra.mxu0 0.0
    %9796 = vmatprep.subr.mxu0 0.0
    %9797 = vmatpush1.xpose.msra.mxu0 0.0
    %9798 = vmatprep.subr.mxu0 0.0
    %9799 = vmatpush1.xpose.msra.mxu0 0.0
    %9800 = vmatprep.subr.mxu0 0.0
    %9801 = vmatpush1.xpose.msra.mxu0 0.0
    %9802 = vmatprep.subr.mxu0 0.0
    %9803 = vmatpush1.xpose.msra.mxu0 0.0
    %9804 = vmatprep.subr.mxu0 0.0
    %9805 = vmatpush1.xpose.msra.mxu0 0.0
    %9806 = vmatprep.subr.mxu0 0.0
    %9807 = vmatpush1.xpose.msra.mxu0 0.0
    %9808 = vmatprep.subr.mxu0 0.0
    %9809 = vmatpush1.xpose.msra.mxu0 0.0
    %9810 = vmatprep.subr.mxu0 0.0
    %9811 = vmatpush1.xpose.msra.mxu0 0.0
    %9812 = vmatprep.subr.mxu0 0.0
    %9813 = vmatpush1.xpose.msra.mxu0 0.0
    %9814 = vmatprep.subr.mxu0 0.0
    %9815 = vmatpush1.xpose.msra.mxu0 0.0
    %9816 = vmatprep.subr.mxu0 0.0
    %9817 = vmatpush1.xpose.msra.mxu0 0.0
    %9818 = vmatprep.subr.mxu0 0.0
    %9819 = vmatpush1.xpose.msra.mxu0 0.0
    %9820 = vmatprep.subr.mxu0 0.0
    %9821 = vmatpush1.xpose.msra.mxu0 0.0
    %9822 = vmatprep.subr.mxu0 0.0
    %9823 = vmatpush1.xpose.msra.mxu0 0.0
    %9824 = vmatprep.subr.mxu0 0.0
    %9825 = vmatpush1.xpose.msra.mxu0 0.0
    %9826 = vmatprep.subr.mxu0 0.0
    %9827 = vmatpush1.xpose.msra.mxu0 0.0
    %9828 = vmatprep.subr.mxu0 0.0
    %9829 = vmatpush1.xpose.msra.mxu0 0.0
    %9830 = vmatprep.subr.mxu0 0.0
    %9831 = vmatpush1.xpose.msra.mxu0 0.0
    %9832 = vmatprep.subr.mxu0 0.0
    %9833 = vmatpush1.xpose.msra.mxu0 0.0
    %9834 = vmatprep.subr.mxu0 0.0
    %9835 = vmatpush1.xpose.msra.mxu0 0.0
    %9836 = vmatprep.subr.mxu0 0.0
    %9837 = vmatpush1.xpose.msra.mxu0 0.0
    %9838 = vmatprep.subr.mxu0 0.0
    %9839 = vmatpush1.xpose.msra.mxu0 0.0
    %9840 = vmatprep.subr.mxu0 0.0
    %9841 = vmatpush1.xpose.msra.mxu0 0.0
    %9842 = vmatprep.subr.mxu0 0.0
    %9843 = vmatpush1.xpose.msra.mxu0 0.0
    %9844 = vmatprep.subr.mxu0 0.0
    %9845 = vmatpush1.xpose.msra.mxu0 0.0
    %9846 = vmatprep.subr.mxu0 0.0
    %9847 = vmatpush1.xpose.msra.mxu0 0.0
    %9848 = vmatprep.subr.mxu0 0.0
    %9849 = vmatpush1.xpose.msra.mxu0 0.0
    %9850 = vmatprep.subr.mxu0 0.0
    %9851 = vmatpush1.xpose.msra.mxu0 0.0
    %9852 = vmatprep.subr.mxu0 0.0
    %9853 = vmatpush1.xpose.msra.mxu0 0.0
    %9854 = vmatprep.subr.mxu0 0.0
    %9855 = vmatpush1.xpose.msra.mxu0 0.0
    %9856 = vmatprep.mubr.f32.mxu0 %v9282
    %9857 = vmatmul.mubr.f32.gmra.mrb[0].mxu0 %v9281
    %v9858 = vpop.f32.mrb[0].mxu0
    %v9859 = vadd.f32 %v9789, %v9858
    %v9860 = vpop.f32.mrb[0].mxu0
    %9861 = vdwg.mxu0
    %9862 = vmatprep.subr.mxu0 %v9347
    %9863 = vmatpush1.xpose.msra.mxu0 %v9308
    %9864 = vmatprep.subr.mxu0 0.0
    %9865 = vmatpush1.xpose.msra.mxu0 0.0
    %9866 = vmatprep.subr.mxu0 0.0
    %9867 = vmatpush1.xpose.msra.mxu0 0.0
    %9868 = vmatprep.subr.mxu0 0.0
    %9869 = vmatpush1.xpose.msra.mxu0 0.0
    %9870 = vmatprep.subr.mxu0 0.0
    %9871 = vmatpush1.xpose.msra.mxu0 0.0
    %9872 = vmatprep.subr.mxu0 0.0
    %9873 = vmatpush1.xpose.msra.mxu0 0.0
    %9874 = vmatprep.subr.mxu0 0.0
    %9875 = vmatpush1.xpose.msra.mxu0 0.0
    %9876 = vmatprep.subr.mxu0 0.0
    %9877 = vmatpush1.xpose.msra.mxu0 0.0
    %9878 = vmatprep.subr.mxu0 0.0
    %9879 = vmatpush1.xpose.msra.mxu0 0.0
    %9880 = vmatprep.subr.mxu0 0.0
    %9881 = vmatpush1.xpose.msra.mxu0 0.0
    %9882 = vmatprep.subr.mxu0 0.0
    %9883 = vmatpush1.xpose.msra.mxu0 0.0
    %9884 = vmatprep.subr.mxu0 0.0
    %9885 = vmatpush1.xpose.msra.mxu0 0.0
    %9886 = vmatprep.subr.mxu0 0.0
    %9887 = vmatpush1.xpose.msra.mxu0 0.0
    %9888 = vmatprep.subr.mxu0 0.0
    %9889 = vmatpush1.xpose.msra.mxu0 0.0
    %9890 = vmatprep.subr.mxu0 0.0
    %9891 = vmatpush1.xpose.msra.mxu0 0.0
    %9892 = vmatprep.subr.mxu0 0.0
    %9893 = vmatpush1.xpose.msra.mxu0 0.0
    %9894 = vmatprep.subr.mxu0 0.0
    %9895 = vmatpush1.xpose.msra.mxu0 0.0
    %9896 = vmatprep.subr.mxu0 0.0
    %9897 = vmatpush1.xpose.msra.mxu0 0.0
    %9898 = vmatprep.subr.mxu0 0.0
    %9899 = vmatpush1.xpose.msra.mxu0 0.0
    %9900 = vmatprep.subr.mxu0 0.0
    %9901 = vmatpush1.xpose.msra.mxu0 0.0
    %9902 = vmatprep.subr.mxu0 0.0
    %9903 = vmatpush1.xpose.msra.mxu0 0.0
    %9904 = vmatprep.subr.mxu0 0.0
    %9905 = vmatpush1.xpose.msra.mxu0 0.0
    %9906 = vmatprep.subr.mxu0 0.0
    %9907 = vmatpush1.xpose.msra.mxu0 0.0
    %9908 = vmatprep.subr.mxu0 0.0
    %9909 = vmatpush1.xpose.msra.mxu0 0.0
    %9910 = vmatprep.subr.mxu0 0.0
    %9911 = vmatpush1.xpose.msra.mxu0 0.0
    %9912 = vmatprep.subr.mxu0 0.0
    %9913 = vmatpush1.xpose.msra.mxu0 0.0
    %9914 = vmatprep.subr.mxu0 0.0
    %9915 = vmatpush1.xpose.msra.mxu0 0.0
    %9916 = vmatprep.subr.mxu0 0.0
    %9917 = vmatpush1.xpose.msra.mxu0 0.0
    %9918 = vmatprep.subr.mxu0 0.0
    %9919 = vmatpush1.xpose.msra.mxu0 0.0
    %9920 = vmatprep.subr.mxu0 0.0
    %9921 = vmatpush1.xpose.msra.mxu0 0.0
    %9922 = vmatprep.subr.mxu0 0.0
    %9923 = vmatpush1.xpose.msra.mxu0 0.0
    %9924 = vmatprep.subr.mxu0 0.0
    %9925 = vmatpush1.xpose.msra.mxu0 0.0
    %9926 = vmatprep.mubr.f32.mxu0 %v9284
    %9927 = vmatmul.mubr.f32.gmra.mrb[0].mxu0 %v9283
    %v9928 = vpop.f32.mrb[0].mxu0
    %v9929 = vadd.f32 %v9859, %v9928
    %v9930 = vpop.f32.mrb[0].mxu0
    %9931 = vdwg.mxu0
    %9932 = vmatprep.subr.mxu0 %v9348
    %9933 = vmatpush1.xpose.msra.mxu0 %v9309
    %9934 = vmatprep.subr.mxu0 0.0
    %9935 = vmatpush1.xpose.msra.mxu0 0.0
    %9936 = vmatprep.subr.mxu0 0.0
    %9937 = vmatpush1.xpose.msra.mxu0 0.0
    %9938 = vmatprep.subr.mxu0 0.0
    %9939 = vmatpush1.xpose.msra.mxu0 0.0
    %9940 = vmatprep.subr.mxu0 0.0
    %9941 = vmatpush1.xpose.msra.mxu0 0.0
    %9942 = vmatprep.subr.mxu0 0.0
    %9943 = vmatpush1.xpose.msra.mxu0 0.0
    %9944 = vmatprep.subr.mxu0 0.0
    %9945 = vmatpush1.xpose.msra.mxu0 0.0
    %9946 = vmatprep.subr.mxu0 0.0
    %9947 = vmatpush1.xpose.msra.mxu0 0.0
    %9948 = vmatprep.subr.mxu0 0.0
    %9949 = vmatpush1.xpose.msra.mxu0 0.0
    %9950 = vmatprep.subr.mxu0 0.0
    %9951 = vmatpush1.xpose.msra.mxu0 0.0
    %9952 = vmatprep.subr.mxu0 0.0
    %9953 = vmatpush1.xpose.msra.mxu0 0.0
    %9954 = vmatprep.subr.mxu0 0.0
    %9955 = vmatpush1.xpose.msra.mxu0 0.0
    %9956 = vmatprep.subr.mxu0 0.0
    %9957 = vmatpush1.xpose.msra.mxu0 0.0
    %9958 = vmatprep.subr.mxu0 0.0
    %9959 = vmatpush1.xpose.msra.mxu0 0.0
    %9960 = vmatprep.subr.mxu0 0.0
    %9961 = vmatpush1.xpose.msra.mxu0 0.0
    %9962 = vmatprep.subr.mxu0 0.0
    %9963 = vmatpush1.xpose.msra.mxu0 0.0
    %9964 = vmatprep.subr.mxu0 0.0
    %9965 = vmatpush1.xpose.msra.mxu0 0.0
    %9966 = vmatprep.subr.mxu0 0.0
    %9967 = vmatpush1.xpose.msra.mxu0 0.0
    %9968 = vmatprep.subr.mxu0 0.0
    %9969 = vmatpush1.xpose.msra.mxu0 0.0
    %9970 = vmatprep.subr.mxu0 0.0
    %9971 = vmatpush1.xpose.msra.mxu0 0.0
    %9972 = vmatprep.subr.mxu0 0.0
    %9973 = vmatpush1.xpose.msra.mxu0 0.0
    %9974 = vmatprep.subr.mxu0 0.0
    %9975 = vmatpush1.xpose.msra.mxu0 0.0
    %9976 = vmatprep.subr.mxu0 0.0
    %9977 = vmatpush1.xpose.msra.mxu0 0.0
    %9978 = vmatprep.subr.mxu0 0.0
    %9979 = vmatpush1.xpose.msra.mxu0 0.0
    %9980 = vmatprep.subr.mxu0 0.0
    %9981 = vmatpush1.xpose.msra.mxu0 0.0
    %9982 = vmatprep.subr.mxu0 0.0
    %9983 = vmatpush1.xpose.msra.mxu0 0.0
    %9984 = vmatprep.subr.mxu0 0.0
    %9985 = vmatpush1.xpose.msra.mxu0 0.0
    %9986 = vmatprep.subr.mxu0 0.0
    %9987 = vmatpush1.xpose.msra.mxu0 0.0
    %9988 = vmatprep.subr.mxu0 0.0
    %9989 = vmatpush1.xpose.msra.mxu0 0.0
    %9990 = vmatprep.subr.mxu0 0.0
    %9991 = vmatpush1.xpose.msra.mxu0 0.0
    %9992 = vmatprep.subr.mxu0 0.0
    %9993 = vmatpush1.xpose.msra.mxu0 0.0
    %9994 = vmatprep.subr.mxu0 0.0
    %9995 = vmatpush1.xpose.msra.mxu0 0.0
    %9996 = vmatprep.mubr.f32.mxu0 %v9286
    %9997 = vmatmul.mubr.f32.gmra.mrb[0].mxu0 %v9285
    %v9998 = vpop.f32.mrb[0].mxu0
    %v9999 = vadd.f32 %v9929, %v9998
    %v10000 = vpop.f32.mrb[0].mxu0
    %10001 = vdwg.mxu0
    %10002 = vmatprep.subr.mxu0 %v9349
    %10003 = vmatpush1.xpose.msra.mxu0 %v9310
    %10004 = vmatprep.subr.mxu0 0.0
    %10005 = vmatpush1.xpose.msra.mxu0 0.0
    %10006 = vmatprep.subr.mxu0 0.0
    %10007 = vmatpush1.xpose.msra.mxu0 0.0
    %10008 = vmatprep.subr.mxu0 0.0
    %10009 = vmatpush1.xpose.msra.mxu0 0.0
    %10010 = vmatprep.subr.mxu0 0.0
    %10011 = vmatpush1.xpose.msra.mxu0 0.0
    %10012 = vmatprep.subr.mxu0 0.0
    %10013 = vmatpush1.xpose.msra.mxu0 0.0
    %10014 = vmatprep.subr.mxu0 0.0
    %10015 = vmatpush1.xpose.msra.mxu0 0.0
    %10016 = vmatprep.subr.mxu0 0.0
    %10017 = vmatpush1.xpose.msra.mxu0 0.0
    %10018 = vmatprep.subr.mxu0 0.0
    %10019 = vmatpush1.xpose.msra.mxu0 0.0
    %10020 = vmatprep.subr.mxu0 0.0
    %10021 = vmatpush1.xpose.msra.mxu0 0.0
    %10022 = vmatprep.subr.mxu0 0.0
    %10023 = vmatpush1.xpose.msra.mxu0 0.0
    %10024 = vmatprep.subr.mxu0 0.0
    %10025 = vmatpush1.xpose.msra.mxu0 0.0
    %10026 = vmatprep.subr.mxu0 0.0
    %10027 = vmatpush1.xpose.msra.mxu0 0.0
    %10028 = vmatprep.subr.mxu0 0.0
    %10029 = vmatpush1.xpose.msra.mxu0 0.0
    %10030 = vmatprep.subr.mxu0 0.0
    %10031 = vmatpush1.xpose.msra.mxu0 0.0
    %10032 = vmatprep.subr.mxu0 0.0
    %10033 = vmatpush1.xpose.msra.mxu0 0.0
    %10034 = vmatprep.subr.mxu0 0.0
    %10035 = vmatpush1.xpose.msra.mxu0 0.0
    %10036 = vmatprep.subr.mxu0 0.0
    %10037 = vmatpush1.xpose.msra.mxu0 0.0
    %10038 = vmatprep.subr.mxu0 0.0
    %10039 = vmatpush1.xpose.msra.mxu0 0.0
    %10040 = vmatprep.subr.mxu0 0.0
    %10041 = vmatpush1.xpose.msra.mxu0 0.0
    %10042 = vmatprep.subr.mxu0 0.0
    %10043 = vmatpush1.xpose.msra.mxu0 0.0
    %10044 = vmatprep.subr.mxu0 0.0
    %10045 = vmatpush1.xpose.msra.mxu0 0.0
    %10046 = vmatprep.subr.mxu0 0.0
    %10047 = vmatpush1.xpose.msra.mxu0 0.0
    %10048 = vmatprep.subr.mxu0 0.0
    %10049 = vmatpush1.xpose.msra.mxu0 0.0
    %10050 = vmatprep.subr.mxu0 0.0
    %10051 = vmatpush1.xpose.msra.mxu0 0.0
    %10052 = vmatprep.subr.mxu0 0.0
    %10053 = vmatpush1.xpose.msra.mxu0 0.0
    %10054 = vmatprep.subr.mxu0 0.0
    %10055 = vmatpush1.xpose.msra.mxu0 0.0
    %10056 = vmatprep.subr.mxu0 0.0
    %10057 = vmatpush1.xpose.msra.mxu0 0.0
    %10058 = vmatprep.subr.mxu0 0.0
    %10059 = vmatpush1.xpose.msra.mxu0 0.0
    %10060 = vmatprep.subr.mxu0 0.0
    %10061 = vmatpush1.xpose.msra.mxu0 0.0
    %10062 = vmatprep.subr.mxu0 0.0
    %10063 = vmatpush1.xpose.msra.mxu0 0.0
    %10064 = vmatprep.subr.mxu0 0.0
    %10065 = vmatpush1.xpose.msra.mxu0 0.0
    %10066 = vmatprep.mubr.f32.mxu0 %v9288
    %10067 = vmatmul.mubr.f32.gmra.mrb[0].mxu0 %v9287
    %v10068 = vpop.f32.mrb[0].mxu0
    %v10069 = vadd.f32 %v9999, %v10068
    %v10070 = vpop.f32.mrb[0].mxu0
    %10071 = vdwg.mxu0
    %10072 = vmatprep.subr.mxu0 %v9350
    %10073 = vmatpush1.xpose.msra.mxu0 %v9311
    %10074 = vmatprep.subr.mxu0 0.0
    %10075 = vmatpush1.xpose.msra.mxu0 0.0
    %10076 = vmatprep.subr.mxu0 0.0
    %10077 = vmatpush1.xpose.msra.mxu0 0.0
    %10078 = vmatprep.subr.mxu0 0.0
    %10079 = vmatpush1.xpose.msra.mxu0 0.0
    %10080 = vmatprep.subr.mxu0 0.0
    %10081 = vmatpush1.xpose.msra.mxu0 0.0
    %10082 = vmatprep.subr.mxu0 0.0
    %10083 = vmatpush1.xpose.msra.mxu0 0.0
    %10084 = vmatprep.subr.mxu0 0.0
    %10085 = vmatpush1.xpose.msra.mxu0 0.0
    %10086 = vmatprep.subr.mxu0 0.0
    %10087 = vmatpush1.xpose.msra.mxu0 0.0
    %10088 = vmatprep.subr.mxu0 0.0
    %10089 = vmatpush1.xpose.msra.mxu0 0.0
    %10090 = vmatprep.subr.mxu0 0.0
    %10091 = vmatpush1.xpose.msra.mxu0 0.0
    %10092 = vmatprep.subr.mxu0 0.0
    %10093 = vmatpush1.xpose.msra.mxu0 0.0
    %10094 = vmatprep.subr.mxu0 0.0
    %10095 = vmatpush1.xpose.msra.mxu0 0.0
    %10096 = vmatprep.subr.mxu0 0.0
    %10097 = vmatpush1.xpose.msra.mxu0 0.0
    %10098 = vmatprep.subr.mxu0 0.0
    %10099 = vmatpush1.xpose.msra.mxu0 0.0
    %10100 = vmatprep.subr.mxu0 0.0
    %10101 = vmatpush1.xpose.msra.mxu0 0.0
    %10102 = vmatprep.subr.mxu0 0.0
    %10103 = vmatpush1.xpose.msra.mxu0 0.0
    %10104 = vmatprep.subr.mxu0 0.0
    %10105 = vmatpush1.xpose.msra.mxu0 0.0
    %10106 = vmatprep.subr.mxu0 0.0
    %10107 = vmatpush1.xpose.msra.mxu0 0.0
    %10108 = vmatprep.subr.mxu0 0.0
    %10109 = vmatpush1.xpose.msra.mxu0 0.0
    %10110 = vmatprep.subr.mxu0 0.0
    %10111 = vmatpush1.xpose.msra.mxu0 0.0
    %10112 = vmatprep.subr.mxu0 0.0
    %10113 = vmatpush1.xpose.msra.mxu0 0.0
    %10114 = vmatprep.subr.mxu0 0.0
    %10115 = vmatpush1.xpose.msra.mxu0 0.0
    %10116 = vmatprep.subr.mxu0 0.0
    %10117 = vmatpush1.xpose.msra.mxu0 0.0
    %10118 = vmatprep.subr.mxu0 0.0
    %10119 = vmatpush1.xpose.msra.mxu0 0.0
    %10120 = vmatprep.subr.mxu0 0.0
    %10121 = vmatpush1.xpose.msra.mxu0 0.0
    %10122 = vmatprep.subr.mxu0 0.0
    %10123 = vmatpush1.xpose.msra.mxu0 0.0
    %10124 = vmatprep.subr.mxu0 0.0
    %10125 = vmatpush1.xpose.msra.mxu0 0.0
    %10126 = vmatprep.subr.mxu0 0.0
    %10127 = vmatpush1.xpose.msra.mxu0 0.0
    %10128 = vmatprep.subr.mxu0 0.0
    %10129 = vmatpush1.xpose.msra.mxu0 0.0
    %10130 = vmatprep.subr.mxu0 0.0
    %10131 = vmatpush1.xpose.msra.mxu0 0.0
    %10132 = vmatprep.subr.mxu0 0.0
    %10133 = vmatpush1.xpose.msra.mxu0 0.0
    %10134 = vmatprep.subr.mxu0 0.0
    %10135 = vmatpush1.xpose.msra.mxu0 0.0
    %10136 = vmatprep.mubr.f32.mxu0 %v9290
    %10137 = vmatmul.mubr.f32.gmra.mrb[0].mxu0 %v9289
    %v10138 = vpop.f32.mrb[0].mxu0
    %v10139 = vadd.f32 %v10069, %v10138
    %v10140 = vpop.f32.mrb[0].mxu0
    %10141 = vdwg.mxu0
    %10142 = vmatprep.subr.mxu0 %v9351
    %10143 = vmatpush1.xpose.msra.mxu0 %v9312
    %10144 = vmatprep.subr.mxu0 0.0
    %10145 = vmatpush1.xpose.msra.mxu0 0.0
    %10146 = vmatprep.subr.mxu0 0.0
    %10147 = vmatpush1.xpose.msra.mxu0 0.0
    %10148 = vmatprep.subr.mxu0 0.0
    %10149 = vmatpush1.xpose.msra.mxu0 0.0
    %10150 = vmatprep.subr.mxu0 0.0
    %10151 = vmatpush1.xpose.msra.mxu0 0.0
    %10152 = vmatprep.subr.mxu0 0.0
    %10153 = vmatpush1.xpose.msra.mxu0 0.0
    %10154 = vmatprep.subr.mxu0 0.0
    %10155 = vmatpush1.xpose.msra.mxu0 0.0
    %10156 = vmatprep.subr.mxu0 0.0
    %10157 = vmatpush1.xpose.msra.mxu0 0.0
    %10158 = vmatprep.subr.mxu0 0.0
    %10159 = vmatpush1.xpose.msra.mxu0 0.0
    %10160 = vmatprep.subr.mxu0 0.0
    %10161 = vmatpush1.xpose.msra.mxu0 0.0
    %10162 = vmatprep.subr.mxu0 0.0
    %10163 = vmatpush1.xpose.msra.mxu0 0.0
    %10164 = vmatprep.subr.mxu0 0.0
    %10165 = vmatpush1.xpose.msra.mxu0 0.0
    %10166 = vmatprep.subr.mxu0 0.0
    %10167 = vmatpush1.xpose.msra.mxu0 0.0
    %10168 = vmatprep.subr.mxu0 0.0
    %10169 = vmatpush1.xpose.msra.mxu0 0.0
    %10170 = vmatprep.subr.mxu0 0.0
    %10171 = vmatpush1.xpose.msra.mxu0 0.0
    %10172 = vmatprep.subr.mxu0 0.0
    %10173 = vmatpush1.xpose.msra.mxu0 0.0
    %10174 = vmatprep.subr.mxu0 0.0
    %10175 = vmatpush1.xpose.msra.mxu0 0.0
    %10176 = vmatprep.subr.mxu0 0.0
    %10177 = vmatpush1.xpose.msra.mxu0 0.0
    %10178 = vmatprep.subr.mxu0 0.0
    %10179 = vmatpush1.xpose.msra.mxu0 0.0
    %10180 = vmatprep.subr.mxu0 0.0
    %10181 = vmatpush1.xpose.msra.mxu0 0.0
    %10182 = vmatprep.subr.mxu0 0.0
    %10183 = vmatpush1.xpose.msra.mxu0 0.0
    %10184 = vmatprep.subr.mxu0 0.0
    %10185 = vmatpush1.xpose.msra.mxu0 0.0
    %10186 = vmatprep.subr.mxu0 0.0
    %10187 = vmatpush1.xpose.msra.mxu0 0.0
    %10188 = vmatprep.subr.mxu0 0.0
    %10189 = vmatpush1.xpose.msra.mxu0 0.0
    %10190 = vmatprep.subr.mxu0 0.0
    %10191 = vmatpush1.xpose.msra.mxu0 0.0
    %10192 = vmatprep.subr.mxu0 0.0
    %10193 = vmatpush1.xpose.msra.mxu0 0.0
    %10194 = vmatprep.subr.mxu0 0.0
    %10195 = vmatpush1.xpose.msra.mxu0 0.0
    %10196 = vmatprep.subr.mxu0 0.0
    %10197 = vmatpush1.xpose.msra.mxu0 0.0
    %10198 = vmatprep.subr.mxu0 0.0
    %10199 = vmatpush1.xpose.msra.mxu0 0.0
    %10200 = vmatprep.subr.mxu0 0.0
    %10201 = vmatpush1.xpose.msra.mxu0 0.0
    %10202 = vmatprep.subr.mxu0 0.0
    %10203 = vmatpush1.xpose.msra.mxu0 0.0
    %10204 = vmatprep.subr.mxu0 0.0
    %10205 = vmatpush1.xpose.msra.mxu0 0.0
    %10206 = vmatprep.mubr.f32.mxu0 %v9292
    %10207 = vmatmul.mubr.f32.gmra.mrb[0].mxu0 %v9291
    %v10208 = vpop.f32.mrb[0].mxu0
    %v10209 = vadd.f32 %v10139, %v10208
    %v10210 = vpop.f32.mrb[0].mxu0
    %10211 = vdwg.mxu0
    %10212 = vmatprep.subr.mxu0 %v9352
    %10213 = vmatpush1.xpose.msra.mxu0 %v9313
    %10214 = vmatprep.subr.mxu0 0.0
    %10215 = vmatpush1.xpose.msra.mxu0 0.0
    %10216 = vmatprep.subr.mxu0 0.0
    %10217 = vmatpush1.xpose.msra.mxu0 0.0
    %10218 = vmatprep.subr.mxu0 0.0
    %10219 = vmatpush1.xpose.msra.mxu0 0.0
    %10220 = vmatprep.subr.mxu0 0.0
    %10221 = vmatpush1.xpose.msra.mxu0 0.0
    %10222 = vmatprep.subr.mxu0 0.0
    %10223 = vmatpush1.xpose.msra.mxu0 0.0
    %10224 = vmatprep.subr.mxu0 0.0
    %10225 = vmatpush1.xpose.msra.mxu0 0.0
    %10226 = vmatprep.subr.mxu0 0.0
    %10227 = vmatpush1.xpose.msra.mxu0 0.0
    %10228 = vmatprep.subr.mxu0 0.0
    %10229 = vmatpush1.xpose.msra.mxu0 0.0
    %10230 = vmatprep.subr.mxu0 0.0
    %10231 = vmatpush1.xpose.msra.mxu0 0.0
    %10232 = vmatprep.subr.mxu0 0.0
    %10233 = vmatpush1.xpose.msra.mxu0 0.0
    %10234 = vmatprep.subr.mxu0 0.0
    %10235 = vmatpush1.xpose.msra.mxu0 0.0
    %10236 = vmatprep.subr.mxu0 0.0
    %10237 = vmatpush1.xpose.msra.mxu0 0.0
    %10238 = vmatprep.subr.mxu0 0.0
    %10239 = vmatpush1.xpose.msra.mxu0 0.0
    %10240 = vmatprep.subr.mxu0 0.0
    %10241 = vmatpush1.xpose.msra.mxu0 0.0
    %10242 = vmatprep.subr.mxu0 0.0
    %10243 = vmatpush1.xpose.msra.mxu0 0.0
    %10244 = vmatprep.subr.mxu0 0.0
    %10245 = vmatpush1.xpose.msra.mxu0 0.0
    %10246 = vmatprep.subr.mxu0 0.0
    %10247 = vmatpush1.xpose.msra.mxu0 0.0
    %10248 = vmatprep.subr.mxu0 0.0
    %10249 = vmatpush1.xpose.msra.mxu0 0.0
    %10250 = vmatprep.subr.mxu0 0.0
    %10251 = vmatpush1.xpose.msra.mxu0 0.0
    %10252 = vmatprep.subr.mxu0 0.0
    %10253 = vmatpush1.xpose.msra.mxu0 0.0
    %10254 = vmatprep.subr.mxu0 0.0
    %10255 = vmatpush1.xpose.msra.mxu0 0.0
    %10256 = vmatprep.subr.mxu0 0.0
    %10257 = vmatpush1.xpose.msra.mxu0 0.0
    %10258 = vmatprep.subr.mxu0 0.0
    %10259 = vmatpush1.xpose.msra.mxu0 0.0
    %10260 = vmatprep.subr.mxu0 0.0
    %10261 = vmatpush1.xpose.msra.mxu0 0.0
    %10262 = vmatprep.subr.mxu0 0.0
    %10263 = vmatpush1.xpose.msra.mxu0 0.0
    %10264 = vmatprep.subr.mxu0 0.0
    %10265 = vmatpush1.xpose.msra.mxu0 0.0
    %10266 = vmatprep.subr.mxu0 0.0
    %10267 = vmatpush1.xpose.msra.mxu0 0.0
    %10268 = vmatprep.subr.mxu0 0.0
    %10269 = vmatpush1.xpose.msra.mxu0 0.0
    %10270 = vmatprep.subr.mxu0 0.0
    %10271 = vmatpush1.xpose.msra.mxu0 0.0
    %10272 = vmatprep.subr.mxu0 0.0
    %10273 = vmatpush1.xpose.msra.mxu0 0.0
    %10274 = vmatprep.subr.mxu0 0.0
    %10275 = vmatpush1.xpose.msra.mxu0 0.0
    %10276 = vmatprep.mubr.f32.mxu0 %v9294
    %10277 = vmatmul.mubr.f32.gmra.mrb[0].mxu0 %v9293
    %v10278 = vpop.f32.mrb[0].mxu0
    %v10279 = vadd.f32 %v10209, %v10278
    %v10280 = vpop.f32.mrb[0].mxu0
    %10281 = vdwg.mxu0
    %10282 = vmatprep.subr.mxu0 %v9353
    %10283 = vmatpush1.xpose.msra.mxu0 %v9314
    %10284 = vmatprep.subr.mxu0 0.0
    %10285 = vmatpush1.xpose.msra.mxu0 0.0
    %10286 = vmatprep.subr.mxu0 0.0
    %10287 = vmatpush1.xpose.msra.mxu0 0.0
    %10288 = vmatprep.subr.mxu0 0.0
    %10289 = vmatpush1.xpose.msra.mxu0 0.0
    %10290 = vmatprep.subr.mxu0 0.0
    %10291 = vmatpush1.xpose.msra.mxu0 0.0
    %10292 = vmatprep.subr.mxu0 0.0
    %10293 = vmatpush1.xpose.msra.mxu0 0.0
    %10294 = vmatprep.subr.mxu0 0.0
    %10295 = vmatpush1.xpose.msra.mxu0 0.0
    %10296 = vmatprep.subr.mxu0 0.0
    %10297 = vmatpush1.xpose.msra.mxu0 0.0
    %10298 = vmatprep.subr.mxu0 0.0
    %10299 = vmatpush1.xpose.msra.mxu0 0.0
    %10300 = vmatprep.subr.mxu0 0.0
    %10301 = vmatpush1.xpose.msra.mxu0 0.0
    %10302 = vmatprep.subr.mxu0 0.0
    %10303 = vmatpush1.xpose.msra.mxu0 0.0
    %10304 = vmatprep.subr.mxu0 0.0
    %10305 = vmatpush1.xpose.msra.mxu0 0.0
    %10306 = vmatprep.subr.mxu0 0.0
    %10307 = vmatpush1.xpose.msra.mxu0 0.0
    %10308 = vmatprep.subr.mxu0 0.0
    %10309 = vmatpush1.xpose.msra.mxu0 0.0
    %10310 = vmatprep.subr.mxu0 0.0
    %10311 = vmatpush1.xpose.msra.mxu0 0.0
    %10312 = vmatprep.subr.mxu0 0.0
    %10313 = vmatpush1.xpose.msra.mxu0 0.0
    %10314 = vmatprep.subr.mxu0 0.0
    %10315 = vmatpush1.xpose.msra.mxu0 0.0
    %10316 = vmatprep.subr.mxu0 0.0
    %10317 = vmatpush1.xpose.msra.mxu0 0.0
    %10318 = vmatprep.subr.mxu0 0.0
    %10319 = vmatpush1.xpose.msra.mxu0 0.0
    %10320 = vmatprep.subr.mxu0 0.0
    %10321 = vmatpush1.xpose.msra.mxu0 0.0
    %10322 = vmatprep.subr.mxu0 0.0
    %10323 = vmatpush1.xpose.msra.mxu0 0.0
    %10324 = vmatprep.subr.mxu0 0.0
    %10325 = vmatpush1.xpose.msra.mxu0 0.0
    %10326 = vmatprep.subr.mxu0 0.0
    %10327 = vmatpush1.xpose.msra.mxu0 0.0
    %10328 = vmatprep.subr.mxu0 0.0
    %10329 = vmatpush1.xpose.msra.mxu0 0.0
    %10330 = vmatprep.subr.mxu0 0.0
    %10331 = vmatpush1.xpose.msra.mxu0 0.0
    %10332 = vmatprep.subr.mxu0 0.0
    %10333 = vmatpush1.xpose.msra.mxu0 0.0
    %10334 = vmatprep.subr.mxu0 0.0
    %10335 = vmatpush1.xpose.msra.mxu0 0.0
    %10336 = vmatprep.subr.mxu0 0.0
    %10337 = vmatpush1.xpose.msra.mxu0 0.0
    %10338 = vmatprep.subr.mxu0 0.0
    %10339 = vmatpush1.xpose.msra.mxu0 0.0
    %10340 = vmatprep.subr.mxu0 0.0
    %10341 = vmatpush1.xpose.msra.mxu0 0.0
    %10342 = vmatprep.subr.mxu0 0.0
    %10343 = vmatpush1.xpose.msra.mxu0 0.0
    %10344 = vmatprep.subr.mxu0 0.0
    %10345 = vmatpush1.xpose.msra.mxu0 0.0
    %10346 = vmatprep.mubr.f32.mxu0 %v9296
    %10347 = vmatmul.mubr.f32.gmra.mrb[0].mxu0 %v9295
    %v10348 = vpop.f32.mrb[0].mxu0
    %v10349 = vadd.f32 %v10279, %v10348
    %v10350 = vpop.f32.mrb[0].mxu0
    %10351 = vdwg.mxu0
    %10352 = vmatprep.subr.mxu0 %v9354
    %10353 = vmatpush1.xpose.msra.mxu0 %v9315
    %10354 = vmatprep.subr.mxu0 0.0
    %10355 = vmatpush1.xpose.msra.mxu0 0.0
    %10356 = vmatprep.subr.mxu0 0.0
    %10357 = vmatpush1.xpose.msra.mxu0 0.0
    %10358 = vmatprep.subr.mxu0 0.0
    %10359 = vmatpush1.xpose.msra.mxu0 0.0
    %10360 = vmatprep.subr.mxu0 0.0
    %10361 = vmatpush1.xpose.msra.mxu0 0.0
    %10362 = vmatprep.subr.mxu0 0.0
    %10363 = vmatpush1.xpose.msra.mxu0 0.0
    %10364 = vmatprep.subr.mxu0 0.0
    %10365 = vmatpush1.xpose.msra.mxu0 0.0
    %10366 = vmatprep.subr.mxu0 0.0
    %10367 = vmatpush1.xpose.msra.mxu0 0.0
    %10368 = vmatprep.subr.mxu0 0.0
    %10369 = vmatpush1.xpose.msra.mxu0 0.0
    %10370 = vmatprep.subr.mxu0 0.0
    %10371 = vmatpush1.xpose.msra.mxu0 0.0
    %10372 = vmatprep.subr.mxu0 0.0
    %10373 = vmatpush1.xpose.msra.mxu0 0.0
    %10374 = vmatprep.subr.mxu0 0.0
    %10375 = vmatpush1.xpose.msra.mxu0 0.0
    %10376 = vmatprep.subr.mxu0 0.0
    %10377 = vmatpush1.xpose.msra.mxu0 0.0
    %10378 = vmatprep.subr.mxu0 0.0
    %10379 = vmatpush1.xpose.msra.mxu0 0.0
    %10380 = vmatprep.subr.mxu0 0.0
    %10381 = vmatpush1.xpose.msra.mxu0 0.0
    %10382 = vmatprep.subr.mxu0 0.0
    %10383 = vmatpush1.xpose.msra.mxu0 0.0
    %10384 = vmatprep.subr.mxu0 0.0
    %10385 = vmatpush1.xpose.msra.mxu0 0.0
    %10386 = vmatprep.subr.mxu0 0.0
    %10387 = vmatpush1.xpose.msra.mxu0 0.0
    %10388 = vmatprep.subr.mxu0 0.0
    %10389 = vmatpush1.xpose.msra.mxu0 0.0
    %10390 = vmatprep.subr.mxu0 0.0
    %10391 = vmatpush1.xpose.msra.mxu0 0.0
    %10392 = vmatprep.subr.mxu0 0.0
    %10393 = vmatpush1.xpose.msra.mxu0 0.0
    %10394 = vmatprep.subr.mxu0 0.0
    %10395 = vmatpush1.xpose.msra.mxu0 0.0
    %10396 = vmatprep.subr.mxu0 0.0
    %10397 = vmatpush1.xpose.msra.mxu0 0.0
    %10398 = vmatprep.subr.mxu0 0.0
    %10399 = vmatpush1.xpose.msra.mxu0 0.0
    %10400 = vmatprep.subr.mxu0 0.0
    %10401 = vmatpush1.xpose.msra.mxu0 0.0
    %10402 = vmatprep.subr.mxu0 0.0
    %10403 = vmatpush1.xpose.msra.mxu0 0.0
    %10404 = vmatprep.subr.mxu0 0.0
    %10405 = vmatpush1.xpose.msra.mxu0 0.0
    %10406 = vmatprep.subr.mxu0 0.0
    %10407 = vmatpush1.xpose.msra.mxu0 0.0
    %10408 = vmatprep.subr.mxu0 0.0
    %10409 = vmatpush1.xpose.msra.mxu0 0.0
    %10410 = vmatprep.subr.mxu0 0.0
    %10411 = vmatpush1.xpose.msra.mxu0 0.0
    %10412 = vmatprep.subr.mxu0 0.0
    %10413 = vmatpush1.xpose.msra.mxu0 0.0
    %10414 = vmatprep.subr.mxu0 0.0
    %10415 = vmatpush1.xpose.msra.mxu0 0.0
    %10416 = vmatprep.mubr.f32.mxu0 %v9298
    %10417 = vmatmul.mubr.f32.gmra.mrb[0].mxu0 %v9297
    %v10418 = vpop.f32.mrb[0].mxu0
    %v10419 = vadd.f32 %v10349, %v10418
    %v10420 = vpop.f32.mrb[0].mxu0
    %10421 = vdwg.mxu0
    %10422 = vmatprep.subr.mxu0 %v9355
    %10423 = vmatpush1.xpose.msra.mxu0 %v9316
    %10424 = vmatprep.subr.mxu0 0.0
    %10425 = vmatpush1.xpose.msra.mxu0 0.0
    %10426 = vmatprep.subr.mxu0 0.0
    %10427 = vmatpush1.xpose.msra.mxu0 0.0
    %10428 = vmatprep.subr.mxu0 0.0
    %10429 = vmatpush1.xpose.msra.mxu0 0.0
    %10430 = vmatprep.subr.mxu0 0.0
    %10431 = vmatpush1.xpose.msra.mxu0 0.0
    %10432 = vmatprep.subr.mxu0 0.0
    %10433 = vmatpush1.xpose.msra.mxu0 0.0
    %10434 = vmatprep.subr.mxu0 0.0
    %10435 = vmatpush1.xpose.msra.mxu0 0.0
    %10436 = vmatprep.subr.mxu0 0.0
    %10437 = vmatpush1.xpose.msra.mxu0 0.0
    %10438 = vmatprep.subr.mxu0 0.0
    %10439 = vmatpush1.xpose.msra.mxu0 0.0
    %10440 = vmatprep.subr.mxu0 0.0
    %10441 = vmatpush1.xpose.msra.mxu0 0.0
    %10442 = vmatprep.subr.mxu0 0.0
    %10443 = vmatpush1.xpose.msra.mxu0 0.0
    %10444 = vmatprep.subr.mxu0 0.0
    %10445 = vmatpush1.xpose.msra.mxu0 0.0
    %10446 = vmatprep.subr.mxu0 0.0
    %10447 = vmatpush1.xpose.msra.mxu0 0.0
    %10448 = vmatprep.subr.mxu0 0.0
    %10449 = vmatpush1.xpose.msra.mxu0 0.0
    %10450 = vmatprep.subr.mxu0 0.0
    %10451 = vmatpush1.xpose.msra.mxu0 0.0
    %10452 = vmatprep.subr.mxu0 0.0
    %10453 = vmatpush1.xpose.msra.mxu0 0.0
    %10454 = vmatprep.subr.mxu0 0.0
    %10455 = vmatpush1.xpose.msra.mxu0 0.0
    %10456 = vmatprep.subr.mxu0 0.0
    %10457 = vmatpush1.xpose.msra.mxu0 0.0
    %10458 = vmatprep.subr.mxu0 0.0
    %10459 = vmatpush1.xpose.msra.mxu0 0.0
    %10460 = vmatprep.subr.mxu0 0.0
    %10461 = vmatpush1.xpose.msra.mxu0 0.0
    %10462 = vmatprep.subr.mxu0 0.0
    %10463 = vmatpush1.xpose.msra.mxu0 0.0
    %10464 = vmatprep.subr.mxu0 0.0
    %10465 = vmatpush1.xpose.msra.mxu0 0.0
    %10466 = vmatprep.subr.mxu0 0.0
    %10467 = vmatpush1.xpose.msra.mxu0 0.0
    %10468 = vmatprep.subr.mxu0 0.0
    %10469 = vmatpush1.xpose.msra.mxu0 0.0
    %10470 = vmatprep.subr.mxu0 0.0
    %10471 = vmatpush1.xpose.msra.mxu0 0.0
    %10472 = vmatprep.subr.mxu0 0.0
    %10473 = vmatpush1.xpose.msra.mxu0 0.0
    %10474 = vmatprep.subr.mxu0 0.0
    %10475 = vmatpush1.xpose.msra.mxu0 0.0
    %10476 = vmatprep.subr.mxu0 0.0
    %10477 = vmatpush1.xpose.msra.mxu0 0.0
    %10478 = vmatprep.subr.mxu0 0.0
    %10479 = vmatpush1.xpose.msra.mxu0 0.0
    %10480 = vmatprep.subr.mxu0 0.0
    %10481 = vmatpush1.xpose.msra.mxu0 0.0
    %10482 = vmatprep.subr.mxu0 0.0
    %10483 = vmatpush1.xpose.msra.mxu0 0.0
    %10484 = vmatprep.subr.mxu0 0.0
    %10485 = vmatpush1.xpose.msra.mxu0 0.0
    %10486 = vmatprep.mubr.f32.mxu0 %v9300
    %10487 = vmatmul.mubr.f32.gmra.mrb[0].mxu0 %v9299
    %v10488 = vpop.f32.mrb[0].mxu0
    %v10489 = vadd.f32 %v10419, %v10488
    %v10490 = vpop.f32.mrb[0].mxu0
    %10491 = vdwg.mxu0
    %vm10492 = vcmask 17408
    %10493 = vst.msk [vmem:[#allocation10] sm:$0x3] %vm10492, %v10489
    // Predicated region
    $region38: #{tpu_custom_call.1} parent=1 // pred_check
      _
    $region39: #{tpu_custom_call.1} parent=1 // pred_check_branch
      %10495 = sbr.rel (0) target = $region41
    $region40: #{tpu_custom_call.1} parent=1 // pred_region
      %s10497 = ssub.s32 32, 32
      %10498 = vsyncadd [#allocation4], %s10497
      %s10500 = sshll.u32 [#allocation10], 4
      %s10501 = int_to_ptr.vmem [resolvable:$true] %s10500
      %10503 = dma.vmem_to_hbm [thread:$0]  %s10501, 32, %s5, [#allocation4]
    $region41: #{tpu_custom_call.1} parent=1 // pred_fallthru
      _
    // Predicated region
    $region42: #{tpu_custom_call.1} parent=1 // pred_check
      _
    $region43: #{tpu_custom_call.1} parent=1 // pred_check_branch
      %10505 = sbr.rel (0) target = $region45
    $region44: #{tpu_custom_call.1} parent=1 // pred_region
      %10506 = dma.done [#allocation4], 32
    $region45: #{tpu_custom_call.1} parent=1 // pred_fallthru
      _
    %10507 = vsyncpa [#allocation3], 1
    %10508 = vsyncpa [#allocation6], 1
    %10509 = vsyncpa [#allocation9], 1
    %10510 = vsyncpa [#allocation4], 1

</llo_original>
